<compile_context>
chip_gen: v7x
topology: tpu7x:2x2x1
jax: 0.10.0
libtpu: 0.0.40
codegen_flags: <defaults>
</compile_context>

<pallas_src>
import jax
import jax.numpy as jnp
from jax import lax
from jax.experimental import pallas as pl
from jax.experimental.pallas import tpu as pltpu  # noqa: F401

EPS = 1e-5
KSIZE, STRIDE = 10, 2


def _full_spec(a):
    # whole-array VMEM block, constant index map (grid=(1,))
    nd = a.ndim
    return pl.BlockSpec(a.shape, lambda i, _n=nd: (0,) * _n)


# --------- kernel 1: conv (im2col matmul) + BN + ReLU + hoisted layer-1 input projection ---------
def _conv_bn_relu_proj_kernel(p_ref, wc_ref, g_ref, beta_ref, w1_ref, b1_ref, o_ref):
    # p: (N, C_in*K), wc: (C_in*K, C_out), g/beta: (1, C_out), w1: (C_out, 4H), b1: (1, 4H)
    # conv bias omitted: it is exactly cancelled by the train-mode BatchNorm mean subtraction.
    y = jnp.dot(p_ref[...], wc_ref[...], preferred_element_type=jnp.float32)
    mu = jnp.mean(y, axis=0, keepdims=True)
    var = jnp.mean((y - mu) ** 2, axis=0, keepdims=True)        # biased, like PyTorch BN fwd
    scale = g_ref[...] * lax.rsqrt(var + EPS)
    shift = beta_ref[...] - mu * scale
    y = jnp.maximum(y * scale + shift, 0.0)
    # hoisted layer-1 LSTM input projection (one well-shaped matmul, off the recurrence path)
    o_ref[...] = jnp.dot(y, w1_ref[...], preferred_element_type=jnp.float32) + b1_ref[...]


def conv_bn_relu_proj(patches, wc_t, gamma, beta, wih1_t, b1):
    n = patches.shape[0]
    g4 = wih1_t.shape[1]
    args = (patches, wc_t, gamma, beta, wih1_t, b1)
    return pl.pallas_call(
        _conv_bn_relu_proj_kernel,
        out_shape=jax.ShapeDtypeStruct((n, g4), jnp.float32),
        grid=(1,),
        in_specs=[_full_spec(a) for a in args],
        out_specs=pl.BlockSpec((n, g4), lambda i: (0, 0)),
    )(*args)


# --------- kernel 2: full 2-layer LSTM recurrence (in-kernel time loop) + final Linear ---------
def _lstm_fc_kernel(xw1_ref, whh1_ref, w2_ref, b2_ref, wfc_ref, bfc_ref, out_ref):
    seq_len, bsz, g4 = xw1_ref.shape
    hidden = g4 // 4
    whh1 = whh1_ref[...]          # (H, 4H)  pre-transposed, loaded once outside the loop
    w2 = w2_ref[...]              # (2H, 4H) = [Wih_l1^T ; Whh_l1^T]
    b2 = b2_ref[...]              # (1, 4H)

    def gate_update(gates, c):
        i = jax.nn.sigmoid(gates[:, 0 * hidden:1 * hidden])    # PyTorch gate order: i, f, g, o
        f = jax.nn.sigmoid(gates[:, 1 * hidden:2 * hidden])
        g = jnp.tanh(gates[:, 2 * hidden:3 * hidden])
        o = jax.nn.sigmoid(gates[:, 3 * hidden:4 * hidden])
        c_new = f * c + i * g
        return o * jnp.tanh(c_new), c_new

    def step(t, carry):
        h1, c1, h2, c2 = carry
        # layer 1: input projection + bias already precomputed in kernel 1
        g1 = xw1_ref[t] + jnp.dot(h1, whh1, preferred_element_type=jnp.float32)
        h1, c1 = gate_update(g1, c1)
        # TODO(synk): stochastic inter-layer dropout (train mode, p>0) not implemented; p=0.0 here.
        # layer 2: single fused matmul over concat([h1_new, h2_old])
        g2 = jnp.dot(jnp.concatenate([h1, h2], axis=-1), w2,
                     preferred_element_type=jnp.float32) + b2
        h2, c2 = gate_update(g2, c2)
        return h1, c1, h2, c2

    z = jnp.zeros((bsz, hidden), jnp.float32)
    _, _, h2, _ = lax.fori_loop(0, seq_len, step, (z, z, z, z), unroll=True)
    out_ref[...] = jnp.dot(h2, wfc_ref[...], preferred_element_type=jnp.float32) + bfc_ref[...]


def lstm_fc(xw1_seq, whh1_t, w2_t, b2, wfc_t, bfc):
    bsz = xw1_seq.shape[1]
    out_dim = wfc_t.shape[1]
    args = (xw1_seq, whh1_t, w2_t, b2, wfc_t, bfc)
    return pl.pallas_call(
        _lstm_fc_kernel,
        out_shape=jax.ShapeDtypeStruct((bsz, out_dim), jnp.float32),
        grid=(1,),
        in_specs=[_full_spec(a) for a in args],
        out_specs=pl.BlockSpec((bsz, out_dim), lambda i: (0, 0)),
    )(*args)


# ------------------- glue (im2col, weight pre-transposes, param plumbing) -------------------
def cnn_lstm_forward(x, params):
    b, c_in, length = x.shape
    l_out = (length - KSIZE) // STRIDE + 1
    idx = STRIDE * jnp.arange(l_out)[:, None] + jnp.arange(KSIZE)[None, :]      # (L_out, K)
    patches = x[:, :, idx]                                                      # (B, C_in, L_out, K)
    # sequence-major row ordering (row = t*B + b) so the kernel-1 output reshapes directly
    # to (L_out, B, 4H) without any transpose between the two kernels.
    patches = jnp.transpose(patches, (2, 0, 1, 3)).reshape(l_out * b, c_in * KSIZE)

    c_out = params["conv_w"].shape[0]
    hidden = params["whh_l0"].shape[1]

    wc_t = params["conv_w"].reshape(c_out, -1).T                                # (C_in*K, C_out)
    wih1_t = params["wih_l0"].T                                                 # (C_out, 4H)
    b1 = (params["bih_l0"] + params["bhh_l0"])[None, :]

    xw1 = conv_bn_relu_proj(patches, wc_t,
                            params["bn_gamma"][None, :], params["bn_beta"][None, :],
                            wih1_t, b1)                                         # (L_out*B, 4H)
    xw1_seq = xw1.reshape(l_out, b, 4 * hidden)                                 # (L_out, B, 4H)

    whh1_t = params["whh_l0"].T                                                 # (H, 4H)
    w2_t = jnp.concatenate([params["wih_l1"].T, params["whh_l1"].T], axis=0)    # (2H, 4H)
    b2 = (params["bih_l1"] + params["bhh_l1"])[None, :]
    return lstm_fc(xw1_seq, whh1_t, w2_t, b2,
                   params["fc_w"].T, params["fc_b"][None, :])


# ------------------- pure-JAX reference for correctness check -------------------
def reference_forward(x, params):
    b = x.shape[0]
    length = x.shape[2]
    l_out = (length - KSIZE) // STRIDE + 1
    idx = STRIDE * jnp.arange(l_out)[:, None] + jnp.arange(KSIZE)[None, :]
    patches = x[:, :, idx]                                                      # (B, C_in, L_out, K)
    patches = jnp.transpose(patches, (0, 2, 1, 3)).reshape(b * l_out, -1)
    w2d = params["conv_w"].reshape(params["conv_w"].shape[0], -1)
    y = patches @ w2d.T + params["conv_b"][None, :]
    mu = y.mean(0, keepdims=True)
    var = ((y - mu) ** 2).mean(0, keepdims=True)
    y = params["bn_gamma"][None, :] * (y - mu) / jnp.sqrt(var + EPS) + params["bn_beta"][None, :]
    y = jnp.maximum(y, 0.0)
    c_out = w2d.shape[0]
    x_seq = y.reshape(b, l_out, c_out).transpose(1, 0, 2)

    def cell(x_t, h, c, wih, whh, bias):
        g = x_t @ wih.T + h @ whh.T + bias
        hdim = h.shape[-1]
        i = jax.nn.sigmoid(g[:, :hdim])
        f = jax.nn.sigmoid(g[:, hdim:2 * hdim])
        gg = jnp.tanh(g[:, 2 * hdim:3 * hdim])
        o = jax.nn.sigmoid(g[:, 3 * hdim:])
        c = f * c + i * gg
        h = o * jnp.tanh(c)
        return h, c

    hidden = params["whh_l0"].shape[1]
    h1 = c1 = h2 = c2 = jnp.zeros((b, hidden), jnp.float32)
    b1 = params["bih_l0"] + params["bhh_l0"]
    b2 = params["bih_l1"] + params["bhh_l1"]
    for t in range(l_out):
        h1, c1 = cell(x_seq[t], h1, c1, params["wih_l0"], params["whh_l0"], b1)
        h2, c2 = cell(h1, h2, c2, params["wih_l1"], params["whh_l1"], b2)
    return h2 @ params["fc_w"].T + params["fc_b"]


if __name__ == "__main__":
    cnn_input_size, rnn_input_size, hidden_size, output_dim = 4, 8, 32, 3
    batch, length = 2, 64

    key = jax.random.PRNGKey(0)
    ks = jax.random.split(key, 16)
    u = lambda k, shape, s: jax.random.uniform(k, shape, jnp.float32, -s, s)
    params = {
        "conv_w":   u(ks[0], (rnn_input_size, cnn_input_size, KSIZE), 0.1),
        "conv_b":   u(ks[1], (rnn_input_size,), 0.1),
        "bn_gamma": jnp.ones((rnn_input_size,), jnp.float32),
        "bn_beta":  jnp.zeros((rnn_input_size,), jnp.float32),
        "wih_l0":   u(ks[2], (4 * hidden_size, rnn_input_size), 0.1),
        "whh_l0":   u(ks[3], (4 * hidden_size, hidden_size), 0.1),
        "bih_l0":   u(ks[4], (4 * hidden_size,), 0.1),
        "bhh_l0":   u(ks[5], (4 * hidden_size,), 0.1),
        "wih_l1":   u(ks[6], (4 * hidden_size, hidden_size), 0.1),
        "whh_l1":   u(ks[7], (4 * hidden_size, hidden_size), 0.1),
        "bih_l1":   u(ks[8], (4 * hidden_size,), 0.1),
        "bhh_l1":   u(ks[9], (4 * hidden_size,), 0.1),
        "fc_w":     u(ks[10], (output_dim, hidden_size), 0.1),
        "fc_b":     u(ks[11], (output_dim,), 0.1),
    }
    x = jax.random.normal(ks[12], (batch, cnn_input_size, length), jnp.float32)

    fwd = jax.jit(cnn_lstm_forward)
    out = jax.block_until_ready(fwd(x, params))
    ref = reference_forward(x, params)
    assert out.shape == (batch, output_dim)
    assert jnp.allclose(out, ref, rtol=1e-3, atol=1e-3), (out, ref)
    print("KERNEL_OK")
</pallas_src>

<mosaic_0001>
module attributes {stable_mosaic.version = 11 : i64} {
  func.func @_conv_bn_relu_proj_kernel(%arg0: i32, %arg1: memref<56x40xf32, #tpu.memory_space<vmem>>, %arg2: memref<40x8xf32, #tpu.memory_space<vmem>>, %arg3: memref<1x8xf32, #tpu.memory_space<vmem>>, %arg4: memref<1x8xf32, #tpu.memory_space<vmem>>, %arg5: memref<8x128xf32, #tpu.memory_space<vmem>>, %arg6: memref<1x128xf32, #tpu.memory_space<vmem>>, %arg7: memref<56x128xf32, #tpu.memory_space<vmem>>) attributes {dimension_semantics = [#tpu.dimension_semantics<arbitrary>], iteration_bounds = array<i64: 1>, scalar_prefetch = 0 : i64, scratch_operands = 0 : i64, tpu.core_type = #tpu.core_type<tc>, window_params = [{pipeline_mode = #tpu.pipeline_mode<synchronous>, transform_indices = @transform_0, window_bounds = array<i64: 56, 40>}, {pipeline_mode = #tpu.pipeline_mode<synchronous>, transform_indices = @transform_1, window_bounds = array<i64: 40, 8>}, {pipeline_mode = #tpu.pipeline_mode<synchronous>, transform_indices = @transform_2, window_bounds = array<i64: 1, 8>}, {pipeline_mode = #tpu.pipeline_mode<synchronous>, transform_indices = @transform_3, window_bounds = array<i64: 1, 8>}, {pipeline_mode = #tpu.pipeline_mode<synchronous>, transform_indices = @transform_4, window_bounds = array<i64: 8, 128>}, {pipeline_mode = #tpu.pipeline_mode<synchronous>, transform_indices = @transform_5, window_bounds = array<i64: 1, 128>}, {pipeline_mode = #tpu.pipeline_mode<synchronous>, transform_indices = @transform_6, window_bounds = array<i64: 56, 128>}]} {
    %c0 = arith.constant 0 : index
    %c0_0 = arith.constant 0 : index
    %0 = vector.load %arg1[%c0, %c0_0] : memref<56x40xf32, #tpu.memory_space<vmem>>, vector<56x40xf32>
    %c0_1 = arith.constant 0 : index
    %c0_2 = arith.constant 0 : index
    %1 = vector.load %arg2[%c0_1, %c0_2] : memref<40x8xf32, #tpu.memory_space<vmem>>, vector<40x8xf32>
    %cst = arith.constant dense<0.000000e+00> : vector<56x8xf32>
    %2 = tpu.matmul %0, %1, %cst {dimension_numbers = #tpu.dot_dimension_numbers<[1], [0], [0], [1], [0, 0, 1, 1], [], []>} : vector<56x40xf32>, vector<40x8xf32>, vector<56x8xf32> -> vector<56x8xf32>
    %cst_3 = arith.constant dense<0.000000e+00> : vector<8xf32>
    %3 = vector.multi_reduction <add>, %2, %cst_3 [0] : vector<56x8xf32> to vector<8xf32>
    %4 = vector.shape_cast %3 : vector<8xf32> to vector<1x8xf32>
    %cst_4 = arith.constant 5.600000e+01 : f32
    %5 = vector.broadcast %cst_4 : f32 to vector<1x8xf32>
    %6 = arith.divf %4, %5 : vector<1x8xf32>
    %7 = vector.broadcast %6 : vector<1x8xf32> to vector<56x8xf32>
    %8 = arith.subf %2, %7 : vector<56x8xf32>
    %9 = arith.mulf %8, %8 : vector<56x8xf32>
    %cst_5 = arith.constant dense<0.000000e+00> : vector<8xf32>
    %10 = vector.multi_reduction <add>, %9, %cst_5 [0] : vector<56x8xf32> to vector<8xf32>
    %11 = vector.shape_cast %10 : vector<8xf32> to vector<1x8xf32>
    %cst_6 = arith.constant 5.600000e+01 : f32
    %12 = vector.broadcast %cst_6 : f32 to vector<1x8xf32>
    %13 = arith.divf %11, %12 : vector<1x8xf32>
    %c0_7 = arith.constant 0 : index
    %c0_8 = arith.constant 0 : index
    %14 = vector.load %arg3[%c0_7, %c0_8] : memref<1x8xf32, #tpu.memory_space<vmem>>, vector<1x8xf32>
    %cst_9 = arith.constant 9.99999974E-6 : f32
    %15 = vector.broadcast %cst_9 : f32 to vector<1x8xf32>
    %16 = arith.addf %13, %15 : vector<1x8xf32>
    %17 = math.rsqrt %16 : vector<1x8xf32>
    %18 = arith.mulf %14, %17 : vector<1x8xf32>
    %c0_10 = arith.constant 0 : index
    %c0_11 = arith.constant 0 : index
    %19 = vector.load %arg4[%c0_10, %c0_11] : memref<1x8xf32, #tpu.memory_space<vmem>>, vector<1x8xf32>
    %20 = arith.mulf %6, %18 : vector<1x8xf32>
    %21 = arith.subf %19, %20 : vector<1x8xf32>
    %22 = vector.broadcast %18 : vector<1x8xf32> to vector<56x8xf32>
    %23 = arith.mulf %2, %22 : vector<56x8xf32>
    %24 = vector.broadcast %21 : vector<1x8xf32> to vector<56x8xf32>
    %25 = arith.addf %23, %24 : vector<56x8xf32>
    %cst_12 = arith.constant 0.000000e+00 : f32
    %26 = vector.broadcast %cst_12 : f32 to vector<56x8xf32>
    %27 = arith.maximumf %25, %26 : vector<56x8xf32>
    %c0_13 = arith.constant 0 : index
    %c0_14 = arith.constant 0 : index
    %28 = vector.load %arg5[%c0_13, %c0_14] : memref<8x128xf32, #tpu.memory_space<vmem>>, vector<8x128xf32>
    %cst_15 = arith.constant dense<0.000000e+00> : vector<56x128xf32>
    %29 = tpu.matmul %27, %28, %cst_15 {dimension_numbers = #tpu.dot_dimension_numbers<[1], [0], [0], [1], [0, 0, 1, 1], [], []>} : vector<56x8xf32>, vector<8x128xf32>, vector<56x128xf32> -> vector<56x128xf32>
    %c0_16 = arith.constant 0 : index
    %c0_17 = arith.constant 0 : index
    %30 = vector.load %arg6[%c0_16, %c0_17] : memref<1x128xf32, #tpu.memory_space<vmem>>, vector<1x128xf32>
    %31 = vector.broadcast %30 : vector<1x128xf32> to vector<56x128xf32>
    %32 = arith.addf %29, %31 : vector<56x128xf32>
    %c0_18 = arith.constant 0 : index
    %c0_19 = arith.constant 0 : index
    %33 = vector.load %arg7[%c0_18, %c0_19] : memref<56x128xf32, #tpu.memory_space<vmem>>, vector<56x128xf32>
    tpu.vector_store %arg7[%c0_18, %c0_19], %32 {strides = array<i32>} : memref<56x128xf32, #tpu.memory_space<vmem>>, vector<56x128xf32>,
    return
  }
  func.func @transform_0(%arg0: i32) -> (i32, i32) {
    %c0_i32 = arith.constant 0 : i32
    %c0_i32_0 = arith.constant 0 : i32
    %c0_i32_1 = arith.constant 0 : i32
    return %c0_i32, %c0_i32_0 : i32, i32
  }
  func.func @transform_1(%arg0: i32) -> (i32, i32) {
    %c0_i32 = arith.constant 0 : i32
    %c0_i32_0 = arith.constant 0 : i32
    %c0_i32_1 = arith.constant 0 : i32
    return %c0_i32, %c0_i32_0 : i32, i32
  }
  func.func @transform_2(%arg0: i32) -> (i32, i32) {
    %c0_i32 = arith.constant 0 : i32
    %c0_i32_0 = arith.constant 0 : i32
    %c0_i32_1 = arith.constant 0 : i32
    return %c0_i32, %c0_i32_0 : i32, i32
  }
  func.func @transform_3(%arg0: i32) -> (i32, i32) {
    %c0_i32 = arith.constant 0 : i32
    %c0_i32_0 = arith.constant 0 : i32
    %c0_i32_1 = arith.constant 0 : i32
    return %c0_i32, %c0_i32_0 : i32, i32
  }
  func.func @transform_4(%arg0: i32) -> (i32, i32) {
    %c0_i32 = arith.constant 0 : i32
    %c0_i32_0 = arith.constant 0 : i32
    %c0_i32_1 = arith.constant 0 : i32
    return %c0_i32, %c0_i32_0 : i32, i32
  }
  func.func @transform_5(%arg0: i32) -> (i32, i32) {
    %c0_i32 = arith.constant 0 : i32
    %c0_i32_0 = arith.constant 0 : i32
    %c0_i32_1 = arith.constant 0 : i32
    return %c0_i32, %c0_i32_0 : i32, i32
  }
  func.func @transform_6(%arg0: i32) -> (i32, i32) {
    %c0_i32 = arith.constant 0 : i32
    %c0_i32_0 = arith.constant 0 : i32
    %c0_i32_1 = arith.constant 0 : i32
    return %c0_i32, %c0_i32_0 : i32, i32
  }
}

module attributes {stable_mosaic.version = 11 : i64} {
  func.func @_lstm_fc_kernel(%arg0: i32, %arg1: memref<28x2x128xf32, #tpu.memory_space<vmem>>, %arg2: memref<32x128xf32, #tpu.memory_space<vmem>>, %arg3: memref<64x128xf32, #tpu.memory_space<vmem>>, %arg4: memref<1x128xf32, #tpu.memory_space<vmem>>, %arg5: memref<32x3xf32, #tpu.memory_space<vmem>>, %arg6: memref<1x3xf32, #tpu.memory_space<vmem>>, %arg7: memref<2x3xf32, #tpu.memory_space<vmem>>) attributes {dimension_semantics = [#tpu.dimension_semantics<arbitrary>], iteration_bounds = array<i64: 1>, scalar_prefetch = 0 : i64, scratch_operands = 0 : i64, tpu.core_type = #tpu.core_type<tc>, window_params = [{pipeline_mode = #tpu.pipeline_mode<synchronous>, transform_indices = @transform_0, window_bounds = array<i64: 28, 2, 128>}, {pipeline_mode = #tpu.pipeline_mode<synchronous>, transform_indices = @transform_1, window_bounds = array<i64: 32, 128>}, {pipeline_mode = #tpu.pipeline_mode<synchronous>, transform_indices = @transform_2, window_bounds = array<i64: 64, 128>}, {pipeline_mode = #tpu.pipeline_mode<synchronous>, transform_indices = @transform_3, window_bounds = array<i64: 1, 128>}, {pipeline_mode = #tpu.pipeline_mode<synchronous>, transform_indices = @transform_4, window_bounds = array<i64: 32, 3>}, {pipeline_mode = #tpu.pipeline_mode<synchronous>, transform_indices = @transform_5, window_bounds = array<i64: 1, 3>}, {pipeline_mode = #tpu.pipeline_mode<synchronous>, transform_indices = @transform_6, window_bounds = array<i64: 2, 3>}]} {
    %c0 = arith.constant 0 : index
    %c0_0 = arith.constant 0 : index
    %0 = vector.load %arg2[%c0, %c0_0] : memref<32x128xf32, #tpu.memory_space<vmem>>, vector<32x128xf32>
    %c0_1 = arith.constant 0 : index
    %c0_2 = arith.constant 0 : index
    %1 = vector.load %arg3[%c0_1, %c0_2] : memref<64x128xf32, #tpu.memory_space<vmem>>, vector<64x128xf32>
    %c0_3 = arith.constant 0 : index
    %c0_4 = arith.constant 0 : index
    %2 = vector.load %arg4[%c0_3, %c0_4] : memref<1x128xf32, #tpu.memory_space<vmem>>, vector<1x128xf32>
    %cst = arith.constant 0.000000e+00 : f32
    %3 = vector.broadcast %cst : f32 to vector<2x32xf32>
    %c0_i32 = arith.constant 0 : i32
    %4 = arith.index_cast %c0_i32 : i32 to index
    %c0_5 = arith.constant 0 : index
    %c0_6 = arith.constant 0 : index
    %5 = vector.load %arg1[%4, %c0_5, %c0_6] : memref<28x2x128xf32, #tpu.memory_space<vmem>>, vector<1x2x128xf32>
    %6 = vector.shape_cast %5 : vector<1x2x128xf32> to vector<2x128xf32>
    %cst_7 = arith.constant dense<0.000000e+00> : vector<2x128xf32>
    %7 = tpu.matmul %3, %0, %cst_7 {dimension_numbers = #tpu.dot_dimension_numbers<[1], [0], [0], [1], [0, 0, 1, 1], [], []>} : vector<2x32xf32>, vector<32x128xf32>, vector<2x128xf32> -> vector<2x128xf32>
    %8 = arith.addf %6, %7 : vector<2x128xf32>
    %9 = vector.extract_strided_slice %8 {offsets = [0, 0], sizes = [2, 32], strides = [1, 1]} : vector<2x128xf32> to vector<2x32xf32>
    %10 = arith.negf %9 : vector<2x32xf32>
    %11 = math.exp %10 : vector<2x32xf32>
    %cst_8 = arith.constant 1.000000e+00 : f32
    %12 = vector.broadcast %cst_8 : f32 to vector<2x32xf32>
    %13 = arith.addf %12, %11 : vector<2x32xf32>
    %14 = arith.divf %12, %13 : vector<2x32xf32>
    %15 = vector.extract_strided_slice %8 {offsets = [0, 32], sizes = [2, 32], strides = [1, 1]} : vector<2x128xf32> to vector<2x32xf32>
    %16 = arith.negf %15 : vector<2x32xf32>
    %17 = math.exp %16 : vector<2x32xf32>
    %cst_9 = arith.constant 1.000000e+00 : f32
    %18 = vector.broadcast %cst_9 : f32 to vector<2x32xf32>
    %19 = arith.addf %18, %17 : vector<2x32xf32>
    %20 = arith.divf %18, %19 : vector<2x32xf32>
    %21 = vector.extract_strided_slice %8 {offsets = [0, 64], sizes = [2, 32], strides = [1, 1]} : vector<2x128xf32> to vector<2x32xf32>
    %22 = math.tanh %21 : vector<2x32xf32>
    %23 = vector.extract_strided_slice %8 {offsets = [0, 96], sizes = [2, 32], strides = [1, 1]} : vector<2x128xf32> to vector<2x32xf32>
    %24 = arith.negf %23 : vector<2x32xf32>
    %25 = math.exp %24 : vector<2x32xf32>
    %cst_10 = arith.constant 1.000000e+00 : f32
    %26 = vector.broadcast %cst_10 : f32 to vector<2x32xf32>
    %27 = arith.addf %26, %25 : vector<2x32xf32>
    %28 = arith.divf %26, %27 : vector<2x32xf32>
    %29 = arith.mulf %20, %3 : vector<2x32xf32>
    %30 = arith.mulf %14, %22 : vector<2x32xf32>
    %31 = arith.addf %29, %30 : vector<2x32xf32>
    %32 = math.tanh %31 : vector<2x32xf32>
    %33 = arith.mulf %28, %32 : vector<2x32xf32>
    %34 = tpu.concatenate %33, %3 in 1 : vector<2x32xf32>, vector<2x32xf32> -> vector<2x64xf32>
    %cst_11 = arith.constant dense<0.000000e+00> : vector<2x128xf32>
    %35 = tpu.matmul %34, %1, %cst_11 {dimension_numbers = #tpu.dot_dimension_numbers<[1], [0], [0], [1], [0, 0, 1, 1], [], []>} : vector<2x64xf32>, vector<64x128xf32>, vector<2x128xf32> -> vector<2x128xf32>
    %36 = vector.broadcast %2 : vector<1x128xf32> to vector<2x128xf32>
    %37 = arith.addf %35, %36 : vector<2x128xf32>
    %38 = vector.extract_strided_slice %37 {offsets = [0, 0], sizes = [2, 32], strides = [1, 1]} : vector<2x128xf32> to vector<2x32xf32>
    %39 = arith.negf %38 : vector<2x32xf32>
    %40 = math.exp %39 : vector<2x32xf32>
    %cst_12 = arith.constant 1.000000e+00 : f32
    %41 = vector.broadcast %cst_12 : f32 to vector<2x32xf32>
    %42 = arith.addf %41, %40 : vector<2x32xf32>
    %43 = arith.divf %41, %42 : vector<2x32xf32>
    %44 = vector.extract_strided_slice %37 {offsets = [0, 32], sizes = [2, 32], strides = [1, 1]} : vector<2x128xf32> to vector<2x32xf32>
    %45 = arith.negf %44 : vector<2x32xf32>
    %46 = math.exp %45 : vector<2x32xf32>
    %cst_13 = arith.constant 1.000000e+00 : f32
    %47 = vector.broadcast %cst_13 : f32 to vector<2x32xf32>
    %48 = arith.addf %47, %46 : vector<2x32xf32>
    %49 = arith.divf %47, %48 : vector<2x32xf32>
    %50 = vector.extract_strided_slice %37 {offsets = [0, 64], sizes = [2, 32], strides = [1, 1]} : vector<2x128xf32> to vector<2x32xf32>
    %51 = math.tanh %50 : vector<2x32xf32>
    %52 = vector.extract_strided_slice %37 {offsets = [0, 96], sizes = [2, 32], strides = [1, 1]} : vector<2x128xf32> to vector<2x32xf32>
    %53 = arith.negf %52 : vector<2x32xf32>
    %54 = math.exp %53 : vector<2x32xf32>
    %cst_14 = arith.constant 1.000000e+00 : f32
    %55 = vector.broadcast %cst_14 : f32 to vector<2x32xf32>
    %56 = arith.addf %55, %54 : vector<2x32xf32>
    %57 = arith.divf %55, %56 : vector<2x32xf32>
    %58 = arith.mulf %49, %3 : vector<2x32xf32>
    %59 = arith.mulf %43, %51 : vector<2x32xf32>
    %60 = arith.addf %58, %59 : vector<2x32xf32>
    %61 = math.tanh %60 : vector<2x32xf32>
    %62 = arith.mulf %57, %61 : vector<2x32xf32>
    %c1_i32 = arith.constant 1 : i32
    %63 = arith.index_cast %c1_i32 : i32 to index
    %c0_15 = arith.constant 0 : index
    %c0_16 = arith.constant 0 : index
    %64 = vector.load %arg1[%63, %c0_15, %c0_16] : memref<28x2x128xf32, #tpu.memory_space<vmem>>, vector<1x2x128xf32>
    %65 = vector.shape_cast %64 : vector<1x2x128xf32> to vector<2x128xf32>
    %cst_17 = arith.constant dense<0.000000e+00> : vector<2x128xf32>
    %66 = tpu.matmul %33, %0, %cst_17 {dimension_numbers = #tpu.dot_dimension_numbers<[1], [0], [0], [1], [0, 0, 1, 1], [], []>} : vector<2x32xf32>, vector<32x128xf32>, vector<2x128xf32> -> vector<2x128xf32>
    %67 = arith.addf %65, %66 : vector<2x128xf32>
    %68 = vector.extract_strided_slice %67 {offsets = [0, 0], sizes = [2, 32], strides = [1, 1]} : vector<2x128xf32> to vector<2x32xf32>
    %69 = arith.negf %68 : vector<2x32xf32>
    %70 = math.exp %69 : vector<2x32xf32>
    %cst_18 = arith.constant 1.000000e+00 : f32
    %71 = vector.broadcast %cst_18 : f32 to vector<2x32xf32>
    %72 = arith.addf %71, %70 : vector<2x32xf32>
    %73 = arith.divf %71, %72 : vector<2x32xf32>
    %74 = vector.extract_strided_slice %67 {offsets = [0, 32], sizes = [2, 32], strides = [1, 1]} : vector<2x128xf32> to vector<2x32xf32>
    %75 = arith.negf %74 : vector<2x32xf32>
    %76 = math.exp %75 : vector<2x32xf32>
    %cst_19 = arith.constant 1.000000e+00 : f32
    %77 = vector.broadcast %cst_19 : f32 to vector<2x32xf32>
    %78 = arith.addf %77, %76 : vector<2x32xf32>
    %79 = arith.divf %77, %78 : vector<2x32xf32>
    %80 = vector.extract_strided_slice %67 {offsets = [0, 64], sizes = [2, 32], strides = [1, 1]} : vector<2x128xf32> to vector<2x32xf32>
    %81 = math.tanh %80 : vector<2x32xf32>
    %82 = vector.extract_strided_slice %67 {offsets = [0, 96], sizes = [2, 32], strides = [1, 1]} : vector<2x128xf32> to vector<2x32xf32>
    %83 = arith.negf %82 : vector<2x32xf32>
    %84 = math.exp %83 : vector<2x32xf32>
    %cst_20 = arith.constant 1.000000e+00 : f32
    %85 = vector.broadcast %cst_20 : f32 to vector<2x32xf32>
    %86 = arith.addf %85, %84 : vector<2x32xf32>
    %87 = arith.divf %85, %86 : vector<2x32xf32>
    %88 = arith.mulf %79, %31 : vector<2x32xf32>
    %89 = arith.mulf %73, %81 : vector<2x32xf32>
    %90 = arith.addf %88, %89 : vector<2x32xf32>
    %91 = math.tanh %90 : vector<2x32xf32>
    %92 = arith.mulf %87, %91 : vector<2x32xf32>
    %93 = tpu.concatenate %92, %62 in 1 : vector<2x32xf32>, vector<2x32xf32> -> vector<2x64xf32>
    %cst_21 = arith.constant dense<0.000000e+00> : vector<2x128xf32>
    %94 = tpu.matmul %93, %1, %cst_21 {dimension_numbers = #tpu.dot_dimension_numbers<[1], [0], [0], [1], [0, 0, 1, 1], [], []>} : vector<2x64xf32>, vector<64x128xf32>, vector<2x128xf32> -> vector<2x128xf32>
    %95 = vector.broadcast %2 : vector<1x128xf32> to vector<2x128xf32>
    %96 = arith.addf %94, %95 : vector<2x128xf32>
    %97 = vector.extract_strided_slice %96 {offsets = [0, 0], sizes = [2, 32], strides = [1, 1]} : vector<2x128xf32> to vector<2x32xf32>
    %98 = arith.negf %97 : vector<2x32xf32>
    %99 = math.exp %98 : vector<2x32xf32>
    %cst_22 = arith.constant 1.000000e+00 : f32
    %100 = vector.broadcast %cst_22 : f32 to vector<2x32xf32>
    %101 = arith.addf %100, %99 : vector<2x32xf32>
    %102 = arith.divf %100, %101 : vector<2x32xf32>
    %103 = vector.extract_strided_slice %96 {offsets = [0, 32], sizes = [2, 32], strides = [1, 1]} : vector<2x128xf32> to vector<2x32xf32>
    %104 = arith.negf %103 : vector<2x32xf32>
    %105 = math.exp %104 : vector<2x32xf32>
    %cst_23 = arith.constant 1.000000e+00 : f32
    %106 = vector.broadcast %cst_23 : f32 to vector<2x32xf32>
    %107 = arith.addf %106, %105 : vector<2x32xf32>
    %108 = arith.divf %106, %107 : vector<2x32xf32>
    %109 = vector.extract_strided_slice %96 {offsets = [0, 64], sizes = [2, 32], strides = [1, 1]} : vector<2x128xf32> to vector<2x32xf32>
    %110 = math.tanh %109 : vector<2x32xf32>
    %111 = vector.extract_strided_slice %96 {offsets = [0, 96], sizes = [2, 32], strides = [1, 1]} : vector<2x128xf32> to vector<2x32xf32>
    %112 = arith.negf %111 : vector<2x32xf32>
    %113 = math.exp %112 : vector<2x32xf32>
    %cst_24 = arith.constant 1.000000e+00 : f32
    %114 = vector.broadcast %cst_24 : f32 to vector<2x32xf32>
    %115 = arith.addf %114, %113 : vector<2x32xf32>
    %116 = arith.divf %114, %115 : vector<2x32xf32>
    %117 = arith.mulf %108, %60 : vector<2x32xf32>
    %118 = arith.mulf %102, %110 : vector<2x32xf32>
    %119 = arith.addf %117, %118 : vector<2x32xf32>
    %120 = math.tanh %119 : vector<2x32xf32>
    %121 = arith.mulf %116, %120 : vector<2x32xf32>
    %c2_i32 = arith.constant 2 : i32
    %122 = arith.index_cast %c2_i32 : i32 to index
    %c0_25 = arith.constant 0 : index
    %c0_26 = arith.constant 0 : index
    %123 = vector.load %arg1[%122, %c0_25, %c0_26] : memref<28x2x128xf32, #tpu.memory_space<vmem>>, vector<1x2x128xf32>
    %124 = vector.shape_cast %123 : vector<1x2x128xf32> to vector<2x128xf32>
    %cst_27 = arith.constant dense<0.000000e+00> : vector<2x128xf32>
    %125 = tpu.matmul %92, %0, %cst_27 {dimension_numbers = #tpu.dot_dimension_numbers<[1], [0], [0], [1], [0, 0, 1, 1], [], []>} : vector<2x32xf32>, vector<32x128xf32>, vector<2x128xf32> -> vector<2x128xf32>
    %126 = arith.addf %124, %125 : vector<2x128xf32>
    %127 = vector.extract_strided_slice %126 {offsets = [0, 0], sizes = [2, 32], strides = [1, 1]} : vector<2x128xf32> to vector<2x32xf32>
    %128 = arith.negf %127 : vector<2x32xf32>
    %129 = math.exp %128 : vector<2x32xf32>
    %cst_28 = arith.constant 1.000000e+00 : f32
    %130 = vector.broadcast %cst_28 : f32 to vector<2x32xf32>
    %131 = arith.addf %130, %129 : vector<2x32xf32>
    %132 = arith.divf %130, %131 : vector<2x32xf32>
    %133 = vector.extract_strided_slice %126 {offsets = [0, 32], sizes = [2, 32], strides = [1, 1]} : vector<2x128xf32> to vector<2x32xf32>
    %134 = arith.negf %133 : vector<2x32xf32>
    %135 = math.exp %134 : vector<2x32xf32>
    %cst_29 = arith.constant 1.000000e+00 : f32
    %136 = vector.broadcast %cst_29 : f32 to vector<2x32xf32>
    %137 = arith.addf %136, %135 : vector<2x32xf32>
    %138 = arith.divf %136, %137 : vector<2x32xf32>
    %139 = vector.extract_strided_slice %126 {offsets = [0, 64], sizes = [2, 32], strides = [1, 1]} : vector<2x128xf32> to vector<2x32xf32>
    %140 = math.tanh %139 : vector<2x32xf32>
    %141 = vector.extract_strided_slice %126 {offsets = [0, 96], sizes = [2, 32], strides = [1, 1]} : vector<2x128xf32> to vector<2x32xf32>
    %142 = arith.negf %141 : vector<2x32xf32>
    %143 = math.exp %142 : vector<2x32xf32>
    %cst_30 = arith.constant 1.000000e+00 : f32
    %144 = vector.broadcast %cst_30 : f32 to vector<2x32xf32>
    %145 = arith.addf %144, %143 : vector<2x32xf32>
    %146 = arith.divf %144, %145 : vector<2x32xf32>
    %147 = arith.mulf %138, %90 : vector<2x32xf32>
    %148 = arith.mulf %132, %140 : vector<2x32xf32>
    %149 = arith.addf %147, %148 : vector<2x32xf32>
    %150 = math.tanh %149 : vector<2x32xf32>
    %151 = arith.mulf %146, %150 : vector<2x32xf32>
    %152 = tpu.concatenate %151, %121 in 1 : vector<2x32xf32>, vector<2x32xf32> -> vector<2x64xf32>
    %cst_31 = arith.constant dense<0.000000e+00> : vector<2x128xf32>
    %153 = tpu.matmul %152, %1, %cst_31 {dimension_numbers = #tpu.dot_dimension_numbers<[1], [0], [0], [1], [0, 0, 1, 1], [], []>} : vector<2x64xf32>, vector<64x128xf32>, vector<2x128xf32> -> vector<2x128xf32>
    %154 = vector.broadcast %2 : vector<1x128xf32> to vector<2x128xf32>
    %155 = arith.addf %153, %154 : vector<2x128xf32>
    %156 = vector.extract_strided_slice %155 {offsets = [0, 0], sizes = [2, 32], strides = [1, 1]} : vector<2x128xf32> to vector<2x32xf32>
    %157 = arith.negf %156 : vector<2x32xf32>
    %158 = math.exp %157 : vector<2x32xf32>
    %cst_32 = arith.constant 1.000000e+00 : f32
    %159 = vector.broadcast %cst_32 : f32 to vector<2x32xf32>
    %160 = arith.addf %159, %158 : vector<2x32xf32>
    %161 = arith.divf %159, %160 : vector<2x32xf32>
    %162 = vector.extract_strided_slice %155 {offsets = [0, 32], sizes = [2, 32], strides = [1, 1]} : vector<2x128xf32> to vector<2x32xf32>
    %163 = arith.negf %162 : vector<2x32xf32>
    %164 = math.exp %163 : vector<2x32xf32>
    %cst_33 = arith.constant 1.000000e+00 : f32
    %165 = vector.broadcast %cst_33 : f32 to vector<2x32xf32>
    %166 = arith.addf %165, %164 : vector<2x32xf32>
    %167 = arith.divf %165, %166 : vector<2x32xf32>
    %168 = vector.extract_strided_slice %155 {offsets = [0, 64], sizes = [2, 32], strides = [1, 1]} : vector<2x128xf32> to vector<2x32xf32>
    %169 = math.tanh %168 : vector<2x32xf32>
    %170 = vector.extract_strided_slice %155 {offsets = [0, 96], sizes = [2, 32], strides = [1, 1]} : vector<2x128xf32> to vector<2x32xf32>
    %171 = arith.negf %170 : vector<2x32xf32>
    %172 = math.exp %171 : vector<2x32xf32>
    %cst_34 = arith.constant 1.000000e+00 : f32
    %173 = vector.broadcast %cst_34 : f32 to vector<2x32xf32>
    %174 = arith.addf %173, %172 : vector<2x32xf32>
    %175 = arith.divf %173, %174 : vector<2x32xf32>
    %176 = arith.mulf %167, %119 : vector<2x32xf32>
    %177 = arith.mulf %161, %169 : vector<2x32xf32>
    %178 = arith.addf %176, %177 : vector<2x32xf32>
    %179 = math.tanh %178 : vector<2x32xf32>
    %180 = arith.mulf %175, %179 : vector<2x32xf32>
    %c3_i32 = arith.constant 3 : i32
    %181 = arith.index_cast %c3_i32 : i32 to index
    %c0_35 = arith.constant 0 : index
    %c0_36 = arith.constant 0 : index
    %182 = vector.load %arg1[%181, %c0_35, %c0_36] : memref<28x2x128xf32, #tpu.memory_space<vmem>>, vector<1x2x128xf32>
    %183 = vector.shape_cast %182 : vector<1x2x128xf32> to vector<2x128xf32>
    %cst_37 = arith.constant dense<0.000000e+00> : vector<2x128xf32>
    %184 = tpu.matmul %151, %0, %cst_37 {dimension_numbers = #tpu.dot_dimension_numbers<[1], [0], [0], [1], [0, 0, 1, 1], [], []>} : vector<2x32xf32>, vector<32x128xf32>, vector<2x128xf32> -> vector<2x128xf32>
    %185 = arith.addf %183, %184 : vector<2x128xf32>
    %186 = vector.extract_strided_slice %185 {offsets = [0, 0], sizes = [2, 32], strides = [1, 1]} : vector<2x128xf32> to vector<2x32xf32>
    %187 = arith.negf %186 : vector<2x32xf32>
    %188 = math.exp %187 : vector<2x32xf32>
    %cst_38 = arith.constant 1.000000e+00 : f32
    %189 = vector.broadcast %cst_38 : f32 to vector<2x32xf32>
    %190 = arith.addf %189, %188 : vector<2x32xf32>
    %191 = arith.divf %189, %190 : vector<2x32xf32>
    %192 = vector.extract_strided_slice %185 {offsets = [0, 32], sizes = [2, 32], strides = [1, 1]} : vector<2x128xf32> to vector<2x32xf32>
    %193 = arith.negf %192 : vector<2x32xf32>
    %194 = math.exp %193 : vector<2x32xf32>
    %cst_39 = arith.constant 1.000000e+00 : f32
    %195 = vector.broadcast %cst_39 : f32 to vector<2x32xf32>
    %196 = arith.addf %195, %194 : vector<2x32xf32>
    %197 = arith.divf %195, %196 : vector<2x32xf32>
    %198 = vector.extract_strided_slice %185 {offsets = [0, 64], sizes = [2, 32], strides = [1, 1]} : vector<2x128xf32> to vector<2x32xf32>
    %199 = math.tanh %198 : vector<2x32xf32>
    %200 = vector.extract_strided_slice %185 {offsets = [0, 96], sizes = [2, 32], strides = [1, 1]} : vector<2x128xf32> to vector<2x32xf32>
    %201 = arith.negf %200 : vector<2x32xf32>
    %202 = math.exp %201 : vector<2x32xf32>
    %cst_40 = arith.constant 1.000000e+00 : f32
    %203 = vector.broadcast %cst_40 : f32 to vector<2x32xf32>
    %204 = arith.addf %203, %202 : vector<2x32xf32>
    %205 = arith.divf %203, %204 : vector<2x32xf32>
    %206 = arith.mulf %197, %149 : vector<2x32xf32>
    %207 = arith.mulf %191, %199 : vector<2x32xf32>
    %208 = arith.addf %206, %207 : vector<2x32xf32>
    %209 = math.tanh %208 : vector<2x32xf32>
    %210 = arith.mulf %205, %209 : vector<2x32xf32>
    %211 = tpu.concatenate %210, %180 in 1 : vector<2x32xf32>, vector<2x32xf32> -> vector<2x64xf32>
    %cst_41 = arith.constant dense<0.000000e+00> : vector<2x128xf32>
    %212 = tpu.matmul %211, %1, %cst_41 {dimension_numbers = #tpu.dot_dimension_numbers<[1], [0], [0], [1], [0, 0, 1, 1], [], []>} : vector<2x64xf32>, vector<64x128xf32>, vector<2x128xf32> -> vector<2x128xf32>
    %213 = vector.broadcast %2 : vector<1x128xf32> to vector<2x128xf32>
    %214 = arith.addf %212, %213 : vector<2x128xf32>
    %215 = vector.extract_strided_slice %214 {offsets = [0, 0], sizes = [2, 32], strides = [1, 1]} : vector<2x128xf32> to vector<2x32xf32>
    %216 = arith.negf %215 : vector<2x32xf32>
    %217 = math.exp %216 : vector<2x32xf32>
    %cst_42 = arith.constant 1.000000e+00 : f32
    %218 = vector.broadcast %cst_42 : f32 to vector<2x32xf32>
    %219 = arith.addf %218, %217 : vector<2x32xf32>
    %220 = arith.divf %218, %219 : vector<2x32xf32>
    %221 = vector.extract_strided_slice %214 {offsets = [0, 32], sizes = [2, 32], strides = [1, 1]} : vector<2x128xf32> to vector<2x32xf32>
    %222 = arith.negf %221 : vector<2x32xf32>
    %223 = math.exp %222 : vector<2x32xf32>
    %cst_43 = arith.constant 1.000000e+00 : f32
    %224 = vector.broadcast %cst_43 : f32 to vector<2x32xf32>
    %225 = arith.addf %224, %223 : vector<2x32xf32>
    %226 = arith.divf %224, %225 : vector<2x32xf32>
    %227 = vector.extract_strided_slice %214 {offsets = [0, 64], sizes = [2, 32], strides = [1, 1]} : vector<2x128xf32> to vector<2x32xf32>
    %228 = math.tanh %227 : vector<2x32xf32>
    %229 = vector.extract_strided_slice %214 {offsets = [0, 96], sizes = [2, 32], strides = [1, 1]} : vector<2x128xf32> to vector<2x32xf32>
    %230 = arith.negf %229 : vector<2x32xf32>
    %231 = math.exp %230 : vector<2x32xf32>
    %cst_44 = arith.constant 1.000000e+00 : f32
    %232 = vector.broadcast %cst_44 : f32 to vector<2x32xf32>
    %233 = arith.addf %232, %231 : vector<2x32xf32>
    %234 = arith.divf %232, %233 : vector<2x32xf32>
    %235 = arith.mulf %226, %178 : vector<2x32xf32>
    %236 = arith.mulf %220, %228 : vector<2x32xf32>
    %237 = arith.addf %235, %236 : vector<2x32xf32>
    %238 = math.tanh %237 : vector<2x32xf32>
    %239 = arith.mulf %234, %238 : vector<2x32xf32>
    %c4_i32 = arith.constant 4 : i32
    %240 = arith.index_cast %c4_i32 : i32 to index
    %c0_45 = arith.constant 0 : index
    %c0_46 = arith.constant 0 : index
    %241 = vector.load %arg1[%240, %c0_45, %c0_46] : memref<28x2x128xf32, #tpu.memory_space<vmem>>, vector<1x2x128xf32>
    %242 = vector.shape_cast %241 : vector<1x2x128xf32> to vector<2x128xf32>
    %cst_47 = arith.constant dense<0.000000e+00> : vector<2x128xf32>
    %243 = tpu.matmul %210, %0, %cst_47 {dimension_numbers = #tpu.dot_dimension_numbers<[1], [0], [0], [1], [0, 0, 1, 1], [], []>} : vector<2x32xf32>, vector<32x128xf32>, vector<2x128xf32> -> vector<2x128xf32>
    %244 = arith.addf %242, %243 : vector<2x128xf32>
    %245 = vector.extract_strided_slice %244 {offsets = [0, 0], sizes = [2, 32], strides = [1, 1]} : vector<2x128xf32> to vector<2x32xf32>
    %246 = arith.negf %245 : vector<2x32xf32>
    %247 = math.exp %246 : vector<2x32xf32>
    %cst_48 = arith.constant 1.000000e+00 : f32
    %248 = vector.broadcast %cst_48 : f32 to vector<2x32xf32>
    %249 = arith.addf %248, %247 : vector<2x32xf32>
    %250 = arith.divf %248, %249 : vector<2x32xf32>
    %251 = vector.extract_strided_slice %244 {offsets = [0, 32], sizes = [2, 32], strides = [1, 1]} : vector<2x128xf32> to vector<2x32xf32>
    %252 = arith.negf %251 : vector<2x32xf32>
    %253 = math.exp %252 : vector<2x32xf32>
    %cst_49 = arith.constant 1.000000e+00 : f32
    %254 = vector.broadcast %cst_49 : f32 to vector<2x32xf32>
    %255 = arith.addf %254, %253 : vector<2x32xf32>
    %256 = arith.divf %254, %255 : vector<2x32xf32>
    %257 = vector.extract_strided_slice %244 {offsets = [0, 64], sizes = [2, 32], strides = [1, 1]} : vector<2x128xf32> to vector<2x32xf32>
    %258 = math.tanh %257 : vector<2x32xf32>
    %259 = vector.extract_strided_slice %244 {offsets = [0, 96], sizes = [2, 32], strides = [1, 1]} : vector<2x128xf32> to vector<2x32xf32>
    %260 = arith.negf %259 : vector<2x32xf32>
    %261 = math.exp %260 : vector<2x32xf32>
    %cst_50 = arith.constant 1.000000e+00 : f32
    %262 = vector.broadcast %cst_50 : f32 to vector<2x32xf32>
    %263 = arith.addf %262, %261 : vector<2x32xf32>
    %264 = arith.divf %262, %263 : vector<2x32xf32>
    %265 = arith.mulf %256, %208 : vector<2x32xf32>
    %266 = arith.mulf %250, %258 : vector<2x32xf32>
    %267 = arith.addf %265, %266 : vector<2x32xf32>
    %268 = math.tanh %267 : vector<2x32xf32>
    %269 = arith.mulf %264, %268 : vector<2x32xf32>
    %270 = tpu.concatenate %269, %239 in 1 : vector<2x32xf32>, vector<2x32xf32> -> vector<2x64xf32>
    %cst_51 = arith.constant dense<0.000000e+00> : vector<2x128xf32>
    %271 = tpu.matmul %270, %1, %cst_51 {dimension_numbers = #tpu.dot_dimension_numbers<[1], [0], [0], [1], [0, 0, 1, 1], [], []>} : vector<2x64xf32>, vector<64x128xf32>, vector<2x128xf32> -> vector<2x128xf32>
    %272 = vector.broadcast %2 : vector<1x128xf32> to vector<2x128xf32>
    %273 = arith.addf %271, %272 : vector<2x128xf32>
    %274 = vector.extract_strided_slice %273 {offsets = [0, 0], sizes = [2, 32], strides = [1, 1]} : vector<2x128xf32> to vector<2x32xf32>
    %275 = arith.negf %274 : vector<2x32xf32>
    %276 = math.exp %275 : vector<2x32xf32>
    %cst_52 = arith.constant 1.000000e+00 : f32
    %277 = vector.broadcast %cst_52 : f32 to vector<2x32xf32>
    %278 = arith.addf %277, %276 : vector<2x32xf32>
    %279 = arith.divf %277, %278 : vector<2x32xf32>
    %280 = vector.extract_strided_slice %273 {offsets = [0, 32], sizes = [2, 32], strides = [1, 1]} : vector<2x128xf32> to vector<2x32xf32>
    %281 = arith.negf %280 : vector<2x32xf32>
    %282 = math.exp %281 : vector<2x32xf32>
    %cst_53 = arith.constant 1.000000e+00 : f32
    %283 = vector.broadcast %cst_53 : f32 to vector<2x32xf32>
    %284 = arith.addf %283, %282 : vector<2x32xf32>
    %285 = arith.divf %283, %284 : vector<2x32xf32>
    %286 = vector.extract_strided_slice %273 {offsets = [0, 64], sizes = [2, 32], strides = [1, 1]} : vector<2x128xf32> to vector<2x32xf32>
    %287 = math.tanh %286 : vector<2x32xf32>
    %288 = vector.extract_strided_slice %273 {offsets = [0, 96], sizes = [2, 32], strides = [1, 1]} : vector<2x128xf32> to vector<2x32xf32>
    %289 = arith.negf %288 : vector<2x32xf32>
    %290 = math.exp %289 : vector<2x32xf32>
    %cst_54 = arith.constant 1.000000e+00 : f32
    %291 = vector.broadcast %cst_54 : f32 to vector<2x32xf32>
    %292 = arith.addf %291, %290 : vector<2x32xf32>
    %293 = arith.divf %291, %292 : vector<2x32xf32>
    %294 = arith.mulf %285, %237 : vector<2x32xf32>
    %295 = arith.mulf %279, %287 : vector<2x32xf32>
    %296 = arith.addf %294, %295 : vector<2x32xf32>
    %297 = math.tanh %296 : vector<2x32xf32>
    %298 = arith.mulf %293, %297 : vector<2x32xf32>
    %c5_i32 = arith.constant 5 : i32
    %299 = arith.index_cast %c5_i32 : i32 to index
    %c0_55 = arith.constant 0 : index
    %c0_56 = arith.constant 0 : index
    %300 = vector.load %arg1[%299, %c0_55, %c0_56] : memref<28x2x128xf32, #tpu.memory_space<vmem>>, vector<1x2x128xf32>
    %301 = vector.shape_cast %300 : vector<1x2x128xf32> to vector<2x128xf32>
    %cst_57 = arith.constant dense<0.000000e+00> : vector<2x128xf32>
    %302 = tpu.matmul %269, %0, %cst_57 {dimension_numbers = #tpu.dot_dimension_numbers<[1], [0], [0], [1], [0, 0, 1, 1], [], []>} : vector<2x32xf32>, vector<32x128xf32>, vector<2x128xf32> -> vector<2x128xf32>
    %303 = arith.addf %301, %302 : vector<2x128xf32>
    %304 = vector.extract_strided_slice %303 {offsets = [0, 0], sizes = [2, 32], strides = [1, 1]} : vector<2x128xf32> to vector<2x32xf32>
    %305 = arith.negf %304 : vector<2x32xf32>
    %306 = math.exp %305 : vector<2x32xf32>
    %cst_58 = arith.constant 1.000000e+00 : f32
    %307 = vector.broadcast %cst_58 : f32 to vector<2x32xf32>
    %308 = arith.addf %307, %306 : vector<2x32xf32>
    %309 = arith.divf %307, %308 : vector<2x32xf32>
    %310 = vector.extract_strided_slice %303 {offsets = [0, 32], sizes = [2, 32], strides = [1, 1]} : vector<2x128xf32> to vector<2x32xf32>
    %311 = arith.negf %310 : vector<2x32xf32>
    %312 = math.exp %311 : vector<2x32xf32>
    %cst_59 = arith.constant 1.000000e+00 : f32
    %313 = vector.broadcast %cst_59 : f32 to vector<2x32xf32>
    %314 = arith.addf %313, %312 : vector<2x32xf32>
    %315 = arith.divf %313, %314 : vector<2x32xf32>
    %316 = vector.extract_strided_slice %303 {offsets = [0, 64], sizes = [2, 32], strides = [1, 1]} : vector<2x128xf32> to vector<2x32xf32>
    %317 = math.tanh %316 : vector<2x32xf32>
    %318 = vector.extract_strided_slice %303 {offsets = [0, 96], sizes = [2, 32], strides = [1, 1]} : vector<2x128xf32> to vector<2x32xf32>
    %319 = arith.negf %318 : vector<2x32xf32>
    %320 = math.exp %319 : vector<2x32xf32>
    %cst_60 = arith.constant 1.000000e+00 : f32
    %321 = vector.broadcast %cst_60 : f32 to vector<2x32xf32>
    %322 = arith.addf %321, %320 : vector<2x32xf32>
    %323 = arith.divf %321, %322 : vector<2x32xf32>
    %324 = arith.mulf %315, %267 : vector<2x32xf32>
    %325 = arith.mulf %309, %317 : vector<2x32xf32>
    %326 = arith.addf %324, %325 : vector<2x32xf32>
    %327 = math.tanh %326 : vector<2x32xf32>
    %328 = arith.mulf %323, %327 : vector<2x32xf32>
    %329 = tpu.concatenate %328, %298 in 1 : vector<2x32xf32>, vector<2x32xf32> -> vector<2x64xf32>
    %cst_61 = arith.constant dense<0.000000e+00> : vector<2x128xf32>
    %330 = tpu.matmul %329, %1, %cst_61 {dimension_numbers = #tpu.dot_dimension_numbers<[1], [0], [0], [1], [0, 0, 1, 1], [], []>} : vector<2x64xf32>, vector<64x128xf32>, vector<2x128xf32> -> vector<2x128xf32>
    %331 = vector.broadcast %2 : vector<1x128xf32> to vector<2x128xf32>
    %332 = arith.addf %330, %331 : vector<2x128xf32>
    %333 = vector.extract_strided_slice %332 {offsets = [0, 0], sizes = [2, 32], strides = [1, 1]} : vector<2x128xf32> to vector<2x32xf32>
    %334 = arith.negf %333 : vector<2x32xf32>
    %335 = math.exp %334 : vector<2x32xf32>
    %cst_62 = arith.constant 1.000000e+00 : f32
    %336 = vector.broadcast %cst_62 : f32 to vector<2x32xf32>
    %337 = arith.addf %336, %335 : vector<2x32xf32>
    %338 = arith.divf %336, %337 : vector<2x32xf32>
    %339 = vector.extract_strided_slice %332 {offsets = [0, 32], sizes = [2, 32], strides = [1, 1]} : vector<2x128xf32> to vector<2x32xf32>
    %340 = arith.negf %339 : vector<2x32xf32>
    %341 = math.exp %340 : vector<2x32xf32>
    %cst_63 = arith.constant 1.000000e+00 : f32
    %342 = vector.broadcast %cst_63 : f32 to vector<2x32xf32>
    %343 = arith.addf %342, %341 : vector<2x32xf32>
    %344 = arith.divf %342, %343 : vector<2x32xf32>
    %345 = vector.extract_strided_slice %332 {offsets = [0, 64], sizes = [2, 32], strides = [1, 1]} : vector<2x128xf32> to vector<2x32xf32>
    %346 = math.tanh %345 : vector<2x32xf32>
    %347 = vector.extract_strided_slice %332 {offsets = [0, 96], sizes = [2, 32], strides = [1, 1]} : vector<2x128xf32> to vector<2x32xf32>
    %348 = arith.negf %347 : vector<2x32xf32>
    %349 = math.exp %348 : vector<2x32xf32>
    %cst_64 = arith.constant 1.000000e+00 : f32
    %350 = vector.broadcast %cst_64 : f32 to vector<2x32xf32>
    %351 = arith.addf %350, %349 : vector<2x32xf32>
    %352 = arith.divf %350, %351 : vector<2x32xf32>
    %353 = arith.mulf %344, %296 : vector<2x32xf32>
    %354 = arith.mulf %338, %346 : vector<2x32xf32>
    %355 = arith.addf %353, %354 : vector<2x32xf32>
    %356 = math.tanh %355 : vector<2x32xf32>
    %357 = arith.mulf %352, %356 : vector<2x32xf32>
    %c6_i32 = arith.constant 6 : i32
    %358 = arith.index_cast %c6_i32 : i32 to index
    %c0_65 = arith.constant 0 : index
    %c0_66 = arith.constant 0 : index
    %359 = vector.load %arg1[%358, %c0_65, %c0_66] : memref<28x2x128xf32, #tpu.memory_space<vmem>>, vector<1x2x128xf32>
    %360 = vector.shape_cast %359 : vector<1x2x128xf32> to vector<2x128xf32>
    %cst_67 = arith.constant dense<0.000000e+00> : vector<2x128xf32>
    %361 = tpu.matmul %328, %0, %cst_67 {dimension_numbers = #tpu.dot_dimension_numbers<[1], [0], [0], [1], [0, 0, 1, 1], [], []>} : vector<2x32xf32>, vector<32x128xf32>, vector<2x128xf32> -> vector<2x128xf32>
    %362 = arith.addf %360, %361 : vector<2x128xf32>
    %363 = vector.extract_strided_slice %362 {offsets = [0, 0], sizes = [2, 32], strides = [1, 1]} : vector<2x128xf32> to vector<2x32xf32>
    %364 = arith.negf %363 : vector<2x32xf32>
    %365 = math.exp %364 : vector<2x32xf32>
    %cst_68 = arith.constant 1.000000e+00 : f32
    %366 = vector.broadcast %cst_68 : f32 to vector<2x32xf32>
    %367 = arith.addf %366, %365 : vector<2x32xf32>
    %368 = arith.divf %366, %367 : vector<2x32xf32>
    %369 = vector.extract_strided_slice %362 {offsets = [0, 32], sizes = [2, 32], strides = [1, 1]} : vector<2x128xf32> to vector<2x32xf32>
    %370 = arith.negf %369 : vector<2x32xf32>
    %371 = math.exp %370 : vector<2x32xf32>
    %cst_69 = arith.constant 1.000000e+00 : f32
    %372 = vector.broadcast %cst_69 : f32 to vector<2x32xf32>
    %373 = arith.addf %372, %371 : vector<2x32xf32>
    %374 = arith.divf %372, %373 : vector<2x32xf32>
    %375 = vector.extract_strided_slice %362 {offsets = [0, 64], sizes = [2, 32], strides = [1, 1]} : vector<2x128xf32> to vector<2x32xf32>
    %376 = math.tanh %375 : vector<2x32xf32>
    %377 = vector.extract_strided_slice %362 {offsets = [0, 96], sizes = [2, 32], strides = [1, 1]} : vector<2x128xf32> to vector<2x32xf32>
    %378 = arith.negf %377 : vector<2x32xf32>
    %379 = math.exp %378 : vector<2x32xf32>
    %cst_70 = arith.constant 1.000000e+00 : f32
    %380 = vector.broadcast %cst_70 : f32 to vector<2x32xf32>
    %381 = arith.addf %380, %379 : vector<2x32xf32>
    %382 = arith.divf %380, %381 : vector<2x32xf32>
    %383 = arith.mulf %374, %326 : vector<2x32xf32>
    %384 = arith.mulf %368, %376 : vector<2x32xf32>
    %385 = arith.addf %383, %384 : vector<2x32xf32>
    %386 = math.tanh %385 : vector<2x32xf32>
    %387 = arith.mulf %382, %386 : vector<2x32xf32>
    %388 = tpu.concatenate %387, %357 in 1 : vector<2x32xf32>, vector<2x32xf32> -> vector<2x64xf32>
    %cst_71 = arith.constant dense<0.000000e+00> : vector<2x128xf32>
    %389 = tpu.matmul %388, %1, %cst_71 {dimension_numbers = #tpu.dot_dimension_numbers<[1], [0], [0], [1], [0, 0, 1, 1], [], []>} : vector<2x64xf32>, vector<64x128xf32>, vector<2x128xf32> -> vector<2x128xf32>
    %390 = vector.broadcast %2 : vector<1x128xf32> to vector<2x128xf32>
    %391 = arith.addf %389, %390 : vector<2x128xf32>
    %392 = vector.extract_strided_slice %391 {offsets = [0, 0], sizes = [2, 32], strides = [1, 1]} : vector<2x128xf32> to vector<2x32xf32>
    %393 = arith.negf %392 : vector<2x32xf32>
    %394 = math.exp %393 : vector<2x32xf32>
    %cst_72 = arith.constant 1.000000e+00 : f32
    %395 = vector.broadcast %cst_72 : f32 to vector<2x32xf32>
    %396 = arith.addf %395, %394 : vector<2x32xf32>
    %397 = arith.divf %395, %396 : vector<2x32xf32>
    %398 = vector.extract_strided_slice %391 {offsets = [0, 32], sizes = [2, 32], strides = [1, 1]} : vector<2x128xf32> to vector<2x32xf32>
    %399 = arith.negf %398 : vector<2x32xf32>
    %400 = math.exp %399 : vector<2x32xf32>
    %cst_73 = arith.constant 1.000000e+00 : f32
    %401 = vector.broadcast %cst_73 : f32 to vector<2x32xf32>
    %402 = arith.addf %401, %400 : vector<2x32xf32>
    %403 = arith.divf %401, %402 : vector<2x32xf32>
    %404 = vector.extract_strided_slice %391 {offsets = [0, 64], sizes = [2, 32], strides = [1, 1]} : vector<2x128xf32> to vector<2x32xf32>
    %405 = math.tanh %404 : vector<2x32xf32>
    %406 = vector.extract_strided_slice %391 {offsets = [0, 96], sizes = [2, 32], strides = [1, 1]} : vector<2x128xf32> to vector<2x32xf32>
    %407 = arith.negf %406 : vector<2x32xf32>
    %408 = math.exp %407 : vector<2x32xf32>
    %cst_74 = arith.constant 1.000000e+00 : f32
    %409 = vector.broadcast %cst_74 : f32 to vector<2x32xf32>
    %410 = arith.addf %409, %408 : vector<2x32xf32>
    %411 = arith.divf %409, %410 : vector<2x32xf32>
    %412 = arith.mulf %403, %355 : vector<2x32xf32>
    %413 = arith.mulf %397, %405 : vector<2x32xf32>
    %414 = arith.addf %412, %413 : vector<2x32xf32>
    %415 = math.tanh %414 : vector<2x32xf32>
    %416 = arith.mulf %411, %415 : vector<2x32xf32>
    %c7_i32 = arith.constant 7 : i32
    %417 = arith.index_cast %c7_i32 : i32 to index
    %c0_75 = arith.constant 0 : index
    %c0_76 = arith.constant 0 : index
    %418 = vector.load %arg1[%417, %c0_75, %c0_76] : memref<28x2x128xf32, #tpu.memory_space<vmem>>, vector<1x2x128xf32>
    %419 = vector.shape_cast %418 : vector<1x2x128xf32> to vector<2x128xf32>
    %cst_77 = arith.constant dense<0.000000e+00> : vector<2x128xf32>
    %420 = tpu.matmul %387, %0, %cst_77 {dimension_numbers = #tpu.dot_dimension_numbers<[1], [0], [0], [1], [0, 0, 1, 1], [], []>} : vector<2x32xf32>, vector<32x128xf32>, vector<2x128xf32> -> vector<2x128xf32>
    %421 = arith.addf %419, %420 : vector<2x128xf32>
    %422 = vector.extract_strided_slice %421 {offsets = [0, 0], sizes = [2, 32], strides = [1, 1]} : vector<2x128xf32> to vector<2x32xf32>
    %423 = arith.negf %422 : vector<2x32xf32>
    %424 = math.exp %423 : vector<2x32xf32>
    %cst_78 = arith.constant 1.000000e+00 : f32
    %425 = vector.broadcast %cst_78 : f32 to vector<2x32xf32>
    %426 = arith.addf %425, %424 : vector<2x32xf32>
    %427 = arith.divf %425, %426 : vector<2x32xf32>
    %428 = vector.extract_strided_slice %421 {offsets = [0, 32], sizes = [2, 32], strides = [1, 1]} : vector<2x128xf32> to vector<2x32xf32>
    %429 = arith.negf %428 : vector<2x32xf32>
    %430 = math.exp %429 : vector<2x32xf32>
    %cst_79 = arith.constant 1.000000e+00 : f32
    %431 = vector.broadcast %cst_79 : f32 to vector<2x32xf32>
    %432 = arith.addf %431, %430 : vector<2x32xf32>
    %433 = arith.divf %431, %432 : vector<2x32xf32>
    %434 = vector.extract_strided_slice %421 {offsets = [0, 64], sizes = [2, 32], strides = [1, 1]} : vector<2x128xf32> to vector<2x32xf32>
    %435 = math.tanh %434 : vector<2x32xf32>
    %436 = vector.extract_strided_slice %421 {offsets = [0, 96], sizes = [2, 32], strides = [1, 1]} : vector<2x128xf32> to vector<2x32xf32>
    %437 = arith.negf %436 : vector<2x32xf32>
    %438 = math.exp %437 : vector<2x32xf32>
    %cst_80 = arith.constant 1.000000e+00 : f32
    %439 = vector.broadcast %cst_80 : f32 to vector<2x32xf32>
    %440 = arith.addf %439, %438 : vector<2x32xf32>
    %441 = arith.divf %439, %440 : vector<2x32xf32>
    %442 = arith.mulf %433, %385 : vector<2x32xf32>
    %443 = arith.mulf %427, %435 : vector<2x32xf32>
    %444 = arith.addf %442, %443 : vector<2x32xf32>
    %445 = math.tanh %444 : vector<2x32xf32>
    %446 = arith.mulf %441, %445 : vector<2x32xf32>
    %447 = tpu.concatenate %446, %416 in 1 : vector<2x32xf32>, vector<2x32xf32> -> vector<2x64xf32>
    %cst_81 = arith.constant dense<0.000000e+00> : vector<2x128xf32>
    %448 = tpu.matmul %447, %1, %cst_81 {dimension_numbers = #tpu.dot_dimension_numbers<[1], [0], [0], [1], [0, 0, 1, 1], [], []>} : vector<2x64xf32>, vector<64x128xf32>, vector<2x128xf32> -> vector<2x128xf32>
    %449 = vector.broadcast %2 : vector<1x128xf32> to vector<2x128xf32>
    %450 = arith.addf %448, %449 : vector<2x128xf32>
    %451 = vector.extract_strided_slice %450 {offsets = [0, 0], sizes = [2, 32], strides = [1, 1]} : vector<2x128xf32> to vector<2x32xf32>
    %452 = arith.negf %451 : vector<2x32xf32>
    %453 = math.exp %452 : vector<2x32xf32>
    %cst_82 = arith.constant 1.000000e+00 : f32
    %454 = vector.broadcast %cst_82 : f32 to vector<2x32xf32>
    %455 = arith.addf %454, %453 : vector<2x32xf32>
    %456 = arith.divf %454, %455 : vector<2x32xf32>
    %457 = vector.extract_strided_slice %450 {offsets = [0, 32], sizes = [2, 32], strides = [1, 1]} : vector<2x128xf32> to vector<2x32xf32>
    %458 = arith.negf %457 : vector<2x32xf32>
    %459 = math.exp %458 : vector<2x32xf32>
    %cst_83 = arith.constant 1.000000e+00 : f32
    %460 = vector.broadcast %cst_83 : f32 to vector<2x32xf32>
    %461 = arith.addf %460, %459 : vector<2x32xf32>
    %462 = arith.divf %460, %461 : vector<2x32xf32>
    %463 = vector.extract_strided_slice %450 {offsets = [0, 64], sizes = [2, 32], strides = [1, 1]} : vector<2x128xf32> to vector<2x32xf32>
    %464 = math.tanh %463 : vector<2x32xf32>
    %465 = vector.extract_strided_slice %450 {offsets = [0, 96], sizes = [2, 32], strides = [1, 1]} : vector<2x128xf32> to vector<2x32xf32>
    %466 = arith.negf %465 : vector<2x32xf32>
    %467 = math.exp %466 : vector<2x32xf32>
    %cst_84 = arith.constant 1.000000e+00 : f32
    %468 = vector.broadcast %cst_84 : f32 to vector<2x32xf32>
    %469 = arith.addf %468, %467 : vector<2x32xf32>
    %470 = arith.divf %468, %469 : vector<2x32xf32>
    %471 = arith.mulf %462, %414 : vector<2x32xf32>
    %472 = arith.mulf %456, %464 : vector<2x32xf32>
    %473 = arith.addf %471, %472 : vector<2x32xf32>
    %474 = math.tanh %473 : vector<2x32xf32>
    %475 = arith.mulf %470, %474 : vector<2x32xf32>
    %c8_i32 = arith.constant 8 : i32
    %476 = arith.index_cast %c8_i32 : i32 to index
    %c0_85 = arith.constant 0 : index
    %c0_86 = arith.constant 0 : index
    %477 = vector.load %arg1[%476, %c0_85, %c0_86] : memref<28x2x128xf32, #tpu.memory_space<vmem>>, vector<1x2x128xf32>
    %478 = vector.shape_cast %477 : vector<1x2x128xf32> to vector<2x128xf32>
    %cst_87 = arith.constant dense<0.000000e+00> : vector<2x128xf32>
    %479 = tpu.matmul %446, %0, %cst_87 {dimension_numbers = #tpu.dot_dimension_numbers<[1], [0], [0], [1], [0, 0, 1, 1], [], []>} : vector<2x32xf32>, vector<32x128xf32>, vector<2x128xf32> -> vector<2x128xf32>
    %480 = arith.addf %478, %479 : vector<2x128xf32>
    %481 = vector.extract_strided_slice %480 {offsets = [0, 0], sizes = [2, 32], strides = [1, 1]} : vector<2x128xf32> to vector<2x32xf32>
    %482 = arith.negf %481 : vector<2x32xf32>
    %483 = math.exp %482 : vector<2x32xf32>
    %cst_88 = arith.constant 1.000000e+00 : f32
    %484 = vector.broadcast %cst_88 : f32 to vector<2x32xf32>
    %485 = arith.addf %484, %483 : vector<2x32xf32>
    %486 = arith.divf %484, %485 : vector<2x32xf32>
    %487 = vector.extract_strided_slice %480 {offsets = [0, 32], sizes = [2, 32], strides = [1, 1]} : vector<2x128xf32> to vector<2x32xf32>
    %488 = arith.negf %487 : vector<2x32xf32>
    %489 = math.exp %488 : vector<2x32xf32>
    %cst_89 = arith.constant 1.000000e+00 : f32
    %490 = vector.broadcast %cst_89 : f32 to vector<2x32xf32>
    %491 = arith.addf %490, %489 : vector<2x32xf32>
    %492 = arith.divf %490, %491 : vector<2x32xf32>
    %493 = vector.extract_strided_slice %480 {offsets = [0, 64], sizes = [2, 32], strides = [1, 1]} : vector<2x128xf32> to vector<2x32xf32>
    %494 = math.tanh %493 : vector<2x32xf32>
    %495 = vector.extract_strided_slice %480 {offsets = [0, 96], sizes = [2, 32], strides = [1, 1]} : vector<2x128xf32> to vector<2x32xf32>
    %496 = arith.negf %495 : vector<2x32xf32>
    %497 = math.exp %496 : vector<2x32xf32>
    %cst_90 = arith.constant 1.000000e+00 : f32
    %498 = vector.broadcast %cst_90 : f32 to vector<2x32xf32>
    %499 = arith.addf %498, %497 : vector<2x32xf32>
    %500 = arith.divf %498, %499 : vector<2x32xf32>
    %501 = arith.mulf %492, %444 : vector<2x32xf32>
    %502 = arith.mulf %486, %494 : vector<2x32xf32>
    %503 = arith.addf %501, %502 : vector<2x32xf32>
    %504 = math.tanh %503 : vector<2x32xf32>
    %505 = arith.mulf %500, %504 : vector<2x32xf32>
    %506 = tpu.concatenate %505, %475 in 1 : vector<2x32xf32>, vector<2x32xf32> -> vector<2x64xf32>
    %cst_91 = arith.constant dense<0.000000e+00> : vector<2x128xf32>
    %507 = tpu.matmul %506, %1, %cst_91 {dimension_numbers = #tpu.dot_dimension_numbers<[1], [0], [0], [1], [0, 0, 1, 1], [], []>} : vector<2x64xf32>, vector<64x128xf32>, vector<2x128xf32> -> vector<2x128xf32>
    %508 = vector.broadcast %2 : vector<1x128xf32> to vector<2x128xf32>
    %509 = arith.addf %507, %508 : vector<2x128xf32>
    %510 = vector.extract_strided_slice %509 {offsets = [0, 0], sizes = [2, 32], strides = [1, 1]} : vector<2x128xf32> to vector<2x32xf32>
    %511 = arith.negf %510 : vector<2x32xf32>
    %512 = math.exp %511 : vector<2x32xf32>
    %cst_92 = arith.constant 1.000000e+00 : f32
    %513 = vector.broadcast %cst_92 : f32 to vector<2x32xf32>
    %514 = arith.addf %513, %512 : vector<2x32xf32>
    %515 = arith.divf %513, %514 : vector<2x32xf32>
    %516 = vector.extract_strided_slice %509 {offsets = [0, 32], sizes = [2, 32], strides = [1, 1]} : vector<2x128xf32> to vector<2x32xf32>
    %517 = arith.negf %516 : vector<2x32xf32>
    %518 = math.exp %517 : vector<2x32xf32>
    %cst_93 = arith.constant 1.000000e+00 : f32
    %519 = vector.broadcast %cst_93 : f32 to vector<2x32xf32>
    %520 = arith.addf %519, %518 : vector<2x32xf32>
    %521 = arith.divf %519, %520 : vector<2x32xf32>
    %522 = vector.extract_strided_slice %509 {offsets = [0, 64], sizes = [2, 32], strides = [1, 1]} : vector<2x128xf32> to vector<2x32xf32>
    %523 = math.tanh %522 : vector<2x32xf32>
    %524 = vector.extract_strided_slice %509 {offsets = [0, 96], sizes = [2, 32], strides = [1, 1]} : vector<2x128xf32> to vector<2x32xf32>
    %525 = arith.negf %524 : vector<2x32xf32>
    %526 = math.exp %525 : vector<2x32xf32>
    %cst_94 = arith.constant 1.000000e+00 : f32
    %527 = vector.broadcast %cst_94 : f32 to vector<2x32xf32>
    %528 = arith.addf %527, %526 : vector<2x32xf32>
    %529 = arith.divf %527, %528 : vector<2x32xf32>
    %530 = arith.mulf %521, %473 : vector<2x32xf32>
    %531 = arith.mulf %515, %523 : vector<2x32xf32>
    %532 = arith.addf %530, %531 : vector<2x32xf32>
    %533 = math.tanh %532 : vector<2x32xf32>
    %534 = arith.mulf %529, %533 : vector<2x32xf32>
    %c9_i32 = arith.constant 9 : i32
    %535 = arith.index_cast %c9_i32 : i32 to index
    %c0_95 = arith.constant 0 : index
    %c0_96 = arith.constant 0 : index
    %536 = vector.load %arg1[%535, %c0_95, %c0_96] : memref<28x2x128xf32, #tpu.memory_space<vmem>>, vector<1x2x128xf32>
    %537 = vector.shape_cast %536 : vector<1x2x128xf32> to vector<2x128xf32>
    %cst_97 = arith.constant dense<0.000000e+00> : vector<2x128xf32>
    %538 = tpu.matmul %505, %0, %cst_97 {dimension_numbers = #tpu.dot_dimension_numbers<[1], [0], [0], [1], [0, 0, 1, 1], [], []>} : vector<2x32xf32>, vector<32x128xf32>, vector<2x128xf32> -> vector<2x128xf32>
    %539 = arith.addf %537, %538 : vector<2x128xf32>
    %540 = vector.extract_strided_slice %539 {offsets = [0, 0], sizes = [2, 32], strides = [1, 1]} : vector<2x128xf32> to vector<2x32xf32>
    %541 = arith.negf %540 : vector<2x32xf32>
    %542 = math.exp %541 : vector<2x32xf32>
    %cst_98 = arith.constant 1.000000e+00 : f32
    %543 = vector.broadcast %cst_98 : f32 to vector<2x32xf32>
    %544 = arith.addf %543, %542 : vector<2x32xf32>
    %545 = arith.divf %543, %544 : vector<2x32xf32>
    %546 = vector.extract_strided_slice %539 {offsets = [0, 32], sizes = [2, 32], strides = [1, 1]} : vector<2x128xf32> to vector<2x32xf32>
    %547 = arith.negf %546 : vector<2x32xf32>
    %548 = math.exp %547 : vector<2x32xf32>
    %cst_99 = arith.constant 1.000000e+00 : f32
    %549 = vector.broadcast %cst_99 : f32 to vector<2x32xf32>
    %550 = arith.addf %549, %548 : vector<2x32xf32>
    %551 = arith.divf %549, %550 : vector<2x32xf32>
    %552 = vector.extract_strided_slice %539 {offsets = [0, 64], sizes = [2, 32], strides = [1, 1]} : vector<2x128xf32> to vector<2x32xf32>
    %553 = math.tanh %552 : vector<2x32xf32>
    %554 = vector.extract_strided_slice %539 {offsets = [0, 96], sizes = [2, 32], strides = [1, 1]} : vector<2x128xf32> to vector<2x32xf32>
    %555 = arith.negf %554 : vector<2x32xf32>
    %556 = math.exp %555 : vector<2x32xf32>
    %cst_100 = arith.constant 1.000000e+00 : f32
    %557 = vector.broadcast %cst_100 : f32 to vector<2x32xf32>
    %558 = arith.addf %557, %556 : vector<2x32xf32>
    %559 = arith.divf %557, %558 : vector<2x32xf32>
    %560 = arith.mulf %551, %503 : vector<2x32xf32>
    %561 = arith.mulf %545, %553 : vector<2x32xf32>
    %562 = arith.addf %560, %561 : vector<2x32xf32>
    %563 = math.tanh %562 : vector<2x32xf32>
    %564 = arith.mulf %559, %563 : vector<2x32xf32>
    %565 = tpu.concatenate %564, %534 in 1 : vector<2x32xf32>, vector<2x32xf32> -> vector<2x64xf32>
    %cst_101 = arith.constant dense<0.000000e+00> : vector<2x128xf32>
    %566 = tpu.matmul %565, %1, %cst_101 {dimension_numbers = #tpu.dot_dimension_numbers<[1], [0], [0], [1], [0, 0, 1, 1], [], []>} : vector<2x64xf32>, vector<64x128xf32>, vector<2x128xf32> -> vector<2x128xf32>
    %567 = vector.broadcast %2 : vector<1x128xf32> to vector<2x128xf32>
    %568 = arith.addf %566, %567 : vector<2x128xf32>
    %569 = vector.extract_strided_slice %568 {offsets = [0, 0], sizes = [2, 32], strides = [1, 1]} : vector<2x128xf32> to vector<2x32xf32>
    %570 = arith.negf %569 : vector<2x32xf32>
    %571 = math.exp %570 : vector<2x32xf32>
    %cst_102 = arith.constant 1.000000e+00 : f32
    %572 = vector.broadcast %cst_102 : f32 to vector<2x32xf32>
    %573 = arith.addf %572, %571 : vector<2x32xf32>
    %574 = arith.divf %572, %573 : vector<2x32xf32>
    %575 = vector.extract_strided_slice %568 {offsets = [0, 32], sizes = [2, 32], strides = [1, 1]} : vector<2x128xf32> to vector<2x32xf32>
    %576 = arith.negf %575 : vector<2x32xf32>
    %577 = math.exp %576 : vector<2x32xf32>
    %cst_103 = arith.constant 1.000000e+00 : f32
    %578 = vector.broadcast %cst_103 : f32 to vector<2x32xf32>
    %579 = arith.addf %578, %577 : vector<2x32xf32>
    %580 = arith.divf %578, %579 : vector<2x32xf32>
    %581 = vector.extract_strided_slice %568 {offsets = [0, 64], sizes = [2, 32], strides = [1, 1]} : vector<2x128xf32> to vector<2x32xf32>
    %582 = math.tanh %581 : vector<2x32xf32>
    %583 = vector.extract_strided_slice %568 {offsets = [0, 96], sizes = [2, 32], strides = [1, 1]} : vector<2x128xf32> to vector<2x32xf32>
    %584 = arith.negf %583 : vector<2x32xf32>
    %585 = math.exp %584 : vector<2x32xf32>
    %cst_104 = arith.constant 1.000000e+00 : f32
    %586 = vector.broadcast %cst_104 : f32 to vector<2x32xf32>
    %587 = arith.addf %586, %585 : vector<2x32xf32>
    %588 = arith.divf %586, %587 : vector<2x32xf32>
    %589 = arith.mulf %580, %532 : vector<2x32xf32>
    %590 = arith.mulf %574, %582 : vector<2x32xf32>
    %591 = arith.addf %589, %590 : vector<2x32xf32>
    %592 = math.tanh %591 : vector<2x32xf32>
    %593 = arith.mulf %588, %592 : vector<2x32xf32>
    %c10_i32 = arith.constant 10 : i32
    %594 = arith.index_cast %c10_i32 : i32 to index
    %c0_105 = arith.constant 0 : index
    %c0_106 = arith.constant 0 : index
    %595 = vector.load %arg1[%594, %c0_105, %c0_106] : memref<28x2x128xf32, #tpu.memory_space<vmem>>, vector<1x2x128xf32>
    %596 = vector.shape_cast %595 : vector<1x2x128xf32> to vector<2x128xf32>
    %cst_107 = arith.constant dense<0.000000e+00> : vector<2x128xf32>
    %597 = tpu.matmul %564, %0, %cst_107 {dimension_numbers = #tpu.dot_dimension_numbers<[1], [0], [0], [1], [0, 0, 1, 1], [], []>} : vector<2x32xf32>, vector<32x128xf32>, vector<2x128xf32> -> vector<2x128xf32>
    %598 = arith.addf %596, %597 : vector<2x128xf32>
    %599 = vector.extract_strided_slice %598 {offsets = [0, 0], sizes = [2, 32], strides = [1, 1]} : vector<2x128xf32> to vector<2x32xf32>
    %600 = arith.negf %599 : vector<2x32xf32>
    %601 = math.exp %600 : vector<2x32xf32>
    %cst_108 = arith.constant 1.000000e+00 : f32
    %602 = vector.broadcast %cst_108 : f32 to vector<2x32xf32>
    %603 = arith.addf %602, %601 : vector<2x32xf32>
    %604 = arith.divf %602, %603 : vector<2x32xf32>
    %605 = vector.extract_strided_slice %598 {offsets = [0, 32], sizes = [2, 32], strides = [1, 1]} : vector<2x128xf32> to vector<2x32xf32>
    %606 = arith.negf %605 : vector<2x32xf32>
    %607 = math.exp %606 : vector<2x32xf32>
    %cst_109 = arith.constant 1.000000e+00 : f32
    %608 = vector.broadcast %cst_109 : f32 to vector<2x32xf32>
    %609 = arith.addf %608, %607 : vector<2x32xf32>
    %610 = arith.divf %608, %609 : vector<2x32xf32>
    %611 = vector.extract_strided_slice %598 {offsets = [0, 64], sizes = [2, 32], strides = [1, 1]} : vector<2x128xf32> to vector<2x32xf32>
    %612 = math.tanh %611 : vector<2x32xf32>
    %613 = vector.extract_strided_slice %598 {offsets = [0, 96], sizes = [2, 32], strides = [1, 1]} : vector<2x128xf32> to vector<2x32xf32>
    %614 = arith.negf %613 : vector<2x32xf32>
    %615 = math.exp %614 : vector<2x32xf32>
    %cst_110 = arith.constant 1.000000e+00 : f32
    %616 = vector.broadcast %cst_110 : f32 to vector<2x32xf32>
    %617 = arith.addf %616, %615 : vector<2x32xf32>
    %618 = arith.divf %616, %617 : vector<2x32xf32>
    %619 = arith.mulf %610, %562 : vector<2x32xf32>
    %620 = arith.mulf %604, %612 : vector<2x32xf32>
    %621 = arith.addf %619, %620 : vector<2x32xf32>
    %622 = math.tanh %621 : vector<2x32xf32>
    %623 = arith.mulf %618, %622 : vector<2x32xf32>
    %624 = tpu.concatenate %623, %593 in 1 : vector<2x32xf32>, vector<2x32xf32> -> vector<2x64xf32>
    %cst_111 = arith.constant dense<0.000000e+00> : vector<2x128xf32>
    %625 = tpu.matmul %624, %1, %cst_111 {dimension_numbers = #tpu.dot_dimension_numbers<[1], [0], [0], [1], [0, 0, 1, 1], [], []>} : vector<2x64xf32>, vector<64x128xf32>, vector<2x128xf32> -> vector<2x128xf32>
    %626 = vector.broadcast %2 : vector<1x128xf32> to vector<2x128xf32>
    %627 = arith.addf %625, %626 : vector<2x128xf32>
    %628 = vector.extract_strided_slice %627 {offsets = [0, 0], sizes = [2, 32], strides = [1, 1]} : vector<2x128xf32> to vector<2x32xf32>
    %629 = arith.negf %628 : vector<2x32xf32>
    %630 = math.exp %629 : vector<2x32xf32>
    %cst_112 = arith.constant 1.000000e+00 : f32
    %631 = vector.broadcast %cst_112 : f32 to vector<2x32xf32>
    %632 = arith.addf %631, %630 : vector<2x32xf32>
    %633 = arith.divf %631, %632 : vector<2x32xf32>
    %634 = vector.extract_strided_slice %627 {offsets = [0, 32], sizes = [2, 32], strides = [1, 1]} : vector<2x128xf32> to vector<2x32xf32>
    %635 = arith.negf %634 : vector<2x32xf32>
    %636 = math.exp %635 : vector<2x32xf32>
    %cst_113 = arith.constant 1.000000e+00 : f32
    %637 = vector.broadcast %cst_113 : f32 to vector<2x32xf32>
    %638 = arith.addf %637, %636 : vector<2x32xf32>
    %639 = arith.divf %637, %638 : vector<2x32xf32>
    %640 = vector.extract_strided_slice %627 {offsets = [0, 64], sizes = [2, 32], strides = [1, 1]} : vector<2x128xf32> to vector<2x32xf32>
    %641 = math.tanh %640 : vector<2x32xf32>
    %642 = vector.extract_strided_slice %627 {offsets = [0, 96], sizes = [2, 32], strides = [1, 1]} : vector<2x128xf32> to vector<2x32xf32>
    %643 = arith.negf %642 : vector<2x32xf32>
    %644 = math.exp %643 : vector<2x32xf32>
    %cst_114 = arith.constant 1.000000e+00 : f32
    %645 = vector.broadcast %cst_114 : f32 to vector<2x32xf32>
    %646 = arith.addf %645, %644 : vector<2x32xf32>
    %647 = arith.divf %645, %646 : vector<2x32xf32>
    %648 = arith.mulf %639, %591 : vector<2x32xf32>
    %649 = arith.mulf %633, %641 : vector<2x32xf32>
    %650 = arith.addf %648, %649 : vector<2x32xf32>
    %651 = math.tanh %650 : vector<2x32xf32>
    %652 = arith.mulf %647, %651 : vector<2x32xf32>
    %c11_i32 = arith.constant 11 : i32
    %653 = arith.index_cast %c11_i32 : i32 to index
    %c0_115 = arith.constant 0 : index
    %c0_116 = arith.constant 0 : index
    %654 = vector.load %arg1[%653, %c0_115, %c0_116] : memref<28x2x128xf32, #tpu.memory_space<vmem>>, vector<1x2x128xf32>
    %655 = vector.shape_cast %654 : vector<1x2x128xf32> to vector<2x128xf32>
    %cst_117 = arith.constant dense<0.000000e+00> : vector<2x128xf32>
    %656 = tpu.matmul %623, %0, %cst_117 {dimension_numbers = #tpu.dot_dimension_numbers<[1], [0], [0], [1], [0, 0, 1, 1], [], []>} : vector<2x32xf32>, vector<32x128xf32>, vector<2x128xf32> -> vector<2x128xf32>
    %657 = arith.addf %655, %656 : vector<2x128xf32>
    %658 = vector.extract_strided_slice %657 {offsets = [0, 0], sizes = [2, 32], strides = [1, 1]} : vector<2x128xf32> to vector<2x32xf32>
    %659 = arith.negf %658 : vector<2x32xf32>
    %660 = math.exp %659 : vector<2x32xf32>
    %cst_118 = arith.constant 1.000000e+00 : f32
    %661 = vector.broadcast %cst_118 : f32 to vector<2x32xf32>
    %662 = arith.addf %661, %660 : vector<2x32xf32>
    %663 = arith.divf %661, %662 : vector<2x32xf32>
    %664 = vector.extract_strided_slice %657 {offsets = [0, 32], sizes = [2, 32], strides = [1, 1]} : vector<2x128xf32> to vector<2x32xf32>
    %665 = arith.negf %664 : vector<2x32xf32>
    %666 = math.exp %665 : vector<2x32xf32>
    %cst_119 = arith.constant 1.000000e+00 : f32
    %667 = vector.broadcast %cst_119 : f32 to vector<2x32xf32>
    %668 = arith.addf %667, %666 : vector<2x32xf32>
    %669 = arith.divf %667, %668 : vector<2x32xf32>
    %670 = vector.extract_strided_slice %657 {offsets = [0, 64], sizes = [2, 32], strides = [1, 1]} : vector<2x128xf32> to vector<2x32xf32>
    %671 = math.tanh %670 : vector<2x32xf32>
    %672 = vector.extract_strided_slice %657 {offsets = [0, 96], sizes = [2, 32], strides = [1, 1]} : vector<2x128xf32> to vector<2x32xf32>
    %673 = arith.negf %672 : vector<2x32xf32>
    %674 = math.exp %673 : vector<2x32xf32>
    %cst_120 = arith.constant 1.000000e+00 : f32
    %675 = vector.broadcast %cst_120 : f32 to vector<2x32xf32>
    %676 = arith.addf %675, %674 : vector<2x32xf32>
    %677 = arith.divf %675, %676 : vector<2x32xf32>
    %678 = arith.mulf %669, %621 : vector<2x32xf32>
    %679 = arith.mulf %663, %671 : vector<2x32xf32>
    %680 = arith.addf %678, %679 : vector<2x32xf32>
    %681 = math.tanh %680 : vector<2x32xf32>
    %682 = arith.mulf %677, %681 : vector<2x32xf32>
    %683 = tpu.concatenate %682, %652 in 1 : vector<2x32xf32>, vector<2x32xf32> -> vector<2x64xf32>
    %cst_121 = arith.constant dense<0.000000e+00> : vector<2x128xf32>
    %684 = tpu.matmul %683, %1, %cst_121 {dimension_numbers = #tpu.dot_dimension_numbers<[1], [0], [0], [1], [0, 0, 1, 1], [], []>} : vector<2x64xf32>, vector<64x128xf32>, vector<2x128xf32> -> vector<2x128xf32>
    %685 = vector.broadcast %2 : vector<1x128xf32> to vector<2x128xf32>
    %686 = arith.addf %684, %685 : vector<2x128xf32>
    %687 = vector.extract_strided_slice %686 {offsets = [0, 0], sizes = [2, 32], strides = [1, 1]} : vector<2x128xf32> to vector<2x32xf32>
    %688 = arith.negf %687 : vector<2x32xf32>
    %689 = math.exp %688 : vector<2x32xf32>
    %cst_122 = arith.constant 1.000000e+00 : f32
    %690 = vector.broadcast %cst_122 : f32 to vector<2x32xf32>
    %691 = arith.addf %690, %689 : vector<2x32xf32>
    %692 = arith.divf %690, %691 : vector<2x32xf32>
    %693 = vector.extract_strided_slice %686 {offsets = [0, 32], sizes = [2, 32], strides = [1, 1]} : vector<2x128xf32> to vector<2x32xf32>
    %694 = arith.negf %693 : vector<2x32xf32>
    %695 = math.exp %694 : vector<2x32xf32>
    %cst_123 = arith.constant 1.000000e+00 : f32
    %696 = vector.broadcast %cst_123 : f32 to vector<2x32xf32>
    %697 = arith.addf %696, %695 : vector<2x32xf32>
    %698 = arith.divf %696, %697 : vector<2x32xf32>
    %699 = vector.extract_strided_slice %686 {offsets = [0, 64], sizes = [2, 32], strides = [1, 1]} : vector<2x128xf32> to vector<2x32xf32>
    %700 = math.tanh %699 : vector<2x32xf32>
    %701 = vector.extract_strided_slice %686 {offsets = [0, 96], sizes = [2, 32], strides = [1, 1]} : vector<2x128xf32> to vector<2x32xf32>
    %702 = arith.negf %701 : vector<2x32xf32>
    %703 = math.exp %702 : vector<2x32xf32>
    %cst_124 = arith.constant 1.000000e+00 : f32
    %704 = vector.broadcast %cst_124 : f32 to vector<2x32xf32>
    %705 = arith.addf %704, %703 : vector<2x32xf32>
    %706 = arith.divf %704, %705 : vector<2x32xf32>
    %707 = arith.mulf %698, %650 : vector<2x32xf32>
    %708 = arith.mulf %692, %700 : vector<2x32xf32>
    %709 = arith.addf %707, %708 : vector<2x32xf32>
    %710 = math.tanh %709 : vector<2x32xf32>
    %711 = arith.mulf %706, %710 : vector<2x32xf32>
    %c12_i32 = arith.constant 12 : i32
    %712 = arith.index_cast %c12_i32 : i32 to index
    %c0_125 = arith.constant 0 : index
    %c0_126 = arith.constant 0 : index
    %713 = vector.load %arg1[%712, %c0_125, %c0_126] : memref<28x2x128xf32, #tpu.memory_space<vmem>>, vector<1x2x128xf32>
    %714 = vector.shape_cast %713 : vector<1x2x128xf32> to vector<2x128xf32>
    %cst_127 = arith.constant dense<0.000000e+00> : vector<2x128xf32>
    %715 = tpu.matmul %682, %0, %cst_127 {dimension_numbers = #tpu.dot_dimension_numbers<[1], [0], [0], [1], [0, 0, 1, 1], [], []>} : vector<2x32xf32>, vector<32x128xf32>, vector<2x128xf32> -> vector<2x128xf32>
    %716 = arith.addf %714, %715 : vector<2x128xf32>
    %717 = vector.extract_strided_slice %716 {offsets = [0, 0], sizes = [2, 32], strides = [1, 1]} : vector<2x128xf32> to vector<2x32xf32>
    %718 = arith.negf %717 : vector<2x32xf32>
    %719 = math.exp %718 : vector<2x32xf32>
    %cst_128 = arith.constant 1.000000e+00 : f32
    %720 = vector.broadcast %cst_128 : f32 to vector<2x32xf32>
    %721 = arith.addf %720, %719 : vector<2x32xf32>
    %722 = arith.divf %720, %721 : vector<2x32xf32>
    %723 = vector.extract_strided_slice %716 {offsets = [0, 32], sizes = [2, 32], strides = [1, 1]} : vector<2x128xf32> to vector<2x32xf32>
    %724 = arith.negf %723 : vector<2x32xf32>
    %725 = math.exp %724 : vector<2x32xf32>
    %cst_129 = arith.constant 1.000000e+00 : f32
    %726 = vector.broadcast %cst_129 : f32 to vector<2x32xf32>
    %727 = arith.addf %726, %725 : vector<2x32xf32>
    %728 = arith.divf %726, %727 : vector<2x32xf32>
    %729 = vector.extract_strided_slice %716 {offsets = [0, 64], sizes = [2, 32], strides = [1, 1]} : vector<2x128xf32> to vector<2x32xf32>
    %730 = math.tanh %729 : vector<2x32xf32>
    %731 = vector.extract_strided_slice %716 {offsets = [0, 96], sizes = [2, 32], strides = [1, 1]} : vector<2x128xf32> to vector<2x32xf32>
    %732 = arith.negf %731 : vector<2x32xf32>
    %733 = math.exp %732 : vector<2x32xf32>
    %cst_130 = arith.constant 1.000000e+00 : f32
    %734 = vector.broadcast %cst_130 : f32 to vector<2x32xf32>
    %735 = arith.addf %734, %733 : vector<2x32xf32>
    %736 = arith.divf %734, %735 : vector<2x32xf32>
    %737 = arith.mulf %728, %680 : vector<2x32xf32>
    %738 = arith.mulf %722, %730 : vector<2x32xf32>
    %739 = arith.addf %737, %738 : vector<2x32xf32>
    %740 = math.tanh %739 : vector<2x32xf32>
    %741 = arith.mulf %736, %740 : vector<2x32xf32>
    %742 = tpu.concatenate %741, %711 in 1 : vector<2x32xf32>, vector<2x32xf32> -> vector<2x64xf32>
    %cst_131 = arith.constant dense<0.000000e+00> : vector<2x128xf32>
    %743 = tpu.matmul %742, %1, %cst_131 {dimension_numbers = #tpu.dot_dimension_numbers<[1], [0], [0], [1], [0, 0, 1, 1], [], []>} : vector<2x64xf32>, vector<64x128xf32>, vector<2x128xf32> -> vector<2x128xf32>
    %744 = vector.broadcast %2 : vector<1x128xf32> to vector<2x128xf32>
    %745 = arith.addf %743, %744 : vector<2x128xf32>
    %746 = vector.extract_strided_slice %745 {offsets = [0, 0], sizes = [2, 32], strides = [1, 1]} : vector<2x128xf32> to vector<2x32xf32>
    %747 = arith.negf %746 : vector<2x32xf32>
    %748 = math.exp %747 : vector<2x32xf32>
    %cst_132 = arith.constant 1.000000e+00 : f32
    %749 = vector.broadcast %cst_132 : f32 to vector<2x32xf32>
    %750 = arith.addf %749, %748 : vector<2x32xf32>
    %751 = arith.divf %749, %750 : vector<2x32xf32>
    %752 = vector.extract_strided_slice %745 {offsets = [0, 32], sizes = [2, 32], strides = [1, 1]} : vector<2x128xf32> to vector<2x32xf32>
    %753 = arith.negf %752 : vector<2x32xf32>
    %754 = math.exp %753 : vector<2x32xf32>
    %cst_133 = arith.constant 1.000000e+00 : f32
    %755 = vector.broadcast %cst_133 : f32 to vector<2x32xf32>
    %756 = arith.addf %755, %754 : vector<2x32xf32>
    %757 = arith.divf %755, %756 : vector<2x32xf32>
    %758 = vector.extract_strided_slice %745 {offsets = [0, 64], sizes = [2, 32], strides = [1, 1]} : vector<2x128xf32> to vector<2x32xf32>
    %759 = math.tanh %758 : vector<2x32xf32>
    %760 = vector.extract_strided_slice %745 {offsets = [0, 96], sizes = [2, 32], strides = [1, 1]} : vector<2x128xf32> to vector<2x32xf32>
    %761 = arith.negf %760 : vector<2x32xf32>
    %762 = math.exp %761 : vector<2x32xf32>
    %cst_134 = arith.constant 1.000000e+00 : f32
    %763 = vector.broadcast %cst_134 : f32 to vector<2x32xf32>
    %764 = arith.addf %763, %762 : vector<2x32xf32>
    %765 = arith.divf %763, %764 : vector<2x32xf32>
    %766 = arith.mulf %757, %709 : vector<2x32xf32>
    %767 = arith.mulf %751, %759 : vector<2x32xf32>
    %768 = arith.addf %766, %767 : vector<2x32xf32>
    %769 = math.tanh %768 : vector<2x32xf32>
    %770 = arith.mulf %765, %769 : vector<2x32xf32>
    %c13_i32 = arith.constant 13 : i32
    %771 = arith.index_cast %c13_i32 : i32 to index
    %c0_135 = arith.constant 0 : index
    %c0_136 = arith.constant 0 : index
    %772 = vector.load %arg1[%771, %c0_135, %c0_136] : memref<28x2x128xf32, #tpu.memory_space<vmem>>, vector<1x2x128xf32>
    %773 = vector.shape_cast %772 : vector<1x2x128xf32> to vector<2x128xf32>
    %cst_137 = arith.constant dense<0.000000e+00> : vector<2x128xf32>
    %774 = tpu.matmul %741, %0, %cst_137 {dimension_numbers = #tpu.dot_dimension_numbers<[1], [0], [0], [1], [0, 0, 1, 1], [], []>} : vector<2x32xf32>, vector<32x128xf32>, vector<2x128xf32> -> vector<2x128xf32>
    %775 = arith.addf %773, %774 : vector<2x128xf32>
    %776 = vector.extract_strided_slice %775 {offsets = [0, 0], sizes = [2, 32], strides = [1, 1]} : vector<2x128xf32> to vector<2x32xf32>
    %777 = arith.negf %776 : vector<2x32xf32>
    %778 = math.exp %777 : vector<2x32xf32>
    %cst_138 = arith.constant 1.000000e+00 : f32
    %779 = vector.broadcast %cst_138 : f32 to vector<2x32xf32>
    %780 = arith.addf %779, %778 : vector<2x32xf32>
    %781 = arith.divf %779, %780 : vector<2x32xf32>
    %782 = vector.extract_strided_slice %775 {offsets = [0, 32], sizes = [2, 32], strides = [1, 1]} : vector<2x128xf32> to vector<2x32xf32>
    %783 = arith.negf %782 : vector<2x32xf32>
    %784 = math.exp %783 : vector<2x32xf32>
    %cst_139 = arith.constant 1.000000e+00 : f32
    %785 = vector.broadcast %cst_139 : f32 to vector<2x32xf32>
    %786 = arith.addf %785, %784 : vector<2x32xf32>
    %787 = arith.divf %785, %786 : vector<2x32xf32>
    %788 = vector.extract_strided_slice %775 {offsets = [0, 64], sizes = [2, 32], strides = [1, 1]} : vector<2x128xf32> to vector<2x32xf32>
    %789 = math.tanh %788 : vector<2x32xf32>
    %790 = vector.extract_strided_slice %775 {offsets = [0, 96], sizes = [2, 32], strides = [1, 1]} : vector<2x128xf32> to vector<2x32xf32>
    %791 = arith.negf %790 : vector<2x32xf32>
    %792 = math.exp %791 : vector<2x32xf32>
    %cst_140 = arith.constant 1.000000e+00 : f32
    %793 = vector.broadcast %cst_140 : f32 to vector<2x32xf32>
    %794 = arith.addf %793, %792 : vector<2x32xf32>
    %795 = arith.divf %793, %794 : vector<2x32xf32>
    %796 = arith.mulf %787, %739 : vector<2x32xf32>
    %797 = arith.mulf %781, %789 : vector<2x32xf32>
    %798 = arith.addf %796, %797 : vector<2x32xf32>
    %799 = math.tanh %798 : vector<2x32xf32>
    %800 = arith.mulf %795, %799 : vector<2x32xf32>
    %801 = tpu.concatenate %800, %770 in 1 : vector<2x32xf32>, vector<2x32xf32> -> vector<2x64xf32>
    %cst_141 = arith.constant dense<0.000000e+00> : vector<2x128xf32>
    %802 = tpu.matmul %801, %1, %cst_141 {dimension_numbers = #tpu.dot_dimension_numbers<[1], [0], [0], [1], [0, 0, 1, 1], [], []>} : vector<2x64xf32>, vector<64x128xf32>, vector<2x128xf32> -> vector<2x128xf32>
    %803 = vector.broadcast %2 : vector<1x128xf32> to vector<2x128xf32>
    %804 = arith.addf %802, %803 : vector<2x128xf32>
    %805 = vector.extract_strided_slice %804 {offsets = [0, 0], sizes = [2, 32], strides = [1, 1]} : vector<2x128xf32> to vector<2x32xf32>
    %806 = arith.negf %805 : vector<2x32xf32>
    %807 = math.exp %806 : vector<2x32xf32>
    %cst_142 = arith.constant 1.000000e+00 : f32
    %808 = vector.broadcast %cst_142 : f32 to vector<2x32xf32>
    %809 = arith.addf %808, %807 : vector<2x32xf32>
    %810 = arith.divf %808, %809 : vector<2x32xf32>
    %811 = vector.extract_strided_slice %804 {offsets = [0, 32], sizes = [2, 32], strides = [1, 1]} : vector<2x128xf32> to vector<2x32xf32>
    %812 = arith.negf %811 : vector<2x32xf32>
    %813 = math.exp %812 : vector<2x32xf32>
    %cst_143 = arith.constant 1.000000e+00 : f32
    %814 = vector.broadcast %cst_143 : f32 to vector<2x32xf32>
    %815 = arith.addf %814, %813 : vector<2x32xf32>
    %816 = arith.divf %814, %815 : vector<2x32xf32>
    %817 = vector.extract_strided_slice %804 {offsets = [0, 64], sizes = [2, 32], strides = [1, 1]} : vector<2x128xf32> to vector<2x32xf32>
    %818 = math.tanh %817 : vector<2x32xf32>
    %819 = vector.extract_strided_slice %804 {offsets = [0, 96], sizes = [2, 32], strides = [1, 1]} : vector<2x128xf32> to vector<2x32xf32>
    %820 = arith.negf %819 : vector<2x32xf32>
    %821 = math.exp %820 : vector<2x32xf32>
    %cst_144 = arith.constant 1.000000e+00 : f32
    %822 = vector.broadcast %cst_144 : f32 to vector<2x32xf32>
    %823 = arith.addf %822, %821 : vector<2x32xf32>
    %824 = arith.divf %822, %823 : vector<2x32xf32>
    %825 = arith.mulf %816, %768 : vector<2x32xf32>
    %826 = arith.mulf %810, %818 : vector<2x32xf32>
    %827 = arith.addf %825, %826 : vector<2x32xf32>
    %828 = math.tanh %827 : vector<2x32xf32>
    %829 = arith.mulf %824, %828 : vector<2x32xf32>
    %c14_i32 = arith.constant 14 : i32
    %830 = arith.index_cast %c14_i32 : i32 to index
    %c0_145 = arith.constant 0 : index
    %c0_146 = arith.constant 0 : index
    %831 = vector.load %arg1[%830, %c0_145, %c0_146] : memref<28x2x128xf32, #tpu.memory_space<vmem>>, vector<1x2x128xf32>
    %832 = vector.shape_cast %831 : vector<1x2x128xf32> to vector<2x128xf32>
    %cst_147 = arith.constant dense<0.000000e+00> : vector<2x128xf32>
    %833 = tpu.matmul %800, %0, %cst_147 {dimension_numbers = #tpu.dot_dimension_numbers<[1], [0], [0], [1], [0, 0, 1, 1], [], []>} : vector<2x32xf32>, vector<32x128xf32>, vector<2x128xf32> -> vector<2x128xf32>
    %834 = arith.addf %832, %833 : vector<2x128xf32>
    %835 = vector.extract_strided_slice %834 {offsets = [0, 0], sizes = [2, 32], strides = [1, 1]} : vector<2x128xf32> to vector<2x32xf32>
    %836 = arith.negf %835 : vector<2x32xf32>
    %837 = math.exp %836 : vector<2x32xf32>
    %cst_148 = arith.constant 1.000000e+00 : f32
    %838 = vector.broadcast %cst_148 : f32 to vector<2x32xf32>
    %839 = arith.addf %838, %837 : vector<2x32xf32>
    %840 = arith.divf %838, %839 : vector<2x32xf32>
    %841 = vector.extract_strided_slice %834 {offsets = [0, 32], sizes = [2, 32], strides = [1, 1]} : vector<2x128xf32> to vector<2x32xf32>
    %842 = arith.negf %841 : vector<2x32xf32>
    %843 = math.exp %842 : vector<2x32xf32>
    %cst_149 = arith.constant 1.000000e+00 : f32
    %844 = vector.broadcast %cst_149 : f32 to vector<2x32xf32>
    %845 = arith.addf %844, %843 : vector<2x32xf32>
    %846 = arith.divf %844, %845 : vector<2x32xf32>
    %847 = vector.extract_strided_slice %834 {offsets = [0, 64], sizes = [2, 32], strides = [1, 1]} : vector<2x128xf32> to vector<2x32xf32>
    %848 = math.tanh %847 : vector<2x32xf32>
    %849 = vector.extract_strided_slice %834 {offsets = [0, 96], sizes = [2, 32], strides = [1, 1]} : vector<2x128xf32> to vector<2x32xf32>
    %850 = arith.negf %849 : vector<2x32xf32>
    %851 = math.exp %850 : vector<2x32xf32>
    %cst_150 = arith.constant 1.000000e+00 : f32
    %852 = vector.broadcast %cst_150 : f32 to vector<2x32xf32>
    %853 = arith.addf %852, %851 : vector<2x32xf32>
    %854 = arith.divf %852, %853 : vector<2x32xf32>
    %855 = arith.mulf %846, %798 : vector<2x32xf32>
    %856 = arith.mulf %840, %848 : vector<2x32xf32>
    %857 = arith.addf %855, %856 : vector<2x32xf32>
    %858 = math.tanh %857 : vector<2x32xf32>
    %859 = arith.mulf %854, %858 : vector<2x32xf32>
    %860 = tpu.concatenate %859, %829 in 1 : vector<2x32xf32>, vector<2x32xf32> -> vector<2x64xf32>
    %cst_151 = arith.constant dense<0.000000e+00> : vector<2x128xf32>
    %861 = tpu.matmul %860, %1, %cst_151 {dimension_numbers = #tpu.dot_dimension_numbers<[1], [0], [0], [1], [0, 0, 1, 1], [], []>} : vector<2x64xf32>, vector<64x128xf32>, vector<2x128xf32> -> vector<2x128xf32>
    %862 = vector.broadcast %2 : vector<1x128xf32> to vector<2x128xf32>
    %863 = arith.addf %861, %862 : vector<2x128xf32>
    %864 = vector.extract_strided_slice %863 {offsets = [0, 0], sizes = [2, 32], strides = [1, 1]} : vector<2x128xf32> to vector<2x32xf32>
    %865 = arith.negf %864 : vector<2x32xf32>
    %866 = math.exp %865 : vector<2x32xf32>
    %cst_152 = arith.constant 1.000000e+00 : f32
    %867 = vector.broadcast %cst_152 : f32 to vector<2x32xf32>
    %868 = arith.addf %867, %866 : vector<2x32xf32>
    %869 = arith.divf %867, %868 : vector<2x32xf32>
    %870 = vector.extract_strided_slice %863 {offsets = [0, 32], sizes = [2, 32], strides = [1, 1]} : vector<2x128xf32> to vector<2x32xf32>
    %871 = arith.negf %870 : vector<2x32xf32>
    %872 = math.exp %871 : vector<2x32xf32>
    %cst_153 = arith.constant 1.000000e+00 : f32
    %873 = vector.broadcast %cst_153 : f32 to vector<2x32xf32>
    %874 = arith.addf %873, %872 : vector<2x32xf32>
    %875 = arith.divf %873, %874 : vector<2x32xf32>
    %876 = vector.extract_strided_slice %863 {offsets = [0, 64], sizes = [2, 32], strides = [1, 1]} : vector<2x128xf32> to vector<2x32xf32>
    %877 = math.tanh %876 : vector<2x32xf32>
    %878 = vector.extract_strided_slice %863 {offsets = [0, 96], sizes = [2, 32], strides = [1, 1]} : vector<2x128xf32> to vector<2x32xf32>
    %879 = arith.negf %878 : vector<2x32xf32>
    %880 = math.exp %879 : vector<2x32xf32>
    %cst_154 = arith.constant 1.000000e+00 : f32
    %881 = vector.broadcast %cst_154 : f32 to vector<2x32xf32>
    %882 = arith.addf %881, %880 : vector<2x32xf32>
    %883 = arith.divf %881, %882 : vector<2x32xf32>
    %884 = arith.mulf %875, %827 : vector<2x32xf32>
    %885 = arith.mulf %869, %877 : vector<2x32xf32>
    %886 = arith.addf %884, %885 : vector<2x32xf32>
    %887 = math.tanh %886 : vector<2x32xf32>
    %888 = arith.mulf %883, %887 : vector<2x32xf32>
    %c15_i32 = arith.constant 15 : i32
    %889 = arith.index_cast %c15_i32 : i32 to index
    %c0_155 = arith.constant 0 : index
    %c0_156 = arith.constant 0 : index
    %890 = vector.load %arg1[%889, %c0_155, %c0_156] : memref<28x2x128xf32, #tpu.memory_space<vmem>>, vector<1x2x128xf32>
    %891 = vector.shape_cast %890 : vector<1x2x128xf32> to vector<2x128xf32>
    %cst_157 = arith.constant dense<0.000000e+00> : vector<2x128xf32>
    %892 = tpu.matmul %859, %0, %cst_157 {dimension_numbers = #tpu.dot_dimension_numbers<[1], [0], [0], [1], [0, 0, 1, 1], [], []>} : vector<2x32xf32>, vector<32x128xf32>, vector<2x128xf32> -> vector<2x128xf32>
    %893 = arith.addf %891, %892 : vector<2x128xf32>
    %894 = vector.extract_strided_slice %893 {offsets = [0, 0], sizes = [2, 32], strides = [1, 1]} : vector<2x128xf32> to vector<2x32xf32>
    %895 = arith.negf %894 : vector<2x32xf32>
    %896 = math.exp %895 : vector<2x32xf32>
    %cst_158 = arith.constant 1.000000e+00 : f32
    %897 = vector.broadcast %cst_158 : f32 to vector<2x32xf32>
    %898 = arith.addf %897, %896 : vector<2x32xf32>
    %899 = arith.divf %897, %898 : vector<2x32xf32>
    %900 = vector.extract_strided_slice %893 {offsets = [0, 32], sizes = [2, 32], strides = [1, 1]} : vector<2x128xf32> to vector<2x32xf32>
    %901 = arith.negf %900 : vector<2x32xf32>
    %902 = math.exp %901 : vector<2x32xf32>
    %cst_159 = arith.constant 1.000000e+00 : f32
    %903 = vector.broadcast %cst_159 : f32 to vector<2x32xf32>
    %904 = arith.addf %903, %902 : vector<2x32xf32>
    %905 = arith.divf %903, %904 : vector<2x32xf32>
    %906 = vector.extract_strided_slice %893 {offsets = [0, 64], sizes = [2, 32], strides = [1, 1]} : vector<2x128xf32> to vector<2x32xf32>
    %907 = math.tanh %906 : vector<2x32xf32>
    %908 = vector.extract_strided_slice %893 {offsets = [0, 96], sizes = [2, 32], strides = [1, 1]} : vector<2x128xf32> to vector<2x32xf32>
    %909 = arith.negf %908 : vector<2x32xf32>
    %910 = math.exp %909 : vector<2x32xf32>
    %cst_160 = arith.constant 1.000000e+00 : f32
    %911 = vector.broadcast %cst_160 : f32 to vector<2x32xf32>
    %912 = arith.addf %911, %910 : vector<2x32xf32>
    %913 = arith.divf %911, %912 : vector<2x32xf32>
    %914 = arith.mulf %905, %857 : vector<2x32xf32>
    %915 = arith.mulf %899, %907 : vector<2x32xf32>
    %916 = arith.addf %914, %915 : vector<2x32xf32>
    %917 = math.tanh %916 : vector<2x32xf32>
    %918 = arith.mulf %913, %917 : vector<2x32xf32>
    %919 = tpu.concatenate %918, %888 in 1 : vector<2x32xf32>, vector<2x32xf32> -> vector<2x64xf32>
    %cst_161 = arith.constant dense<0.000000e+00> : vector<2x128xf32>
    %920 = tpu.matmul %919, %1, %cst_161 {dimension_numbers = #tpu.dot_dimension_numbers<[1], [0], [0], [1], [0, 0, 1, 1], [], []>} : vector<2x64xf32>, vector<64x128xf32>, vector<2x128xf32> -> vector<2x128xf32>
    %921 = vector.broadcast %2 : vector<1x128xf32> to vector<2x128xf32>
    %922 = arith.addf %920, %921 : vector<2x128xf32>
    %923 = vector.extract_strided_slice %922 {offsets = [0, 0], sizes = [2, 32], strides = [1, 1]} : vector<2x128xf32> to vector<2x32xf32>
    %924 = arith.negf %923 : vector<2x32xf32>
    %925 = math.exp %924 : vector<2x32xf32>
    %cst_162 = arith.constant 1.000000e+00 : f32
    %926 = vector.broadcast %cst_162 : f32 to vector<2x32xf32>
    %927 = arith.addf %926, %925 : vector<2x32xf32>
    %928 = arith.divf %926, %927 : vector<2x32xf32>
    %929 = vector.extract_strided_slice %922 {offsets = [0, 32], sizes = [2, 32], strides = [1, 1]} : vector<2x128xf32> to vector<2x32xf32>
    %930 = arith.negf %929 : vector<2x32xf32>
    %931 = math.exp %930 : vector<2x32xf32>
    %cst_163 = arith.constant 1.000000e+00 : f32
    %932 = vector.broadcast %cst_163 : f32 to vector<2x32xf32>
    %933 = arith.addf %932, %931 : vector<2x32xf32>
    %934 = arith.divf %932, %933 : vector<2x32xf32>
    %935 = vector.extract_strided_slice %922 {offsets = [0, 64], sizes = [2, 32], strides = [1, 1]} : vector<2x128xf32> to vector<2x32xf32>
    %936 = math.tanh %935 : vector<2x32xf32>
    %937 = vector.extract_strided_slice %922 {offsets = [0, 96], sizes = [2, 32], strides = [1, 1]} : vector<2x128xf32> to vector<2x32xf32>
    %938 = arith.negf %937 : vector<2x32xf32>
    %939 = math.exp %938 : vector<2x32xf32>
    %cst_164 = arith.constant 1.000000e+00 : f32
    %940 = vector.broadcast %cst_164 : f32 to vector<2x32xf32>
    %941 = arith.addf %940, %939 : vector<2x32xf32>
    %942 = arith.divf %940, %941 : vector<2x32xf32>
    %943 = arith.mulf %934, %886 : vector<2x32xf32>
    %944 = arith.mulf %928, %936 : vector<2x32xf32>
    %945 = arith.addf %943, %944 : vector<2x32xf32>
    %946 = math.tanh %945 : vector<2x32xf32>
    %947 = arith.mulf %942, %946 : vector<2x32xf32>
    %c16_i32 = arith.constant 16 : i32
    %948 = arith.index_cast %c16_i32 : i32 to index
    %c0_165 = arith.constant 0 : index
    %c0_166 = arith.constant 0 : index
    %949 = vector.load %arg1[%948, %c0_165, %c0_166] : memref<28x2x128xf32, #tpu.memory_space<vmem>>, vector<1x2x128xf32>
    %950 = vector.shape_cast %949 : vector<1x2x128xf32> to vector<2x128xf32>
    %cst_167 = arith.constant dense<0.000000e+00> : vector<2x128xf32>
    %951 = tpu.matmul %918, %0, %cst_167 {dimension_numbers = #tpu.dot_dimension_numbers<[1], [0], [0], [1], [0, 0, 1, 1], [], []>} : vector<2x32xf32>, vector<32x128xf32>, vector<2x128xf32> -> vector<2x128xf32>
    %952 = arith.addf %950, %951 : vector<2x128xf32>
    %953 = vector.extract_strided_slice %952 {offsets = [0, 0], sizes = [2, 32], strides = [1, 1]} : vector<2x128xf32> to vector<2x32xf32>
    %954 = arith.negf %953 : vector<2x32xf32>
    %955 = math.exp %954 : vector<2x32xf32>
    %cst_168 = arith.constant 1.000000e+00 : f32
    %956 = vector.broadcast %cst_168 : f32 to vector<2x32xf32>
    %957 = arith.addf %956, %955 : vector<2x32xf32>
    %958 = arith.divf %956, %957 : vector<2x32xf32>
    %959 = vector.extract_strided_slice %952 {offsets = [0, 32], sizes = [2, 32], strides = [1, 1]} : vector<2x128xf32> to vector<2x32xf32>
    %960 = arith.negf %959 : vector<2x32xf32>
    %961 = math.exp %960 : vector<2x32xf32>
    %cst_169 = arith.constant 1.000000e+00 : f32
    %962 = vector.broadcast %cst_169 : f32 to vector<2x32xf32>
    %963 = arith.addf %962, %961 : vector<2x32xf32>
    %964 = arith.divf %962, %963 : vector<2x32xf32>
    %965 = vector.extract_strided_slice %952 {offsets = [0, 64], sizes = [2, 32], strides = [1, 1]} : vector<2x128xf32> to vector<2x32xf32>
    %966 = math.tanh %965 : vector<2x32xf32>
    %967 = vector.extract_strided_slice %952 {offsets = [0, 96], sizes = [2, 32], strides = [1, 1]} : vector<2x128xf32> to vector<2x32xf32>
    %968 = arith.negf %967 : vector<2x32xf32>
    %969 = math.exp %968 : vector<2x32xf32>
    %cst_170 = arith.constant 1.000000e+00 : f32
    %970 = vector.broadcast %cst_170 : f32 to vector<2x32xf32>
    %971 = arith.addf %970, %969 : vector<2x32xf32>
    %972 = arith.divf %970, %971 : vector<2x32xf32>
    %973 = arith.mulf %964, %916 : vector<2x32xf32>
    %974 = arith.mulf %958, %966 : vector<2x32xf32>
    %975 = arith.addf %973, %974 : vector<2x32xf32>
    %976 = math.tanh %975 : vector<2x32xf32>
    %977 = arith.mulf %972, %976 : vector<2x32xf32>
    %978 = tpu.concatenate %977, %947 in 1 : vector<2x32xf32>, vector<2x32xf32> -> vector<2x64xf32>
    %cst_171 = arith.constant dense<0.000000e+00> : vector<2x128xf32>
    %979 = tpu.matmul %978, %1, %cst_171 {dimension_numbers = #tpu.dot_dimension_numbers<[1], [0], [0], [1], [0, 0, 1, 1], [], []>} : vector<2x64xf32>, vector<64x128xf32>, vector<2x128xf32> -> vector<2x128xf32>
    %980 = vector.broadcast %2 : vector<1x128xf32> to vector<2x128xf32>
    %981 = arith.addf %979, %980 : vector<2x128xf32>
    %982 = vector.extract_strided_slice %981 {offsets = [0, 0], sizes = [2, 32], strides = [1, 1]} : vector<2x128xf32> to vector<2x32xf32>
    %983 = arith.negf %982 : vector<2x32xf32>
    %984 = math.exp %983 : vector<2x32xf32>
    %cst_172 = arith.constant 1.000000e+00 : f32
    %985 = vector.broadcast %cst_172 : f32 to vector<2x32xf32>
    %986 = arith.addf %985, %984 : vector<2x32xf32>
    %987 = arith.divf %985, %986 : vector<2x32xf32>
    %988 = vector.extract_strided_slice %981 {offsets = [0, 32], sizes = [2, 32], strides = [1, 1]} : vector<2x128xf32> to vector<2x32xf32>
    %989 = arith.negf %988 : vector<2x32xf32>
    %990 = math.exp %989 : vector<2x32xf32>
    %cst_173 = arith.constant 1.000000e+00 : f32
    %991 = vector.broadcast %cst_173 : f32 to vector<2x32xf32>
    %992 = arith.addf %991, %990 : vector<2x32xf32>
    %993 = arith.divf %991, %992 : vector<2x32xf32>
    %994 = vector.extract_strided_slice %981 {offsets = [0, 64], sizes = [2, 32], strides = [1, 1]} : vector<2x128xf32> to vector<2x32xf32>
    %995 = math.tanh %994 : vector<2x32xf32>
    %996 = vector.extract_strided_slice %981 {offsets = [0, 96], sizes = [2, 32], strides = [1, 1]} : vector<2x128xf32> to vector<2x32xf32>
    %997 = arith.negf %996 : vector<2x32xf32>
    %998 = math.exp %997 : vector<2x32xf32>
    %cst_174 = arith.constant 1.000000e+00 : f32
    %999 = vector.broadcast %cst_174 : f32 to vector<2x32xf32>
    %1000 = arith.addf %999, %998 : vector<2x32xf32>
    %1001 = arith.divf %999, %1000 : vector<2x32xf32>
    %1002 = arith.mulf %993, %945 : vector<2x32xf32>
    %1003 = arith.mulf %987, %995 : vector<2x32xf32>
    %1004 = arith.addf %1002, %1003 : vector<2x32xf32>
    %1005 = math.tanh %1004 : vector<2x32xf32>
    %1006 = arith.mulf %1001, %1005 : vector<2x32xf32>
    %c17_i32 = arith.constant 17 : i32
    %1007 = arith.index_cast %c17_i32 : i32 to index
    %c0_175 = arith.constant 0 : index
    %c0_176 = arith.constant 0 : index
    %1008 = vector.load %arg1[%1007, %c0_175, %c0_176] : memref<28x2x128xf32, #tpu.memory_space<vmem>>, vector<1x2x128xf32>
    %1009 = vector.shape_cast %1008 : vector<1x2x128xf32> to vector<2x128xf32>
    %cst_177 = arith.constant dense<0.000000e+00> : vector<2x128xf32>
    %1010 = tpu.matmul %977, %0, %cst_177 {dimension_numbers = #tpu.dot_dimension_numbers<[1], [0], [0], [1], [0, 0, 1, 1], [], []>} : vector<2x32xf32>, vector<32x128xf32>, vector<2x128xf32> -> vector<2x128xf32>
    %1011 = arith.addf %1009, %1010 : vector<2x128xf32>
    %1012 = vector.extract_strided_slice %1011 {offsets = [0, 0], sizes = [2, 32], strides = [1, 1]} : vector<2x128xf32> to vector<2x32xf32>
    %1013 = arith.negf %1012 : vector<2x32xf32>
    %1014 = math.exp %1013 : vector<2x32xf32>
    %cst_178 = arith.constant 1.000000e+00 : f32
    %1015 = vector.broadcast %cst_178 : f32 to vector<2x32xf32>
    %1016 = arith.addf %1015, %1014 : vector<2x32xf32>
    %1017 = arith.divf %1015, %1016 : vector<2x32xf32>
    %1018 = vector.extract_strided_slice %1011 {offsets = [0, 32], sizes = [2, 32], strides = [1, 1]} : vector<2x128xf32> to vector<2x32xf32>
    %1019 = arith.negf %1018 : vector<2x32xf32>
    %1020 = math.exp %1019 : vector<2x32xf32>
    %cst_179 = arith.constant 1.000000e+00 : f32
    %1021 = vector.broadcast %cst_179 : f32 to vector<2x32xf32>
    %1022 = arith.addf %1021, %1020 : vector<2x32xf32>
    %1023 = arith.divf %1021, %1022 : vector<2x32xf32>
    %1024 = vector.extract_strided_slice %1011 {offsets = [0, 64], sizes = [2, 32], strides = [1, 1]} : vector<2x128xf32> to vector<2x32xf32>
    %1025 = math.tanh %1024 : vector<2x32xf32>
    %1026 = vector.extract_strided_slice %1011 {offsets = [0, 96], sizes = [2, 32], strides = [1, 1]} : vector<2x128xf32> to vector<2x32xf32>
    %1027 = arith.negf %1026 : vector<2x32xf32>
    %1028 = math.exp %1027 : vector<2x32xf32>
    %cst_180 = arith.constant 1.000000e+00 : f32
    %1029 = vector.broadcast %cst_180 : f32 to vector<2x32xf32>
    %1030 = arith.addf %1029, %1028 : vector<2x32xf32>
    %1031 = arith.divf %1029, %1030 : vector<2x32xf32>
    %1032 = arith.mulf %1023, %975 : vector<2x32xf32>
    %1033 = arith.mulf %1017, %1025 : vector<2x32xf32>
    %1034 = arith.addf %1032, %1033 : vector<2x32xf32>
    %1035 = math.tanh %1034 : vector<2x32xf32>
    %1036 = arith.mulf %1031, %1035 : vector<2x32xf32>
    %1037 = tpu.concatenate %1036, %1006 in 1 : vector<2x32xf32>, vector<2x32xf32> -> vector<2x64xf32>
    %cst_181 = arith.constant dense<0.000000e+00> : vector<2x128xf32>
    %1038 = tpu.matmul %1037, %1, %cst_181 {dimension_numbers = #tpu.dot_dimension_numbers<[1], [0], [0], [1], [0, 0, 1, 1], [], []>} : vector<2x64xf32>, vector<64x128xf32>, vector<2x128xf32> -> vector<2x128xf32>
    %1039 = vector.broadcast %2 : vector<1x128xf32> to vector<2x128xf32>
    %1040 = arith.addf %1038, %1039 : vector<2x128xf32>
    %1041 = vector.extract_strided_slice %1040 {offsets = [0, 0], sizes = [2, 32], strides = [1, 1]} : vector<2x128xf32> to vector<2x32xf32>
    %1042 = arith.negf %1041 : vector<2x32xf32>
    %1043 = math.exp %1042 : vector<2x32xf32>
    %cst_182 = arith.constant 1.000000e+00 : f32
    %1044 = vector.broadcast %cst_182 : f32 to vector<2x32xf32>
    %1045 = arith.addf %1044, %1043 : vector<2x32xf32>
    %1046 = arith.divf %1044, %1045 : vector<2x32xf32>
    %1047 = vector.extract_strided_slice %1040 {offsets = [0, 32], sizes = [2, 32], strides = [1, 1]} : vector<2x128xf32> to vector<2x32xf32>
    %1048 = arith.negf %1047 : vector<2x32xf32>
    %1049 = math.exp %1048 : vector<2x32xf32>
    %cst_183 = arith.constant 1.000000e+00 : f32
    %1050 = vector.broadcast %cst_183 : f32 to vector<2x32xf32>
    %1051 = arith.addf %1050, %1049 : vector<2x32xf32>
    %1052 = arith.divf %1050, %1051 : vector<2x32xf32>
    %1053 = vector.extract_strided_slice %1040 {offsets = [0, 64], sizes = [2, 32], strides = [1, 1]} : vector<2x128xf32> to vector<2x32xf32>
    %1054 = math.tanh %1053 : vector<2x32xf32>
    %1055 = vector.extract_strided_slice %1040 {offsets = [0, 96], sizes = [2, 32], strides = [1, 1]} : vector<2x128xf32> to vector<2x32xf32>
    %1056 = arith.negf %1055 : vector<2x32xf32>
    %1057 = math.exp %1056 : vector<2x32xf32>
    %cst_184 = arith.constant 1.000000e+00 : f32
    %1058 = vector.broadcast %cst_184 : f32 to vector<2x32xf32>
    %1059 = arith.addf %1058, %1057 : vector<2x32xf32>
    %1060 = arith.divf %1058, %1059 : vector<2x32xf32>
    %1061 = arith.mulf %1052, %1004 : vector<2x32xf32>
    %1062 = arith.mulf %1046, %1054 : vector<2x32xf32>
    %1063 = arith.addf %1061, %1062 : vector<2x32xf32>
    %1064 = math.tanh %1063 : vector<2x32xf32>
    %1065 = arith.mulf %1060, %1064 : vector<2x32xf32>
    %c18_i32 = arith.constant 18 : i32
    %1066 = arith.index_cast %c18_i32 : i32 to index
    %c0_185 = arith.constant 0 : index
    %c0_186 = arith.constant 0 : index
    %1067 = vector.load %arg1[%1066, %c0_185, %c0_186] : memref<28x2x128xf32, #tpu.memory_space<vmem>>, vector<1x2x128xf32>
    %1068 = vector.shape_cast %1067 : vector<1x2x128xf32> to vector<2x128xf32>
    %cst_187 = arith.constant dense<0.000000e+00> : vector<2x128xf32>
    %1069 = tpu.matmul %1036, %0, %cst_187 {dimension_numbers = #tpu.dot_dimension_numbers<[1], [0], [0], [1], [0, 0, 1, 1], [], []>} : vector<2x32xf32>, vector<32x128xf32>, vector<2x128xf32> -> vector<2x128xf32>
    %1070 = arith.addf %1068, %1069 : vector<2x128xf32>
    %1071 = vector.extract_strided_slice %1070 {offsets = [0, 0], sizes = [2, 32], strides = [1, 1]} : vector<2x128xf32> to vector<2x32xf32>
    %1072 = arith.negf %1071 : vector<2x32xf32>
    %1073 = math.exp %1072 : vector<2x32xf32>
    %cst_188 = arith.constant 1.000000e+00 : f32
    %1074 = vector.broadcast %cst_188 : f32 to vector<2x32xf32>
    %1075 = arith.addf %1074, %1073 : vector<2x32xf32>
    %1076 = arith.divf %1074, %1075 : vector<2x32xf32>
    %1077 = vector.extract_strided_slice %1070 {offsets = [0, 32], sizes = [2, 32], strides = [1, 1]} : vector<2x128xf32> to vector<2x32xf32>
    %1078 = arith.negf %1077 : vector<2x32xf32>
    %1079 = math.exp %1078 : vector<2x32xf32>
    %cst_189 = arith.constant 1.000000e+00 : f32
    %1080 = vector.broadcast %cst_189 : f32 to vector<2x32xf32>
    %1081 = arith.addf %1080, %1079 : vector<2x32xf32>
    %1082 = arith.divf %1080, %1081 : vector<2x32xf32>
    %1083 = vector.extract_strided_slice %1070 {offsets = [0, 64], sizes = [2, 32], strides = [1, 1]} : vector<2x128xf32> to vector<2x32xf32>
    %1084 = math.tanh %1083 : vector<2x32xf32>
    %1085 = vector.extract_strided_slice %1070 {offsets = [0, 96], sizes = [2, 32], strides = [1, 1]} : vector<2x128xf32> to vector<2x32xf32>
    %1086 = arith.negf %1085 : vector<2x32xf32>
    %1087 = math.exp %1086 : vector<2x32xf32>
    %cst_190 = arith.constant 1.000000e+00 : f32
    %1088 = vector.broadcast %cst_190 : f32 to vector<2x32xf32>
    %1089 = arith.addf %1088, %1087 : vector<2x32xf32>
    %1090 = arith.divf %1088, %1089 : vector<2x32xf32>
    %1091 = arith.mulf %1082, %1034 : vector<2x32xf32>
    %1092 = arith.mulf %1076, %1084 : vector<2x32xf32>
    %1093 = arith.addf %1091, %1092 : vector<2x32xf32>
    %1094 = math.tanh %1093 : vector<2x32xf32>
    %1095 = arith.mulf %1090, %1094 : vector<2x32xf32>
    %1096 = tpu.concatenate %1095, %1065 in 1 : vector<2x32xf32>, vector<2x32xf32> -> vector<2x64xf32>
    %cst_191 = arith.constant dense<0.000000e+00> : vector<2x128xf32>
    %1097 = tpu.matmul %1096, %1, %cst_191 {dimension_numbers = #tpu.dot_dimension_numbers<[1], [0], [0], [1], [0, 0, 1, 1], [], []>} : vector<2x64xf32>, vector<64x128xf32>, vector<2x128xf32> -> vector<2x128xf32>
    %1098 = vector.broadcast %2 : vector<1x128xf32> to vector<2x128xf32>
    %1099 = arith.addf %1097, %1098 : vector<2x128xf32>
    %1100 = vector.extract_strided_slice %1099 {offsets = [0, 0], sizes = [2, 32], strides = [1, 1]} : vector<2x128xf32> to vector<2x32xf32>
    %1101 = arith.negf %1100 : vector<2x32xf32>
    %1102 = math.exp %1101 : vector<2x32xf32>
    %cst_192 = arith.constant 1.000000e+00 : f32
    %1103 = vector.broadcast %cst_192 : f32 to vector<2x32xf32>
    %1104 = arith.addf %1103, %1102 : vector<2x32xf32>
    %1105 = arith.divf %1103, %1104 : vector<2x32xf32>
    %1106 = vector.extract_strided_slice %1099 {offsets = [0, 32], sizes = [2, 32], strides = [1, 1]} : vector<2x128xf32> to vector<2x32xf32>
    %1107 = arith.negf %1106 : vector<2x32xf32>
    %1108 = math.exp %1107 : vector<2x32xf32>
    %cst_193 = arith.constant 1.000000e+00 : f32
    %1109 = vector.broadcast %cst_193 : f32 to vector<2x32xf32>
    %1110 = arith.addf %1109, %1108 : vector<2x32xf32>
    %1111 = arith.divf %1109, %1110 : vector<2x32xf32>
    %1112 = vector.extract_strided_slice %1099 {offsets = [0, 64], sizes = [2, 32], strides = [1, 1]} : vector<2x128xf32> to vector<2x32xf32>
    %1113 = math.tanh %1112 : vector<2x32xf32>
    %1114 = vector.extract_strided_slice %1099 {offsets = [0, 96], sizes = [2, 32], strides = [1, 1]} : vector<2x128xf32> to vector<2x32xf32>
    %1115 = arith.negf %1114 : vector<2x32xf32>
    %1116 = math.exp %1115 : vector<2x32xf32>
    %cst_194 = arith.constant 1.000000e+00 : f32
    %1117 = vector.broadcast %cst_194 : f32 to vector<2x32xf32>
    %1118 = arith.addf %1117, %1116 : vector<2x32xf32>
    %1119 = arith.divf %1117, %1118 : vector<2x32xf32>
    %1120 = arith.mulf %1111, %1063 : vector<2x32xf32>
    %1121 = arith.mulf %1105, %1113 : vector<2x32xf32>
    %1122 = arith.addf %1120, %1121 : vector<2x32xf32>
    %1123 = math.tanh %1122 : vector<2x32xf32>
    %1124 = arith.mulf %1119, %1123 : vector<2x32xf32>
    %c19_i32 = arith.constant 19 : i32
    %1125 = arith.index_cast %c19_i32 : i32 to index
    %c0_195 = arith.constant 0 : index
    %c0_196 = arith.constant 0 : index
    %1126 = vector.load %arg1[%1125, %c0_195, %c0_196] : memref<28x2x128xf32, #tpu.memory_space<vmem>>, vector<1x2x128xf32>
    %1127 = vector.shape_cast %1126 : vector<1x2x128xf32> to vector<2x128xf32>
    %cst_197 = arith.constant dense<0.000000e+00> : vector<2x128xf32>
    %1128 = tpu.matmul %1095, %0, %cst_197 {dimension_numbers = #tpu.dot_dimension_numbers<[1], [0], [0], [1], [0, 0, 1, 1], [], []>} : vector<2x32xf32>, vector<32x128xf32>, vector<2x128xf32> -> vector<2x128xf32>
    %1129 = arith.addf %1127, %1128 : vector<2x128xf32>
    %1130 = vector.extract_strided_slice %1129 {offsets = [0, 0], sizes = [2, 32], strides = [1, 1]} : vector<2x128xf32> to vector<2x32xf32>
    %1131 = arith.negf %1130 : vector<2x32xf32>
    %1132 = math.exp %1131 : vector<2x32xf32>
    %cst_198 = arith.constant 1.000000e+00 : f32
    %1133 = vector.broadcast %cst_198 : f32 to vector<2x32xf32>
    %1134 = arith.addf %1133, %1132 : vector<2x32xf32>
    %1135 = arith.divf %1133, %1134 : vector<2x32xf32>
    %1136 = vector.extract_strided_slice %1129 {offsets = [0, 32], sizes = [2, 32], strides = [1, 1]} : vector<2x128xf32> to vector<2x32xf32>
    %1137 = arith.negf %1136 : vector<2x32xf32>
    %1138 = math.exp %1137 : vector<2x32xf32>
    %cst_199 = arith.constant 1.000000e+00 : f32
    %1139 = vector.broadcast %cst_199 : f32 to vector<2x32xf32>
    %1140 = arith.addf %1139, %1138 : vector<2x32xf32>
    %1141 = arith.divf %1139, %1140 : vector<2x32xf32>
    %1142 = vector.extract_strided_slice %1129 {offsets = [0, 64], sizes = [2, 32], strides = [1, 1]} : vector<2x128xf32> to vector<2x32xf32>
    %1143 = math.tanh %1142 : vector<2x32xf32>
    %1144 = vector.extract_strided_slice %1129 {offsets = [0, 96], sizes = [2, 32], strides = [1, 1]} : vector<2x128xf32> to vector<2x32xf32>
    %1145 = arith.negf %1144 : vector<2x32xf32>
    %1146 = math.exp %1145 : vector<2x32xf32>
    %cst_200 = arith.constant 1.000000e+00 : f32
    %1147 = vector.broadcast %cst_200 : f32 to vector<2x32xf32>
    %1148 = arith.addf %1147, %1146 : vector<2x32xf32>
    %1149 = arith.divf %1147, %1148 : vector<2x32xf32>
    %1150 = arith.mulf %1141, %1093 : vector<2x32xf32>
    %1151 = arith.mulf %1135, %1143 : vector<2x32xf32>
    %1152 = arith.addf %1150, %1151 : vector<2x32xf32>
    %1153 = math.tanh %1152 : vector<2x32xf32>
    %1154 = arith.mulf %1149, %1153 : vector<2x32xf32>
    %1155 = tpu.concatenate %1154, %1124 in 1 : vector<2x32xf32>, vector<2x32xf32> -> vector<2x64xf32>
    %cst_201 = arith.constant dense<0.000000e+00> : vector<2x128xf32>
    %1156 = tpu.matmul %1155, %1, %cst_201 {dimension_numbers = #tpu.dot_dimension_numbers<[1], [0], [0], [1], [0, 0, 1, 1], [], []>} : vector<2x64xf32>, vector<64x128xf32>, vector<2x128xf32> -> vector<2x128xf32>
    %1157 = vector.broadcast %2 : vector<1x128xf32> to vector<2x128xf32>
    %1158 = arith.addf %1156, %1157 : vector<2x128xf32>
    %1159 = vector.extract_strided_slice %1158 {offsets = [0, 0], sizes = [2, 32], strides = [1, 1]} : vector<2x128xf32> to vector<2x32xf32>
    %1160 = arith.negf %1159 : vector<2x32xf32>
    %1161 = math.exp %1160 : vector<2x32xf32>
    %cst_202 = arith.constant 1.000000e+00 : f32
    %1162 = vector.broadcast %cst_202 : f32 to vector<2x32xf32>
    %1163 = arith.addf %1162, %1161 : vector<2x32xf32>
    %1164 = arith.divf %1162, %1163 : vector<2x32xf32>
    %1165 = vector.extract_strided_slice %1158 {offsets = [0, 32], sizes = [2, 32], strides = [1, 1]} : vector<2x128xf32> to vector<2x32xf32>
    %1166 = arith.negf %1165 : vector<2x32xf32>
    %1167 = math.exp %1166 : vector<2x32xf32>
    %cst_203 = arith.constant 1.000000e+00 : f32
    %1168 = vector.broadcast %cst_203 : f32 to vector<2x32xf32>
    %1169 = arith.addf %1168, %1167 : vector<2x32xf32>
    %1170 = arith.divf %1168, %1169 : vector<2x32xf32>
    %1171 = vector.extract_strided_slice %1158 {offsets = [0, 64], sizes = [2, 32], strides = [1, 1]} : vector<2x128xf32> to vector<2x32xf32>
    %1172 = math.tanh %1171 : vector<2x32xf32>
    %1173 = vector.extract_strided_slice %1158 {offsets = [0, 96], sizes = [2, 32], strides = [1, 1]} : vector<2x128xf32> to vector<2x32xf32>
    %1174 = arith.negf %1173 : vector<2x32xf32>
    %1175 = math.exp %1174 : vector<2x32xf32>
    %cst_204 = arith.constant 1.000000e+00 : f32
    %1176 = vector.broadcast %cst_204 : f32 to vector<2x32xf32>
    %1177 = arith.addf %1176, %1175 : vector<2x32xf32>
    %1178 = arith.divf %1176, %1177 : vector<2x32xf32>
    %1179 = arith.mulf %1170, %1122 : vector<2x32xf32>
    %1180 = arith.mulf %1164, %1172 : vector<2x32xf32>
    %1181 = arith.addf %1179, %1180 : vector<2x32xf32>
    %1182 = math.tanh %1181 : vector<2x32xf32>
    %1183 = arith.mulf %1178, %1182 : vector<2x32xf32>
    %c20_i32 = arith.constant 20 : i32
    %1184 = arith.index_cast %c20_i32 : i32 to index
    %c0_205 = arith.constant 0 : index
    %c0_206 = arith.constant 0 : index
    %1185 = vector.load %arg1[%1184, %c0_205, %c0_206] : memref<28x2x128xf32, #tpu.memory_space<vmem>>, vector<1x2x128xf32>
    %1186 = vector.shape_cast %1185 : vector<1x2x128xf32> to vector<2x128xf32>
    %cst_207 = arith.constant dense<0.000000e+00> : vector<2x128xf32>
    %1187 = tpu.matmul %1154, %0, %cst_207 {dimension_numbers = #tpu.dot_dimension_numbers<[1], [0], [0], [1], [0, 0, 1, 1], [], []>} : vector<2x32xf32>, vector<32x128xf32>, vector<2x128xf32> -> vector<2x128xf32>
    %1188 = arith.addf %1186, %1187 : vector<2x128xf32>
    %1189 = vector.extract_strided_slice %1188 {offsets = [0, 0], sizes = [2, 32], strides = [1, 1]} : vector<2x128xf32> to vector<2x32xf32>
    %1190 = arith.negf %1189 : vector<2x32xf32>
    %1191 = math.exp %1190 : vector<2x32xf32>
    %cst_208 = arith.constant 1.000000e+00 : f32
    %1192 = vector.broadcast %cst_208 : f32 to vector<2x32xf32>
    %1193 = arith.addf %1192, %1191 : vector<2x32xf32>
    %1194 = arith.divf %1192, %1193 : vector<2x32xf32>
    %1195 = vector.extract_strided_slice %1188 {offsets = [0, 32], sizes = [2, 32], strides = [1, 1]} : vector<2x128xf32> to vector<2x32xf32>
    %1196 = arith.negf %1195 : vector<2x32xf32>
    %1197 = math.exp %1196 : vector<2x32xf32>
    %cst_209 = arith.constant 1.000000e+00 : f32
    %1198 = vector.broadcast %cst_209 : f32 to vector<2x32xf32>
    %1199 = arith.addf %1198, %1197 : vector<2x32xf32>
    %1200 = arith.divf %1198, %1199 : vector<2x32xf32>
    %1201 = vector.extract_strided_slice %1188 {offsets = [0, 64], sizes = [2, 32], strides = [1, 1]} : vector<2x128xf32> to vector<2x32xf32>
    %1202 = math.tanh %1201 : vector<2x32xf32>
    %1203 = vector.extract_strided_slice %1188 {offsets = [0, 96], sizes = [2, 32], strides = [1, 1]} : vector<2x128xf32> to vector<2x32xf32>
    %1204 = arith.negf %1203 : vector<2x32xf32>
    %1205 = math.exp %1204 : vector<2x32xf32>
    %cst_210 = arith.constant 1.000000e+00 : f32
    %1206 = vector.broadcast %cst_210 : f32 to vector<2x32xf32>
    %1207 = arith.addf %1206, %1205 : vector<2x32xf32>
    %1208 = arith.divf %1206, %1207 : vector<2x32xf32>
    %1209 = arith.mulf %1200, %1152 : vector<2x32xf32>
    %1210 = arith.mulf %1194, %1202 : vector<2x32xf32>
    %1211 = arith.addf %1209, %1210 : vector<2x32xf32>
    %1212 = math.tanh %1211 : vector<2x32xf32>
    %1213 = arith.mulf %1208, %1212 : vector<2x32xf32>
    %1214 = tpu.concatenate %1213, %1183 in 1 : vector<2x32xf32>, vector<2x32xf32> -> vector<2x64xf32>
    %cst_211 = arith.constant dense<0.000000e+00> : vector<2x128xf32>
    %1215 = tpu.matmul %1214, %1, %cst_211 {dimension_numbers = #tpu.dot_dimension_numbers<[1], [0], [0], [1], [0, 0, 1, 1], [], []>} : vector<2x64xf32>, vector<64x128xf32>, vector<2x128xf32> -> vector<2x128xf32>
    %1216 = vector.broadcast %2 : vector<1x128xf32> to vector<2x128xf32>
    %1217 = arith.addf %1215, %1216 : vector<2x128xf32>
    %1218 = vector.extract_strided_slice %1217 {offsets = [0, 0], sizes = [2, 32], strides = [1, 1]} : vector<2x128xf32> to vector<2x32xf32>
    %1219 = arith.negf %1218 : vector<2x32xf32>
    %1220 = math.exp %1219 : vector<2x32xf32>
    %cst_212 = arith.constant 1.000000e+00 : f32
    %1221 = vector.broadcast %cst_212 : f32 to vector<2x32xf32>
    %1222 = arith.addf %1221, %1220 : vector<2x32xf32>
    %1223 = arith.divf %1221, %1222 : vector<2x32xf32>
    %1224 = vector.extract_strided_slice %1217 {offsets = [0, 32], sizes = [2, 32], strides = [1, 1]} : vector<2x128xf32> to vector<2x32xf32>
    %1225 = arith.negf %1224 : vector<2x32xf32>
    %1226 = math.exp %1225 : vector<2x32xf32>
    %cst_213 = arith.constant 1.000000e+00 : f32
    %1227 = vector.broadcast %cst_213 : f32 to vector<2x32xf32>
    %1228 = arith.addf %1227, %1226 : vector<2x32xf32>
    %1229 = arith.divf %1227, %1228 : vector<2x32xf32>
    %1230 = vector.extract_strided_slice %1217 {offsets = [0, 64], sizes = [2, 32], strides = [1, 1]} : vector<2x128xf32> to vector<2x32xf32>
    %1231 = math.tanh %1230 : vector<2x32xf32>
    %1232 = vector.extract_strided_slice %1217 {offsets = [0, 96], sizes = [2, 32], strides = [1, 1]} : vector<2x128xf32> to vector<2x32xf32>
    %1233 = arith.negf %1232 : vector<2x32xf32>
    %1234 = math.exp %1233 : vector<2x32xf32>
    %cst_214 = arith.constant 1.000000e+00 : f32
    %1235 = vector.broadcast %cst_214 : f32 to vector<2x32xf32>
    %1236 = arith.addf %1235, %1234 : vector<2x32xf32>
    %1237 = arith.divf %1235, %1236 : vector<2x32xf32>
    %1238 = arith.mulf %1229, %1181 : vector<2x32xf32>
    %1239 = arith.mulf %1223, %1231 : vector<2x32xf32>
    %1240 = arith.addf %1238, %1239 : vector<2x32xf32>
    %1241 = math.tanh %1240 : vector<2x32xf32>
    %1242 = arith.mulf %1237, %1241 : vector<2x32xf32>
    %c21_i32 = arith.constant 21 : i32
    %1243 = arith.index_cast %c21_i32 : i32 to index
    %c0_215 = arith.constant 0 : index
    %c0_216 = arith.constant 0 : index
    %1244 = vector.load %arg1[%1243, %c0_215, %c0_216] : memref<28x2x128xf32, #tpu.memory_space<vmem>>, vector<1x2x128xf32>
    %1245 = vector.shape_cast %1244 : vector<1x2x128xf32> to vector<2x128xf32>
    %cst_217 = arith.constant dense<0.000000e+00> : vector<2x128xf32>
    %1246 = tpu.matmul %1213, %0, %cst_217 {dimension_numbers = #tpu.dot_dimension_numbers<[1], [0], [0], [1], [0, 0, 1, 1], [], []>} : vector<2x32xf32>, vector<32x128xf32>, vector<2x128xf32> -> vector<2x128xf32>
    %1247 = arith.addf %1245, %1246 : vector<2x128xf32>
    %1248 = vector.extract_strided_slice %1247 {offsets = [0, 0], sizes = [2, 32], strides = [1, 1]} : vector<2x128xf32> to vector<2x32xf32>
    %1249 = arith.negf %1248 : vector<2x32xf32>
    %1250 = math.exp %1249 : vector<2x32xf32>
    %cst_218 = arith.constant 1.000000e+00 : f32
    %1251 = vector.broadcast %cst_218 : f32 to vector<2x32xf32>
    %1252 = arith.addf %1251, %1250 : vector<2x32xf32>
    %1253 = arith.divf %1251, %1252 : vector<2x32xf32>
    %1254 = vector.extract_strided_slice %1247 {offsets = [0, 32], sizes = [2, 32], strides = [1, 1]} : vector<2x128xf32> to vector<2x32xf32>
    %1255 = arith.negf %1254 : vector<2x32xf32>
    %1256 = math.exp %1255 : vector<2x32xf32>
    %cst_219 = arith.constant 1.000000e+00 : f32
    %1257 = vector.broadcast %cst_219 : f32 to vector<2x32xf32>
    %1258 = arith.addf %1257, %1256 : vector<2x32xf32>
    %1259 = arith.divf %1257, %1258 : vector<2x32xf32>
    %1260 = vector.extract_strided_slice %1247 {offsets = [0, 64], sizes = [2, 32], strides = [1, 1]} : vector<2x128xf32> to vector<2x32xf32>
    %1261 = math.tanh %1260 : vector<2x32xf32>
    %1262 = vector.extract_strided_slice %1247 {offsets = [0, 96], sizes = [2, 32], strides = [1, 1]} : vector<2x128xf32> to vector<2x32xf32>
    %1263 = arith.negf %1262 : vector<2x32xf32>
    %1264 = math.exp %1263 : vector<2x32xf32>
    %cst_220 = arith.constant 1.000000e+00 : f32
    %1265 = vector.broadcast %cst_220 : f32 to vector<2x32xf32>
    %1266 = arith.addf %1265, %1264 : vector<2x32xf32>
    %1267 = arith.divf %1265, %1266 : vector<2x32xf32>
    %1268 = arith.mulf %1259, %1211 : vector<2x32xf32>
    %1269 = arith.mulf %1253, %1261 : vector<2x32xf32>
    %1270 = arith.addf %1268, %1269 : vector<2x32xf32>
    %1271 = math.tanh %1270 : vector<2x32xf32>
    %1272 = arith.mulf %1267, %1271 : vector<2x32xf32>
    %1273 = tpu.concatenate %1272, %1242 in 1 : vector<2x32xf32>, vector<2x32xf32> -> vector<2x64xf32>
    %cst_221 = arith.constant dense<0.000000e+00> : vector<2x128xf32>
    %1274 = tpu.matmul %1273, %1, %cst_221 {dimension_numbers = #tpu.dot_dimension_numbers<[1], [0], [0], [1], [0, 0, 1, 1], [], []>} : vector<2x64xf32>, vector<64x128xf32>, vector<2x128xf32> -> vector<2x128xf32>
    %1275 = vector.broadcast %2 : vector<1x128xf32> to vector<2x128xf32>
    %1276 = arith.addf %1274, %1275 : vector<2x128xf32>
    %1277 = vector.extract_strided_slice %1276 {offsets = [0, 0], sizes = [2, 32], strides = [1, 1]} : vector<2x128xf32> to vector<2x32xf32>
    %1278 = arith.negf %1277 : vector<2x32xf32>
    %1279 = math.exp %1278 : vector<2x32xf32>
    %cst_222 = arith.constant 1.000000e+00 : f32
    %1280 = vector.broadcast %cst_222 : f32 to vector<2x32xf32>
    %1281 = arith.addf %1280, %1279 : vector<2x32xf32>
    %1282 = arith.divf %1280, %1281 : vector<2x32xf32>
    %1283 = vector.extract_strided_slice %1276 {offsets = [0, 32], sizes = [2, 32], strides = [1, 1]} : vector<2x128xf32> to vector<2x32xf32>
    %1284 = arith.negf %1283 : vector<2x32xf32>
    %1285 = math.exp %1284 : vector<2x32xf32>
    %cst_223 = arith.constant 1.000000e+00 : f32
    %1286 = vector.broadcast %cst_223 : f32 to vector<2x32xf32>
    %1287 = arith.addf %1286, %1285 : vector<2x32xf32>
    %1288 = arith.divf %1286, %1287 : vector<2x32xf32>
    %1289 = vector.extract_strided_slice %1276 {offsets = [0, 64], sizes = [2, 32], strides = [1, 1]} : vector<2x128xf32> to vector<2x32xf32>
    %1290 = math.tanh %1289 : vector<2x32xf32>
    %1291 = vector.extract_strided_slice %1276 {offsets = [0, 96], sizes = [2, 32], strides = [1, 1]} : vector<2x128xf32> to vector<2x32xf32>
    %1292 = arith.negf %1291 : vector<2x32xf32>
    %1293 = math.exp %1292 : vector<2x32xf32>
    %cst_224 = arith.constant 1.000000e+00 : f32
    %1294 = vector.broadcast %cst_224 : f32 to vector<2x32xf32>
    %1295 = arith.addf %1294, %1293 : vector<2x32xf32>
    %1296 = arith.divf %1294, %1295 : vector<2x32xf32>
    %1297 = arith.mulf %1288, %1240 : vector<2x32xf32>
    %1298 = arith.mulf %1282, %1290 : vector<2x32xf32>
    %1299 = arith.addf %1297, %1298 : vector<2x32xf32>
    %1300 = math.tanh %1299 : vector<2x32xf32>
    %1301 = arith.mulf %1296, %1300 : vector<2x32xf32>
    %c22_i32 = arith.constant 22 : i32
    %1302 = arith.index_cast %c22_i32 : i32 to index
    %c0_225 = arith.constant 0 : index
    %c0_226 = arith.constant 0 : index
    %1303 = vector.load %arg1[%1302, %c0_225, %c0_226] : memref<28x2x128xf32, #tpu.memory_space<vmem>>, vector<1x2x128xf32>
    %1304 = vector.shape_cast %1303 : vector<1x2x128xf32> to vector<2x128xf32>
    %cst_227 = arith.constant dense<0.000000e+00> : vector<2x128xf32>
    %1305 = tpu.matmul %1272, %0, %cst_227 {dimension_numbers = #tpu.dot_dimension_numbers<[1], [0], [0], [1], [0, 0, 1, 1], [], []>} : vector<2x32xf32>, vector<32x128xf32>, vector<2x128xf32> -> vector<2x128xf32>
    %1306 = arith.addf %1304, %1305 : vector<2x128xf32>
    %1307 = vector.extract_strided_slice %1306 {offsets = [0, 0], sizes = [2, 32], strides = [1, 1]} : vector<2x128xf32> to vector<2x32xf32>
    %1308 = arith.negf %1307 : vector<2x32xf32>
    %1309 = math.exp %1308 : vector<2x32xf32>
    %cst_228 = arith.constant 1.000000e+00 : f32
    %1310 = vector.broadcast %cst_228 : f32 to vector<2x32xf32>
    %1311 = arith.addf %1310, %1309 : vector<2x32xf32>
    %1312 = arith.divf %1310, %1311 : vector<2x32xf32>
    %1313 = vector.extract_strided_slice %1306 {offsets = [0, 32], sizes = [2, 32], strides = [1, 1]} : vector<2x128xf32> to vector<2x32xf32>
    %1314 = arith.negf %1313 : vector<2x32xf32>
    %1315 = math.exp %1314 : vector<2x32xf32>
    %cst_229 = arith.constant 1.000000e+00 : f32
    %1316 = vector.broadcast %cst_229 : f32 to vector<2x32xf32>
    %1317 = arith.addf %1316, %1315 : vector<2x32xf32>
    %1318 = arith.divf %1316, %1317 : vector<2x32xf32>
    %1319 = vector.extract_strided_slice %1306 {offsets = [0, 64], sizes = [2, 32], strides = [1, 1]} : vector<2x128xf32> to vector<2x32xf32>
    %1320 = math.tanh %1319 : vector<2x32xf32>
    %1321 = vector.extract_strided_slice %1306 {offsets = [0, 96], sizes = [2, 32], strides = [1, 1]} : vector<2x128xf32> to vector<2x32xf32>
    %1322 = arith.negf %1321 : vector<2x32xf32>
    %1323 = math.exp %1322 : vector<2x32xf32>
    %cst_230 = arith.constant 1.000000e+00 : f32
    %1324 = vector.broadcast %cst_230 : f32 to vector<2x32xf32>
    %1325 = arith.addf %1324, %1323 : vector<2x32xf32>
    %1326 = arith.divf %1324, %1325 : vector<2x32xf32>
    %1327 = arith.mulf %1318, %1270 : vector<2x32xf32>
    %1328 = arith.mulf %1312, %1320 : vector<2x32xf32>
    %1329 = arith.addf %1327, %1328 : vector<2x32xf32>
    %1330 = math.tanh %1329 : vector<2x32xf32>
    %1331 = arith.mulf %1326, %1330 : vector<2x32xf32>
    %1332 = tpu.concatenate %1331, %1301 in 1 : vector<2x32xf32>, vector<2x32xf32> -> vector<2x64xf32>
    %cst_231 = arith.constant dense<0.000000e+00> : vector<2x128xf32>
    %1333 = tpu.matmul %1332, %1, %cst_231 {dimension_numbers = #tpu.dot_dimension_numbers<[1], [0], [0], [1], [0, 0, 1, 1], [], []>} : vector<2x64xf32>, vector<64x128xf32>, vector<2x128xf32> -> vector<2x128xf32>
    %1334 = vector.broadcast %2 : vector<1x128xf32> to vector<2x128xf32>
    %1335 = arith.addf %1333, %1334 : vector<2x128xf32>
    %1336 = vector.extract_strided_slice %1335 {offsets = [0, 0], sizes = [2, 32], strides = [1, 1]} : vector<2x128xf32> to vector<2x32xf32>
    %1337 = arith.negf %1336 : vector<2x32xf32>
    %1338 = math.exp %1337 : vector<2x32xf32>
    %cst_232 = arith.constant 1.000000e+00 : f32
    %1339 = vector.broadcast %cst_232 : f32 to vector<2x32xf32>
    %1340 = arith.addf %1339, %1338 : vector<2x32xf32>
    %1341 = arith.divf %1339, %1340 : vector<2x32xf32>
    %1342 = vector.extract_strided_slice %1335 {offsets = [0, 32], sizes = [2, 32], strides = [1, 1]} : vector<2x128xf32> to vector<2x32xf32>
    %1343 = arith.negf %1342 : vector<2x32xf32>
    %1344 = math.exp %1343 : vector<2x32xf32>
    %cst_233 = arith.constant 1.000000e+00 : f32
    %1345 = vector.broadcast %cst_233 : f32 to vector<2x32xf32>
    %1346 = arith.addf %1345, %1344 : vector<2x32xf32>
    %1347 = arith.divf %1345, %1346 : vector<2x32xf32>
    %1348 = vector.extract_strided_slice %1335 {offsets = [0, 64], sizes = [2, 32], strides = [1, 1]} : vector<2x128xf32> to vector<2x32xf32>
    %1349 = math.tanh %1348 : vector<2x32xf32>
    %1350 = vector.extract_strided_slice %1335 {offsets = [0, 96], sizes = [2, 32], strides = [1, 1]} : vector<2x128xf32> to vector<2x32xf32>
    %1351 = arith.negf %1350 : vector<2x32xf32>
    %1352 = math.exp %1351 : vector<2x32xf32>
    %cst_234 = arith.constant 1.000000e+00 : f32
    %1353 = vector.broadcast %cst_234 : f32 to vector<2x32xf32>
    %1354 = arith.addf %1353, %1352 : vector<2x32xf32>
    %1355 = arith.divf %1353, %1354 : vector<2x32xf32>
    %1356 = arith.mulf %1347, %1299 : vector<2x32xf32>
    %1357 = arith.mulf %1341, %1349 : vector<2x32xf32>
    %1358 = arith.addf %1356, %1357 : vector<2x32xf32>
    %1359 = math.tanh %1358 : vector<2x32xf32>
    %1360 = arith.mulf %1355, %1359 : vector<2x32xf32>
    %c23_i32 = arith.constant 23 : i32
    %1361 = arith.index_cast %c23_i32 : i32 to index
    %c0_235 = arith.constant 0 : index
    %c0_236 = arith.constant 0 : index
    %1362 = vector.load %arg1[%1361, %c0_235, %c0_236] : memref<28x2x128xf32, #tpu.memory_space<vmem>>, vector<1x2x128xf32>
    %1363 = vector.shape_cast %1362 : vector<1x2x128xf32> to vector<2x128xf32>
    %cst_237 = arith.constant dense<0.000000e+00> : vector<2x128xf32>
    %1364 = tpu.matmul %1331, %0, %cst_237 {dimension_numbers = #tpu.dot_dimension_numbers<[1], [0], [0], [1], [0, 0, 1, 1], [], []>} : vector<2x32xf32>, vector<32x128xf32>, vector<2x128xf32> -> vector<2x128xf32>
    %1365 = arith.addf %1363, %1364 : vector<2x128xf32>
    %1366 = vector.extract_strided_slice %1365 {offsets = [0, 0], sizes = [2, 32], strides = [1, 1]} : vector<2x128xf32> to vector<2x32xf32>
    %1367 = arith.negf %1366 : vector<2x32xf32>
    %1368 = math.exp %1367 : vector<2x32xf32>
    %cst_238 = arith.constant 1.000000e+00 : f32
    %1369 = vector.broadcast %cst_238 : f32 to vector<2x32xf32>
    %1370 = arith.addf %1369, %1368 : vector<2x32xf32>
    %1371 = arith.divf %1369, %1370 : vector<2x32xf32>
    %1372 = vector.extract_strided_slice %1365 {offsets = [0, 32], sizes = [2, 32], strides = [1, 1]} : vector<2x128xf32> to vector<2x32xf32>
    %1373 = arith.negf %1372 : vector<2x32xf32>
    %1374 = math.exp %1373 : vector<2x32xf32>
    %cst_239 = arith.constant 1.000000e+00 : f32
    %1375 = vector.broadcast %cst_239 : f32 to vector<2x32xf32>
    %1376 = arith.addf %1375, %1374 : vector<2x32xf32>
    %1377 = arith.divf %1375, %1376 : vector<2x32xf32>
    %1378 = vector.extract_strided_slice %1365 {offsets = [0, 64], sizes = [2, 32], strides = [1, 1]} : vector<2x128xf32> to vector<2x32xf32>
    %1379 = math.tanh %1378 : vector<2x32xf32>
    %1380 = vector.extract_strided_slice %1365 {offsets = [0, 96], sizes = [2, 32], strides = [1, 1]} : vector<2x128xf32> to vector<2x32xf32>
    %1381 = arith.negf %1380 : vector<2x32xf32>
    %1382 = math.exp %1381 : vector<2x32xf32>
    %cst_240 = arith.constant 1.000000e+00 : f32
    %1383 = vector.broadcast %cst_240 : f32 to vector<2x32xf32>
    %1384 = arith.addf %1383, %1382 : vector<2x32xf32>
    %1385 = arith.divf %1383, %1384 : vector<2x32xf32>
    %1386 = arith.mulf %1377, %1329 : vector<2x32xf32>
    %1387 = arith.mulf %1371, %1379 : vector<2x32xf32>
    %1388 = arith.addf %1386, %1387 : vector<2x32xf32>
    %1389 = math.tanh %1388 : vector<2x32xf32>
    %1390 = arith.mulf %1385, %1389 : vector<2x32xf32>
    %1391 = tpu.concatenate %1390, %1360 in 1 : vector<2x32xf32>, vector<2x32xf32> -> vector<2x64xf32>
    %cst_241 = arith.constant dense<0.000000e+00> : vector<2x128xf32>
    %1392 = tpu.matmul %1391, %1, %cst_241 {dimension_numbers = #tpu.dot_dimension_numbers<[1], [0], [0], [1], [0, 0, 1, 1], [], []>} : vector<2x64xf32>, vector<64x128xf32>, vector<2x128xf32> -> vector<2x128xf32>
    %1393 = vector.broadcast %2 : vector<1x128xf32> to vector<2x128xf32>
    %1394 = arith.addf %1392, %1393 : vector<2x128xf32>
    %1395 = vector.extract_strided_slice %1394 {offsets = [0, 0], sizes = [2, 32], strides = [1, 1]} : vector<2x128xf32> to vector<2x32xf32>
    %1396 = arith.negf %1395 : vector<2x32xf32>
    %1397 = math.exp %1396 : vector<2x32xf32>
    %cst_242 = arith.constant 1.000000e+00 : f32
    %1398 = vector.broadcast %cst_242 : f32 to vector<2x32xf32>
    %1399 = arith.addf %1398, %1397 : vector<2x32xf32>
    %1400 = arith.divf %1398, %1399 : vector<2x32xf32>
    %1401 = vector.extract_strided_slice %1394 {offsets = [0, 32], sizes = [2, 32], strides = [1, 1]} : vector<2x128xf32> to vector<2x32xf32>
    %1402 = arith.negf %1401 : vector<2x32xf32>
    %1403 = math.exp %1402 : vector<2x32xf32>
    %cst_243 = arith.constant 1.000000e+00 : f32
    %1404 = vector.broadcast %cst_243 : f32 to vector<2x32xf32>
    %1405 = arith.addf %1404, %1403 : vector<2x32xf32>
    %1406 = arith.divf %1404, %1405 : vector<2x32xf32>
    %1407 = vector.extract_strided_slice %1394 {offsets = [0, 64], sizes = [2, 32], strides = [1, 1]} : vector<2x128xf32> to vector<2x32xf32>
    %1408 = math.tanh %1407 : vector<2x32xf32>
    %1409 = vector.extract_strided_slice %1394 {offsets = [0, 96], sizes = [2, 32], strides = [1, 1]} : vector<2x128xf32> to vector<2x32xf32>
    %1410 = arith.negf %1409 : vector<2x32xf32>
    %1411 = math.exp %1410 : vector<2x32xf32>
    %cst_244 = arith.constant 1.000000e+00 : f32
    %1412 = vector.broadcast %cst_244 : f32 to vector<2x32xf32>
    %1413 = arith.addf %1412, %1411 : vector<2x32xf32>
    %1414 = arith.divf %1412, %1413 : vector<2x32xf32>
    %1415 = arith.mulf %1406, %1358 : vector<2x32xf32>
    %1416 = arith.mulf %1400, %1408 : vector<2x32xf32>
    %1417 = arith.addf %1415, %1416 : vector<2x32xf32>
    %1418 = math.tanh %1417 : vector<2x32xf32>
    %1419 = arith.mulf %1414, %1418 : vector<2x32xf32>
    %c24_i32 = arith.constant 24 : i32
    %1420 = arith.index_cast %c24_i32 : i32 to index
    %c0_245 = arith.constant 0 : index
    %c0_246 = arith.constant 0 : index
    %1421 = vector.load %arg1[%1420, %c0_245, %c0_246] : memref<28x2x128xf32, #tpu.memory_space<vmem>>, vector<1x2x128xf32>
    %1422 = vector.shape_cast %1421 : vector<1x2x128xf32> to vector<2x128xf32>
    %cst_247 = arith.constant dense<0.000000e+00> : vector<2x128xf32>
    %1423 = tpu.matmul %1390, %0, %cst_247 {dimension_numbers = #tpu.dot_dimension_numbers<[1], [0], [0], [1], [0, 0, 1, 1], [], []>} : vector<2x32xf32>, vector<32x128xf32>, vector<2x128xf32> -> vector<2x128xf32>
    %1424 = arith.addf %1422, %1423 : vector<2x128xf32>
    %1425 = vector.extract_strided_slice %1424 {offsets = [0, 0], sizes = [2, 32], strides = [1, 1]} : vector<2x128xf32> to vector<2x32xf32>
    %1426 = arith.negf %1425 : vector<2x32xf32>
    %1427 = math.exp %1426 : vector<2x32xf32>
    %cst_248 = arith.constant 1.000000e+00 : f32
    %1428 = vector.broadcast %cst_248 : f32 to vector<2x32xf32>
    %1429 = arith.addf %1428, %1427 : vector<2x32xf32>
    %1430 = arith.divf %1428, %1429 : vector<2x32xf32>
    %1431 = vector.extract_strided_slice %1424 {offsets = [0, 32], sizes = [2, 32], strides = [1, 1]} : vector<2x128xf32> to vector<2x32xf32>
    %1432 = arith.negf %1431 : vector<2x32xf32>
    %1433 = math.exp %1432 : vector<2x32xf32>
    %cst_249 = arith.constant 1.000000e+00 : f32
    %1434 = vector.broadcast %cst_249 : f32 to vector<2x32xf32>
    %1435 = arith.addf %1434, %1433 : vector<2x32xf32>
    %1436 = arith.divf %1434, %1435 : vector<2x32xf32>
    %1437 = vector.extract_strided_slice %1424 {offsets = [0, 64], sizes = [2, 32], strides = [1, 1]} : vector<2x128xf32> to vector<2x32xf32>
    %1438 = math.tanh %1437 : vector<2x32xf32>
    %1439 = vector.extract_strided_slice %1424 {offsets = [0, 96], sizes = [2, 32], strides = [1, 1]} : vector<2x128xf32> to vector<2x32xf32>
    %1440 = arith.negf %1439 : vector<2x32xf32>
    %1441 = math.exp %1440 : vector<2x32xf32>
    %cst_250 = arith.constant 1.000000e+00 : f32
    %1442 = vector.broadcast %cst_250 : f32 to vector<2x32xf32>
    %1443 = arith.addf %1442, %1441 : vector<2x32xf32>
    %1444 = arith.divf %1442, %1443 : vector<2x32xf32>
    %1445 = arith.mulf %1436, %1388 : vector<2x32xf32>
    %1446 = arith.mulf %1430, %1438 : vector<2x32xf32>
    %1447 = arith.addf %1445, %1446 : vector<2x32xf32>
    %1448 = math.tanh %1447 : vector<2x32xf32>
    %1449 = arith.mulf %1444, %1448 : vector<2x32xf32>
    %1450 = tpu.concatenate %1449, %1419 in 1 : vector<2x32xf32>, vector<2x32xf32> -> vector<2x64xf32>
    %cst_251 = arith.constant dense<0.000000e+00> : vector<2x128xf32>
    %1451 = tpu.matmul %1450, %1, %cst_251 {dimension_numbers = #tpu.dot_dimension_numbers<[1], [0], [0], [1], [0, 0, 1, 1], [], []>} : vector<2x64xf32>, vector<64x128xf32>, vector<2x128xf32> -> vector<2x128xf32>
    %1452 = vector.broadcast %2 : vector<1x128xf32> to vector<2x128xf32>
    %1453 = arith.addf %1451, %1452 : vector<2x128xf32>
    %1454 = vector.extract_strided_slice %1453 {offsets = [0, 0], sizes = [2, 32], strides = [1, 1]} : vector<2x128xf32> to vector<2x32xf32>
    %1455 = arith.negf %1454 : vector<2x32xf32>
    %1456 = math.exp %1455 : vector<2x32xf32>
    %cst_252 = arith.constant 1.000000e+00 : f32
    %1457 = vector.broadcast %cst_252 : f32 to vector<2x32xf32>
    %1458 = arith.addf %1457, %1456 : vector<2x32xf32>
    %1459 = arith.divf %1457, %1458 : vector<2x32xf32>
    %1460 = vector.extract_strided_slice %1453 {offsets = [0, 32], sizes = [2, 32], strides = [1, 1]} : vector<2x128xf32> to vector<2x32xf32>
    %1461 = arith.negf %1460 : vector<2x32xf32>
    %1462 = math.exp %1461 : vector<2x32xf32>
    %cst_253 = arith.constant 1.000000e+00 : f32
    %1463 = vector.broadcast %cst_253 : f32 to vector<2x32xf32>
    %1464 = arith.addf %1463, %1462 : vector<2x32xf32>
    %1465 = arith.divf %1463, %1464 : vector<2x32xf32>
    %1466 = vector.extract_strided_slice %1453 {offsets = [0, 64], sizes = [2, 32], strides = [1, 1]} : vector<2x128xf32> to vector<2x32xf32>
    %1467 = math.tanh %1466 : vector<2x32xf32>
    %1468 = vector.extract_strided_slice %1453 {offsets = [0, 96], sizes = [2, 32], strides = [1, 1]} : vector<2x128xf32> to vector<2x32xf32>
    %1469 = arith.negf %1468 : vector<2x32xf32>
    %1470 = math.exp %1469 : vector<2x32xf32>
    %cst_254 = arith.constant 1.000000e+00 : f32
    %1471 = vector.broadcast %cst_254 : f32 to vector<2x32xf32>
    %1472 = arith.addf %1471, %1470 : vector<2x32xf32>
    %1473 = arith.divf %1471, %1472 : vector<2x32xf32>
    %1474 = arith.mulf %1465, %1417 : vector<2x32xf32>
    %1475 = arith.mulf %1459, %1467 : vector<2x32xf32>
    %1476 = arith.addf %1474, %1475 : vector<2x32xf32>
    %1477 = math.tanh %1476 : vector<2x32xf32>
    %1478 = arith.mulf %1473, %1477 : vector<2x32xf32>
    %c25_i32 = arith.constant 25 : i32
    %1479 = arith.index_cast %c25_i32 : i32 to index
    %c0_255 = arith.constant 0 : index
    %c0_256 = arith.constant 0 : index
    %1480 = vector.load %arg1[%1479, %c0_255, %c0_256] : memref<28x2x128xf32, #tpu.memory_space<vmem>>, vector<1x2x128xf32>
    %1481 = vector.shape_cast %1480 : vector<1x2x128xf32> to vector<2x128xf32>
    %cst_257 = arith.constant dense<0.000000e+00> : vector<2x128xf32>
    %1482 = tpu.matmul %1449, %0, %cst_257 {dimension_numbers = #tpu.dot_dimension_numbers<[1], [0], [0], [1], [0, 0, 1, 1], [], []>} : vector<2x32xf32>, vector<32x128xf32>, vector<2x128xf32> -> vector<2x128xf32>
    %1483 = arith.addf %1481, %1482 : vector<2x128xf32>
    %1484 = vector.extract_strided_slice %1483 {offsets = [0, 0], sizes = [2, 32], strides = [1, 1]} : vector<2x128xf32> to vector<2x32xf32>
    %1485 = arith.negf %1484 : vector<2x32xf32>
    %1486 = math.exp %1485 : vector<2x32xf32>
    %cst_258 = arith.constant 1.000000e+00 : f32
    %1487 = vector.broadcast %cst_258 : f32 to vector<2x32xf32>
    %1488 = arith.addf %1487, %1486 : vector<2x32xf32>
    %1489 = arith.divf %1487, %1488 : vector<2x32xf32>
    %1490 = vector.extract_strided_slice %1483 {offsets = [0, 32], sizes = [2, 32], strides = [1, 1]} : vector<2x128xf32> to vector<2x32xf32>
    %1491 = arith.negf %1490 : vector<2x32xf32>
    %1492 = math.exp %1491 : vector<2x32xf32>
    %cst_259 = arith.constant 1.000000e+00 : f32
    %1493 = vector.broadcast %cst_259 : f32 to vector<2x32xf32>
    %1494 = arith.addf %1493, %1492 : vector<2x32xf32>
    %1495 = arith.divf %1493, %1494 : vector<2x32xf32>
    %1496 = vector.extract_strided_slice %1483 {offsets = [0, 64], sizes = [2, 32], strides = [1, 1]} : vector<2x128xf32> to vector<2x32xf32>
    %1497 = math.tanh %1496 : vector<2x32xf32>
    %1498 = vector.extract_strided_slice %1483 {offsets = [0, 96], sizes = [2, 32], strides = [1, 1]} : vector<2x128xf32> to vector<2x32xf32>
    %1499 = arith.negf %1498 : vector<2x32xf32>
    %1500 = math.exp %1499 : vector<2x32xf32>
    %cst_260 = arith.constant 1.000000e+00 : f32
    %1501 = vector.broadcast %cst_260 : f32 to vector<2x32xf32>
    %1502 = arith.addf %1501, %1500 : vector<2x32xf32>
    %1503 = arith.divf %1501, %1502 : vector<2x32xf32>
    %1504 = arith.mulf %1495, %1447 : vector<2x32xf32>
    %1505 = arith.mulf %1489, %1497 : vector<2x32xf32>
    %1506 = arith.addf %1504, %1505 : vector<2x32xf32>
    %1507 = math.tanh %1506 : vector<2x32xf32>
    %1508 = arith.mulf %1503, %1507 : vector<2x32xf32>
    %1509 = tpu.concatenate %1508, %1478 in 1 : vector<2x32xf32>, vector<2x32xf32> -> vector<2x64xf32>
    %cst_261 = arith.constant dense<0.000000e+00> : vector<2x128xf32>
    %1510 = tpu.matmul %1509, %1, %cst_261 {dimension_numbers = #tpu.dot_dimension_numbers<[1], [0], [0], [1], [0, 0, 1, 1], [], []>} : vector<2x64xf32>, vector<64x128xf32>, vector<2x128xf32> -> vector<2x128xf32>
    %1511 = vector.broadcast %2 : vector<1x128xf32> to vector<2x128xf32>
    %1512 = arith.addf %1510, %1511 : vector<2x128xf32>
    %1513 = vector.extract_strided_slice %1512 {offsets = [0, 0], sizes = [2, 32], strides = [1, 1]} : vector<2x128xf32> to vector<2x32xf32>
    %1514 = arith.negf %1513 : vector<2x32xf32>
    %1515 = math.exp %1514 : vector<2x32xf32>
    %cst_262 = arith.constant 1.000000e+00 : f32
    %1516 = vector.broadcast %cst_262 : f32 to vector<2x32xf32>
    %1517 = arith.addf %1516, %1515 : vector<2x32xf32>
    %1518 = arith.divf %1516, %1517 : vector<2x32xf32>
    %1519 = vector.extract_strided_slice %1512 {offsets = [0, 32], sizes = [2, 32], strides = [1, 1]} : vector<2x128xf32> to vector<2x32xf32>
    %1520 = arith.negf %1519 : vector<2x32xf32>
    %1521 = math.exp %1520 : vector<2x32xf32>
    %cst_263 = arith.constant 1.000000e+00 : f32
    %1522 = vector.broadcast %cst_263 : f32 to vector<2x32xf32>
    %1523 = arith.addf %1522, %1521 : vector<2x32xf32>
    %1524 = arith.divf %1522, %1523 : vector<2x32xf32>
    %1525 = vector.extract_strided_slice %1512 {offsets = [0, 64], sizes = [2, 32], strides = [1, 1]} : vector<2x128xf32> to vector<2x32xf32>
    %1526 = math.tanh %1525 : vector<2x32xf32>
    %1527 = vector.extract_strided_slice %1512 {offsets = [0, 96], sizes = [2, 32], strides = [1, 1]} : vector<2x128xf32> to vector<2x32xf32>
    %1528 = arith.negf %1527 : vector<2x32xf32>
    %1529 = math.exp %1528 : vector<2x32xf32>
    %cst_264 = arith.constant 1.000000e+00 : f32
    %1530 = vector.broadcast %cst_264 : f32 to vector<2x32xf32>
    %1531 = arith.addf %1530, %1529 : vector<2x32xf32>
    %1532 = arith.divf %1530, %1531 : vector<2x32xf32>
    %1533 = arith.mulf %1524, %1476 : vector<2x32xf32>
    %1534 = arith.mulf %1518, %1526 : vector<2x32xf32>
    %1535 = arith.addf %1533, %1534 : vector<2x32xf32>
    %1536 = math.tanh %1535 : vector<2x32xf32>
    %1537 = arith.mulf %1532, %1536 : vector<2x32xf32>
    %c26_i32 = arith.constant 26 : i32
    %1538 = arith.index_cast %c26_i32 : i32 to index
    %c0_265 = arith.constant 0 : index
    %c0_266 = arith.constant 0 : index
    %1539 = vector.load %arg1[%1538, %c0_265, %c0_266] : memref<28x2x128xf32, #tpu.memory_space<vmem>>, vector<1x2x128xf32>
    %1540 = vector.shape_cast %1539 : vector<1x2x128xf32> to vector<2x128xf32>
    %cst_267 = arith.constant dense<0.000000e+00> : vector<2x128xf32>
    %1541 = tpu.matmul %1508, %0, %cst_267 {dimension_numbers = #tpu.dot_dimension_numbers<[1], [0], [0], [1], [0, 0, 1, 1], [], []>} : vector<2x32xf32>, vector<32x128xf32>, vector<2x128xf32> -> vector<2x128xf32>
    %1542 = arith.addf %1540, %1541 : vector<2x128xf32>
    %1543 = vector.extract_strided_slice %1542 {offsets = [0, 0], sizes = [2, 32], strides = [1, 1]} : vector<2x128xf32> to vector<2x32xf32>
    %1544 = arith.negf %1543 : vector<2x32xf32>
    %1545 = math.exp %1544 : vector<2x32xf32>
    %cst_268 = arith.constant 1.000000e+00 : f32
    %1546 = vector.broadcast %cst_268 : f32 to vector<2x32xf32>
    %1547 = arith.addf %1546, %1545 : vector<2x32xf32>
    %1548 = arith.divf %1546, %1547 : vector<2x32xf32>
    %1549 = vector.extract_strided_slice %1542 {offsets = [0, 32], sizes = [2, 32], strides = [1, 1]} : vector<2x128xf32> to vector<2x32xf32>
    %1550 = arith.negf %1549 : vector<2x32xf32>
    %1551 = math.exp %1550 : vector<2x32xf32>
    %cst_269 = arith.constant 1.000000e+00 : f32
    %1552 = vector.broadcast %cst_269 : f32 to vector<2x32xf32>
    %1553 = arith.addf %1552, %1551 : vector<2x32xf32>
    %1554 = arith.divf %1552, %1553 : vector<2x32xf32>
    %1555 = vector.extract_strided_slice %1542 {offsets = [0, 64], sizes = [2, 32], strides = [1, 1]} : vector<2x128xf32> to vector<2x32xf32>
    %1556 = math.tanh %1555 : vector<2x32xf32>
    %1557 = vector.extract_strided_slice %1542 {offsets = [0, 96], sizes = [2, 32], strides = [1, 1]} : vector<2x128xf32> to vector<2x32xf32>
    %1558 = arith.negf %1557 : vector<2x32xf32>
    %1559 = math.exp %1558 : vector<2x32xf32>
    %cst_270 = arith.constant 1.000000e+00 : f32
    %1560 = vector.broadcast %cst_270 : f32 to vector<2x32xf32>
    %1561 = arith.addf %1560, %1559 : vector<2x32xf32>
    %1562 = arith.divf %1560, %1561 : vector<2x32xf32>
    %1563 = arith.mulf %1554, %1506 : vector<2x32xf32>
    %1564 = arith.mulf %1548, %1556 : vector<2x32xf32>
    %1565 = arith.addf %1563, %1564 : vector<2x32xf32>
    %1566 = math.tanh %1565 : vector<2x32xf32>
    %1567 = arith.mulf %1562, %1566 : vector<2x32xf32>
    %1568 = tpu.concatenate %1567, %1537 in 1 : vector<2x32xf32>, vector<2x32xf32> -> vector<2x64xf32>
    %cst_271 = arith.constant dense<0.000000e+00> : vector<2x128xf32>
    %1569 = tpu.matmul %1568, %1, %cst_271 {dimension_numbers = #tpu.dot_dimension_numbers<[1], [0], [0], [1], [0, 0, 1, 1], [], []>} : vector<2x64xf32>, vector<64x128xf32>, vector<2x128xf32> -> vector<2x128xf32>
    %1570 = vector.broadcast %2 : vector<1x128xf32> to vector<2x128xf32>
    %1571 = arith.addf %1569, %1570 : vector<2x128xf32>
    %1572 = vector.extract_strided_slice %1571 {offsets = [0, 0], sizes = [2, 32], strides = [1, 1]} : vector<2x128xf32> to vector<2x32xf32>
    %1573 = arith.negf %1572 : vector<2x32xf32>
    %1574 = math.exp %1573 : vector<2x32xf32>
    %cst_272 = arith.constant 1.000000e+00 : f32
    %1575 = vector.broadcast %cst_272 : f32 to vector<2x32xf32>
    %1576 = arith.addf %1575, %1574 : vector<2x32xf32>
    %1577 = arith.divf %1575, %1576 : vector<2x32xf32>
    %1578 = vector.extract_strided_slice %1571 {offsets = [0, 32], sizes = [2, 32], strides = [1, 1]} : vector<2x128xf32> to vector<2x32xf32>
    %1579 = arith.negf %1578 : vector<2x32xf32>
    %1580 = math.exp %1579 : vector<2x32xf32>
    %cst_273 = arith.constant 1.000000e+00 : f32
    %1581 = vector.broadcast %cst_273 : f32 to vector<2x32xf32>
    %1582 = arith.addf %1581, %1580 : vector<2x32xf32>
    %1583 = arith.divf %1581, %1582 : vector<2x32xf32>
    %1584 = vector.extract_strided_slice %1571 {offsets = [0, 64], sizes = [2, 32], strides = [1, 1]} : vector<2x128xf32> to vector<2x32xf32>
    %1585 = math.tanh %1584 : vector<2x32xf32>
    %1586 = vector.extract_strided_slice %1571 {offsets = [0, 96], sizes = [2, 32], strides = [1, 1]} : vector<2x128xf32> to vector<2x32xf32>
    %1587 = arith.negf %1586 : vector<2x32xf32>
    %1588 = math.exp %1587 : vector<2x32xf32>
    %cst_274 = arith.constant 1.000000e+00 : f32
    %1589 = vector.broadcast %cst_274 : f32 to vector<2x32xf32>
    %1590 = arith.addf %1589, %1588 : vector<2x32xf32>
    %1591 = arith.divf %1589, %1590 : vector<2x32xf32>
    %1592 = arith.mulf %1583, %1535 : vector<2x32xf32>
    %1593 = arith.mulf %1577, %1585 : vector<2x32xf32>
    %1594 = arith.addf %1592, %1593 : vector<2x32xf32>
    %1595 = math.tanh %1594 : vector<2x32xf32>
    %1596 = arith.mulf %1591, %1595 : vector<2x32xf32>
    %c27_i32 = arith.constant 27 : i32
    %1597 = arith.index_cast %c27_i32 : i32 to index
    %c0_275 = arith.constant 0 : index
    %c0_276 = arith.constant 0 : index
    %1598 = vector.load %arg1[%1597, %c0_275, %c0_276] : memref<28x2x128xf32, #tpu.memory_space<vmem>>, vector<1x2x128xf32>
    %1599 = vector.shape_cast %1598 : vector<1x2x128xf32> to vector<2x128xf32>
    %cst_277 = arith.constant dense<0.000000e+00> : vector<2x128xf32>
    %1600 = tpu.matmul %1567, %0, %cst_277 {dimension_numbers = #tpu.dot_dimension_numbers<[1], [0], [0], [1], [0, 0, 1, 1], [], []>} : vector<2x32xf32>, vector<32x128xf32>, vector<2x128xf32> -> vector<2x128xf32>
    %1601 = arith.addf %1599, %1600 : vector<2x128xf32>
    %1602 = vector.extract_strided_slice %1601 {offsets = [0, 0], sizes = [2, 32], strides = [1, 1]} : vector<2x128xf32> to vector<2x32xf32>
    %1603 = arith.negf %1602 : vector<2x32xf32>
    %1604 = math.exp %1603 : vector<2x32xf32>
    %cst_278 = arith.constant 1.000000e+00 : f32
    %1605 = vector.broadcast %cst_278 : f32 to vector<2x32xf32>
    %1606 = arith.addf %1605, %1604 : vector<2x32xf32>
    %1607 = arith.divf %1605, %1606 : vector<2x32xf32>
    %1608 = vector.extract_strided_slice %1601 {offsets = [0, 32], sizes = [2, 32], strides = [1, 1]} : vector<2x128xf32> to vector<2x32xf32>
    %1609 = arith.negf %1608 : vector<2x32xf32>
    %1610 = math.exp %1609 : vector<2x32xf32>
    %cst_279 = arith.constant 1.000000e+00 : f32
    %1611 = vector.broadcast %cst_279 : f32 to vector<2x32xf32>
    %1612 = arith.addf %1611, %1610 : vector<2x32xf32>
    %1613 = arith.divf %1611, %1612 : vector<2x32xf32>
    %1614 = vector.extract_strided_slice %1601 {offsets = [0, 64], sizes = [2, 32], strides = [1, 1]} : vector<2x128xf32> to vector<2x32xf32>
    %1615 = math.tanh %1614 : vector<2x32xf32>
    %1616 = vector.extract_strided_slice %1601 {offsets = [0, 96], sizes = [2, 32], strides = [1, 1]} : vector<2x128xf32> to vector<2x32xf32>
    %1617 = arith.negf %1616 : vector<2x32xf32>
    %1618 = math.exp %1617 : vector<2x32xf32>
    %cst_280 = arith.constant 1.000000e+00 : f32
    %1619 = vector.broadcast %cst_280 : f32 to vector<2x32xf32>
    %1620 = arith.addf %1619, %1618 : vector<2x32xf32>
    %1621 = arith.divf %1619, %1620 : vector<2x32xf32>
    %1622 = arith.mulf %1613, %1565 : vector<2x32xf32>
    %1623 = arith.mulf %1607, %1615 : vector<2x32xf32>
    %1624 = arith.addf %1622, %1623 : vector<2x32xf32>
    %1625 = math.tanh %1624 : vector<2x32xf32>
    %1626 = arith.mulf %1621, %1625 : vector<2x32xf32>
    %1627 = tpu.concatenate %1626, %1596 in 1 : vector<2x32xf32>, vector<2x32xf32> -> vector<2x64xf32>
    %cst_281 = arith.constant dense<0.000000e+00> : vector<2x128xf32>
    %1628 = tpu.matmul %1627, %1, %cst_281 {dimension_numbers = #tpu.dot_dimension_numbers<[1], [0], [0], [1], [0, 0, 1, 1], [], []>} : vector<2x64xf32>, vector<64x128xf32>, vector<2x128xf32> -> vector<2x128xf32>
    %1629 = vector.broadcast %2 : vector<1x128xf32> to vector<2x128xf32>
    %1630 = arith.addf %1628, %1629 : vector<2x128xf32>
    %1631 = vector.extract_strided_slice %1630 {offsets = [0, 0], sizes = [2, 32], strides = [1, 1]} : vector<2x128xf32> to vector<2x32xf32>
    %1632 = arith.negf %1631 : vector<2x32xf32>
    %1633 = math.exp %1632 : vector<2x32xf32>
    %cst_282 = arith.constant 1.000000e+00 : f32
    %1634 = vector.broadcast %cst_282 : f32 to vector<2x32xf32>
    %1635 = arith.addf %1634, %1633 : vector<2x32xf32>
    %1636 = arith.divf %1634, %1635 : vector<2x32xf32>
    %1637 = vector.extract_strided_slice %1630 {offsets = [0, 32], sizes = [2, 32], strides = [1, 1]} : vector<2x128xf32> to vector<2x32xf32>
    %1638 = arith.negf %1637 : vector<2x32xf32>
    %1639 = math.exp %1638 : vector<2x32xf32>
    %cst_283 = arith.constant 1.000000e+00 : f32
    %1640 = vector.broadcast %cst_283 : f32 to vector<2x32xf32>
    %1641 = arith.addf %1640, %1639 : vector<2x32xf32>
    %1642 = arith.divf %1640, %1641 : vector<2x32xf32>
    %1643 = vector.extract_strided_slice %1630 {offsets = [0, 64], sizes = [2, 32], strides = [1, 1]} : vector<2x128xf32> to vector<2x32xf32>
    %1644 = math.tanh %1643 : vector<2x32xf32>
    %1645 = vector.extract_strided_slice %1630 {offsets = [0, 96], sizes = [2, 32], strides = [1, 1]} : vector<2x128xf32> to vector<2x32xf32>
    %1646 = arith.negf %1645 : vector<2x32xf32>
    %1647 = math.exp %1646 : vector<2x32xf32>
    %cst_284 = arith.constant 1.000000e+00 : f32
    %1648 = vector.broadcast %cst_284 : f32 to vector<2x32xf32>
    %1649 = arith.addf %1648, %1647 : vector<2x32xf32>
    %1650 = arith.divf %1648, %1649 : vector<2x32xf32>
    %1651 = arith.mulf %1642, %1594 : vector<2x32xf32>
    %1652 = arith.mulf %1636, %1644 : vector<2x32xf32>
    %1653 = arith.addf %1651, %1652 : vector<2x32xf32>
    %1654 = math.tanh %1653 : vector<2x32xf32>
    %1655 = arith.mulf %1650, %1654 : vector<2x32xf32>
    %c28_i32 = arith.constant 28 : i32
    %c0_285 = arith.constant 0 : index
    %c0_286 = arith.constant 0 : index
    %1656 = vector.load %arg5[%c0_285, %c0_286] : memref<32x3xf32, #tpu.memory_space<vmem>>, vector<32x3xf32>
    %cst_287 = arith.constant dense<0.000000e+00> : vector<2x3xf32>
    %1657 = tpu.matmul %1655, %1656, %cst_287 {dimension_numbers = #tpu.dot_dimension_numbers<[1], [0], [0], [1], [0, 0, 1, 1], [], []>} : vector<2x32xf32>, vector<32x3xf32>, vector<2x3xf32> -> vector<2x3xf32>
    %c0_288 = arith.constant 0 : index
    %c0_289 = arith.constant 0 : index
    %1658 = vector.load %arg6[%c0_288, %c0_289] : memref<1x3xf32, #tpu.memory_space<vmem>>, vector<1x3xf32>
    %1659 = vector.broadcast %1658 : vector<1x3xf32> to vector<2x3xf32>
    %1660 = arith.addf %1657, %1659 : vector<2x3xf32>
    %c0_290 = arith.constant 0 : index
    %c0_291 = arith.constant 0 : index
    %1661 = vector.load %arg7[%c0_290, %c0_291] : memref<2x3xf32, #tpu.memory_space<vmem>>, vector<2x3xf32>
    tpu.vector_store %arg7[%c0_290, %c0_291], %1660 {strides = array<i32>} : memref<2x3xf32, #tpu.memory_space<vmem>>, vector<2x3xf32>,
    return
  }
  func.func @transform_0(%arg0: i32) -> (i32, i32, i32) {
    %c0_i32 = arith.constant 0 : i32
    %c0_i32_0 = arith.constant 0 : i32
    %c0_i32_1 = arith.constant 0 : i32
    %c0_i32_2 = arith.constant 0 : i32
    return %c0_i32, %c0_i32_0, %c0_i32_1 : i32, i32, i32
  }
  func.func @transform_1(%arg0: i32) -> (i32, i32) {
    %c0_i32 = arith.constant 0 : i32
    %c0_i32_0 = arith.constant 0 : i32
    %c0_i32_1 = arith.constant 0 : i32
    return %c0_i32, %c0_i32_0 : i32, i32
  }
  func.func @transform_2(%arg0: i32) -> (i32, i32) {
    %c0_i32 = arith.constant 0 : i32
    %c0_i32_0 = arith.constant 0 : i32
    %c0_i32_1 = arith.constant 0 : i32
    return %c0_i32, %c0_i32_0 : i32, i32
  }
  func.func @transform_3(%arg0: i32) -> (i32, i32) {
    %c0_i32 = arith.constant 0 : i32
    %c0_i32_0 = arith.constant 0 : i32
    %c0_i32_1 = arith.constant 0 : i32
    return %c0_i32, %c0_i32_0 : i32, i32
  }
  func.func @transform_4(%arg0: i32) -> (i32, i32) {
    %c0_i32 = arith.constant 0 : i32
    %c0_i32_0 = arith.constant 0 : i32
    %c0_i32_1 = arith.constant 0 : i32
    return %c0_i32, %c0_i32_0 : i32, i32
  }
  func.func @transform_5(%arg0: i32) -> (i32, i32) {
    %c0_i32 = arith.constant 0 : i32
    %c0_i32_0 = arith.constant 0 : i32
    %c0_i32_1 = arith.constant 0 : i32
    return %c0_i32, %c0_i32_0 : i32, i32
  }
  func.func @transform_6(%arg0: i32) -> (i32, i32) {
    %c0_i32 = arith.constant 0 : i32
    %c0_i32_0 = arith.constant 0 : i32
    %c0_i32_1 = arith.constant 0 : i32
    return %c0_i32, %c0_i32_0 : i32, i32
  }
}

</mosaic_0001>

<llo_original>
// kernel: cnn_lstm_forward.2
$region0: #{cnn_lstm_forward.2}
  #allocation0 [shape = 'u32[]', space=smem, size = 0x4, offset = 0x4, fixed_abs, tag = 'smem constant byte address 0x4 - core index']
  #allocation1 [shape = 'u32[144,128]{1,0:T(1,128)}', space=vmem, size = 0x12000, scoped, tag = 'internal scratch']
  %s0 = inlined_call_operand.vmem [shape: f32[56,40], index: 0, kind: input, shape index: {}]
  %s1 = inlined_call_operand.vmem [shape: f32[40,8], index: 1, kind: input, shape index: {}]
  %s2 = inlined_call_operand.vmem [shape: f32[1,8], index: 2, kind: input, shape index: {}]
  %s3 = inlined_call_operand.vmem [shape: f32[1,8], index: 3, kind: input, shape index: {}]
  %s4 = inlined_call_operand.vmem [shape: f32[8,128], index: 4, kind: input, shape index: {}]
  %s5 = inlined_call_operand.vmem [shape: f32[1,128], index: 5, kind: input, shape index: {}]
  %s6 = inlined_call_operand.vmem [shape: f32[56,128], index: 6, kind: output, shape index: {}]
  %s7 = sld [smem:[#allocation0]]
  $region34: #{cnn_lstm_forward.2} parent=0
    _
  %s9 = ssub.s32 1, %s7
  %s10 = scalar_select 0, %s9, %s7
  // Predicated region
  $region2: #{cnn_lstm_forward.2} parent=0 // pred_check
    _
  $region3: #{cnn_lstm_forward.2} parent=0 // pred_check_branch
    %12 = sbr.rel (0) target = $region5
  $region4: #{cnn_lstm_forward.2} parent=0 // pred_region
    _
  $region5: #{cnn_lstm_forward.2} parent=0 // pred_fallthru
    _
  // Predicated region
  $region6: #{cnn_lstm_forward.2} parent=0 // pred_check
    _
  $region7: #{cnn_lstm_forward.2} parent=0 // pred_check_branch
    %14 = sbr.rel (0) target = $region9
  $region8: #{cnn_lstm_forward.2} parent=0 // pred_region
    _
  $region9: #{cnn_lstm_forward.2} parent=0 // pred_fallthru
    _
  // Predicated region
  $region10: #{cnn_lstm_forward.2} parent=0 // pred_check
    _
  $region11: #{cnn_lstm_forward.2} parent=0 // pred_check_branch
    %16 = sbr.rel (0) target = $region13
  $region12: #{cnn_lstm_forward.2} parent=0 // pred_region
    _
  $region13: #{cnn_lstm_forward.2} parent=0 // pred_fallthru
    _
  // Predicated region
  $region14: #{cnn_lstm_forward.2} parent=0 // pred_check
    _
  $region15: #{cnn_lstm_forward.2} parent=0 // pred_check_branch
    %18 = sbr.rel (0) target = $region17
  $region16: #{cnn_lstm_forward.2} parent=0 // pred_region
    _
  $region17: #{cnn_lstm_forward.2} parent=0 // pred_fallthru
    _
  // Predicated region
  $region18: #{cnn_lstm_forward.2} parent=0 // pred_check
    _
  $region19: #{cnn_lstm_forward.2} parent=0 // pred_check_branch
    %20 = sbr.rel (0) target = $region21
  $region20: #{cnn_lstm_forward.2} parent=0 // pred_region
    _
  $region21: #{cnn_lstm_forward.2} parent=0 // pred_fallthru
    _
  // Predicated region
  $region22: #{cnn_lstm_forward.2} parent=0 // pred_check
    _
  $region23: #{cnn_lstm_forward.2} parent=0 // pred_check_branch
    %22 = sbr.rel (0) target = $region25
  $region24: #{cnn_lstm_forward.2} parent=0 // pred_region
    _
  $region25: #{cnn_lstm_forward.2} parent=0 // pred_fallthru
    _
  %v23 = vld [vmem:[%s0] sm:$0xff]
  %v24 = vld [vmem:[%s0 + $0x8] sm:$0xff]
  %v25 = vld [vmem:[%s0 + $0x10] sm:$0xff]
  %v26 = vld [vmem:[%s0 + $0x18] sm:$0xff]
  %v27 = vld [vmem:[%s0 + $0x20] sm:$0xff]
  %v28 = vld [vmem:[%s0 + $0x28] sm:$0xff]
  %v29 = vld [vmem:[%s0 + $0x30] sm:$0xff]
  %v30 = vld [vmem:[%s1] sm:$0xff]
  %v31 = vld [vmem:[%s1 + $0x8] sm:$0xff]
  %v32 = vld [vmem:[%s1 + $0x10] sm:$0xff]
  %v33 = vld [vmem:[%s1 + $0x18] sm:$0xff]
  %v34 = vld [vmem:[%s1 + $0x20] sm:$0xff]
  %vm35 = vcmask 326656
  %v37 = vsel %vm35, %v23, 0
  %v40 = vsel %vm35, %v24, 0
  %v43 = vsel %vm35, %v25, 0
  %v46 = vsel %vm35, %v26, 0
  %v49 = vsel %vm35, %v27, 0
  %v52 = vsel %vm35, %v28, 0
  %v55 = vsel %vm35, %v29, 0
  %57 = vmatprep.subr.mxu0 0.0
  %58 = vmatpush1.msra.mxu0 %v30
  %59 = vmatprep.subr.mxu0 0.0
  %60 = vmatpush1.msra.mxu0 %v31
  %61 = vmatprep.subr.mxu0 0.0
  %62 = vmatpush1.msra.mxu0 %v32
  %63 = vmatprep.subr.mxu0 0.0
  %64 = vmatpush1.msra.mxu0 %v33
  %65 = vmatprep.subr.mxu0 0.0
  %66 = vmatpush1.msra.mxu0 %v34
  %67 = vmatprep.subr.mxu0 0.0
  %68 = vmatpush1.msra.mxu0 0.0
  %69 = vmatprep.subr.mxu0 0.0
  %70 = vmatpush1.msra.mxu0 0.0
  %71 = vmatprep.subr.mxu0 0.0
  %72 = vmatpush1.msra.mxu0 0.0
  %73 = vmatprep.subr.mxu0 0.0
  %74 = vmatpush1.msra.mxu0 0.0
  %75 = vmatprep.subr.mxu0 0.0
  %76 = vmatpush1.msra.mxu0 0.0
  %77 = vmatprep.subr.mxu0 0.0
  %78 = vmatpush1.msra.mxu0 0.0
  %79 = vmatprep.subr.mxu0 0.0
  %80 = vmatpush1.msra.mxu0 0.0
  %81 = vmatprep.subr.mxu0 0.0
  %82 = vmatpush1.msra.mxu0 0.0
  %83 = vmatprep.subr.mxu0 0.0
  %84 = vmatpush1.msra.mxu0 0.0
  %85 = vmatprep.subr.mxu0 0.0
  %86 = vmatpush1.msra.mxu0 0.0
  %87 = vmatprep.subr.mxu0 0.0
  %88 = vmatpush1.msra.mxu0 0.0
  %89 = vmatprep.subr.mxu0 0.0
  %90 = vmatpush1.msra.mxu0 0.0
  %91 = vmatprep.subr.mxu0 0.0
  %92 = vmatpush1.msra.mxu0 0.0
  %93 = vmatprep.subr.mxu0 0.0
  %94 = vmatpush1.msra.mxu0 0.0
  %95 = vmatprep.subr.mxu0 0.0
  %96 = vmatpush1.msra.mxu0 0.0
  %97 = vmatprep.subr.mxu0 0.0
  %98 = vmatpush1.msra.mxu0 0.0
  %99 = vmatprep.subr.mxu0 0.0
  %100 = vmatpush1.msra.mxu0 0.0
  %101 = vmatprep.subr.mxu0 0.0
  %102 = vmatpush1.msra.mxu0 0.0
  %103 = vmatprep.subr.mxu0 0.0
  %104 = vmatpush1.msra.mxu0 0.0
  %105 = vmatprep.subr.mxu0 0.0
  %106 = vmatpush1.msra.mxu0 0.0
  %107 = vmatprep.subr.mxu0 0.0
  %108 = vmatpush1.msra.mxu0 0.0
  %109 = vmatprep.subr.mxu0 0.0
  %110 = vmatpush1.msra.mxu0 0.0
  %111 = vmatprep.subr.mxu0 0.0
  %112 = vmatpush1.msra.mxu0 0.0
  %113 = vmatprep.subr.mxu0 0.0
  %114 = vmatpush1.msra.mxu0 0.0
  %115 = vmatprep.subr.mxu0 0.0
  %116 = vmatpush1.msra.mxu0 0.0
  %117 = vmatprep.subr.mxu0 0.0
  %118 = vmatpush1.msra.mxu0 0.0
  %119 = vmatprep.subr.mxu0 0.0
  %120 = vmatpush1.msra.mxu0 0.0
  %121 = vmatprep.mubr.f32.mxu0 0.0
  %122 = vmatmul.mubr.f32.gmra.mrb[0].mxu0 %v37
  %v123 = vpop.f32.mrb[0].mxu0
  %v124 = vadd.f32 0.0, %v123
  %v125 = vpop.f32.mrb[0].mxu0
  %126 = vmatprep.mubr.f32.mxu0 0.0
  %127 = vmatmul.mubr.f32.gmra.mrb[0].mxu0 %v40
  %v128 = vpop.f32.mrb[0].mxu0
  %v129 = vadd.f32 0.0, %v128
  %v130 = vpop.f32.mrb[0].mxu0
  %131 = vmatprep.mubr.f32.mxu0 0.0
  %132 = vmatmul.mubr.f32.gmra.mrb[0].mxu0 %v43
  %v133 = vpop.f32.mrb[0].mxu0
  %v134 = vadd.f32 0.0, %v133
  %v135 = vpop.f32.mrb[0].mxu0
  %136 = vmatprep.mubr.f32.mxu0 0.0
  %137 = vmatmul.mubr.f32.gmra.mrb[0].mxu0 %v46
  %v138 = vpop.f32.mrb[0].mxu0
  %v139 = vadd.f32 0.0, %v138
  %v140 = vpop.f32.mrb[0].mxu0
  %141 = vmatprep.mubr.f32.mxu0 0.0
  %142 = vmatmul.mubr.f32.gmra.mrb[0].mxu0 %v49
  %v143 = vpop.f32.mrb[0].mxu0
  %v144 = vadd.f32 0.0, %v143
  %v145 = vpop.f32.mrb[0].mxu0
  %146 = vmatprep.mubr.f32.mxu0 0.0
  %147 = vmatmul.mubr.f32.gmra.mrb[0].mxu0 %v52
  %v148 = vpop.f32.mrb[0].mxu0
  %v149 = vadd.f32 0.0, %v148
  %v150 = vpop.f32.mrb[0].mxu0
  %151 = vmatprep.mubr.f32.mxu0 0.0
  %152 = vmatmul.mubr.f32.gmra.mrb[0].mxu0 %v55
  %v153 = vpop.f32.mrb[0].mxu0
  %v154 = vadd.f32 0.0, %v153
  %v155 = vpop.f32.mrb[0].mxu0
  %156 = vdwg.mxu0
  %vm157 = vcmask 64512
  %v158 = vsel %vm157, %v124, 0.0
  %v159 = vsel %vm157, %v129, 0.0
  %v160 = vadd.f32 %v158, %v159
  %v161 = vsel %vm157, %v134, 0.0
  %v162 = vadd.f32 %v160, %v161
  %v163 = vsel %vm157, %v139, 0.0
  %v164 = vadd.f32 %v162, %v163
  %v165 = vsel %vm157, %v144, 0.0
  %v166 = vadd.f32 %v164, %v165
  %v167 = vsel %vm157, %v149, 0.0
  %v168 = vadd.f32 %v166, %v167
  %v169 = vsel %vm157, %v154, 0.0
  %v170 = vadd.f32 %v168, %v169
  %v171 = vrot.slane %v170, 4
  %v172 = vadd.f32 %v170, %v171
  %v173 = vrot.slane %v172, 2
  %v174 = vadd.f32 %v172, %v173
  %v175 = vrot.slane %v174, 1
  %v176 = vadd.f32 %v174, %v175
  %v177 = vrcp.pop 56.0
  %v178 = vmul.f32 %v176, %v177
  %v179 = vsub.f32 %v124, %v178
  %v180 = vsub.f32 %v129, %v178
  %v181 = vsub.f32 %v134, %v178
  %v182 = vsub.f32 %v139, %v178
  %v183 = vsub.f32 %v144, %v178
  %v184 = vsub.f32 %v149, %v178
  %v185 = vsub.f32 %v154, %v178
  %v186 = vmul.f32 %v179, %v179
  %v187 = vmul.f32 %v180, %v180
  %v188 = vmul.f32 %v181, %v181
  %v189 = vmul.f32 %v182, %v182
  %v190 = vmul.f32 %v183, %v183
  %v191 = vmul.f32 %v184, %v184
  %v192 = vmul.f32 %v185, %v185
  %v193 = vsel %vm157, %v186, 0.0
  %v194 = vsel %vm157, %v187, 0.0
  %v195 = vadd.f32 %v193, %v194
  %v196 = vsel %vm157, %v188, 0.0
  %v197 = vadd.f32 %v195, %v196
  %v198 = vsel %vm157, %v189, 0.0
  %v199 = vadd.f32 %v197, %v198
  %v200 = vsel %vm157, %v190, 0.0
  %v201 = vadd.f32 %v199, %v200
  %v202 = vsel %vm157, %v191, 0.0
  %v203 = vadd.f32 %v201, %v202
  %v204 = vsel %vm157, %v192, 0.0
  %v205 = vadd.f32 %v203, %v204
  %v206 = vrot.slane %v205, 4
  %v207 = vadd.f32 %v205, %v206
  %v208 = vrot.slane %v207, 2
  %v209 = vadd.f32 %v207, %v208
  %v210 = vrot.slane %v209, 1
  %v211 = vadd.f32 %v209, %v210
  %v212 = vmul.f32 %v211, %v177
  %v213 = vld [vmem:[%s2] sm:$0x1]
  %v214 = vadd.f32 %v212, 1e-05
  %v215 = vrsqrt.pop %v214
  %v216 = vmul.f32 %v213, %v215
  %v217 = vld [vmem:[%s3] sm:$0x1]
  %v218 = vmul.f32 %v178, %v216
  %v219 = vsub.f32 %v217, %v218
  %v221 = vlaneseq
  %v222 = vshrl.u32 %v221, 7
  %v223 = vsub.s32 0, %v222
  %v224 = vrot.slane %v216, %v223
  %v226 = vmul.f32 %v124, %v224
  %v227 = vmul.f32 %v129, %v224
  %v228 = vmul.f32 %v134, %v224
  %v229 = vmul.f32 %v139, %v224
  %v230 = vmul.f32 %v144, %v224
  %v231 = vmul.f32 %v149, %v224
  %v232 = vmul.f32 %v154, %v224
  %v234 = vlaneseq
  %v235 = vshrl.u32 %v234, 7
  %v236 = vsub.s32 0, %v235
  %v237 = vrot.slane %v219, %v236
  %v239 = vadd.f32 %v226, %v237
  %v240 = vadd.f32 %v227, %v237
  %v241 = vadd.f32 %v228, %v237
  %v242 = vadd.f32 %v229, %v237
  %v243 = vadd.f32 %v230, %v237
  %v244 = vadd.f32 %v231, %v237
  %v245 = vadd.f32 %v232, %v237
  %v246 = vmax.f32 %v239, 0.0
  %v247 = vmax.f32 %v240, 0.0
  %v248 = vmax.f32 %v241, 0.0
  %v249 = vmax.f32 %v242, 0.0
  %v250 = vmax.f32 %v243, 0.0
  %v251 = vmax.f32 %v244, 0.0
  %v252 = vmax.f32 %v245, 0.0
  %v253 = vld [vmem:[%s4] sm:$0xff]
  %v254 = vld [vmem:[%s5] sm:$0x1]
  %v256 = vlaneseq
  %v257 = vshrl.u32 %v256, 7
  %v258 = vsub.s32 0, %v257
  %v259 = vrot.slane %v254, %v258
  %v262 = vsel %vm157, %v246, 0
  %v265 = vsel %vm157, %v247, 0
  %v268 = vsel %vm157, %v248, 0
  %v271 = vsel %vm157, %v249, 0
  %v274 = vsel %vm157, %v250, 0
  %v277 = vsel %vm157, %v251, 0
  %v280 = vsel %vm157, %v252, 0
  %282 = vmatprep.subr.mxu0 0.0
  %283 = vmatpush1.msra.mxu0 %v253
  %284 = vmatprep.subr.mxu0 0.0
  %285 = vmatpush1.msra.mxu0 0.0
  %286 = vmatprep.subr.mxu0 0.0
  %287 = vmatpush1.msra.mxu0 0.0
  %288 = vmatprep.subr.mxu0 0.0
  %289 = vmatpush1.msra.mxu0 0.0
  %290 = vmatprep.subr.mxu0 0.0
  %291 = vmatpush1.msra.mxu0 0.0
  %292 = vmatprep.subr.mxu0 0.0
  %293 = vmatpush1.msra.mxu0 0.0
  %294 = vmatprep.subr.mxu0 0.0
  %295 = vmatpush1.msra.mxu0 0.0
  %296 = vmatprep.subr.mxu0 0.0
  %297 = vmatpush1.msra.mxu0 0.0
  %298 = vmatprep.subr.mxu0 0.0
  %299 = vmatpush1.msra.mxu0 0.0
  %300 = vmatprep.subr.mxu0 0.0
  %301 = vmatpush1.msra.mxu0 0.0
  %302 = vmatprep.subr.mxu0 0.0
  %303 = vmatpush1.msra.mxu0 0.0
  %304 = vmatprep.subr.mxu0 0.0
  %305 = vmatpush1.msra.mxu0 0.0
  %306 = vmatprep.subr.mxu0 0.0
  %307 = vmatpush1.msra.mxu0 0.0
  %308 = vmatprep.subr.mxu0 0.0
  %309 = vmatpush1.msra.mxu0 0.0
  %310 = vmatprep.subr.mxu0 0.0
  %311 = vmatpush1.msra.mxu0 0.0
  %312 = vmatprep.subr.mxu0 0.0
  %313 = vmatpush1.msra.mxu0 0.0
  %314 = vmatprep.subr.mxu0 0.0
  %315 = vmatpush1.msra.mxu0 0.0
  %316 = vmatprep.subr.mxu0 0.0
  %317 = vmatpush1.msra.mxu0 0.0
  %318 = vmatprep.subr.mxu0 0.0
  %319 = vmatpush1.msra.mxu0 0.0
  %320 = vmatprep.subr.mxu0 0.0
  %321 = vmatpush1.msra.mxu0 0.0
  %322 = vmatprep.subr.mxu0 0.0
  %323 = vmatpush1.msra.mxu0 0.0
  %324 = vmatprep.subr.mxu0 0.0
  %325 = vmatpush1.msra.mxu0 0.0
  %326 = vmatprep.subr.mxu0 0.0
  %327 = vmatpush1.msra.mxu0 0.0
  %328 = vmatprep.subr.mxu0 0.0
  %329 = vmatpush1.msra.mxu0 0.0
  %330 = vmatprep.subr.mxu0 0.0
  %331 = vmatpush1.msra.mxu0 0.0
  %332 = vmatprep.subr.mxu0 0.0
  %333 = vmatpush1.msra.mxu0 0.0
  %334 = vmatprep.subr.mxu0 0.0
  %335 = vmatpush1.msra.mxu0 0.0
  %336 = vmatprep.subr.mxu0 0.0
  %337 = vmatpush1.msra.mxu0 0.0
  %338 = vmatprep.subr.mxu0 0.0
  %339 = vmatpush1.msra.mxu0 0.0
  %340 = vmatprep.subr.mxu0 0.0
  %341 = vmatpush1.msra.mxu0 0.0
  %342 = vmatprep.subr.mxu0 0.0
  %343 = vmatpush1.msra.mxu0 0.0
  %344 = vmatprep.subr.mxu0 0.0
  %345 = vmatpush1.msra.mxu0 0.0
  %346 = vmatprep.mubr.f32.mxu0 0.0
  %347 = vmatmul.mubr.f32.gmra.mrb[0].mxu0 %v262
  %v348 = vpop.f32.mrb[0].mxu0
  %v349 = vadd.f32 %v259, %v348
  %v350 = vpop.f32.mrb[0].mxu0
  %351 = vmatprep.mubr.f32.mxu0 0.0
  %352 = vmatmul.mubr.f32.gmra.mrb[0].mxu0 %v265
  %v353 = vpop.f32.mrb[0].mxu0
  %v354 = vadd.f32 %v259, %v353
  %v355 = vpop.f32.mrb[0].mxu0
  %356 = vmatprep.mubr.f32.mxu0 0.0
  %357 = vmatmul.mubr.f32.gmra.mrb[0].mxu0 %v268
  %v358 = vpop.f32.mrb[0].mxu0
  %v359 = vadd.f32 %v259, %v358
  %v360 = vpop.f32.mrb[0].mxu0
  %361 = vmatprep.mubr.f32.mxu0 0.0
  %362 = vmatmul.mubr.f32.gmra.mrb[0].mxu0 %v271
  %v363 = vpop.f32.mrb[0].mxu0
  %v364 = vadd.f32 %v259, %v363
  %v365 = vpop.f32.mrb[0].mxu0
  %366 = vmatprep.mubr.f32.mxu0 0.0
  %367 = vmatmul.mubr.f32.gmra.mrb[0].mxu0 %v274
  %v368 = vpop.f32.mrb[0].mxu0
  %v369 = vadd.f32 %v259, %v368
  %v370 = vpop.f32.mrb[0].mxu0
  %371 = vmatprep.mubr.f32.mxu0 0.0
  %372 = vmatmul.mubr.f32.gmra.mrb[0].mxu0 %v277
  %v373 = vpop.f32.mrb[0].mxu0
  %v374 = vadd.f32 %v259, %v373
  %v375 = vpop.f32.mrb[0].mxu0
  %376 = vmatprep.mubr.f32.mxu0 0.0
  %377 = vmatmul.mubr.f32.gmra.mrb[0].mxu0 %v280
  %v378 = vpop.f32.mrb[0].mxu0
  %v379 = vadd.f32 %v259, %v378
  %v380 = vpop.f32.mrb[0].mxu0
  %381 = vdwg.mxu0
  %382 = vst [vmem:[%s6] sm:$0xff] %v349
  %383 = vst [vmem:[%s6 + $0x8] sm:$0xff] %v354
  %384 = vst [vmem:[%s6 + $0x10] sm:$0xff] %v359
  %385 = vst [vmem:[%s6 + $0x18] sm:$0xff] %v364
  %386 = vst [vmem:[%s6 + $0x20] sm:$0xff] %v369
  %387 = vst [vmem:[%s6 + $0x28] sm:$0xff] %v374
  %388 = vst [vmem:[%s6 + $0x30] sm:$0xff] %v379
  // Predicated region
  $region26: #{cnn_lstm_forward.2} parent=0 // pred_check
    _
  $region27: #{cnn_lstm_forward.2} parent=0 // pred_check_branch
    %390 = sbr.rel (0) target = $region29
  $region28: #{cnn_lstm_forward.2} parent=0 // pred_region
    _
  $region29: #{cnn_lstm_forward.2} parent=0 // pred_fallthru
    _
  // Predicated region
  $region30: #{cnn_lstm_forward.2} parent=0 // pred_check
    _
  $region31: #{cnn_lstm_forward.2} parent=0 // pred_check_branch
    %392 = sbr.rel (0) target = $region33
  $region32: #{cnn_lstm_forward.2} parent=0 // pred_region
    _
  $region33: #{cnn_lstm_forward.2} parent=0 // pred_fallthru
    _

// kernel: cnn_lstm_forward.3
$region0: #{cnn_lstm_forward.3}
  #allocation0 [shape = 'u32[]', space=smem, size = 0x4, offset = 0x4, fixed_abs, tag = 'smem constant byte address 0x4 - core index']
  #allocation1 [shape = 'u32[144,128]{1,0:T(1,128)}', space=vmem, size = 0x12000, scoped, tag = 'internal scratch']
  %s0 = inlined_call_operand.vmem [shape: f32[28,2,128], index: 0, kind: input, shape index: {}]
  %s1 = inlined_call_operand.vmem [shape: f32[32,128], index: 1, kind: input, shape index: {}]
  %s2 = inlined_call_operand.vmem [shape: f32[64,128], index: 2, kind: input, shape index: {}]
  %s3 = inlined_call_operand.vmem [shape: f32[1,128], index: 3, kind: input, shape index: {}]
  %s4 = inlined_call_operand.vmem [shape: f32[32,3], index: 4, kind: input, shape index: {}]
  %s5 = inlined_call_operand.vmem [shape: f32[1,3], index: 5, kind: input, shape index: {}]
  %s6 = inlined_call_operand.hbm [shape: f32[2,3], index: 6, kind: output, shape index: {}]
  %s7 = sld [smem:[#allocation0]]
  $region34: #{cnn_lstm_forward.3} parent=0
    _
  %s9 = ssub.s32 1, %s7
  %s10 = scalar_select 0, %s9, %s7
  $region1: #{cnn_lstm_forward.3} parent=0
    #allocation2 [shape = 'u8[1024]{0}', space=vmem, size = 0x400, scoped, tag = 'output window, operand 0, single buffered']
    #allocation3 [shape = 's32[1]{0}', space=sflag, size = 0x4, scoped, tag = 'scoped memory for cnn_lstm_forward.3']
    %11 = vsyncpa [#allocation3], 0
    // Predicated region
    $region2: #{cnn_lstm_forward.3} parent=1 // pred_check
      _
    $region3: #{cnn_lstm_forward.3} parent=1 // pred_check_branch
      %13 = sbr.rel (0) target = $region5
    $region4: #{cnn_lstm_forward.3} parent=1 // pred_region
      _
    $region5: #{cnn_lstm_forward.3} parent=1 // pred_fallthru
      _
    // Predicated region
    $region6: #{cnn_lstm_forward.3} parent=1 // pred_check
      _
    $region7: #{cnn_lstm_forward.3} parent=1 // pred_check_branch
      %15 = sbr.rel (0) target = $region9
    $region8: #{cnn_lstm_forward.3} parent=1 // pred_region
      _
    $region9: #{cnn_lstm_forward.3} parent=1 // pred_fallthru
      _
    // Predicated region
    $region10: #{cnn_lstm_forward.3} parent=1 // pred_check
      _
    $region11: #{cnn_lstm_forward.3} parent=1 // pred_check_branch
      %17 = sbr.rel (0) target = $region13
    $region12: #{cnn_lstm_forward.3} parent=1 // pred_region
      _
    $region13: #{cnn_lstm_forward.3} parent=1 // pred_fallthru
      _
    // Predicated region
    $region14: #{cnn_lstm_forward.3} parent=1 // pred_check
      _
    $region15: #{cnn_lstm_forward.3} parent=1 // pred_check_branch
      %19 = sbr.rel (0) target = $region17
    $region16: #{cnn_lstm_forward.3} parent=1 // pred_region
      _
    $region17: #{cnn_lstm_forward.3} parent=1 // pred_fallthru
      _
    // Predicated region
    $region18: #{cnn_lstm_forward.3} parent=1 // pred_check
      _
    $region19: #{cnn_lstm_forward.3} parent=1 // pred_check_branch
      %21 = sbr.rel (0) target = $region21
    $region20: #{cnn_lstm_forward.3} parent=1 // pred_region
      _
    $region21: #{cnn_lstm_forward.3} parent=1 // pred_fallthru
      _
    // Predicated region
    $region22: #{cnn_lstm_forward.3} parent=1 // pred_check
      _
    $region23: #{cnn_lstm_forward.3} parent=1 // pred_check_branch
      %23 = sbr.rel (0) target = $region25
    $region24: #{cnn_lstm_forward.3} parent=1 // pred_region
      _
    $region25: #{cnn_lstm_forward.3} parent=1 // pred_fallthru
      _
    %v24 = vld [vmem:[%s1] sm:$0xff]
    %v25 = vld [vmem:[%s1 + $0x8] sm:$0xff]
    %v26 = vld [vmem:[%s1 + $0x10] sm:$0xff]
    %v27 = vld [vmem:[%s1 + $0x18] sm:$0xff]
    %v28 = vld [vmem:[%s2] sm:$0xff]
    %v29 = vld [vmem:[%s2 + $0x8] sm:$0xff]
    %v30 = vld [vmem:[%s2 + $0x10] sm:$0xff]
    %v31 = vld [vmem:[%s2 + $0x18] sm:$0xff]
    %v32 = vld [vmem:[%s2 + $0x20] sm:$0xff]
    %v33 = vld [vmem:[%s2 + $0x28] sm:$0xff]
    %v34 = vld [vmem:[%s2 + $0x30] sm:$0xff]
    %v35 = vld [vmem:[%s2 + $0x38] sm:$0xff]
    %v36 = vld [vmem:[%s3] sm:$0x1]
    %v37 = vld [vmem:[%s0] sm:$0x3]
    %vm38 = vcmask 261120
    %v40 = vsel %vm38, 0.0, 0
    %42 = vmatprep.subr.mxu0 0.0
    %43 = vmatpush1.msra.mxu0 %v24
    %44 = vmatprep.subr.mxu0 0.0
    %45 = vmatpush1.msra.mxu0 %v25
    %46 = vmatprep.subr.mxu0 0.0
    %47 = vmatpush1.msra.mxu0 %v26
    %48 = vmatprep.subr.mxu0 0.0
    %49 = vmatpush1.msra.mxu0 %v27
    %50 = vmatprep.subr.mxu0 0.0
    %51 = vmatpush1.msra.mxu0 0.0
    %52 = vmatprep.subr.mxu0 0.0
    %53 = vmatpush1.msra.mxu0 0.0
    %54 = vmatprep.subr.mxu0 0.0
    %55 = vmatpush1.msra.mxu0 0.0
    %56 = vmatprep.subr.mxu0 0.0
    %57 = vmatpush1.msra.mxu0 0.0
    %58 = vmatprep.subr.mxu0 0.0
    %59 = vmatpush1.msra.mxu0 0.0
    %60 = vmatprep.subr.mxu0 0.0
    %61 = vmatpush1.msra.mxu0 0.0
    %62 = vmatprep.subr.mxu0 0.0
    %63 = vmatpush1.msra.mxu0 0.0
    %64 = vmatprep.subr.mxu0 0.0
    %65 = vmatpush1.msra.mxu0 0.0
    %66 = vmatprep.subr.mxu0 0.0
    %67 = vmatpush1.msra.mxu0 0.0
    %68 = vmatprep.subr.mxu0 0.0
    %69 = vmatpush1.msra.mxu0 0.0
    %70 = vmatprep.subr.mxu0 0.0
    %71 = vmatpush1.msra.mxu0 0.0
    %72 = vmatprep.subr.mxu0 0.0
    %73 = vmatpush1.msra.mxu0 0.0
    %74 = vmatprep.subr.mxu0 0.0
    %75 = vmatpush1.msra.mxu0 0.0
    %76 = vmatprep.subr.mxu0 0.0
    %77 = vmatpush1.msra.mxu0 0.0
    %78 = vmatprep.subr.mxu0 0.0
    %79 = vmatpush1.msra.mxu0 0.0
    %80 = vmatprep.subr.mxu0 0.0
    %81 = vmatpush1.msra.mxu0 0.0
    %82 = vmatprep.subr.mxu0 0.0
    %83 = vmatpush1.msra.mxu0 0.0
    %84 = vmatprep.subr.mxu0 0.0
    %85 = vmatpush1.msra.mxu0 0.0
    %86 = vmatprep.subr.mxu0 0.0
    %87 = vmatpush1.msra.mxu0 0.0
    %88 = vmatprep.subr.mxu0 0.0
    %89 = vmatpush1.msra.mxu0 0.0
    %90 = vmatprep.subr.mxu0 0.0
    %91 = vmatpush1.msra.mxu0 0.0
    %92 = vmatprep.subr.mxu0 0.0
    %93 = vmatpush1.msra.mxu0 0.0
    %94 = vmatprep.subr.mxu0 0.0
    %95 = vmatpush1.msra.mxu0 0.0
    %96 = vmatprep.subr.mxu0 0.0
    %97 = vmatpush1.msra.mxu0 0.0
    %98 = vmatprep.subr.mxu0 0.0
    %99 = vmatpush1.msra.mxu0 0.0
    %100 = vmatprep.subr.mxu0 0.0
    %101 = vmatpush1.msra.mxu0 0.0
    %102 = vmatprep.subr.mxu0 0.0
    %103 = vmatpush1.msra.mxu0 0.0
    %104 = vmatprep.subr.mxu0 0.0
    %105 = vmatpush1.msra.mxu0 0.0
    %106 = vmatprep.mubr.f32.mxu0 0.0
    %107 = vmatmul.mubr.f32.gmra.mrb[0].mxu0 %v40
    %v108 = vpop.f32.mrb[0].mxu0
    %v109 = vadd.f32 0.0, %v108
    %v110 = vpop.f32.mrb[0].mxu0
    %111 = vdwg.mxu0
    %v112 = vadd.f32 %v37, %v109
    %v113 = vxor.u32 %v112, 2147483648
    %v114 = vmul.f32 %v113, 1.442695
    %v115 = vpow.pop %v114
    %v116 = vadd.f32 %v115, 1.0
    %v117 = vrcp.pop %v116
    %v118 = vmul.f32 1.0, %v117
    %v119 = vtanh.pop %v112
    %v120 = vmul.f32 %v118, 0.0
    %122 = vrot.lane.b32.xlu0 %v119, 64
    %v123 = vpop.permute.xlu0 %122
    %v125 = vmul.f32 %v118, %v123
    %127 = vrot.lane.b32.xlu0 %v125, 32
    %v128 = vpop.permute.xlu0 %127
    %v130 = vadd.f32 %v120, %v128
    %v131 = vtanh.pop %v130
    %133 = vrot.lane.b32.xlu0 %v131, 64
    %v134 = vpop.permute.xlu0 %133
    %v136 = vmul.f32 %v118, %v134
    %138 = vrot.lane.b32.xlu0 %v136, 32
    %v139 = vpop.permute.xlu0 %138
    %v141 = vsel %vm38, %v139, 0.0
    %v143 = vlaneseq
    %v144 = vshrl.u32 %v143, 7
    %v145 = vsub.s32 0, %v144
    %v146 = vrot.slane %v36, %v145
    %vm148 = vcmask 523264
    %v150 = vsel %vm148, %v141, 0
    %152 = vmatprep.subr.mxu0 0.0
    %153 = vmatpush1.msra.mxu0 %v28
    %154 = vmatprep.subr.mxu0 0.0
    %155 = vmatpush1.msra.mxu0 %v29
    %156 = vmatprep.subr.mxu0 0.0
    %157 = vmatpush1.msra.mxu0 %v30
    %158 = vmatprep.subr.mxu0 0.0
    %159 = vmatpush1.msra.mxu0 %v31
    %160 = vmatprep.subr.mxu0 0.0
    %161 = vmatpush1.msra.mxu0 %v32
    %162 = vmatprep.subr.mxu0 0.0
    %163 = vmatpush1.msra.mxu0 %v33
    %164 = vmatprep.subr.mxu0 0.0
    %165 = vmatpush1.msra.mxu0 %v34
    %166 = vmatprep.subr.mxu0 0.0
    %167 = vmatpush1.msra.mxu0 %v35
    %168 = vmatprep.subr.mxu0 0.0
    %169 = vmatpush1.msra.mxu0 0.0
    %170 = vmatprep.subr.mxu0 0.0
    %171 = vmatpush1.msra.mxu0 0.0
    %172 = vmatprep.subr.mxu0 0.0
    %173 = vmatpush1.msra.mxu0 0.0
    %174 = vmatprep.subr.mxu0 0.0
    %175 = vmatpush1.msra.mxu0 0.0
    %176 = vmatprep.subr.mxu0 0.0
    %177 = vmatpush1.msra.mxu0 0.0
    %178 = vmatprep.subr.mxu0 0.0
    %179 = vmatpush1.msra.mxu0 0.0
    %180 = vmatprep.subr.mxu0 0.0
    %181 = vmatpush1.msra.mxu0 0.0
    %182 = vmatprep.subr.mxu0 0.0
    %183 = vmatpush1.msra.mxu0 0.0
    %184 = vmatprep.subr.mxu0 0.0
    %185 = vmatpush1.msra.mxu0 0.0
    %186 = vmatprep.subr.mxu0 0.0
    %187 = vmatpush1.msra.mxu0 0.0
    %188 = vmatprep.subr.mxu0 0.0
    %189 = vmatpush1.msra.mxu0 0.0
    %190 = vmatprep.subr.mxu0 0.0
    %191 = vmatpush1.msra.mxu0 0.0
    %192 = vmatprep.subr.mxu0 0.0
    %193 = vmatpush1.msra.mxu0 0.0
    %194 = vmatprep.subr.mxu0 0.0
    %195 = vmatpush1.msra.mxu0 0.0
    %196 = vmatprep.subr.mxu0 0.0
    %197 = vmatpush1.msra.mxu0 0.0
    %198 = vmatprep.subr.mxu0 0.0
    %199 = vmatpush1.msra.mxu0 0.0
    %200 = vmatprep.subr.mxu0 0.0
    %201 = vmatpush1.msra.mxu0 0.0
    %202 = vmatprep.subr.mxu0 0.0
    %203 = vmatpush1.msra.mxu0 0.0
    %204 = vmatprep.subr.mxu0 0.0
    %205 = vmatpush1.msra.mxu0 0.0
    %206 = vmatprep.subr.mxu0 0.0
    %207 = vmatpush1.msra.mxu0 0.0
    %208 = vmatprep.subr.mxu0 0.0
    %209 = vmatpush1.msra.mxu0 0.0
    %210 = vmatprep.subr.mxu0 0.0
    %211 = vmatpush1.msra.mxu0 0.0
    %212 = vmatprep.subr.mxu0 0.0
    %213 = vmatpush1.msra.mxu0 0.0
    %214 = vmatprep.subr.mxu0 0.0
    %215 = vmatpush1.msra.mxu0 0.0
    %216 = vmatprep.mubr.f32.mxu0 0.0
    %217 = vmatmul.mubr.f32.gmra.mrb[0].mxu0 %v150
    %v218 = vpop.f32.mrb[0].mxu0
    %v219 = vadd.f32 %v146, %v218
    %v220 = vpop.f32.mrb[0].mxu0
    %221 = vdwg.mxu0
    %v222 = vxor.u32 %v219, 2147483648
    %v223 = vmul.f32 %v222, 1.442695
    %v224 = vpow.pop %v223
    %v225 = vadd.f32 %v224, 1.0
    %v226 = vrcp.pop %v225
    %v227 = vmul.f32 1.0, %v226
    %v228 = vtanh.pop %v219
    %v229 = vmul.f32 %v227, 0.0
    %231 = vrot.lane.b32.xlu0 %v228, 64
    %v232 = vpop.permute.xlu0 %231
    %v234 = vmul.f32 %v227, %v232
    %236 = vrot.lane.b32.xlu0 %v234, 32
    %v237 = vpop.permute.xlu0 %236
    %v239 = vadd.f32 %v229, %v237
    %v240 = vtanh.pop %v239
    %242 = vrot.lane.b32.xlu0 %v240, 64
    %v243 = vpop.permute.xlu0 %242
    %v245 = vmul.f32 %v227, %v243
    %s246 = scalar_lea.vmem %s0, 2
    %v247 = vld [vmem:[%s246] sm:$0x3]
    %v248 = vsel %vm38, %v139, 0
    %250 = vmatprep.subr.mxu0 0.0
    %251 = vmatpush1.msra.mxu0 %v24
    %252 = vmatprep.subr.mxu0 0.0
    %253 = vmatpush1.msra.mxu0 %v25
    %254 = vmatprep.subr.mxu0 0.0
    %255 = vmatpush1.msra.mxu0 %v26
    %256 = vmatprep.subr.mxu0 0.0
    %257 = vmatpush1.msra.mxu0 %v27
    %258 = vmatprep.subr.mxu0 0.0
    %259 = vmatpush1.msra.mxu0 0.0
    %260 = vmatprep.subr.mxu0 0.0
    %261 = vmatpush1.msra.mxu0 0.0
    %262 = vmatprep.subr.mxu0 0.0
    %263 = vmatpush1.msra.mxu0 0.0
    %264 = vmatprep.subr.mxu0 0.0
    %265 = vmatpush1.msra.mxu0 0.0
    %266 = vmatprep.subr.mxu0 0.0
    %267 = vmatpush1.msra.mxu0 0.0
    %268 = vmatprep.subr.mxu0 0.0
    %269 = vmatpush1.msra.mxu0 0.0
    %270 = vmatprep.subr.mxu0 0.0
    %271 = vmatpush1.msra.mxu0 0.0
    %272 = vmatprep.subr.mxu0 0.0
    %273 = vmatpush1.msra.mxu0 0.0
    %274 = vmatprep.subr.mxu0 0.0
    %275 = vmatpush1.msra.mxu0 0.0
    %276 = vmatprep.subr.mxu0 0.0
    %277 = vmatpush1.msra.mxu0 0.0
    %278 = vmatprep.subr.mxu0 0.0
    %279 = vmatpush1.msra.mxu0 0.0
    %280 = vmatprep.subr.mxu0 0.0
    %281 = vmatpush1.msra.mxu0 0.0
    %282 = vmatprep.subr.mxu0 0.0
    %283 = vmatpush1.msra.mxu0 0.0
    %284 = vmatprep.subr.mxu0 0.0
    %285 = vmatpush1.msra.mxu0 0.0
    %286 = vmatprep.subr.mxu0 0.0
    %287 = vmatpush1.msra.mxu0 0.0
    %288 = vmatprep.subr.mxu0 0.0
    %289 = vmatpush1.msra.mxu0 0.0
    %290 = vmatprep.subr.mxu0 0.0
    %291 = vmatpush1.msra.mxu0 0.0
    %292 = vmatprep.subr.mxu0 0.0
    %293 = vmatpush1.msra.mxu0 0.0
    %294 = vmatprep.subr.mxu0 0.0
    %295 = vmatpush1.msra.mxu0 0.0
    %296 = vmatprep.subr.mxu0 0.0
    %297 = vmatpush1.msra.mxu0 0.0
    %298 = vmatprep.subr.mxu0 0.0
    %299 = vmatpush1.msra.mxu0 0.0
    %300 = vmatprep.subr.mxu0 0.0
    %301 = vmatpush1.msra.mxu0 0.0
    %302 = vmatprep.subr.mxu0 0.0
    %303 = vmatpush1.msra.mxu0 0.0
    %304 = vmatprep.subr.mxu0 0.0
    %305 = vmatpush1.msra.mxu0 0.0
    %306 = vmatprep.subr.mxu0 0.0
    %307 = vmatpush1.msra.mxu0 0.0
    %308 = vmatprep.subr.mxu0 0.0
    %309 = vmatpush1.msra.mxu0 0.0
    %310 = vmatprep.subr.mxu0 0.0
    %311 = vmatpush1.msra.mxu0 0.0
    %312 = vmatprep.subr.mxu0 0.0
    %313 = vmatpush1.msra.mxu0 0.0
    %314 = vmatprep.mubr.f32.mxu0 0.0
    %315 = vmatmul.mubr.f32.gmra.mrb[0].mxu0 %v248
    %v316 = vpop.f32.mrb[0].mxu0
    %v317 = vadd.f32 0.0, %v316
    %v318 = vpop.f32.mrb[0].mxu0
    %319 = vdwg.mxu0
    %v320 = vadd.f32 %v247, %v317
    %v321 = vxor.u32 %v320, 2147483648
    %v322 = vmul.f32 %v321, 1.442695
    %v323 = vpow.pop %v322
    %v324 = vadd.f32 %v323, 1.0
    %v325 = vrcp.pop %v324
    %v326 = vmul.f32 1.0, %v325
    %v327 = vtanh.pop %v320
    %v328 = vmul.f32 %v326, %v130
    %330 = vrot.lane.b32.xlu0 %v327, 64
    %v331 = vpop.permute.xlu0 %330
    %v333 = vmul.f32 %v326, %v331
    %335 = vrot.lane.b32.xlu0 %v333, 32
    %v336 = vpop.permute.xlu0 %335
    %v338 = vadd.f32 %v328, %v336
    %v339 = vtanh.pop %v338
    %341 = vrot.lane.b32.xlu0 %v339, 64
    %v342 = vpop.permute.xlu0 %341
    %v344 = vmul.f32 %v326, %v342
    %346 = vrot.lane.b32.xlu0 %v344, 32
    %v347 = vpop.permute.xlu0 %346
    %350 = vrot.lane.b32.xlu0 %v245, 64
    %v351 = vpop.permute.xlu0 %350
    %v353 = vsel %vm38, %v347, %v351
    %v355 = vsel %vm148, %v353, 0
    %357 = vmatprep.subr.mxu0 0.0
    %358 = vmatpush1.msra.mxu0 %v28
    %359 = vmatprep.subr.mxu0 0.0
    %360 = vmatpush1.msra.mxu0 %v29
    %361 = vmatprep.subr.mxu0 0.0
    %362 = vmatpush1.msra.mxu0 %v30
    %363 = vmatprep.subr.mxu0 0.0
    %364 = vmatpush1.msra.mxu0 %v31
    %365 = vmatprep.subr.mxu0 0.0
    %366 = vmatpush1.msra.mxu0 %v32
    %367 = vmatprep.subr.mxu0 0.0
    %368 = vmatpush1.msra.mxu0 %v33
    %369 = vmatprep.subr.mxu0 0.0
    %370 = vmatpush1.msra.mxu0 %v34
    %371 = vmatprep.subr.mxu0 0.0
    %372 = vmatpush1.msra.mxu0 %v35
    %373 = vmatprep.subr.mxu0 0.0
    %374 = vmatpush1.msra.mxu0 0.0
    %375 = vmatprep.subr.mxu0 0.0
    %376 = vmatpush1.msra.mxu0 0.0
    %377 = vmatprep.subr.mxu0 0.0
    %378 = vmatpush1.msra.mxu0 0.0
    %379 = vmatprep.subr.mxu0 0.0
    %380 = vmatpush1.msra.mxu0 0.0
    %381 = vmatprep.subr.mxu0 0.0
    %382 = vmatpush1.msra.mxu0 0.0
    %383 = vmatprep.subr.mxu0 0.0
    %384 = vmatpush1.msra.mxu0 0.0
    %385 = vmatprep.subr.mxu0 0.0
    %386 = vmatpush1.msra.mxu0 0.0
    %387 = vmatprep.subr.mxu0 0.0
    %388 = vmatpush1.msra.mxu0 0.0
    %389 = vmatprep.subr.mxu0 0.0
    %390 = vmatpush1.msra.mxu0 0.0
    %391 = vmatprep.subr.mxu0 0.0
    %392 = vmatpush1.msra.mxu0 0.0
    %393 = vmatprep.subr.mxu0 0.0
    %394 = vmatpush1.msra.mxu0 0.0
    %395 = vmatprep.subr.mxu0 0.0
    %396 = vmatpush1.msra.mxu0 0.0
    %397 = vmatprep.subr.mxu0 0.0
    %398 = vmatpush1.msra.mxu0 0.0
    %399 = vmatprep.subr.mxu0 0.0
    %400 = vmatpush1.msra.mxu0 0.0
    %401 = vmatprep.subr.mxu0 0.0
    %402 = vmatpush1.msra.mxu0 0.0
    %403 = vmatprep.subr.mxu0 0.0
    %404 = vmatpush1.msra.mxu0 0.0
    %405 = vmatprep.subr.mxu0 0.0
    %406 = vmatpush1.msra.mxu0 0.0
    %407 = vmatprep.subr.mxu0 0.0
    %408 = vmatpush1.msra.mxu0 0.0
    %409 = vmatprep.subr.mxu0 0.0
    %410 = vmatpush1.msra.mxu0 0.0
    %411 = vmatprep.subr.mxu0 0.0
    %412 = vmatpush1.msra.mxu0 0.0
    %413 = vmatprep.subr.mxu0 0.0
    %414 = vmatpush1.msra.mxu0 0.0
    %415 = vmatprep.subr.mxu0 0.0
    %416 = vmatpush1.msra.mxu0 0.0
    %417 = vmatprep.subr.mxu0 0.0
    %418 = vmatpush1.msra.mxu0 0.0
    %419 = vmatprep.subr.mxu0 0.0
    %420 = vmatpush1.msra.mxu0 0.0
    %421 = vmatprep.mubr.f32.mxu0 0.0
    %422 = vmatmul.mubr.f32.gmra.mrb[0].mxu0 %v355
    %v423 = vpop.f32.mrb[0].mxu0
    %v424 = vadd.f32 %v146, %v423
    %v425 = vpop.f32.mrb[0].mxu0
    %426 = vdwg.mxu0
    %v427 = vxor.u32 %v424, 2147483648
    %v428 = vmul.f32 %v427, 1.442695
    %v429 = vpow.pop %v428
    %v430 = vadd.f32 %v429, 1.0
    %v431 = vrcp.pop %v430
    %v432 = vmul.f32 1.0, %v431
    %v433 = vtanh.pop %v424
    %v434 = vmul.f32 %v432, %v239
    %436 = vrot.lane.b32.xlu0 %v433, 64
    %v437 = vpop.permute.xlu0 %436
    %v439 = vmul.f32 %v432, %v437
    %441 = vrot.lane.b32.xlu0 %v439, 32
    %v442 = vpop.permute.xlu0 %441
    %v444 = vadd.f32 %v434, %v442
    %v445 = vtanh.pop %v444
    %447 = vrot.lane.b32.xlu0 %v445, 64
    %v448 = vpop.permute.xlu0 %447
    %v450 = vmul.f32 %v432, %v448
    %s451 = scalar_lea.vmem %s0, 4
    %v452 = vld [vmem:[%s451] sm:$0x3]
    %v453 = vsel %vm38, %v347, 0
    %455 = vmatprep.subr.mxu0 0.0
    %456 = vmatpush1.msra.mxu0 %v24
    %457 = vmatprep.subr.mxu0 0.0
    %458 = vmatpush1.msra.mxu0 %v25
    %459 = vmatprep.subr.mxu0 0.0
    %460 = vmatpush1.msra.mxu0 %v26
    %461 = vmatprep.subr.mxu0 0.0
    %462 = vmatpush1.msra.mxu0 %v27
    %463 = vmatprep.subr.mxu0 0.0
    %464 = vmatpush1.msra.mxu0 0.0
    %465 = vmatprep.subr.mxu0 0.0
    %466 = vmatpush1.msra.mxu0 0.0
    %467 = vmatprep.subr.mxu0 0.0
    %468 = vmatpush1.msra.mxu0 0.0
    %469 = vmatprep.subr.mxu0 0.0
    %470 = vmatpush1.msra.mxu0 0.0
    %471 = vmatprep.subr.mxu0 0.0
    %472 = vmatpush1.msra.mxu0 0.0
    %473 = vmatprep.subr.mxu0 0.0
    %474 = vmatpush1.msra.mxu0 0.0
    %475 = vmatprep.subr.mxu0 0.0
    %476 = vmatpush1.msra.mxu0 0.0
    %477 = vmatprep.subr.mxu0 0.0
    %478 = vmatpush1.msra.mxu0 0.0
    %479 = vmatprep.subr.mxu0 0.0
    %480 = vmatpush1.msra.mxu0 0.0
    %481 = vmatprep.subr.mxu0 0.0
    %482 = vmatpush1.msra.mxu0 0.0
    %483 = vmatprep.subr.mxu0 0.0
    %484 = vmatpush1.msra.mxu0 0.0
    %485 = vmatprep.subr.mxu0 0.0
    %486 = vmatpush1.msra.mxu0 0.0
    %487 = vmatprep.subr.mxu0 0.0
    %488 = vmatpush1.msra.mxu0 0.0
    %489 = vmatprep.subr.mxu0 0.0
    %490 = vmatpush1.msra.mxu0 0.0
    %491 = vmatprep.subr.mxu0 0.0
    %492 = vmatpush1.msra.mxu0 0.0
    %493 = vmatprep.subr.mxu0 0.0
    %494 = vmatpush1.msra.mxu0 0.0
    %495 = vmatprep.subr.mxu0 0.0
    %496 = vmatpush1.msra.mxu0 0.0
    %497 = vmatprep.subr.mxu0 0.0
    %498 = vmatpush1.msra.mxu0 0.0
    %499 = vmatprep.subr.mxu0 0.0
    %500 = vmatpush1.msra.mxu0 0.0
    %501 = vmatprep.subr.mxu0 0.0
    %502 = vmatpush1.msra.mxu0 0.0
    %503 = vmatprep.subr.mxu0 0.0
    %504 = vmatpush1.msra.mxu0 0.0
    %505 = vmatprep.subr.mxu0 0.0
    %506 = vmatpush1.msra.mxu0 0.0
    %507 = vmatprep.subr.mxu0 0.0
    %508 = vmatpush1.msra.mxu0 0.0
    %509 = vmatprep.subr.mxu0 0.0
    %510 = vmatpush1.msra.mxu0 0.0
    %511 = vmatprep.subr.mxu0 0.0
    %512 = vmatpush1.msra.mxu0 0.0
    %513 = vmatprep.subr.mxu0 0.0
    %514 = vmatpush1.msra.mxu0 0.0
    %515 = vmatprep.subr.mxu0 0.0
    %516 = vmatpush1.msra.mxu0 0.0
    %517 = vmatprep.subr.mxu0 0.0
    %518 = vmatpush1.msra.mxu0 0.0
    %519 = vmatprep.mubr.f32.mxu0 0.0
    %520 = vmatmul.mubr.f32.gmra.mrb[0].mxu0 %v453
    %v521 = vpop.f32.mrb[0].mxu0
    %v522 = vadd.f32 0.0, %v521
    %v523 = vpop.f32.mrb[0].mxu0
    %524 = vdwg.mxu0
    %v525 = vadd.f32 %v452, %v522
    %v526 = vxor.u32 %v525, 2147483648
    %v527 = vmul.f32 %v526, 1.442695
    %v528 = vpow.pop %v527
    %v529 = vadd.f32 %v528, 1.0
    %v530 = vrcp.pop %v529
    %v531 = vmul.f32 1.0, %v530
    %v532 = vtanh.pop %v525
    %v533 = vmul.f32 %v531, %v338
    %535 = vrot.lane.b32.xlu0 %v532, 64
    %v536 = vpop.permute.xlu0 %535
    %v538 = vmul.f32 %v531, %v536
    %540 = vrot.lane.b32.xlu0 %v538, 32
    %v541 = vpop.permute.xlu0 %540
    %v543 = vadd.f32 %v533, %v541
    %v544 = vtanh.pop %v543
    %546 = vrot.lane.b32.xlu0 %v544, 64
    %v547 = vpop.permute.xlu0 %546
    %v549 = vmul.f32 %v531, %v547
    %551 = vrot.lane.b32.xlu0 %v549, 32
    %v552 = vpop.permute.xlu0 %551
    %555 = vrot.lane.b32.xlu0 %v450, 64
    %v556 = vpop.permute.xlu0 %555
    %v558 = vsel %vm38, %v552, %v556
    %v560 = vsel %vm148, %v558, 0
    %562 = vmatprep.subr.mxu0 0.0
    %563 = vmatpush1.msra.mxu0 %v28
    %564 = vmatprep.subr.mxu0 0.0
    %565 = vmatpush1.msra.mxu0 %v29
    %566 = vmatprep.subr.mxu0 0.0
    %567 = vmatpush1.msra.mxu0 %v30
    %568 = vmatprep.subr.mxu0 0.0
    %569 = vmatpush1.msra.mxu0 %v31
    %570 = vmatprep.subr.mxu0 0.0
    %571 = vmatpush1.msra.mxu0 %v32
    %572 = vmatprep.subr.mxu0 0.0
    %573 = vmatpush1.msra.mxu0 %v33
    %574 = vmatprep.subr.mxu0 0.0
    %575 = vmatpush1.msra.mxu0 %v34
    %576 = vmatprep.subr.mxu0 0.0
    %577 = vmatpush1.msra.mxu0 %v35
    %578 = vmatprep.subr.mxu0 0.0
    %579 = vmatpush1.msra.mxu0 0.0
    %580 = vmatprep.subr.mxu0 0.0
    %581 = vmatpush1.msra.mxu0 0.0
    %582 = vmatprep.subr.mxu0 0.0
    %583 = vmatpush1.msra.mxu0 0.0
    %584 = vmatprep.subr.mxu0 0.0
    %585 = vmatpush1.msra.mxu0 0.0
    %586 = vmatprep.subr.mxu0 0.0
    %587 = vmatpush1.msra.mxu0 0.0
    %588 = vmatprep.subr.mxu0 0.0
    %589 = vmatpush1.msra.mxu0 0.0
    %590 = vmatprep.subr.mxu0 0.0
    %591 = vmatpush1.msra.mxu0 0.0
    %592 = vmatprep.subr.mxu0 0.0
    %593 = vmatpush1.msra.mxu0 0.0
    %594 = vmatprep.subr.mxu0 0.0
    %595 = vmatpush1.msra.mxu0 0.0
    %596 = vmatprep.subr.mxu0 0.0
    %597 = vmatpush1.msra.mxu0 0.0
    %598 = vmatprep.subr.mxu0 0.0
    %599 = vmatpush1.msra.mxu0 0.0
    %600 = vmatprep.subr.mxu0 0.0
    %601 = vmatpush1.msra.mxu0 0.0
    %602 = vmatprep.subr.mxu0 0.0
    %603 = vmatpush1.msra.mxu0 0.0
    %604 = vmatprep.subr.mxu0 0.0
    %605 = vmatpush1.msra.mxu0 0.0
    %606 = vmatprep.subr.mxu0 0.0
    %607 = vmatpush1.msra.mxu0 0.0
    %608 = vmatprep.subr.mxu0 0.0
    %609 = vmatpush1.msra.mxu0 0.0
    %610 = vmatprep.subr.mxu0 0.0
    %611 = vmatpush1.msra.mxu0 0.0
    %612 = vmatprep.subr.mxu0 0.0
    %613 = vmatpush1.msra.mxu0 0.0
    %614 = vmatprep.subr.mxu0 0.0
    %615 = vmatpush1.msra.mxu0 0.0
    %616 = vmatprep.subr.mxu0 0.0
    %617 = vmatpush1.msra.mxu0 0.0
    %618 = vmatprep.subr.mxu0 0.0
    %619 = vmatpush1.msra.mxu0 0.0
    %620 = vmatprep.subr.mxu0 0.0
    %621 = vmatpush1.msra.mxu0 0.0
    %622 = vmatprep.subr.mxu0 0.0
    %623 = vmatpush1.msra.mxu0 0.0
    %624 = vmatprep.subr.mxu0 0.0
    %625 = vmatpush1.msra.mxu0 0.0
    %626 = vmatprep.mubr.f32.mxu0 0.0
    %627 = vmatmul.mubr.f32.gmra.mrb[0].mxu0 %v560
    %v628 = vpop.f32.mrb[0].mxu0
    %v629 = vadd.f32 %v146, %v628
    %v630 = vpop.f32.mrb[0].mxu0
    %631 = vdwg.mxu0
    %v632 = vxor.u32 %v629, 2147483648
    %v633 = vmul.f32 %v632, 1.442695
    %v634 = vpow.pop %v633
    %v635 = vadd.f32 %v634, 1.0
    %v636 = vrcp.pop %v635
    %v637 = vmul.f32 1.0, %v636
    %v638 = vtanh.pop %v629
    %v639 = vmul.f32 %v637, %v444
    %641 = vrot.lane.b32.xlu0 %v638, 64
    %v642 = vpop.permute.xlu0 %641
    %v644 = vmul.f32 %v637, %v642
    %646 = vrot.lane.b32.xlu0 %v644, 32
    %v647 = vpop.permute.xlu0 %646
    %v649 = vadd.f32 %v639, %v647
    %v650 = vtanh.pop %v649
    %652 = vrot.lane.b32.xlu0 %v650, 64
    %v653 = vpop.permute.xlu0 %652
    %v655 = vmul.f32 %v637, %v653
    %s656 = scalar_lea.vmem %s0, 6
    %v657 = vld [vmem:[%s656] sm:$0x3]
    %v658 = vsel %vm38, %v552, 0
    %660 = vmatprep.subr.mxu0 0.0
    %661 = vmatpush1.msra.mxu0 %v24
    %662 = vmatprep.subr.mxu0 0.0
    %663 = vmatpush1.msra.mxu0 %v25
    %664 = vmatprep.subr.mxu0 0.0
    %665 = vmatpush1.msra.mxu0 %v26
    %666 = vmatprep.subr.mxu0 0.0
    %667 = vmatpush1.msra.mxu0 %v27
    %668 = vmatprep.subr.mxu0 0.0
    %669 = vmatpush1.msra.mxu0 0.0
    %670 = vmatprep.subr.mxu0 0.0
    %671 = vmatpush1.msra.mxu0 0.0
    %672 = vmatprep.subr.mxu0 0.0
    %673 = vmatpush1.msra.mxu0 0.0
    %674 = vmatprep.subr.mxu0 0.0
    %675 = vmatpush1.msra.mxu0 0.0
    %676 = vmatprep.subr.mxu0 0.0
    %677 = vmatpush1.msra.mxu0 0.0
    %678 = vmatprep.subr.mxu0 0.0
    %679 = vmatpush1.msra.mxu0 0.0
    %680 = vmatprep.subr.mxu0 0.0
    %681 = vmatpush1.msra.mxu0 0.0
    %682 = vmatprep.subr.mxu0 0.0
    %683 = vmatpush1.msra.mxu0 0.0
    %684 = vmatprep.subr.mxu0 0.0
    %685 = vmatpush1.msra.mxu0 0.0
    %686 = vmatprep.subr.mxu0 0.0
    %687 = vmatpush1.msra.mxu0 0.0
    %688 = vmatprep.subr.mxu0 0.0
    %689 = vmatpush1.msra.mxu0 0.0
    %690 = vmatprep.subr.mxu0 0.0
    %691 = vmatpush1.msra.mxu0 0.0
    %692 = vmatprep.subr.mxu0 0.0
    %693 = vmatpush1.msra.mxu0 0.0
    %694 = vmatprep.subr.mxu0 0.0
    %695 = vmatpush1.msra.mxu0 0.0
    %696 = vmatprep.subr.mxu0 0.0
    %697 = vmatpush1.msra.mxu0 0.0
    %698 = vmatprep.subr.mxu0 0.0
    %699 = vmatpush1.msra.mxu0 0.0
    %700 = vmatprep.subr.mxu0 0.0
    %701 = vmatpush1.msra.mxu0 0.0
    %702 = vmatprep.subr.mxu0 0.0
    %703 = vmatpush1.msra.mxu0 0.0
    %704 = vmatprep.subr.mxu0 0.0
    %705 = vmatpush1.msra.mxu0 0.0
    %706 = vmatprep.subr.mxu0 0.0
    %707 = vmatpush1.msra.mxu0 0.0
    %708 = vmatprep.subr.mxu0 0.0
    %709 = vmatpush1.msra.mxu0 0.0
    %710 = vmatprep.subr.mxu0 0.0
    %711 = vmatpush1.msra.mxu0 0.0
    %712 = vmatprep.subr.mxu0 0.0
    %713 = vmatpush1.msra.mxu0 0.0
    %714 = vmatprep.subr.mxu0 0.0
    %715 = vmatpush1.msra.mxu0 0.0
    %716 = vmatprep.subr.mxu0 0.0
    %717 = vmatpush1.msra.mxu0 0.0
    %718 = vmatprep.subr.mxu0 0.0
    %719 = vmatpush1.msra.mxu0 0.0
    %720 = vmatprep.subr.mxu0 0.0
    %721 = vmatpush1.msra.mxu0 0.0
    %722 = vmatprep.subr.mxu0 0.0
    %723 = vmatpush1.msra.mxu0 0.0
    %724 = vmatprep.mubr.f32.mxu0 0.0
    %725 = vmatmul.mubr.f32.gmra.mrb[0].mxu0 %v658
    %v726 = vpop.f32.mrb[0].mxu0
    %v727 = vadd.f32 0.0, %v726
    %v728 = vpop.f32.mrb[0].mxu0
    %729 = vdwg.mxu0
    %v730 = vadd.f32 %v657, %v727
    %v731 = vxor.u32 %v730, 2147483648
    %v732 = vmul.f32 %v731, 1.442695
    %v733 = vpow.pop %v732
    %v734 = vadd.f32 %v733, 1.0
    %v735 = vrcp.pop %v734
    %v736 = vmul.f32 1.0, %v735
    %v737 = vtanh.pop %v730
    %v738 = vmul.f32 %v736, %v543
    %740 = vrot.lane.b32.xlu0 %v737, 64
    %v741 = vpop.permute.xlu0 %740
    %v743 = vmul.f32 %v736, %v741
    %745 = vrot.lane.b32.xlu0 %v743, 32
    %v746 = vpop.permute.xlu0 %745
    %v748 = vadd.f32 %v738, %v746
    %v749 = vtanh.pop %v748
    %751 = vrot.lane.b32.xlu0 %v749, 64
    %v752 = vpop.permute.xlu0 %751
    %v754 = vmul.f32 %v736, %v752
    %756 = vrot.lane.b32.xlu0 %v754, 32
    %v757 = vpop.permute.xlu0 %756
    %760 = vrot.lane.b32.xlu0 %v655, 64
    %v761 = vpop.permute.xlu0 %760
    %v763 = vsel %vm38, %v757, %v761
    %v765 = vsel %vm148, %v763, 0
    %767 = vmatprep.subr.mxu0 0.0
    %768 = vmatpush1.msra.mxu0 %v28
    %769 = vmatprep.subr.mxu0 0.0
    %770 = vmatpush1.msra.mxu0 %v29
    %771 = vmatprep.subr.mxu0 0.0
    %772 = vmatpush1.msra.mxu0 %v30
    %773 = vmatprep.subr.mxu0 0.0
    %774 = vmatpush1.msra.mxu0 %v31
    %775 = vmatprep.subr.mxu0 0.0
    %776 = vmatpush1.msra.mxu0 %v32
    %777 = vmatprep.subr.mxu0 0.0
    %778 = vmatpush1.msra.mxu0 %v33
    %779 = vmatprep.subr.mxu0 0.0
    %780 = vmatpush1.msra.mxu0 %v34
    %781 = vmatprep.subr.mxu0 0.0
    %782 = vmatpush1.msra.mxu0 %v35
    %783 = vmatprep.subr.mxu0 0.0
    %784 = vmatpush1.msra.mxu0 0.0
    %785 = vmatprep.subr.mxu0 0.0
    %786 = vmatpush1.msra.mxu0 0.0
    %787 = vmatprep.subr.mxu0 0.0
    %788 = vmatpush1.msra.mxu0 0.0
    %789 = vmatprep.subr.mxu0 0.0
    %790 = vmatpush1.msra.mxu0 0.0
    %791 = vmatprep.subr.mxu0 0.0
    %792 = vmatpush1.msra.mxu0 0.0
    %793 = vmatprep.subr.mxu0 0.0
    %794 = vmatpush1.msra.mxu0 0.0
    %795 = vmatprep.subr.mxu0 0.0
    %796 = vmatpush1.msra.mxu0 0.0
    %797 = vmatprep.subr.mxu0 0.0
    %798 = vmatpush1.msra.mxu0 0.0
    %799 = vmatprep.subr.mxu0 0.0
    %800 = vmatpush1.msra.mxu0 0.0
    %801 = vmatprep.subr.mxu0 0.0
    %802 = vmatpush1.msra.mxu0 0.0
    %803 = vmatprep.subr.mxu0 0.0
    %804 = vmatpush1.msra.mxu0 0.0
    %805 = vmatprep.subr.mxu0 0.0
    %806 = vmatpush1.msra.mxu0 0.0
    %807 = vmatprep.subr.mxu0 0.0
    %808 = vmatpush1.msra.mxu0 0.0
    %809 = vmatprep.subr.mxu0 0.0
    %810 = vmatpush1.msra.mxu0 0.0
    %811 = vmatprep.subr.mxu0 0.0
    %812 = vmatpush1.msra.mxu0 0.0
    %813 = vmatprep.subr.mxu0 0.0
    %814 = vmatpush1.msra.mxu0 0.0
    %815 = vmatprep.subr.mxu0 0.0
    %816 = vmatpush1.msra.mxu0 0.0
    %817 = vmatprep.subr.mxu0 0.0
    %818 = vmatpush1.msra.mxu0 0.0
    %819 = vmatprep.subr.mxu0 0.0
    %820 = vmatpush1.msra.mxu0 0.0
    %821 = vmatprep.subr.mxu0 0.0
    %822 = vmatpush1.msra.mxu0 0.0
    %823 = vmatprep.subr.mxu0 0.0
    %824 = vmatpush1.msra.mxu0 0.0
    %825 = vmatprep.subr.mxu0 0.0
    %826 = vmatpush1.msra.mxu0 0.0
    %827 = vmatprep.subr.mxu0 0.0
    %828 = vmatpush1.msra.mxu0 0.0
    %829 = vmatprep.subr.mxu0 0.0
    %830 = vmatpush1.msra.mxu0 0.0
    %831 = vmatprep.mubr.f32.mxu0 0.0
    %832 = vmatmul.mubr.f32.gmra.mrb[0].mxu0 %v765
    %v833 = vpop.f32.mrb[0].mxu0
    %v834 = vadd.f32 %v146, %v833
    %v835 = vpop.f32.mrb[0].mxu0
    %836 = vdwg.mxu0
    %v837 = vxor.u32 %v834, 2147483648
    %v838 = vmul.f32 %v837, 1.442695
    %v839 = vpow.pop %v838
    %v840 = vadd.f32 %v839, 1.0
    %v841 = vrcp.pop %v840
    %v842 = vmul.f32 1.0, %v841
    %v843 = vtanh.pop %v834
    %v844 = vmul.f32 %v842, %v649
    %846 = vrot.lane.b32.xlu0 %v843, 64
    %v847 = vpop.permute.xlu0 %846
    %v849 = vmul.f32 %v842, %v847
    %851 = vrot.lane.b32.xlu0 %v849, 32
    %v852 = vpop.permute.xlu0 %851
    %v854 = vadd.f32 %v844, %v852
    %v855 = vtanh.pop %v854
    %857 = vrot.lane.b32.xlu0 %v855, 64
    %v858 = vpop.permute.xlu0 %857
    %v860 = vmul.f32 %v842, %v858
    %s861 = scalar_lea.vmem %s0, 8
    %v862 = vld [vmem:[%s861] sm:$0x3]
    %v863 = vsel %vm38, %v757, 0
    %865 = vmatprep.subr.mxu0 0.0
    %866 = vmatpush1.msra.mxu0 %v24
    %867 = vmatprep.subr.mxu0 0.0
    %868 = vmatpush1.msra.mxu0 %v25
    %869 = vmatprep.subr.mxu0 0.0
    %870 = vmatpush1.msra.mxu0 %v26
    %871 = vmatprep.subr.mxu0 0.0
    %872 = vmatpush1.msra.mxu0 %v27
    %873 = vmatprep.subr.mxu0 0.0
    %874 = vmatpush1.msra.mxu0 0.0
    %875 = vmatprep.subr.mxu0 0.0
    %876 = vmatpush1.msra.mxu0 0.0
    %877 = vmatprep.subr.mxu0 0.0
    %878 = vmatpush1.msra.mxu0 0.0
    %879 = vmatprep.subr.mxu0 0.0
    %880 = vmatpush1.msra.mxu0 0.0
    %881 = vmatprep.subr.mxu0 0.0
    %882 = vmatpush1.msra.mxu0 0.0
    %883 = vmatprep.subr.mxu0 0.0
    %884 = vmatpush1.msra.mxu0 0.0
    %885 = vmatprep.subr.mxu0 0.0
    %886 = vmatpush1.msra.mxu0 0.0
    %887 = vmatprep.subr.mxu0 0.0
    %888 = vmatpush1.msra.mxu0 0.0
    %889 = vmatprep.subr.mxu0 0.0
    %890 = vmatpush1.msra.mxu0 0.0
    %891 = vmatprep.subr.mxu0 0.0
    %892 = vmatpush1.msra.mxu0 0.0
    %893 = vmatprep.subr.mxu0 0.0
    %894 = vmatpush1.msra.mxu0 0.0
    %895 = vmatprep.subr.mxu0 0.0
    %896 = vmatpush1.msra.mxu0 0.0
    %897 = vmatprep.subr.mxu0 0.0
    %898 = vmatpush1.msra.mxu0 0.0
    %899 = vmatprep.subr.mxu0 0.0
    %900 = vmatpush1.msra.mxu0 0.0
    %901 = vmatprep.subr.mxu0 0.0
    %902 = vmatpush1.msra.mxu0 0.0
    %903 = vmatprep.subr.mxu0 0.0
    %904 = vmatpush1.msra.mxu0 0.0
    %905 = vmatprep.subr.mxu0 0.0
    %906 = vmatpush1.msra.mxu0 0.0
    %907 = vmatprep.subr.mxu0 0.0
    %908 = vmatpush1.msra.mxu0 0.0
    %909 = vmatprep.subr.mxu0 0.0
    %910 = vmatpush1.msra.mxu0 0.0
    %911 = vmatprep.subr.mxu0 0.0
    %912 = vmatpush1.msra.mxu0 0.0
    %913 = vmatprep.subr.mxu0 0.0
    %914 = vmatpush1.msra.mxu0 0.0
    %915 = vmatprep.subr.mxu0 0.0
    %916 = vmatpush1.msra.mxu0 0.0
    %917 = vmatprep.subr.mxu0 0.0
    %918 = vmatpush1.msra.mxu0 0.0
    %919 = vmatprep.subr.mxu0 0.0
    %920 = vmatpush1.msra.mxu0 0.0
    %921 = vmatprep.subr.mxu0 0.0
    %922 = vmatpush1.msra.mxu0 0.0
    %923 = vmatprep.subr.mxu0 0.0
    %924 = vmatpush1.msra.mxu0 0.0
    %925 = vmatprep.subr.mxu0 0.0
    %926 = vmatpush1.msra.mxu0 0.0
    %927 = vmatprep.subr.mxu0 0.0
    %928 = vmatpush1.msra.mxu0 0.0
    %929 = vmatprep.mubr.f32.mxu0 0.0
    %930 = vmatmul.mubr.f32.gmra.mrb[0].mxu0 %v863
    %v931 = vpop.f32.mrb[0].mxu0
    %v932 = vadd.f32 0.0, %v931
    %v933 = vpop.f32.mrb[0].mxu0
    %934 = vdwg.mxu0
    %v935 = vadd.f32 %v862, %v932
    %v936 = vxor.u32 %v935, 2147483648
    %v937 = vmul.f32 %v936, 1.442695
    %v938 = vpow.pop %v937
    %v939 = vadd.f32 %v938, 1.0
    %v940 = vrcp.pop %v939
    %v941 = vmul.f32 1.0, %v940
    %v942 = vtanh.pop %v935
    %v943 = vmul.f32 %v941, %v748
    %945 = vrot.lane.b32.xlu0 %v942, 64
    %v946 = vpop.permute.xlu0 %945
    %v948 = vmul.f32 %v941, %v946
    %950 = vrot.lane.b32.xlu0 %v948, 32
    %v951 = vpop.permute.xlu0 %950
    %v953 = vadd.f32 %v943, %v951
    %v954 = vtanh.pop %v953
    %956 = vrot.lane.b32.xlu0 %v954, 64
    %v957 = vpop.permute.xlu0 %956
    %v959 = vmul.f32 %v941, %v957
    %961 = vrot.lane.b32.xlu0 %v959, 32
    %v962 = vpop.permute.xlu0 %961
    %965 = vrot.lane.b32.xlu0 %v860, 64
    %v966 = vpop.permute.xlu0 %965
    %v968 = vsel %vm38, %v962, %v966
    %v970 = vsel %vm148, %v968, 0
    %972 = vmatprep.subr.mxu0 0.0
    %973 = vmatpush1.msra.mxu0 %v28
    %974 = vmatprep.subr.mxu0 0.0
    %975 = vmatpush1.msra.mxu0 %v29
    %976 = vmatprep.subr.mxu0 0.0
    %977 = vmatpush1.msra.mxu0 %v30
    %978 = vmatprep.subr.mxu0 0.0
    %979 = vmatpush1.msra.mxu0 %v31
    %980 = vmatprep.subr.mxu0 0.0
    %981 = vmatpush1.msra.mxu0 %v32
    %982 = vmatprep.subr.mxu0 0.0
    %983 = vmatpush1.msra.mxu0 %v33
    %984 = vmatprep.subr.mxu0 0.0
    %985 = vmatpush1.msra.mxu0 %v34
    %986 = vmatprep.subr.mxu0 0.0
    %987 = vmatpush1.msra.mxu0 %v35
    %988 = vmatprep.subr.mxu0 0.0
    %989 = vmatpush1.msra.mxu0 0.0
    %990 = vmatprep.subr.mxu0 0.0
    %991 = vmatpush1.msra.mxu0 0.0
    %992 = vmatprep.subr.mxu0 0.0
    %993 = vmatpush1.msra.mxu0 0.0
    %994 = vmatprep.subr.mxu0 0.0
    %995 = vmatpush1.msra.mxu0 0.0
    %996 = vmatprep.subr.mxu0 0.0
    %997 = vmatpush1.msra.mxu0 0.0
    %998 = vmatprep.subr.mxu0 0.0
    %999 = vmatpush1.msra.mxu0 0.0
    %1000 = vmatprep.subr.mxu0 0.0
    %1001 = vmatpush1.msra.mxu0 0.0
    %1002 = vmatprep.subr.mxu0 0.0
    %1003 = vmatpush1.msra.mxu0 0.0
    %1004 = vmatprep.subr.mxu0 0.0
    %1005 = vmatpush1.msra.mxu0 0.0
    %1006 = vmatprep.subr.mxu0 0.0
    %1007 = vmatpush1.msra.mxu0 0.0
    %1008 = vmatprep.subr.mxu0 0.0
    %1009 = vmatpush1.msra.mxu0 0.0
    %1010 = vmatprep.subr.mxu0 0.0
    %1011 = vmatpush1.msra.mxu0 0.0
    %1012 = vmatprep.subr.mxu0 0.0
    %1013 = vmatpush1.msra.mxu0 0.0
    %1014 = vmatprep.subr.mxu0 0.0
    %1015 = vmatpush1.msra.mxu0 0.0
    %1016 = vmatprep.subr.mxu0 0.0
    %1017 = vmatpush1.msra.mxu0 0.0
    %1018 = vmatprep.subr.mxu0 0.0
    %1019 = vmatpush1.msra.mxu0 0.0
    %1020 = vmatprep.subr.mxu0 0.0
    %1021 = vmatpush1.msra.mxu0 0.0
    %1022 = vmatprep.subr.mxu0 0.0
    %1023 = vmatpush1.msra.mxu0 0.0
    %1024 = vmatprep.subr.mxu0 0.0
    %1025 = vmatpush1.msra.mxu0 0.0
    %1026 = vmatprep.subr.mxu0 0.0
    %1027 = vmatpush1.msra.mxu0 0.0
    %1028 = vmatprep.subr.mxu0 0.0
    %1029 = vmatpush1.msra.mxu0 0.0
    %1030 = vmatprep.subr.mxu0 0.0
    %1031 = vmatpush1.msra.mxu0 0.0
    %1032 = vmatprep.subr.mxu0 0.0
    %1033 = vmatpush1.msra.mxu0 0.0
    %1034 = vmatprep.subr.mxu0 0.0
    %1035 = vmatpush1.msra.mxu0 0.0
    %1036 = vmatprep.mubr.f32.mxu0 0.0
    %1037 = vmatmul.mubr.f32.gmra.mrb[0].mxu0 %v970
    %v1038 = vpop.f32.mrb[0].mxu0
    %v1039 = vadd.f32 %v146, %v1038
    %v1040 = vpop.f32.mrb[0].mxu0
    %1041 = vdwg.mxu0
    %v1042 = vxor.u32 %v1039, 2147483648
    %v1043 = vmul.f32 %v1042, 1.442695
    %v1044 = vpow.pop %v1043
    %v1045 = vadd.f32 %v1044, 1.0
    %v1046 = vrcp.pop %v1045
    %v1047 = vmul.f32 1.0, %v1046
    %v1048 = vtanh.pop %v1039
    %v1049 = vmul.f32 %v1047, %v854
    %1051 = vrot.lane.b32.xlu0 %v1048, 64
    %v1052 = vpop.permute.xlu0 %1051
    %v1054 = vmul.f32 %v1047, %v1052
    %1056 = vrot.lane.b32.xlu0 %v1054, 32
    %v1057 = vpop.permute.xlu0 %1056
    %v1059 = vadd.f32 %v1049, %v1057
    %v1060 = vtanh.pop %v1059
    %1062 = vrot.lane.b32.xlu0 %v1060, 64
    %v1063 = vpop.permute.xlu0 %1062
    %v1065 = vmul.f32 %v1047, %v1063
    %s1066 = scalar_lea.vmem %s0, 10
    %v1067 = vld [vmem:[%s1066] sm:$0x3]
    %v1068 = vsel %vm38, %v962, 0
    %1070 = vmatprep.subr.mxu0 0.0
    %1071 = vmatpush1.msra.mxu0 %v24
    %1072 = vmatprep.subr.mxu0 0.0
    %1073 = vmatpush1.msra.mxu0 %v25
    %1074 = vmatprep.subr.mxu0 0.0
    %1075 = vmatpush1.msra.mxu0 %v26
    %1076 = vmatprep.subr.mxu0 0.0
    %1077 = vmatpush1.msra.mxu0 %v27
    %1078 = vmatprep.subr.mxu0 0.0
    %1079 = vmatpush1.msra.mxu0 0.0
    %1080 = vmatprep.subr.mxu0 0.0
    %1081 = vmatpush1.msra.mxu0 0.0
    %1082 = vmatprep.subr.mxu0 0.0
    %1083 = vmatpush1.msra.mxu0 0.0
    %1084 = vmatprep.subr.mxu0 0.0
    %1085 = vmatpush1.msra.mxu0 0.0
    %1086 = vmatprep.subr.mxu0 0.0
    %1087 = vmatpush1.msra.mxu0 0.0
    %1088 = vmatprep.subr.mxu0 0.0
    %1089 = vmatpush1.msra.mxu0 0.0
    %1090 = vmatprep.subr.mxu0 0.0
    %1091 = vmatpush1.msra.mxu0 0.0
    %1092 = vmatprep.subr.mxu0 0.0
    %1093 = vmatpush1.msra.mxu0 0.0
    %1094 = vmatprep.subr.mxu0 0.0
    %1095 = vmatpush1.msra.mxu0 0.0
    %1096 = vmatprep.subr.mxu0 0.0
    %1097 = vmatpush1.msra.mxu0 0.0
    %1098 = vmatprep.subr.mxu0 0.0
    %1099 = vmatpush1.msra.mxu0 0.0
    %1100 = vmatprep.subr.mxu0 0.0
    %1101 = vmatpush1.msra.mxu0 0.0
    %1102 = vmatprep.subr.mxu0 0.0
    %1103 = vmatpush1.msra.mxu0 0.0
    %1104 = vmatprep.subr.mxu0 0.0
    %1105 = vmatpush1.msra.mxu0 0.0
    %1106 = vmatprep.subr.mxu0 0.0
    %1107 = vmatpush1.msra.mxu0 0.0
    %1108 = vmatprep.subr.mxu0 0.0
    %1109 = vmatpush1.msra.mxu0 0.0
    %1110 = vmatprep.subr.mxu0 0.0
    %1111 = vmatpush1.msra.mxu0 0.0
    %1112 = vmatprep.subr.mxu0 0.0
    %1113 = vmatpush1.msra.mxu0 0.0
    %1114 = vmatprep.subr.mxu0 0.0
    %1115 = vmatpush1.msra.mxu0 0.0
    %1116 = vmatprep.subr.mxu0 0.0
    %1117 = vmatpush1.msra.mxu0 0.0
    %1118 = vmatprep.subr.mxu0 0.0
    %1119 = vmatpush1.msra.mxu0 0.0
    %1120 = vmatprep.subr.mxu0 0.0
    %1121 = vmatpush1.msra.mxu0 0.0
    %1122 = vmatprep.subr.mxu0 0.0
    %1123 = vmatpush1.msra.mxu0 0.0
    %1124 = vmatprep.subr.mxu0 0.0
    %1125 = vmatpush1.msra.mxu0 0.0
    %1126 = vmatprep.subr.mxu0 0.0
    %1127 = vmatpush1.msra.mxu0 0.0
    %1128 = vmatprep.subr.mxu0 0.0
    %1129 = vmatpush1.msra.mxu0 0.0
    %1130 = vmatprep.subr.mxu0 0.0
    %1131 = vmatpush1.msra.mxu0 0.0
    %1132 = vmatprep.subr.mxu0 0.0
    %1133 = vmatpush1.msra.mxu0 0.0
    %1134 = vmatprep.mubr.f32.mxu0 0.0
    %1135 = vmatmul.mubr.f32.gmra.mrb[0].mxu0 %v1068
    %v1136 = vpop.f32.mrb[0].mxu0
    %v1137 = vadd.f32 0.0, %v1136
    %v1138 = vpop.f32.mrb[0].mxu0
    %1139 = vdwg.mxu0
    %v1140 = vadd.f32 %v1067, %v1137
    %v1141 = vxor.u32 %v1140, 2147483648
    %v1142 = vmul.f32 %v1141, 1.442695
    %v1143 = vpow.pop %v1142
    %v1144 = vadd.f32 %v1143, 1.0
    %v1145 = vrcp.pop %v1144
    %v1146 = vmul.f32 1.0, %v1145
    %v1147 = vtanh.pop %v1140
    %v1148 = vmul.f32 %v1146, %v953
    %1150 = vrot.lane.b32.xlu0 %v1147, 64
    %v1151 = vpop.permute.xlu0 %1150
    %v1153 = vmul.f32 %v1146, %v1151
    %1155 = vrot.lane.b32.xlu0 %v1153, 32
    %v1156 = vpop.permute.xlu0 %1155
    %v1158 = vadd.f32 %v1148, %v1156
    %v1159 = vtanh.pop %v1158
    %1161 = vrot.lane.b32.xlu0 %v1159, 64
    %v1162 = vpop.permute.xlu0 %1161
    %v1164 = vmul.f32 %v1146, %v1162
    %1166 = vrot.lane.b32.xlu0 %v1164, 32
    %v1167 = vpop.permute.xlu0 %1166
    %1170 = vrot.lane.b32.xlu0 %v1065, 64
    %v1171 = vpop.permute.xlu0 %1170
    %v1173 = vsel %vm38, %v1167, %v1171
    %v1175 = vsel %vm148, %v1173, 0
    %1177 = vmatprep.subr.mxu0 0.0
    %1178 = vmatpush1.msra.mxu0 %v28
    %1179 = vmatprep.subr.mxu0 0.0
    %1180 = vmatpush1.msra.mxu0 %v29
    %1181 = vmatprep.subr.mxu0 0.0
    %1182 = vmatpush1.msra.mxu0 %v30
    %1183 = vmatprep.subr.mxu0 0.0
    %1184 = vmatpush1.msra.mxu0 %v31
    %1185 = vmatprep.subr.mxu0 0.0
    %1186 = vmatpush1.msra.mxu0 %v32
    %1187 = vmatprep.subr.mxu0 0.0
    %1188 = vmatpush1.msra.mxu0 %v33
    %1189 = vmatprep.subr.mxu0 0.0
    %1190 = vmatpush1.msra.mxu0 %v34
    %1191 = vmatprep.subr.mxu0 0.0
    %1192 = vmatpush1.msra.mxu0 %v35
    %1193 = vmatprep.subr.mxu0 0.0
    %1194 = vmatpush1.msra.mxu0 0.0
    %1195 = vmatprep.subr.mxu0 0.0
    %1196 = vmatpush1.msra.mxu0 0.0
    %1197 = vmatprep.subr.mxu0 0.0
    %1198 = vmatpush1.msra.mxu0 0.0
    %1199 = vmatprep.subr.mxu0 0.0
    %1200 = vmatpush1.msra.mxu0 0.0
    %1201 = vmatprep.subr.mxu0 0.0
    %1202 = vmatpush1.msra.mxu0 0.0
    %1203 = vmatprep.subr.mxu0 0.0
    %1204 = vmatpush1.msra.mxu0 0.0
    %1205 = vmatprep.subr.mxu0 0.0
    %1206 = vmatpush1.msra.mxu0 0.0
    %1207 = vmatprep.subr.mxu0 0.0
    %1208 = vmatpush1.msra.mxu0 0.0
    %1209 = vmatprep.subr.mxu0 0.0
    %1210 = vmatpush1.msra.mxu0 0.0
    %1211 = vmatprep.subr.mxu0 0.0
    %1212 = vmatpush1.msra.mxu0 0.0
    %1213 = vmatprep.subr.mxu0 0.0
    %1214 = vmatpush1.msra.mxu0 0.0
    %1215 = vmatprep.subr.mxu0 0.0
    %1216 = vmatpush1.msra.mxu0 0.0
    %1217 = vmatprep.subr.mxu0 0.0
    %1218 = vmatpush1.msra.mxu0 0.0
    %1219 = vmatprep.subr.mxu0 0.0
    %1220 = vmatpush1.msra.mxu0 0.0
    %1221 = vmatprep.subr.mxu0 0.0
    %1222 = vmatpush1.msra.mxu0 0.0
    %1223 = vmatprep.subr.mxu0 0.0
    %1224 = vmatpush1.msra.mxu0 0.0
    %1225 = vmatprep.subr.mxu0 0.0
    %1226 = vmatpush1.msra.mxu0 0.0
    %1227 = vmatprep.subr.mxu0 0.0
    %1228 = vmatpush1.msra.mxu0 0.0
    %1229 = vmatprep.subr.mxu0 0.0
    %1230 = vmatpush1.msra.mxu0 0.0
    %1231 = vmatprep.subr.mxu0 0.0
    %1232 = vmatpush1.msra.mxu0 0.0
    %1233 = vmatprep.subr.mxu0 0.0
    %1234 = vmatpush1.msra.mxu0 0.0
    %1235 = vmatprep.subr.mxu0 0.0
    %1236 = vmatpush1.msra.mxu0 0.0
    %1237 = vmatprep.subr.mxu0 0.0
    %1238 = vmatpush1.msra.mxu0 0.0
    %1239 = vmatprep.subr.mxu0 0.0
    %1240 = vmatpush1.msra.mxu0 0.0
    %1241 = vmatprep.mubr.f32.mxu0 0.0
    %1242 = vmatmul.mubr.f32.gmra.mrb[0].mxu0 %v1175
    %v1243 = vpop.f32.mrb[0].mxu0
    %v1244 = vadd.f32 %v146, %v1243
    %v1245 = vpop.f32.mrb[0].mxu0
    %1246 = vdwg.mxu0
    %v1247 = vxor.u32 %v1244, 2147483648
    %v1248 = vmul.f32 %v1247, 1.442695
    %v1249 = vpow.pop %v1248
    %v1250 = vadd.f32 %v1249, 1.0
    %v1251 = vrcp.pop %v1250
    %v1252 = vmul.f32 1.0, %v1251
    %v1253 = vtanh.pop %v1244
    %v1254 = vmul.f32 %v1252, %v1059
    %1256 = vrot.lane.b32.xlu0 %v1253, 64
    %v1257 = vpop.permute.xlu0 %1256
    %v1259 = vmul.f32 %v1252, %v1257
    %1261 = vrot.lane.b32.xlu0 %v1259, 32
    %v1262 = vpop.permute.xlu0 %1261
    %v1264 = vadd.f32 %v1254, %v1262
    %v1265 = vtanh.pop %v1264
    %1267 = vrot.lane.b32.xlu0 %v1265, 64
    %v1268 = vpop.permute.xlu0 %1267
    %v1270 = vmul.f32 %v1252, %v1268
    %s1271 = scalar_lea.vmem %s0, 12
    %v1272 = vld [vmem:[%s1271] sm:$0x3]
    %v1273 = vsel %vm38, %v1167, 0
    %1275 = vmatprep.subr.mxu0 0.0
    %1276 = vmatpush1.msra.mxu0 %v24
    %1277 = vmatprep.subr.mxu0 0.0
    %1278 = vmatpush1.msra.mxu0 %v25
    %1279 = vmatprep.subr.mxu0 0.0
    %1280 = vmatpush1.msra.mxu0 %v26
    %1281 = vmatprep.subr.mxu0 0.0
    %1282 = vmatpush1.msra.mxu0 %v27
    %1283 = vmatprep.subr.mxu0 0.0
    %1284 = vmatpush1.msra.mxu0 0.0
    %1285 = vmatprep.subr.mxu0 0.0
    %1286 = vmatpush1.msra.mxu0 0.0
    %1287 = vmatprep.subr.mxu0 0.0
    %1288 = vmatpush1.msra.mxu0 0.0
    %1289 = vmatprep.subr.mxu0 0.0
    %1290 = vmatpush1.msra.mxu0 0.0
    %1291 = vmatprep.subr.mxu0 0.0
    %1292 = vmatpush1.msra.mxu0 0.0
    %1293 = vmatprep.subr.mxu0 0.0
    %1294 = vmatpush1.msra.mxu0 0.0
    %1295 = vmatprep.subr.mxu0 0.0
    %1296 = vmatpush1.msra.mxu0 0.0
    %1297 = vmatprep.subr.mxu0 0.0
    %1298 = vmatpush1.msra.mxu0 0.0
    %1299 = vmatprep.subr.mxu0 0.0
    %1300 = vmatpush1.msra.mxu0 0.0
    %1301 = vmatprep.subr.mxu0 0.0
    %1302 = vmatpush1.msra.mxu0 0.0
    %1303 = vmatprep.subr.mxu0 0.0
    %1304 = vmatpush1.msra.mxu0 0.0
    %1305 = vmatprep.subr.mxu0 0.0
    %1306 = vmatpush1.msra.mxu0 0.0
    %1307 = vmatprep.subr.mxu0 0.0
    %1308 = vmatpush1.msra.mxu0 0.0
    %1309 = vmatprep.subr.mxu0 0.0
    %1310 = vmatpush1.msra.mxu0 0.0
    %1311 = vmatprep.subr.mxu0 0.0
    %1312 = vmatpush1.msra.mxu0 0.0
    %1313 = vmatprep.subr.mxu0 0.0
    %1314 = vmatpush1.msra.mxu0 0.0
    %1315 = vmatprep.subr.mxu0 0.0
    %1316 = vmatpush1.msra.mxu0 0.0
    %1317 = vmatprep.subr.mxu0 0.0
    %1318 = vmatpush1.msra.mxu0 0.0
    %1319 = vmatprep.subr.mxu0 0.0
    %1320 = vmatpush1.msra.mxu0 0.0
    %1321 = vmatprep.subr.mxu0 0.0
    %1322 = vmatpush1.msra.mxu0 0.0
    %1323 = vmatprep.subr.mxu0 0.0
    %1324 = vmatpush1.msra.mxu0 0.0
    %1325 = vmatprep.subr.mxu0 0.0
    %1326 = vmatpush1.msra.mxu0 0.0
    %1327 = vmatprep.subr.mxu0 0.0
    %1328 = vmatpush1.msra.mxu0 0.0
    %1329 = vmatprep.subr.mxu0 0.0
    %1330 = vmatpush1.msra.mxu0 0.0
    %1331 = vmatprep.subr.mxu0 0.0
    %1332 = vmatpush1.msra.mxu0 0.0
    %1333 = vmatprep.subr.mxu0 0.0
    %1334 = vmatpush1.msra.mxu0 0.0
    %1335 = vmatprep.subr.mxu0 0.0
    %1336 = vmatpush1.msra.mxu0 0.0
    %1337 = vmatprep.subr.mxu0 0.0
    %1338 = vmatpush1.msra.mxu0 0.0
    %1339 = vmatprep.mubr.f32.mxu0 0.0
    %1340 = vmatmul.mubr.f32.gmra.mrb[0].mxu0 %v1273
    %v1341 = vpop.f32.mrb[0].mxu0
    %v1342 = vadd.f32 0.0, %v1341
    %v1343 = vpop.f32.mrb[0].mxu0
    %1344 = vdwg.mxu0
    %v1345 = vadd.f32 %v1272, %v1342
    %v1346 = vxor.u32 %v1345, 2147483648
    %v1347 = vmul.f32 %v1346, 1.442695
    %v1348 = vpow.pop %v1347
    %v1349 = vadd.f32 %v1348, 1.0
    %v1350 = vrcp.pop %v1349
    %v1351 = vmul.f32 1.0, %v1350
    %v1352 = vtanh.pop %v1345
    %v1353 = vmul.f32 %v1351, %v1158
    %1355 = vrot.lane.b32.xlu0 %v1352, 64
    %v1356 = vpop.permute.xlu0 %1355
    %v1358 = vmul.f32 %v1351, %v1356
    %1360 = vrot.lane.b32.xlu0 %v1358, 32
    %v1361 = vpop.permute.xlu0 %1360
    %v1363 = vadd.f32 %v1353, %v1361
    %v1364 = vtanh.pop %v1363
    %1366 = vrot.lane.b32.xlu0 %v1364, 64
    %v1367 = vpop.permute.xlu0 %1366
    %v1369 = vmul.f32 %v1351, %v1367
    %1371 = vrot.lane.b32.xlu0 %v1369, 32
    %v1372 = vpop.permute.xlu0 %1371
    %1375 = vrot.lane.b32.xlu0 %v1270, 64
    %v1376 = vpop.permute.xlu0 %1375
    %v1378 = vsel %vm38, %v1372, %v1376
    %v1380 = vsel %vm148, %v1378, 0
    %1382 = vmatprep.subr.mxu0 0.0
    %1383 = vmatpush1.msra.mxu0 %v28
    %1384 = vmatprep.subr.mxu0 0.0
    %1385 = vmatpush1.msra.mxu0 %v29
    %1386 = vmatprep.subr.mxu0 0.0
    %1387 = vmatpush1.msra.mxu0 %v30
    %1388 = vmatprep.subr.mxu0 0.0
    %1389 = vmatpush1.msra.mxu0 %v31
    %1390 = vmatprep.subr.mxu0 0.0
    %1391 = vmatpush1.msra.mxu0 %v32
    %1392 = vmatprep.subr.mxu0 0.0
    %1393 = vmatpush1.msra.mxu0 %v33
    %1394 = vmatprep.subr.mxu0 0.0
    %1395 = vmatpush1.msra.mxu0 %v34
    %1396 = vmatprep.subr.mxu0 0.0
    %1397 = vmatpush1.msra.mxu0 %v35
    %1398 = vmatprep.subr.mxu0 0.0
    %1399 = vmatpush1.msra.mxu0 0.0
    %1400 = vmatprep.subr.mxu0 0.0
    %1401 = vmatpush1.msra.mxu0 0.0
    %1402 = vmatprep.subr.mxu0 0.0
    %1403 = vmatpush1.msra.mxu0 0.0
    %1404 = vmatprep.subr.mxu0 0.0
    %1405 = vmatpush1.msra.mxu0 0.0
    %1406 = vmatprep.subr.mxu0 0.0
    %1407 = vmatpush1.msra.mxu0 0.0
    %1408 = vmatprep.subr.mxu0 0.0
    %1409 = vmatpush1.msra.mxu0 0.0
    %1410 = vmatprep.subr.mxu0 0.0
    %1411 = vmatpush1.msra.mxu0 0.0
    %1412 = vmatprep.subr.mxu0 0.0
    %1413 = vmatpush1.msra.mxu0 0.0
    %1414 = vmatprep.subr.mxu0 0.0
    %1415 = vmatpush1.msra.mxu0 0.0
    %1416 = vmatprep.subr.mxu0 0.0
    %1417 = vmatpush1.msra.mxu0 0.0
    %1418 = vmatprep.subr.mxu0 0.0
    %1419 = vmatpush1.msra.mxu0 0.0
    %1420 = vmatprep.subr.mxu0 0.0
    %1421 = vmatpush1.msra.mxu0 0.0
    %1422 = vmatprep.subr.mxu0 0.0
    %1423 = vmatpush1.msra.mxu0 0.0
    %1424 = vmatprep.subr.mxu0 0.0
    %1425 = vmatpush1.msra.mxu0 0.0
    %1426 = vmatprep.subr.mxu0 0.0
    %1427 = vmatpush1.msra.mxu0 0.0
    %1428 = vmatprep.subr.mxu0 0.0
    %1429 = vmatpush1.msra.mxu0 0.0
    %1430 = vmatprep.subr.mxu0 0.0
    %1431 = vmatpush1.msra.mxu0 0.0
    %1432 = vmatprep.subr.mxu0 0.0
    %1433 = vmatpush1.msra.mxu0 0.0
    %1434 = vmatprep.subr.mxu0 0.0
    %1435 = vmatpush1.msra.mxu0 0.0
    %1436 = vmatprep.subr.mxu0 0.0
    %1437 = vmatpush1.msra.mxu0 0.0
    %1438 = vmatprep.subr.mxu0 0.0
    %1439 = vmatpush1.msra.mxu0 0.0
    %1440 = vmatprep.subr.mxu0 0.0
    %1441 = vmatpush1.msra.mxu0 0.0
    %1442 = vmatprep.subr.mxu0 0.0
    %1443 = vmatpush1.msra.mxu0 0.0
    %1444 = vmatprep.subr.mxu0 0.0
    %1445 = vmatpush1.msra.mxu0 0.0
    %1446 = vmatprep.mubr.f32.mxu0 0.0
    %1447 = vmatmul.mubr.f32.gmra.mrb[0].mxu0 %v1380
    %v1448 = vpop.f32.mrb[0].mxu0
    %v1449 = vadd.f32 %v146, %v1448
    %v1450 = vpop.f32.mrb[0].mxu0
    %1451 = vdwg.mxu0
    %v1452 = vxor.u32 %v1449, 2147483648
    %v1453 = vmul.f32 %v1452, 1.442695
    %v1454 = vpow.pop %v1453
    %v1455 = vadd.f32 %v1454, 1.0
    %v1456 = vrcp.pop %v1455
    %v1457 = vmul.f32 1.0, %v1456
    %v1458 = vtanh.pop %v1449
    %v1459 = vmul.f32 %v1457, %v1264
    %1461 = vrot.lane.b32.xlu0 %v1458, 64
    %v1462 = vpop.permute.xlu0 %1461
    %v1464 = vmul.f32 %v1457, %v1462
    %1466 = vrot.lane.b32.xlu0 %v1464, 32
    %v1467 = vpop.permute.xlu0 %1466
    %v1469 = vadd.f32 %v1459, %v1467
    %v1470 = vtanh.pop %v1469
    %1472 = vrot.lane.b32.xlu0 %v1470, 64
    %v1473 = vpop.permute.xlu0 %1472
    %v1475 = vmul.f32 %v1457, %v1473
    %s1476 = scalar_lea.vmem %s0, 14
    %v1477 = vld [vmem:[%s1476] sm:$0x3]
    %v1478 = vsel %vm38, %v1372, 0
    %1480 = vmatprep.subr.mxu0 0.0
    %1481 = vmatpush1.msra.mxu0 %v24
    %1482 = vmatprep.subr.mxu0 0.0
    %1483 = vmatpush1.msra.mxu0 %v25
    %1484 = vmatprep.subr.mxu0 0.0
    %1485 = vmatpush1.msra.mxu0 %v26
    %1486 = vmatprep.subr.mxu0 0.0
    %1487 = vmatpush1.msra.mxu0 %v27
    %1488 = vmatprep.subr.mxu0 0.0
    %1489 = vmatpush1.msra.mxu0 0.0
    %1490 = vmatprep.subr.mxu0 0.0
    %1491 = vmatpush1.msra.mxu0 0.0
    %1492 = vmatprep.subr.mxu0 0.0
    %1493 = vmatpush1.msra.mxu0 0.0
    %1494 = vmatprep.subr.mxu0 0.0
    %1495 = vmatpush1.msra.mxu0 0.0
    %1496 = vmatprep.subr.mxu0 0.0
    %1497 = vmatpush1.msra.mxu0 0.0
    %1498 = vmatprep.subr.mxu0 0.0
    %1499 = vmatpush1.msra.mxu0 0.0
    %1500 = vmatprep.subr.mxu0 0.0
    %1501 = vmatpush1.msra.mxu0 0.0
    %1502 = vmatprep.subr.mxu0 0.0
    %1503 = vmatpush1.msra.mxu0 0.0
    %1504 = vmatprep.subr.mxu0 0.0
    %1505 = vmatpush1.msra.mxu0 0.0
    %1506 = vmatprep.subr.mxu0 0.0
    %1507 = vmatpush1.msra.mxu0 0.0
    %1508 = vmatprep.subr.mxu0 0.0
    %1509 = vmatpush1.msra.mxu0 0.0
    %1510 = vmatprep.subr.mxu0 0.0
    %1511 = vmatpush1.msra.mxu0 0.0
    %1512 = vmatprep.subr.mxu0 0.0
    %1513 = vmatpush1.msra.mxu0 0.0
    %1514 = vmatprep.subr.mxu0 0.0
    %1515 = vmatpush1.msra.mxu0 0.0
    %1516 = vmatprep.subr.mxu0 0.0
    %1517 = vmatpush1.msra.mxu0 0.0
    %1518 = vmatprep.subr.mxu0 0.0
    %1519 = vmatpush1.msra.mxu0 0.0
    %1520 = vmatprep.subr.mxu0 0.0
    %1521 = vmatpush1.msra.mxu0 0.0
    %1522 = vmatprep.subr.mxu0 0.0
    %1523 = vmatpush1.msra.mxu0 0.0
    %1524 = vmatprep.subr.mxu0 0.0
    %1525 = vmatpush1.msra.mxu0 0.0
    %1526 = vmatprep.subr.mxu0 0.0
    %1527 = vmatpush1.msra.mxu0 0.0
    %1528 = vmatprep.subr.mxu0 0.0
    %1529 = vmatpush1.msra.mxu0 0.0
    %1530 = vmatprep.subr.mxu0 0.0
    %1531 = vmatpush1.msra.mxu0 0.0
    %1532 = vmatprep.subr.mxu0 0.0
    %1533 = vmatpush1.msra.mxu0 0.0
    %1534 = vmatprep.subr.mxu0 0.0
    %1535 = vmatpush1.msra.mxu0 0.0
    %1536 = vmatprep.subr.mxu0 0.0
    %1537 = vmatpush1.msra.mxu0 0.0
    %1538 = vmatprep.subr.mxu0 0.0
    %1539 = vmatpush1.msra.mxu0 0.0
    %1540 = vmatprep.subr.mxu0 0.0
    %1541 = vmatpush1.msra.mxu0 0.0
    %1542 = vmatprep.subr.mxu0 0.0
    %1543 = vmatpush1.msra.mxu0 0.0
    %1544 = vmatprep.mubr.f32.mxu0 0.0
    %1545 = vmatmul.mubr.f32.gmra.mrb[0].mxu0 %v1478
    %v1546 = vpop.f32.mrb[0].mxu0
    %v1547 = vadd.f32 0.0, %v1546
    %v1548 = vpop.f32.mrb[0].mxu0
    %1549 = vdwg.mxu0
    %v1550 = vadd.f32 %v1477, %v1547
    %v1551 = vxor.u32 %v1550, 2147483648
    %v1552 = vmul.f32 %v1551, 1.442695
    %v1553 = vpow.pop %v1552
    %v1554 = vadd.f32 %v1553, 1.0
    %v1555 = vrcp.pop %v1554
    %v1556 = vmul.f32 1.0, %v1555
    %v1557 = vtanh.pop %v1550
    %v1558 = vmul.f32 %v1556, %v1363
    %1560 = vrot.lane.b32.xlu0 %v1557, 64
    %v1561 = vpop.permute.xlu0 %1560
    %v1563 = vmul.f32 %v1556, %v1561
    %1565 = vrot.lane.b32.xlu0 %v1563, 32
    %v1566 = vpop.permute.xlu0 %1565
    %v1568 = vadd.f32 %v1558, %v1566
    %v1569 = vtanh.pop %v1568
    %1571 = vrot.lane.b32.xlu0 %v1569, 64
    %v1572 = vpop.permute.xlu0 %1571
    %v1574 = vmul.f32 %v1556, %v1572
    %1576 = vrot.lane.b32.xlu0 %v1574, 32
    %v1577 = vpop.permute.xlu0 %1576
    %1580 = vrot.lane.b32.xlu0 %v1475, 64
    %v1581 = vpop.permute.xlu0 %1580
    %v1583 = vsel %vm38, %v1577, %v1581
    %v1585 = vsel %vm148, %v1583, 0
    %1587 = vmatprep.subr.mxu0 0.0
    %1588 = vmatpush1.msra.mxu0 %v28
    %1589 = vmatprep.subr.mxu0 0.0
    %1590 = vmatpush1.msra.mxu0 %v29
    %1591 = vmatprep.subr.mxu0 0.0
    %1592 = vmatpush1.msra.mxu0 %v30
    %1593 = vmatprep.subr.mxu0 0.0
    %1594 = vmatpush1.msra.mxu0 %v31
    %1595 = vmatprep.subr.mxu0 0.0
    %1596 = vmatpush1.msra.mxu0 %v32
    %1597 = vmatprep.subr.mxu0 0.0
    %1598 = vmatpush1.msra.mxu0 %v33
    %1599 = vmatprep.subr.mxu0 0.0
    %1600 = vmatpush1.msra.mxu0 %v34
    %1601 = vmatprep.subr.mxu0 0.0
    %1602 = vmatpush1.msra.mxu0 %v35
    %1603 = vmatprep.subr.mxu0 0.0
    %1604 = vmatpush1.msra.mxu0 0.0
    %1605 = vmatprep.subr.mxu0 0.0
    %1606 = vmatpush1.msra.mxu0 0.0
    %1607 = vmatprep.subr.mxu0 0.0
    %1608 = vmatpush1.msra.mxu0 0.0
    %1609 = vmatprep.subr.mxu0 0.0
    %1610 = vmatpush1.msra.mxu0 0.0
    %1611 = vmatprep.subr.mxu0 0.0
    %1612 = vmatpush1.msra.mxu0 0.0
    %1613 = vmatprep.subr.mxu0 0.0
    %1614 = vmatpush1.msra.mxu0 0.0
    %1615 = vmatprep.subr.mxu0 0.0
    %1616 = vmatpush1.msra.mxu0 0.0
    %1617 = vmatprep.subr.mxu0 0.0
    %1618 = vmatpush1.msra.mxu0 0.0
    %1619 = vmatprep.subr.mxu0 0.0
    %1620 = vmatpush1.msra.mxu0 0.0
    %1621 = vmatprep.subr.mxu0 0.0
    %1622 = vmatpush1.msra.mxu0 0.0
    %1623 = vmatprep.subr.mxu0 0.0
    %1624 = vmatpush1.msra.mxu0 0.0
    %1625 = vmatprep.subr.mxu0 0.0
    %1626 = vmatpush1.msra.mxu0 0.0
    %1627 = vmatprep.subr.mxu0 0.0
    %1628 = vmatpush1.msra.mxu0 0.0
    %1629 = vmatprep.subr.mxu0 0.0
    %1630 = vmatpush1.msra.mxu0 0.0
    %1631 = vmatprep.subr.mxu0 0.0
    %1632 = vmatpush1.msra.mxu0 0.0
    %1633 = vmatprep.subr.mxu0 0.0
    %1634 = vmatpush1.msra.mxu0 0.0
    %1635 = vmatprep.subr.mxu0 0.0
    %1636 = vmatpush1.msra.mxu0 0.0
    %1637 = vmatprep.subr.mxu0 0.0
    %1638 = vmatpush1.msra.mxu0 0.0
    %1639 = vmatprep.subr.mxu0 0.0
    %1640 = vmatpush1.msra.mxu0 0.0
    %1641 = vmatprep.subr.mxu0 0.0
    %1642 = vmatpush1.msra.mxu0 0.0
    %1643 = vmatprep.subr.mxu0 0.0
    %1644 = vmatpush1.msra.mxu0 0.0
    %1645 = vmatprep.subr.mxu0 0.0
    %1646 = vmatpush1.msra.mxu0 0.0
    %1647 = vmatprep.subr.mxu0 0.0
    %1648 = vmatpush1.msra.mxu0 0.0
    %1649 = vmatprep.subr.mxu0 0.0
    %1650 = vmatpush1.msra.mxu0 0.0
    %1651 = vmatprep.mubr.f32.mxu0 0.0
    %1652 = vmatmul.mubr.f32.gmra.mrb[0].mxu0 %v1585
    %v1653 = vpop.f32.mrb[0].mxu0
    %v1654 = vadd.f32 %v146, %v1653
    %v1655 = vpop.f32.mrb[0].mxu0
    %1656 = vdwg.mxu0
    %v1657 = vxor.u32 %v1654, 2147483648
    %v1658 = vmul.f32 %v1657, 1.442695
    %v1659 = vpow.pop %v1658
    %v1660 = vadd.f32 %v1659, 1.0
    %v1661 = vrcp.pop %v1660
    %v1662 = vmul.f32 1.0, %v1661
    %v1663 = vtanh.pop %v1654
    %v1664 = vmul.f32 %v1662, %v1469
    %1666 = vrot.lane.b32.xlu0 %v1663, 64
    %v1667 = vpop.permute.xlu0 %1666
    %v1669 = vmul.f32 %v1662, %v1667
    %1671 = vrot.lane.b32.xlu0 %v1669, 32
    %v1672 = vpop.permute.xlu0 %1671
    %v1674 = vadd.f32 %v1664, %v1672
    %v1675 = vtanh.pop %v1674
    %1677 = vrot.lane.b32.xlu0 %v1675, 64
    %v1678 = vpop.permute.xlu0 %1677
    %v1680 = vmul.f32 %v1662, %v1678
    %s1681 = scalar_lea.vmem %s0, 16
    %v1682 = vld [vmem:[%s1681] sm:$0x3]
    %v1683 = vsel %vm38, %v1577, 0
    %1685 = vmatprep.subr.mxu0 0.0
    %1686 = vmatpush1.msra.mxu0 %v24
    %1687 = vmatprep.subr.mxu0 0.0
    %1688 = vmatpush1.msra.mxu0 %v25
    %1689 = vmatprep.subr.mxu0 0.0
    %1690 = vmatpush1.msra.mxu0 %v26
    %1691 = vmatprep.subr.mxu0 0.0
    %1692 = vmatpush1.msra.mxu0 %v27
    %1693 = vmatprep.subr.mxu0 0.0
    %1694 = vmatpush1.msra.mxu0 0.0
    %1695 = vmatprep.subr.mxu0 0.0
    %1696 = vmatpush1.msra.mxu0 0.0
    %1697 = vmatprep.subr.mxu0 0.0
    %1698 = vmatpush1.msra.mxu0 0.0
    %1699 = vmatprep.subr.mxu0 0.0
    %1700 = vmatpush1.msra.mxu0 0.0
    %1701 = vmatprep.subr.mxu0 0.0
    %1702 = vmatpush1.msra.mxu0 0.0
    %1703 = vmatprep.subr.mxu0 0.0
    %1704 = vmatpush1.msra.mxu0 0.0
    %1705 = vmatprep.subr.mxu0 0.0
    %1706 = vmatpush1.msra.mxu0 0.0
    %1707 = vmatprep.subr.mxu0 0.0
    %1708 = vmatpush1.msra.mxu0 0.0
    %1709 = vmatprep.subr.mxu0 0.0
    %1710 = vmatpush1.msra.mxu0 0.0
    %1711 = vmatprep.subr.mxu0 0.0
    %1712 = vmatpush1.msra.mxu0 0.0
    %1713 = vmatprep.subr.mxu0 0.0
    %1714 = vmatpush1.msra.mxu0 0.0
    %1715 = vmatprep.subr.mxu0 0.0
    %1716 = vmatpush1.msra.mxu0 0.0
    %1717 = vmatprep.subr.mxu0 0.0
    %1718 = vmatpush1.msra.mxu0 0.0
    %1719 = vmatprep.subr.mxu0 0.0
    %1720 = vmatpush1.msra.mxu0 0.0
    %1721 = vmatprep.subr.mxu0 0.0
    %1722 = vmatpush1.msra.mxu0 0.0
    %1723 = vmatprep.subr.mxu0 0.0
    %1724 = vmatpush1.msra.mxu0 0.0
    %1725 = vmatprep.subr.mxu0 0.0
    %1726 = vmatpush1.msra.mxu0 0.0
    %1727 = vmatprep.subr.mxu0 0.0
    %1728 = vmatpush1.msra.mxu0 0.0
    %1729 = vmatprep.subr.mxu0 0.0
    %1730 = vmatpush1.msra.mxu0 0.0
    %1731 = vmatprep.subr.mxu0 0.0
    %1732 = vmatpush1.msra.mxu0 0.0
    %1733 = vmatprep.subr.mxu0 0.0
    %1734 = vmatpush1.msra.mxu0 0.0
    %1735 = vmatprep.subr.mxu0 0.0
    %1736 = vmatpush1.msra.mxu0 0.0
    %1737 = vmatprep.subr.mxu0 0.0
    %1738 = vmatpush1.msra.mxu0 0.0
    %1739 = vmatprep.subr.mxu0 0.0
    %1740 = vmatpush1.msra.mxu0 0.0
    %1741 = vmatprep.subr.mxu0 0.0
    %1742 = vmatpush1.msra.mxu0 0.0
    %1743 = vmatprep.subr.mxu0 0.0
    %1744 = vmatpush1.msra.mxu0 0.0
    %1745 = vmatprep.subr.mxu0 0.0
    %1746 = vmatpush1.msra.mxu0 0.0
    %1747 = vmatprep.subr.mxu0 0.0
    %1748 = vmatpush1.msra.mxu0 0.0
    %1749 = vmatprep.mubr.f32.mxu0 0.0
    %1750 = vmatmul.mubr.f32.gmra.mrb[0].mxu0 %v1683
    %v1751 = vpop.f32.mrb[0].mxu0
    %v1752 = vadd.f32 0.0, %v1751
    %v1753 = vpop.f32.mrb[0].mxu0
    %1754 = vdwg.mxu0
    %v1755 = vadd.f32 %v1682, %v1752
    %v1756 = vxor.u32 %v1755, 2147483648
    %v1757 = vmul.f32 %v1756, 1.442695
    %v1758 = vpow.pop %v1757
    %v1759 = vadd.f32 %v1758, 1.0
    %v1760 = vrcp.pop %v1759
    %v1761 = vmul.f32 1.0, %v1760
    %v1762 = vtanh.pop %v1755
    %v1763 = vmul.f32 %v1761, %v1568
    %1765 = vrot.lane.b32.xlu0 %v1762, 64
    %v1766 = vpop.permute.xlu0 %1765
    %v1768 = vmul.f32 %v1761, %v1766
    %1770 = vrot.lane.b32.xlu0 %v1768, 32
    %v1771 = vpop.permute.xlu0 %1770
    %v1773 = vadd.f32 %v1763, %v1771
    %v1774 = vtanh.pop %v1773
    %1776 = vrot.lane.b32.xlu0 %v1774, 64
    %v1777 = vpop.permute.xlu0 %1776
    %v1779 = vmul.f32 %v1761, %v1777
    %1781 = vrot.lane.b32.xlu0 %v1779, 32
    %v1782 = vpop.permute.xlu0 %1781
    %1785 = vrot.lane.b32.xlu0 %v1680, 64
    %v1786 = vpop.permute.xlu0 %1785
    %v1788 = vsel %vm38, %v1782, %v1786
    %v1790 = vsel %vm148, %v1788, 0
    %1792 = vmatprep.subr.mxu0 0.0
    %1793 = vmatpush1.msra.mxu0 %v28
    %1794 = vmatprep.subr.mxu0 0.0
    %1795 = vmatpush1.msra.mxu0 %v29
    %1796 = vmatprep.subr.mxu0 0.0
    %1797 = vmatpush1.msra.mxu0 %v30
    %1798 = vmatprep.subr.mxu0 0.0
    %1799 = vmatpush1.msra.mxu0 %v31
    %1800 = vmatprep.subr.mxu0 0.0
    %1801 = vmatpush1.msra.mxu0 %v32
    %1802 = vmatprep.subr.mxu0 0.0
    %1803 = vmatpush1.msra.mxu0 %v33
    %1804 = vmatprep.subr.mxu0 0.0
    %1805 = vmatpush1.msra.mxu0 %v34
    %1806 = vmatprep.subr.mxu0 0.0
    %1807 = vmatpush1.msra.mxu0 %v35
    %1808 = vmatprep.subr.mxu0 0.0
    %1809 = vmatpush1.msra.mxu0 0.0
    %1810 = vmatprep.subr.mxu0 0.0
    %1811 = vmatpush1.msra.mxu0 0.0
    %1812 = vmatprep.subr.mxu0 0.0
    %1813 = vmatpush1.msra.mxu0 0.0
    %1814 = vmatprep.subr.mxu0 0.0
    %1815 = vmatpush1.msra.mxu0 0.0
    %1816 = vmatprep.subr.mxu0 0.0
    %1817 = vmatpush1.msra.mxu0 0.0
    %1818 = vmatprep.subr.mxu0 0.0
    %1819 = vmatpush1.msra.mxu0 0.0
    %1820 = vmatprep.subr.mxu0 0.0
    %1821 = vmatpush1.msra.mxu0 0.0
    %1822 = vmatprep.subr.mxu0 0.0
    %1823 = vmatpush1.msra.mxu0 0.0
    %1824 = vmatprep.subr.mxu0 0.0
    %1825 = vmatpush1.msra.mxu0 0.0
    %1826 = vmatprep.subr.mxu0 0.0
    %1827 = vmatpush1.msra.mxu0 0.0
    %1828 = vmatprep.subr.mxu0 0.0
    %1829 = vmatpush1.msra.mxu0 0.0
    %1830 = vmatprep.subr.mxu0 0.0
    %1831 = vmatpush1.msra.mxu0 0.0
    %1832 = vmatprep.subr.mxu0 0.0
    %1833 = vmatpush1.msra.mxu0 0.0
    %1834 = vmatprep.subr.mxu0 0.0
    %1835 = vmatpush1.msra.mxu0 0.0
    %1836 = vmatprep.subr.mxu0 0.0
    %1837 = vmatpush1.msra.mxu0 0.0
    %1838 = vmatprep.subr.mxu0 0.0
    %1839 = vmatpush1.msra.mxu0 0.0
    %1840 = vmatprep.subr.mxu0 0.0
    %1841 = vmatpush1.msra.mxu0 0.0
    %1842 = vmatprep.subr.mxu0 0.0
    %1843 = vmatpush1.msra.mxu0 0.0
    %1844 = vmatprep.subr.mxu0 0.0
    %1845 = vmatpush1.msra.mxu0 0.0
    %1846 = vmatprep.subr.mxu0 0.0
    %1847 = vmatpush1.msra.mxu0 0.0
    %1848 = vmatprep.subr.mxu0 0.0
    %1849 = vmatpush1.msra.mxu0 0.0
    %1850 = vmatprep.subr.mxu0 0.0
    %1851 = vmatpush1.msra.mxu0 0.0
    %1852 = vmatprep.subr.mxu0 0.0
    %1853 = vmatpush1.msra.mxu0 0.0
    %1854 = vmatprep.subr.mxu0 0.0
    %1855 = vmatpush1.msra.mxu0 0.0
    %1856 = vmatprep.mubr.f32.mxu0 0.0
    %1857 = vmatmul.mubr.f32.gmra.mrb[0].mxu0 %v1790
    %v1858 = vpop.f32.mrb[0].mxu0
    %v1859 = vadd.f32 %v146, %v1858
    %v1860 = vpop.f32.mrb[0].mxu0
    %1861 = vdwg.mxu0
    %v1862 = vxor.u32 %v1859, 2147483648
    %v1863 = vmul.f32 %v1862, 1.442695
    %v1864 = vpow.pop %v1863
    %v1865 = vadd.f32 %v1864, 1.0
    %v1866 = vrcp.pop %v1865
    %v1867 = vmul.f32 1.0, %v1866
    %v1868 = vtanh.pop %v1859
    %v1869 = vmul.f32 %v1867, %v1674
    %1871 = vrot.lane.b32.xlu0 %v1868, 64
    %v1872 = vpop.permute.xlu0 %1871
    %v1874 = vmul.f32 %v1867, %v1872
    %1876 = vrot.lane.b32.xlu0 %v1874, 32
    %v1877 = vpop.permute.xlu0 %1876
    %v1879 = vadd.f32 %v1869, %v1877
    %v1880 = vtanh.pop %v1879
    %1882 = vrot.lane.b32.xlu0 %v1880, 64
    %v1883 = vpop.permute.xlu0 %1882
    %v1885 = vmul.f32 %v1867, %v1883
    %s1886 = scalar_lea.vmem %s0, 18
    %v1887 = vld [vmem:[%s1886] sm:$0x3]
    %v1888 = vsel %vm38, %v1782, 0
    %1890 = vmatprep.subr.mxu0 0.0
    %1891 = vmatpush1.msra.mxu0 %v24
    %1892 = vmatprep.subr.mxu0 0.0
    %1893 = vmatpush1.msra.mxu0 %v25
    %1894 = vmatprep.subr.mxu0 0.0
    %1895 = vmatpush1.msra.mxu0 %v26
    %1896 = vmatprep.subr.mxu0 0.0
    %1897 = vmatpush1.msra.mxu0 %v27
    %1898 = vmatprep.subr.mxu0 0.0
    %1899 = vmatpush1.msra.mxu0 0.0
    %1900 = vmatprep.subr.mxu0 0.0
    %1901 = vmatpush1.msra.mxu0 0.0
    %1902 = vmatprep.subr.mxu0 0.0
    %1903 = vmatpush1.msra.mxu0 0.0
    %1904 = vmatprep.subr.mxu0 0.0
    %1905 = vmatpush1.msra.mxu0 0.0
    %1906 = vmatprep.subr.mxu0 0.0
    %1907 = vmatpush1.msra.mxu0 0.0
    %1908 = vmatprep.subr.mxu0 0.0
    %1909 = vmatpush1.msra.mxu0 0.0
    %1910 = vmatprep.subr.mxu0 0.0
    %1911 = vmatpush1.msra.mxu0 0.0
    %1912 = vmatprep.subr.mxu0 0.0
    %1913 = vmatpush1.msra.mxu0 0.0
    %1914 = vmatprep.subr.mxu0 0.0
    %1915 = vmatpush1.msra.mxu0 0.0
    %1916 = vmatprep.subr.mxu0 0.0
    %1917 = vmatpush1.msra.mxu0 0.0
    %1918 = vmatprep.subr.mxu0 0.0
    %1919 = vmatpush1.msra.mxu0 0.0
    %1920 = vmatprep.subr.mxu0 0.0
    %1921 = vmatpush1.msra.mxu0 0.0
    %1922 = vmatprep.subr.mxu0 0.0
    %1923 = vmatpush1.msra.mxu0 0.0
    %1924 = vmatprep.subr.mxu0 0.0
    %1925 = vmatpush1.msra.mxu0 0.0
    %1926 = vmatprep.subr.mxu0 0.0
    %1927 = vmatpush1.msra.mxu0 0.0
    %1928 = vmatprep.subr.mxu0 0.0
    %1929 = vmatpush1.msra.mxu0 0.0
    %1930 = vmatprep.subr.mxu0 0.0
    %1931 = vmatpush1.msra.mxu0 0.0
    %1932 = vmatprep.subr.mxu0 0.0
    %1933 = vmatpush1.msra.mxu0 0.0
    %1934 = vmatprep.subr.mxu0 0.0
    %1935 = vmatpush1.msra.mxu0 0.0
    %1936 = vmatprep.subr.mxu0 0.0
    %1937 = vmatpush1.msra.mxu0 0.0
    %1938 = vmatprep.subr.mxu0 0.0
    %1939 = vmatpush1.msra.mxu0 0.0
    %1940 = vmatprep.subr.mxu0 0.0
    %1941 = vmatpush1.msra.mxu0 0.0
    %1942 = vmatprep.subr.mxu0 0.0
    %1943 = vmatpush1.msra.mxu0 0.0
    %1944 = vmatprep.subr.mxu0 0.0
    %1945 = vmatpush1.msra.mxu0 0.0
    %1946 = vmatprep.subr.mxu0 0.0
    %1947 = vmatpush1.msra.mxu0 0.0
    %1948 = vmatprep.subr.mxu0 0.0
    %1949 = vmatpush1.msra.mxu0 0.0
    %1950 = vmatprep.subr.mxu0 0.0
    %1951 = vmatpush1.msra.mxu0 0.0
    %1952 = vmatprep.subr.mxu0 0.0
    %1953 = vmatpush1.msra.mxu0 0.0
    %1954 = vmatprep.mubr.f32.mxu0 0.0
    %1955 = vmatmul.mubr.f32.gmra.mrb[0].mxu0 %v1888
    %v1956 = vpop.f32.mrb[0].mxu0
    %v1957 = vadd.f32 0.0, %v1956
    %v1958 = vpop.f32.mrb[0].mxu0
    %1959 = vdwg.mxu0
    %v1960 = vadd.f32 %v1887, %v1957
    %v1961 = vxor.u32 %v1960, 2147483648
    %v1962 = vmul.f32 %v1961, 1.442695
    %v1963 = vpow.pop %v1962
    %v1964 = vadd.f32 %v1963, 1.0
    %v1965 = vrcp.pop %v1964
    %v1966 = vmul.f32 1.0, %v1965
    %v1967 = vtanh.pop %v1960
    %v1968 = vmul.f32 %v1966, %v1773
    %1970 = vrot.lane.b32.xlu0 %v1967, 64
    %v1971 = vpop.permute.xlu0 %1970
    %v1973 = vmul.f32 %v1966, %v1971
    %1975 = vrot.lane.b32.xlu0 %v1973, 32
    %v1976 = vpop.permute.xlu0 %1975
    %v1978 = vadd.f32 %v1968, %v1976
    %v1979 = vtanh.pop %v1978
    %1981 = vrot.lane.b32.xlu0 %v1979, 64
    %v1982 = vpop.permute.xlu0 %1981
    %v1984 = vmul.f32 %v1966, %v1982
    %1986 = vrot.lane.b32.xlu0 %v1984, 32
    %v1987 = vpop.permute.xlu0 %1986
    %1990 = vrot.lane.b32.xlu0 %v1885, 64
    %v1991 = vpop.permute.xlu0 %1990
    %v1993 = vsel %vm38, %v1987, %v1991
    %v1995 = vsel %vm148, %v1993, 0
    %1997 = vmatprep.subr.mxu0 0.0
    %1998 = vmatpush1.msra.mxu0 %v28
    %1999 = vmatprep.subr.mxu0 0.0
    %2000 = vmatpush1.msra.mxu0 %v29
    %2001 = vmatprep.subr.mxu0 0.0
    %2002 = vmatpush1.msra.mxu0 %v30
    %2003 = vmatprep.subr.mxu0 0.0
    %2004 = vmatpush1.msra.mxu0 %v31
    %2005 = vmatprep.subr.mxu0 0.0
    %2006 = vmatpush1.msra.mxu0 %v32
    %2007 = vmatprep.subr.mxu0 0.0
    %2008 = vmatpush1.msra.mxu0 %v33
    %2009 = vmatprep.subr.mxu0 0.0
    %2010 = vmatpush1.msra.mxu0 %v34
    %2011 = vmatprep.subr.mxu0 0.0
    %2012 = vmatpush1.msra.mxu0 %v35
    %2013 = vmatprep.subr.mxu0 0.0
    %2014 = vmatpush1.msra.mxu0 0.0
    %2015 = vmatprep.subr.mxu0 0.0
    %2016 = vmatpush1.msra.mxu0 0.0
    %2017 = vmatprep.subr.mxu0 0.0
    %2018 = vmatpush1.msra.mxu0 0.0
    %2019 = vmatprep.subr.mxu0 0.0
    %2020 = vmatpush1.msra.mxu0 0.0
    %2021 = vmatprep.subr.mxu0 0.0
    %2022 = vmatpush1.msra.mxu0 0.0
    %2023 = vmatprep.subr.mxu0 0.0
    %2024 = vmatpush1.msra.mxu0 0.0
    %2025 = vmatprep.subr.mxu0 0.0
    %2026 = vmatpush1.msra.mxu0 0.0
    %2027 = vmatprep.subr.mxu0 0.0
    %2028 = vmatpush1.msra.mxu0 0.0
    %2029 = vmatprep.subr.mxu0 0.0
    %2030 = vmatpush1.msra.mxu0 0.0
    %2031 = vmatprep.subr.mxu0 0.0
    %2032 = vmatpush1.msra.mxu0 0.0
    %2033 = vmatprep.subr.mxu0 0.0
    %2034 = vmatpush1.msra.mxu0 0.0
    %2035 = vmatprep.subr.mxu0 0.0
    %2036 = vmatpush1.msra.mxu0 0.0
    %2037 = vmatprep.subr.mxu0 0.0
    %2038 = vmatpush1.msra.mxu0 0.0
    %2039 = vmatprep.subr.mxu0 0.0
    %2040 = vmatpush1.msra.mxu0 0.0
    %2041 = vmatprep.subr.mxu0 0.0
    %2042 = vmatpush1.msra.mxu0 0.0
    %2043 = vmatprep.subr.mxu0 0.0
    %2044 = vmatpush1.msra.mxu0 0.0
    %2045 = vmatprep.subr.mxu0 0.0
    %2046 = vmatpush1.msra.mxu0 0.0
    %2047 = vmatprep.subr.mxu0 0.0
    %2048 = vmatpush1.msra.mxu0 0.0
    %2049 = vmatprep.subr.mxu0 0.0
    %2050 = vmatpush1.msra.mxu0 0.0
    %2051 = vmatprep.subr.mxu0 0.0
    %2052 = vmatpush1.msra.mxu0 0.0
    %2053 = vmatprep.subr.mxu0 0.0
    %2054 = vmatpush1.msra.mxu0 0.0
    %2055 = vmatprep.subr.mxu0 0.0
    %2056 = vmatpush1.msra.mxu0 0.0
    %2057 = vmatprep.subr.mxu0 0.0
    %2058 = vmatpush1.msra.mxu0 0.0
    %2059 = vmatprep.subr.mxu0 0.0
    %2060 = vmatpush1.msra.mxu0 0.0
    %2061 = vmatprep.mubr.f32.mxu0 0.0
    %2062 = vmatmul.mubr.f32.gmra.mrb[0].mxu0 %v1995
    %v2063 = vpop.f32.mrb[0].mxu0
    %v2064 = vadd.f32 %v146, %v2063
    %v2065 = vpop.f32.mrb[0].mxu0
    %2066 = vdwg.mxu0
    %v2067 = vxor.u32 %v2064, 2147483648
    %v2068 = vmul.f32 %v2067, 1.442695
    %v2069 = vpow.pop %v2068
    %v2070 = vadd.f32 %v2069, 1.0
    %v2071 = vrcp.pop %v2070
    %v2072 = vmul.f32 1.0, %v2071
    %v2073 = vtanh.pop %v2064
    %v2074 = vmul.f32 %v2072, %v1879
    %2076 = vrot.lane.b32.xlu0 %v2073, 64
    %v2077 = vpop.permute.xlu0 %2076
    %v2079 = vmul.f32 %v2072, %v2077
    %2081 = vrot.lane.b32.xlu0 %v2079, 32
    %v2082 = vpop.permute.xlu0 %2081
    %v2084 = vadd.f32 %v2074, %v2082
    %v2085 = vtanh.pop %v2084
    %2087 = vrot.lane.b32.xlu0 %v2085, 64
    %v2088 = vpop.permute.xlu0 %2087
    %v2090 = vmul.f32 %v2072, %v2088
    %s2091 = scalar_lea.vmem %s0, 20
    %v2092 = vld [vmem:[%s2091] sm:$0x3]
    %v2093 = vsel %vm38, %v1987, 0
    %2095 = vmatprep.subr.mxu0 0.0
    %2096 = vmatpush1.msra.mxu0 %v24
    %2097 = vmatprep.subr.mxu0 0.0
    %2098 = vmatpush1.msra.mxu0 %v25
    %2099 = vmatprep.subr.mxu0 0.0
    %2100 = vmatpush1.msra.mxu0 %v26
    %2101 = vmatprep.subr.mxu0 0.0
    %2102 = vmatpush1.msra.mxu0 %v27
    %2103 = vmatprep.subr.mxu0 0.0
    %2104 = vmatpush1.msra.mxu0 0.0
    %2105 = vmatprep.subr.mxu0 0.0
    %2106 = vmatpush1.msra.mxu0 0.0
    %2107 = vmatprep.subr.mxu0 0.0
    %2108 = vmatpush1.msra.mxu0 0.0
    %2109 = vmatprep.subr.mxu0 0.0
    %2110 = vmatpush1.msra.mxu0 0.0
    %2111 = vmatprep.subr.mxu0 0.0
    %2112 = vmatpush1.msra.mxu0 0.0
    %2113 = vmatprep.subr.mxu0 0.0
    %2114 = vmatpush1.msra.mxu0 0.0
    %2115 = vmatprep.subr.mxu0 0.0
    %2116 = vmatpush1.msra.mxu0 0.0
    %2117 = vmatprep.subr.mxu0 0.0
    %2118 = vmatpush1.msra.mxu0 0.0
    %2119 = vmatprep.subr.mxu0 0.0
    %2120 = vmatpush1.msra.mxu0 0.0
    %2121 = vmatprep.subr.mxu0 0.0
    %2122 = vmatpush1.msra.mxu0 0.0
    %2123 = vmatprep.subr.mxu0 0.0
    %2124 = vmatpush1.msra.mxu0 0.0
    %2125 = vmatprep.subr.mxu0 0.0
    %2126 = vmatpush1.msra.mxu0 0.0
    %2127 = vmatprep.subr.mxu0 0.0
    %2128 = vmatpush1.msra.mxu0 0.0
    %2129 = vmatprep.subr.mxu0 0.0
    %2130 = vmatpush1.msra.mxu0 0.0
    %2131 = vmatprep.subr.mxu0 0.0
    %2132 = vmatpush1.msra.mxu0 0.0
    %2133 = vmatprep.subr.mxu0 0.0
    %2134 = vmatpush1.msra.mxu0 0.0
    %2135 = vmatprep.subr.mxu0 0.0
    %2136 = vmatpush1.msra.mxu0 0.0
    %2137 = vmatprep.subr.mxu0 0.0
    %2138 = vmatpush1.msra.mxu0 0.0
    %2139 = vmatprep.subr.mxu0 0.0
    %2140 = vmatpush1.msra.mxu0 0.0
    %2141 = vmatprep.subr.mxu0 0.0
    %2142 = vmatpush1.msra.mxu0 0.0
    %2143 = vmatprep.subr.mxu0 0.0
    %2144 = vmatpush1.msra.mxu0 0.0
    %2145 = vmatprep.subr.mxu0 0.0
    %2146 = vmatpush1.msra.mxu0 0.0
    %2147 = vmatprep.subr.mxu0 0.0
    %2148 = vmatpush1.msra.mxu0 0.0
    %2149 = vmatprep.subr.mxu0 0.0
    %2150 = vmatpush1.msra.mxu0 0.0
    %2151 = vmatprep.subr.mxu0 0.0
    %2152 = vmatpush1.msra.mxu0 0.0
    %2153 = vmatprep.subr.mxu0 0.0
    %2154 = vmatpush1.msra.mxu0 0.0
    %2155 = vmatprep.subr.mxu0 0.0
    %2156 = vmatpush1.msra.mxu0 0.0
    %2157 = vmatprep.subr.mxu0 0.0
    %2158 = vmatpush1.msra.mxu0 0.0
    %2159 = vmatprep.mubr.f32.mxu0 0.0
    %2160 = vmatmul.mubr.f32.gmra.mrb[0].mxu0 %v2093
    %v2161 = vpop.f32.mrb[0].mxu0
    %v2162 = vadd.f32 0.0, %v2161
    %v2163 = vpop.f32.mrb[0].mxu0
    %2164 = vdwg.mxu0
    %v2165 = vadd.f32 %v2092, %v2162
    %v2166 = vxor.u32 %v2165, 2147483648
    %v2167 = vmul.f32 %v2166, 1.442695
    %v2168 = vpow.pop %v2167
    %v2169 = vadd.f32 %v2168, 1.0
    %v2170 = vrcp.pop %v2169
    %v2171 = vmul.f32 1.0, %v2170
    %v2172 = vtanh.pop %v2165
    %v2173 = vmul.f32 %v2171, %v1978
    %2175 = vrot.lane.b32.xlu0 %v2172, 64
    %v2176 = vpop.permute.xlu0 %2175
    %v2178 = vmul.f32 %v2171, %v2176
    %2180 = vrot.lane.b32.xlu0 %v2178, 32
    %v2181 = vpop.permute.xlu0 %2180
    %v2183 = vadd.f32 %v2173, %v2181
    %v2184 = vtanh.pop %v2183
    %2186 = vrot.lane.b32.xlu0 %v2184, 64
    %v2187 = vpop.permute.xlu0 %2186
    %v2189 = vmul.f32 %v2171, %v2187
    %2191 = vrot.lane.b32.xlu0 %v2189, 32
    %v2192 = vpop.permute.xlu0 %2191
    %2195 = vrot.lane.b32.xlu0 %v2090, 64
    %v2196 = vpop.permute.xlu0 %2195
    %v2198 = vsel %vm38, %v2192, %v2196
    %v2200 = vsel %vm148, %v2198, 0
    %2202 = vmatprep.subr.mxu0 0.0
    %2203 = vmatpush1.msra.mxu0 %v28
    %2204 = vmatprep.subr.mxu0 0.0
    %2205 = vmatpush1.msra.mxu0 %v29
    %2206 = vmatprep.subr.mxu0 0.0
    %2207 = vmatpush1.msra.mxu0 %v30
    %2208 = vmatprep.subr.mxu0 0.0
    %2209 = vmatpush1.msra.mxu0 %v31
    %2210 = vmatprep.subr.mxu0 0.0
    %2211 = vmatpush1.msra.mxu0 %v32
    %2212 = vmatprep.subr.mxu0 0.0
    %2213 = vmatpush1.msra.mxu0 %v33
    %2214 = vmatprep.subr.mxu0 0.0
    %2215 = vmatpush1.msra.mxu0 %v34
    %2216 = vmatprep.subr.mxu0 0.0
    %2217 = vmatpush1.msra.mxu0 %v35
    %2218 = vmatprep.subr.mxu0 0.0
    %2219 = vmatpush1.msra.mxu0 0.0
    %2220 = vmatprep.subr.mxu0 0.0
    %2221 = vmatpush1.msra.mxu0 0.0
    %2222 = vmatprep.subr.mxu0 0.0
    %2223 = vmatpush1.msra.mxu0 0.0
    %2224 = vmatprep.subr.mxu0 0.0
    %2225 = vmatpush1.msra.mxu0 0.0
    %2226 = vmatprep.subr.mxu0 0.0
    %2227 = vmatpush1.msra.mxu0 0.0
    %2228 = vmatprep.subr.mxu0 0.0
    %2229 = vmatpush1.msra.mxu0 0.0
    %2230 = vmatprep.subr.mxu0 0.0
    %2231 = vmatpush1.msra.mxu0 0.0
    %2232 = vmatprep.subr.mxu0 0.0
    %2233 = vmatpush1.msra.mxu0 0.0
    %2234 = vmatprep.subr.mxu0 0.0
    %2235 = vmatpush1.msra.mxu0 0.0
    %2236 = vmatprep.subr.mxu0 0.0
    %2237 = vmatpush1.msra.mxu0 0.0
    %2238 = vmatprep.subr.mxu0 0.0
    %2239 = vmatpush1.msra.mxu0 0.0
    %2240 = vmatprep.subr.mxu0 0.0
    %2241 = vmatpush1.msra.mxu0 0.0
    %2242 = vmatprep.subr.mxu0 0.0
    %2243 = vmatpush1.msra.mxu0 0.0
    %2244 = vmatprep.subr.mxu0 0.0
    %2245 = vmatpush1.msra.mxu0 0.0
    %2246 = vmatprep.subr.mxu0 0.0
    %2247 = vmatpush1.msra.mxu0 0.0
    %2248 = vmatprep.subr.mxu0 0.0
    %2249 = vmatpush1.msra.mxu0 0.0
    %2250 = vmatprep.subr.mxu0 0.0
    %2251 = vmatpush1.msra.mxu0 0.0
    %2252 = vmatprep.subr.mxu0 0.0
    %2253 = vmatpush1.msra.mxu0 0.0
    %2254 = vmatprep.subr.mxu0 0.0
    %2255 = vmatpush1.msra.mxu0 0.0
    %2256 = vmatprep.subr.mxu0 0.0
    %2257 = vmatpush1.msra.mxu0 0.0
    %2258 = vmatprep.subr.mxu0 0.0
    %2259 = vmatpush1.msra.mxu0 0.0
    %2260 = vmatprep.subr.mxu0 0.0
    %2261 = vmatpush1.msra.mxu0 0.0
    %2262 = vmatprep.subr.mxu0 0.0
    %2263 = vmatpush1.msra.mxu0 0.0
    %2264 = vmatprep.subr.mxu0 0.0
    %2265 = vmatpush1.msra.mxu0 0.0
    %2266 = vmatprep.mubr.f32.mxu0 0.0
    %2267 = vmatmul.mubr.f32.gmra.mrb[0].mxu0 %v2200
    %v2268 = vpop.f32.mrb[0].mxu0
    %v2269 = vadd.f32 %v146, %v2268
    %v2270 = vpop.f32.mrb[0].mxu0
    %2271 = vdwg.mxu0
    %v2272 = vxor.u32 %v2269, 2147483648
    %v2273 = vmul.f32 %v2272, 1.442695
    %v2274 = vpow.pop %v2273
    %v2275 = vadd.f32 %v2274, 1.0
    %v2276 = vrcp.pop %v2275
    %v2277 = vmul.f32 1.0, %v2276
    %v2278 = vtanh.pop %v2269
    %v2279 = vmul.f32 %v2277, %v2084
    %2281 = vrot.lane.b32.xlu0 %v2278, 64
    %v2282 = vpop.permute.xlu0 %2281
    %v2284 = vmul.f32 %v2277, %v2282
    %2286 = vrot.lane.b32.xlu0 %v2284, 32
    %v2287 = vpop.permute.xlu0 %2286
    %v2289 = vadd.f32 %v2279, %v2287
    %v2290 = vtanh.pop %v2289
    %2292 = vrot.lane.b32.xlu0 %v2290, 64
    %v2293 = vpop.permute.xlu0 %2292
    %v2295 = vmul.f32 %v2277, %v2293
    %s2296 = scalar_lea.vmem %s0, 22
    %v2297 = vld [vmem:[%s2296] sm:$0x3]
    %v2298 = vsel %vm38, %v2192, 0
    %2300 = vmatprep.subr.mxu0 0.0
    %2301 = vmatpush1.msra.mxu0 %v24
    %2302 = vmatprep.subr.mxu0 0.0
    %2303 = vmatpush1.msra.mxu0 %v25
    %2304 = vmatprep.subr.mxu0 0.0
    %2305 = vmatpush1.msra.mxu0 %v26
    %2306 = vmatprep.subr.mxu0 0.0
    %2307 = vmatpush1.msra.mxu0 %v27
    %2308 = vmatprep.subr.mxu0 0.0
    %2309 = vmatpush1.msra.mxu0 0.0
    %2310 = vmatprep.subr.mxu0 0.0
    %2311 = vmatpush1.msra.mxu0 0.0
    %2312 = vmatprep.subr.mxu0 0.0
    %2313 = vmatpush1.msra.mxu0 0.0
    %2314 = vmatprep.subr.mxu0 0.0
    %2315 = vmatpush1.msra.mxu0 0.0
    %2316 = vmatprep.subr.mxu0 0.0
    %2317 = vmatpush1.msra.mxu0 0.0
    %2318 = vmatprep.subr.mxu0 0.0
    %2319 = vmatpush1.msra.mxu0 0.0
    %2320 = vmatprep.subr.mxu0 0.0
    %2321 = vmatpush1.msra.mxu0 0.0
    %2322 = vmatprep.subr.mxu0 0.0
    %2323 = vmatpush1.msra.mxu0 0.0
    %2324 = vmatprep.subr.mxu0 0.0
    %2325 = vmatpush1.msra.mxu0 0.0
    %2326 = vmatprep.subr.mxu0 0.0
    %2327 = vmatpush1.msra.mxu0 0.0
    %2328 = vmatprep.subr.mxu0 0.0
    %2329 = vmatpush1.msra.mxu0 0.0
    %2330 = vmatprep.subr.mxu0 0.0
    %2331 = vmatpush1.msra.mxu0 0.0
    %2332 = vmatprep.subr.mxu0 0.0
    %2333 = vmatpush1.msra.mxu0 0.0
    %2334 = vmatprep.subr.mxu0 0.0
    %2335 = vmatpush1.msra.mxu0 0.0
    %2336 = vmatprep.subr.mxu0 0.0
    %2337 = vmatpush1.msra.mxu0 0.0
    %2338 = vmatprep.subr.mxu0 0.0
    %2339 = vmatpush1.msra.mxu0 0.0
    %2340 = vmatprep.subr.mxu0 0.0
    %2341 = vmatpush1.msra.mxu0 0.0
    %2342 = vmatprep.subr.mxu0 0.0
    %2343 = vmatpush1.msra.mxu0 0.0
    %2344 = vmatprep.subr.mxu0 0.0
    %2345 = vmatpush1.msra.mxu0 0.0
    %2346 = vmatprep.subr.mxu0 0.0
    %2347 = vmatpush1.msra.mxu0 0.0
    %2348 = vmatprep.subr.mxu0 0.0
    %2349 = vmatpush1.msra.mxu0 0.0
    %2350 = vmatprep.subr.mxu0 0.0
    %2351 = vmatpush1.msra.mxu0 0.0
    %2352 = vmatprep.subr.mxu0 0.0
    %2353 = vmatpush1.msra.mxu0 0.0
    %2354 = vmatprep.subr.mxu0 0.0
    %2355 = vmatpush1.msra.mxu0 0.0
    %2356 = vmatprep.subr.mxu0 0.0
    %2357 = vmatpush1.msra.mxu0 0.0
    %2358 = vmatprep.subr.mxu0 0.0
    %2359 = vmatpush1.msra.mxu0 0.0
    %2360 = vmatprep.subr.mxu0 0.0
    %2361 = vmatpush1.msra.mxu0 0.0
    %2362 = vmatprep.subr.mxu0 0.0
    %2363 = vmatpush1.msra.mxu0 0.0
    %2364 = vmatprep.mubr.f32.mxu0 0.0
    %2365 = vmatmul.mubr.f32.gmra.mrb[0].mxu0 %v2298
    %v2366 = vpop.f32.mrb[0].mxu0
    %v2367 = vadd.f32 0.0, %v2366
    %v2368 = vpop.f32.mrb[0].mxu0
    %2369 = vdwg.mxu0
    %v2370 = vadd.f32 %v2297, %v2367
    %v2371 = vxor.u32 %v2370, 2147483648
    %v2372 = vmul.f32 %v2371, 1.442695
    %v2373 = vpow.pop %v2372
    %v2374 = vadd.f32 %v2373, 1.0
    %v2375 = vrcp.pop %v2374
    %v2376 = vmul.f32 1.0, %v2375
    %v2377 = vtanh.pop %v2370
    %v2378 = vmul.f32 %v2376, %v2183
    %2380 = vrot.lane.b32.xlu0 %v2377, 64
    %v2381 = vpop.permute.xlu0 %2380
    %v2383 = vmul.f32 %v2376, %v2381
    %2385 = vrot.lane.b32.xlu0 %v2383, 32
    %v2386 = vpop.permute.xlu0 %2385
    %v2388 = vadd.f32 %v2378, %v2386
    %v2389 = vtanh.pop %v2388
    %2391 = vrot.lane.b32.xlu0 %v2389, 64
    %v2392 = vpop.permute.xlu0 %2391
    %v2394 = vmul.f32 %v2376, %v2392
    %2396 = vrot.lane.b32.xlu0 %v2394, 32
    %v2397 = vpop.permute.xlu0 %2396
    %2400 = vrot.lane.b32.xlu0 %v2295, 64
    %v2401 = vpop.permute.xlu0 %2400
    %v2403 = vsel %vm38, %v2397, %v2401
    %v2405 = vsel %vm148, %v2403, 0
    %2407 = vmatprep.subr.mxu0 0.0
    %2408 = vmatpush1.msra.mxu0 %v28
    %2409 = vmatprep.subr.mxu0 0.0
    %2410 = vmatpush1.msra.mxu0 %v29
    %2411 = vmatprep.subr.mxu0 0.0
    %2412 = vmatpush1.msra.mxu0 %v30
    %2413 = vmatprep.subr.mxu0 0.0
    %2414 = vmatpush1.msra.mxu0 %v31
    %2415 = vmatprep.subr.mxu0 0.0
    %2416 = vmatpush1.msra.mxu0 %v32
    %2417 = vmatprep.subr.mxu0 0.0
    %2418 = vmatpush1.msra.mxu0 %v33
    %2419 = vmatprep.subr.mxu0 0.0
    %2420 = vmatpush1.msra.mxu0 %v34
    %2421 = vmatprep.subr.mxu0 0.0
    %2422 = vmatpush1.msra.mxu0 %v35
    %2423 = vmatprep.subr.mxu0 0.0
    %2424 = vmatpush1.msra.mxu0 0.0
    %2425 = vmatprep.subr.mxu0 0.0
    %2426 = vmatpush1.msra.mxu0 0.0
    %2427 = vmatprep.subr.mxu0 0.0
    %2428 = vmatpush1.msra.mxu0 0.0
    %2429 = vmatprep.subr.mxu0 0.0
    %2430 = vmatpush1.msra.mxu0 0.0
    %2431 = vmatprep.subr.mxu0 0.0
    %2432 = vmatpush1.msra.mxu0 0.0
    %2433 = vmatprep.subr.mxu0 0.0
    %2434 = vmatpush1.msra.mxu0 0.0
    %2435 = vmatprep.subr.mxu0 0.0
    %2436 = vmatpush1.msra.mxu0 0.0
    %2437 = vmatprep.subr.mxu0 0.0
    %2438 = vmatpush1.msra.mxu0 0.0
    %2439 = vmatprep.subr.mxu0 0.0
    %2440 = vmatpush1.msra.mxu0 0.0
    %2441 = vmatprep.subr.mxu0 0.0
    %2442 = vmatpush1.msra.mxu0 0.0
    %2443 = vmatprep.subr.mxu0 0.0
    %2444 = vmatpush1.msra.mxu0 0.0
    %2445 = vmatprep.subr.mxu0 0.0
    %2446 = vmatpush1.msra.mxu0 0.0
    %2447 = vmatprep.subr.mxu0 0.0
    %2448 = vmatpush1.msra.mxu0 0.0
    %2449 = vmatprep.subr.mxu0 0.0
    %2450 = vmatpush1.msra.mxu0 0.0
    %2451 = vmatprep.subr.mxu0 0.0
    %2452 = vmatpush1.msra.mxu0 0.0
    %2453 = vmatprep.subr.mxu0 0.0
    %2454 = vmatpush1.msra.mxu0 0.0
    %2455 = vmatprep.subr.mxu0 0.0
    %2456 = vmatpush1.msra.mxu0 0.0
    %2457 = vmatprep.subr.mxu0 0.0
    %2458 = vmatpush1.msra.mxu0 0.0
    %2459 = vmatprep.subr.mxu0 0.0
    %2460 = vmatpush1.msra.mxu0 0.0
    %2461 = vmatprep.subr.mxu0 0.0
    %2462 = vmatpush1.msra.mxu0 0.0
    %2463 = vmatprep.subr.mxu0 0.0
    %2464 = vmatpush1.msra.mxu0 0.0
    %2465 = vmatprep.subr.mxu0 0.0
    %2466 = vmatpush1.msra.mxu0 0.0
    %2467 = vmatprep.subr.mxu0 0.0
    %2468 = vmatpush1.msra.mxu0 0.0
    %2469 = vmatprep.subr.mxu0 0.0
    %2470 = vmatpush1.msra.mxu0 0.0
    %2471 = vmatprep.mubr.f32.mxu0 0.0
    %2472 = vmatmul.mubr.f32.gmra.mrb[0].mxu0 %v2405
    %v2473 = vpop.f32.mrb[0].mxu0
    %v2474 = vadd.f32 %v146, %v2473
    %v2475 = vpop.f32.mrb[0].mxu0
    %2476 = vdwg.mxu0
    %v2477 = vxor.u32 %v2474, 2147483648
    %v2478 = vmul.f32 %v2477, 1.442695
    %v2479 = vpow.pop %v2478
    %v2480 = vadd.f32 %v2479, 1.0
    %v2481 = vrcp.pop %v2480
    %v2482 = vmul.f32 1.0, %v2481
    %v2483 = vtanh.pop %v2474
    %v2484 = vmul.f32 %v2482, %v2289
    %2486 = vrot.lane.b32.xlu0 %v2483, 64
    %v2487 = vpop.permute.xlu0 %2486
    %v2489 = vmul.f32 %v2482, %v2487
    %2491 = vrot.lane.b32.xlu0 %v2489, 32
    %v2492 = vpop.permute.xlu0 %2491
    %v2494 = vadd.f32 %v2484, %v2492
    %v2495 = vtanh.pop %v2494
    %2497 = vrot.lane.b32.xlu0 %v2495, 64
    %v2498 = vpop.permute.xlu0 %2497
    %v2500 = vmul.f32 %v2482, %v2498
    %s2501 = scalar_lea.vmem %s0, 24
    %v2502 = vld [vmem:[%s2501] sm:$0x3]
    %v2503 = vsel %vm38, %v2397, 0
    %2505 = vmatprep.subr.mxu0 0.0
    %2506 = vmatpush1.msra.mxu0 %v24
    %2507 = vmatprep.subr.mxu0 0.0
    %2508 = vmatpush1.msra.mxu0 %v25
    %2509 = vmatprep.subr.mxu0 0.0
    %2510 = vmatpush1.msra.mxu0 %v26
    %2511 = vmatprep.subr.mxu0 0.0
    %2512 = vmatpush1.msra.mxu0 %v27
    %2513 = vmatprep.subr.mxu0 0.0
    %2514 = vmatpush1.msra.mxu0 0.0
    %2515 = vmatprep.subr.mxu0 0.0
    %2516 = vmatpush1.msra.mxu0 0.0
    %2517 = vmatprep.subr.mxu0 0.0
    %2518 = vmatpush1.msra.mxu0 0.0
    %2519 = vmatprep.subr.mxu0 0.0
    %2520 = vmatpush1.msra.mxu0 0.0
    %2521 = vmatprep.subr.mxu0 0.0
    %2522 = vmatpush1.msra.mxu0 0.0
    %2523 = vmatprep.subr.mxu0 0.0
    %2524 = vmatpush1.msra.mxu0 0.0
    %2525 = vmatprep.subr.mxu0 0.0
    %2526 = vmatpush1.msra.mxu0 0.0
    %2527 = vmatprep.subr.mxu0 0.0
    %2528 = vmatpush1.msra.mxu0 0.0
    %2529 = vmatprep.subr.mxu0 0.0
    %2530 = vmatpush1.msra.mxu0 0.0
    %2531 = vmatprep.subr.mxu0 0.0
    %2532 = vmatpush1.msra.mxu0 0.0
    %2533 = vmatprep.subr.mxu0 0.0
    %2534 = vmatpush1.msra.mxu0 0.0
    %2535 = vmatprep.subr.mxu0 0.0
    %2536 = vmatpush1.msra.mxu0 0.0
    %2537 = vmatprep.subr.mxu0 0.0
    %2538 = vmatpush1.msra.mxu0 0.0
    %2539 = vmatprep.subr.mxu0 0.0
    %2540 = vmatpush1.msra.mxu0 0.0
    %2541 = vmatprep.subr.mxu0 0.0
    %2542 = vmatpush1.msra.mxu0 0.0
    %2543 = vmatprep.subr.mxu0 0.0
    %2544 = vmatpush1.msra.mxu0 0.0
    %2545 = vmatprep.subr.mxu0 0.0
    %2546 = vmatpush1.msra.mxu0 0.0
    %2547 = vmatprep.subr.mxu0 0.0
    %2548 = vmatpush1.msra.mxu0 0.0
    %2549 = vmatprep.subr.mxu0 0.0
    %2550 = vmatpush1.msra.mxu0 0.0
    %2551 = vmatprep.subr.mxu0 0.0
    %2552 = vmatpush1.msra.mxu0 0.0
    %2553 = vmatprep.subr.mxu0 0.0
    %2554 = vmatpush1.msra.mxu0 0.0
    %2555 = vmatprep.subr.mxu0 0.0
    %2556 = vmatpush1.msra.mxu0 0.0
    %2557 = vmatprep.subr.mxu0 0.0
    %2558 = vmatpush1.msra.mxu0 0.0
    %2559 = vmatprep.subr.mxu0 0.0
    %2560 = vmatpush1.msra.mxu0 0.0
    %2561 = vmatprep.subr.mxu0 0.0
    %2562 = vmatpush1.msra.mxu0 0.0
    %2563 = vmatprep.subr.mxu0 0.0
    %2564 = vmatpush1.msra.mxu0 0.0
    %2565 = vmatprep.subr.mxu0 0.0
    %2566 = vmatpush1.msra.mxu0 0.0
    %2567 = vmatprep.subr.mxu0 0.0
    %2568 = vmatpush1.msra.mxu0 0.0
    %2569 = vmatprep.mubr.f32.mxu0 0.0
    %2570 = vmatmul.mubr.f32.gmra.mrb[0].mxu0 %v2503
    %v2571 = vpop.f32.mrb[0].mxu0
    %v2572 = vadd.f32 0.0, %v2571
    %v2573 = vpop.f32.mrb[0].mxu0
    %2574 = vdwg.mxu0
    %v2575 = vadd.f32 %v2502, %v2572
    %v2576 = vxor.u32 %v2575, 2147483648
    %v2577 = vmul.f32 %v2576, 1.442695
    %v2578 = vpow.pop %v2577
    %v2579 = vadd.f32 %v2578, 1.0
    %v2580 = vrcp.pop %v2579
    %v2581 = vmul.f32 1.0, %v2580
    %v2582 = vtanh.pop %v2575
    %v2583 = vmul.f32 %v2581, %v2388
    %2585 = vrot.lane.b32.xlu0 %v2582, 64
    %v2586 = vpop.permute.xlu0 %2585
    %v2588 = vmul.f32 %v2581, %v2586
    %2590 = vrot.lane.b32.xlu0 %v2588, 32
    %v2591 = vpop.permute.xlu0 %2590
    %v2593 = vadd.f32 %v2583, %v2591
    %v2594 = vtanh.pop %v2593
    %2596 = vrot.lane.b32.xlu0 %v2594, 64
    %v2597 = vpop.permute.xlu0 %2596
    %v2599 = vmul.f32 %v2581, %v2597
    %2601 = vrot.lane.b32.xlu0 %v2599, 32
    %v2602 = vpop.permute.xlu0 %2601
    %2605 = vrot.lane.b32.xlu0 %v2500, 64
    %v2606 = vpop.permute.xlu0 %2605
    %v2608 = vsel %vm38, %v2602, %v2606
    %v2610 = vsel %vm148, %v2608, 0
    %2612 = vmatprep.subr.mxu0 0.0
    %2613 = vmatpush1.msra.mxu0 %v28
    %2614 = vmatprep.subr.mxu0 0.0
    %2615 = vmatpush1.msra.mxu0 %v29
    %2616 = vmatprep.subr.mxu0 0.0
    %2617 = vmatpush1.msra.mxu0 %v30
    %2618 = vmatprep.subr.mxu0 0.0
    %2619 = vmatpush1.msra.mxu0 %v31
    %2620 = vmatprep.subr.mxu0 0.0
    %2621 = vmatpush1.msra.mxu0 %v32
    %2622 = vmatprep.subr.mxu0 0.0
    %2623 = vmatpush1.msra.mxu0 %v33
    %2624 = vmatprep.subr.mxu0 0.0
    %2625 = vmatpush1.msra.mxu0 %v34
    %2626 = vmatprep.subr.mxu0 0.0
    %2627 = vmatpush1.msra.mxu0 %v35
    %2628 = vmatprep.subr.mxu0 0.0
    %2629 = vmatpush1.msra.mxu0 0.0
    %2630 = vmatprep.subr.mxu0 0.0
    %2631 = vmatpush1.msra.mxu0 0.0
    %2632 = vmatprep.subr.mxu0 0.0
    %2633 = vmatpush1.msra.mxu0 0.0
    %2634 = vmatprep.subr.mxu0 0.0
    %2635 = vmatpush1.msra.mxu0 0.0
    %2636 = vmatprep.subr.mxu0 0.0
    %2637 = vmatpush1.msra.mxu0 0.0
    %2638 = vmatprep.subr.mxu0 0.0
    %2639 = vmatpush1.msra.mxu0 0.0
    %2640 = vmatprep.subr.mxu0 0.0
    %2641 = vmatpush1.msra.mxu0 0.0
    %2642 = vmatprep.subr.mxu0 0.0
    %2643 = vmatpush1.msra.mxu0 0.0
    %2644 = vmatprep.subr.mxu0 0.0
    %2645 = vmatpush1.msra.mxu0 0.0
    %2646 = vmatprep.subr.mxu0 0.0
    %2647 = vmatpush1.msra.mxu0 0.0
    %2648 = vmatprep.subr.mxu0 0.0
    %2649 = vmatpush1.msra.mxu0 0.0
    %2650 = vmatprep.subr.mxu0 0.0
    %2651 = vmatpush1.msra.mxu0 0.0
    %2652 = vmatprep.subr.mxu0 0.0
    %2653 = vmatpush1.msra.mxu0 0.0
    %2654 = vmatprep.subr.mxu0 0.0
    %2655 = vmatpush1.msra.mxu0 0.0
    %2656 = vmatprep.subr.mxu0 0.0
    %2657 = vmatpush1.msra.mxu0 0.0
    %2658 = vmatprep.subr.mxu0 0.0
    %2659 = vmatpush1.msra.mxu0 0.0
    %2660 = vmatprep.subr.mxu0 0.0
    %2661 = vmatpush1.msra.mxu0 0.0
    %2662 = vmatprep.subr.mxu0 0.0
    %2663 = vmatpush1.msra.mxu0 0.0
    %2664 = vmatprep.subr.mxu0 0.0
    %2665 = vmatpush1.msra.mxu0 0.0
    %2666 = vmatprep.subr.mxu0 0.0
    %2667 = vmatpush1.msra.mxu0 0.0
    %2668 = vmatprep.subr.mxu0 0.0
    %2669 = vmatpush1.msra.mxu0 0.0
    %2670 = vmatprep.subr.mxu0 0.0
    %2671 = vmatpush1.msra.mxu0 0.0
    %2672 = vmatprep.subr.mxu0 0.0
    %2673 = vmatpush1.msra.mxu0 0.0
    %2674 = vmatprep.subr.mxu0 0.0
    %2675 = vmatpush1.msra.mxu0 0.0
    %2676 = vmatprep.mubr.f32.mxu0 0.0
    %2677 = vmatmul.mubr.f32.gmra.mrb[0].mxu0 %v2610
    %v2678 = vpop.f32.mrb[0].mxu0
    %v2679 = vadd.f32 %v146, %v2678
    %v2680 = vpop.f32.mrb[0].mxu0
    %2681 = vdwg.mxu0
    %v2682 = vxor.u32 %v2679, 2147483648
    %v2683 = vmul.f32 %v2682, 1.442695
    %v2684 = vpow.pop %v2683
    %v2685 = vadd.f32 %v2684, 1.0
    %v2686 = vrcp.pop %v2685
    %v2687 = vmul.f32 1.0, %v2686
    %v2688 = vtanh.pop %v2679
    %v2689 = vmul.f32 %v2687, %v2494
    %2691 = vrot.lane.b32.xlu0 %v2688, 64
    %v2692 = vpop.permute.xlu0 %2691
    %v2694 = vmul.f32 %v2687, %v2692
    %2696 = vrot.lane.b32.xlu0 %v2694, 32
    %v2697 = vpop.permute.xlu0 %2696
    %v2699 = vadd.f32 %v2689, %v2697
    %v2700 = vtanh.pop %v2699
    %2702 = vrot.lane.b32.xlu0 %v2700, 64
    %v2703 = vpop.permute.xlu0 %2702
    %v2705 = vmul.f32 %v2687, %v2703
    %s2706 = scalar_lea.vmem %s0, 26
    %v2707 = vld [vmem:[%s2706] sm:$0x3]
    %v2708 = vsel %vm38, %v2602, 0
    %2710 = vmatprep.subr.mxu0 0.0
    %2711 = vmatpush1.msra.mxu0 %v24
    %2712 = vmatprep.subr.mxu0 0.0
    %2713 = vmatpush1.msra.mxu0 %v25
    %2714 = vmatprep.subr.mxu0 0.0
    %2715 = vmatpush1.msra.mxu0 %v26
    %2716 = vmatprep.subr.mxu0 0.0
    %2717 = vmatpush1.msra.mxu0 %v27
    %2718 = vmatprep.subr.mxu0 0.0
    %2719 = vmatpush1.msra.mxu0 0.0
    %2720 = vmatprep.subr.mxu0 0.0
    %2721 = vmatpush1.msra.mxu0 0.0
    %2722 = vmatprep.subr.mxu0 0.0
    %2723 = vmatpush1.msra.mxu0 0.0
    %2724 = vmatprep.subr.mxu0 0.0
    %2725 = vmatpush1.msra.mxu0 0.0
    %2726 = vmatprep.subr.mxu0 0.0
    %2727 = vmatpush1.msra.mxu0 0.0
    %2728 = vmatprep.subr.mxu0 0.0
    %2729 = vmatpush1.msra.mxu0 0.0
    %2730 = vmatprep.subr.mxu0 0.0
    %2731 = vmatpush1.msra.mxu0 0.0
    %2732 = vmatprep.subr.mxu0 0.0
    %2733 = vmatpush1.msra.mxu0 0.0
    %2734 = vmatprep.subr.mxu0 0.0
    %2735 = vmatpush1.msra.mxu0 0.0
    %2736 = vmatprep.subr.mxu0 0.0
    %2737 = vmatpush1.msra.mxu0 0.0
    %2738 = vmatprep.subr.mxu0 0.0
    %2739 = vmatpush1.msra.mxu0 0.0
    %2740 = vmatprep.subr.mxu0 0.0
    %2741 = vmatpush1.msra.mxu0 0.0
    %2742 = vmatprep.subr.mxu0 0.0
    %2743 = vmatpush1.msra.mxu0 0.0
    %2744 = vmatprep.subr.mxu0 0.0
    %2745 = vmatpush1.msra.mxu0 0.0
    %2746 = vmatprep.subr.mxu0 0.0
    %2747 = vmatpush1.msra.mxu0 0.0
    %2748 = vmatprep.subr.mxu0 0.0
    %2749 = vmatpush1.msra.mxu0 0.0
    %2750 = vmatprep.subr.mxu0 0.0
    %2751 = vmatpush1.msra.mxu0 0.0
    %2752 = vmatprep.subr.mxu0 0.0
    %2753 = vmatpush1.msra.mxu0 0.0
    %2754 = vmatprep.subr.mxu0 0.0
    %2755 = vmatpush1.msra.mxu0 0.0
    %2756 = vmatprep.subr.mxu0 0.0
    %2757 = vmatpush1.msra.mxu0 0.0
    %2758 = vmatprep.subr.mxu0 0.0
    %2759 = vmatpush1.msra.mxu0 0.0
    %2760 = vmatprep.subr.mxu0 0.0
    %2761 = vmatpush1.msra.mxu0 0.0
    %2762 = vmatprep.subr.mxu0 0.0
    %2763 = vmatpush1.msra.mxu0 0.0
    %2764 = vmatprep.subr.mxu0 0.0
    %2765 = vmatpush1.msra.mxu0 0.0
    %2766 = vmatprep.subr.mxu0 0.0
    %2767 = vmatpush1.msra.mxu0 0.0
    %2768 = vmatprep.subr.mxu0 0.0
    %2769 = vmatpush1.msra.mxu0 0.0
    %2770 = vmatprep.subr.mxu0 0.0
    %2771 = vmatpush1.msra.mxu0 0.0
    %2772 = vmatprep.subr.mxu0 0.0
    %2773 = vmatpush1.msra.mxu0 0.0
    %2774 = vmatprep.mubr.f32.mxu0 0.0
    %2775 = vmatmul.mubr.f32.gmra.mrb[0].mxu0 %v2708
    %v2776 = vpop.f32.mrb[0].mxu0
    %v2777 = vadd.f32 0.0, %v2776
    %v2778 = vpop.f32.mrb[0].mxu0
    %2779 = vdwg.mxu0
    %v2780 = vadd.f32 %v2707, %v2777
    %v2781 = vxor.u32 %v2780, 2147483648
    %v2782 = vmul.f32 %v2781, 1.442695
    %v2783 = vpow.pop %v2782
    %v2784 = vadd.f32 %v2783, 1.0
    %v2785 = vrcp.pop %v2784
    %v2786 = vmul.f32 1.0, %v2785
    %v2787 = vtanh.pop %v2780
    %v2788 = vmul.f32 %v2786, %v2593
    %2790 = vrot.lane.b32.xlu0 %v2787, 64
    %v2791 = vpop.permute.xlu0 %2790
    %v2793 = vmul.f32 %v2786, %v2791
    %2795 = vrot.lane.b32.xlu0 %v2793, 32
    %v2796 = vpop.permute.xlu0 %2795
    %v2798 = vadd.f32 %v2788, %v2796
    %v2799 = vtanh.pop %v2798
    %2801 = vrot.lane.b32.xlu0 %v2799, 64
    %v2802 = vpop.permute.xlu0 %2801
    %v2804 = vmul.f32 %v2786, %v2802
    %2806 = vrot.lane.b32.xlu0 %v2804, 32
    %v2807 = vpop.permute.xlu0 %2806
    %2810 = vrot.lane.b32.xlu0 %v2705, 64
    %v2811 = vpop.permute.xlu0 %2810
    %v2813 = vsel %vm38, %v2807, %v2811
    %v2815 = vsel %vm148, %v2813, 0
    %2817 = vmatprep.subr.mxu0 0.0
    %2818 = vmatpush1.msra.mxu0 %v28
    %2819 = vmatprep.subr.mxu0 0.0
    %2820 = vmatpush1.msra.mxu0 %v29
    %2821 = vmatprep.subr.mxu0 0.0
    %2822 = vmatpush1.msra.mxu0 %v30
    %2823 = vmatprep.subr.mxu0 0.0
    %2824 = vmatpush1.msra.mxu0 %v31
    %2825 = vmatprep.subr.mxu0 0.0
    %2826 = vmatpush1.msra.mxu0 %v32
    %2827 = vmatprep.subr.mxu0 0.0
    %2828 = vmatpush1.msra.mxu0 %v33
    %2829 = vmatprep.subr.mxu0 0.0
    %2830 = vmatpush1.msra.mxu0 %v34
    %2831 = vmatprep.subr.mxu0 0.0
    %2832 = vmatpush1.msra.mxu0 %v35
    %2833 = vmatprep.subr.mxu0 0.0
    %2834 = vmatpush1.msra.mxu0 0.0
    %2835 = vmatprep.subr.mxu0 0.0
    %2836 = vmatpush1.msra.mxu0 0.0
    %2837 = vmatprep.subr.mxu0 0.0
    %2838 = vmatpush1.msra.mxu0 0.0
    %2839 = vmatprep.subr.mxu0 0.0
    %2840 = vmatpush1.msra.mxu0 0.0
    %2841 = vmatprep.subr.mxu0 0.0
    %2842 = vmatpush1.msra.mxu0 0.0
    %2843 = vmatprep.subr.mxu0 0.0
    %2844 = vmatpush1.msra.mxu0 0.0
    %2845 = vmatprep.subr.mxu0 0.0
    %2846 = vmatpush1.msra.mxu0 0.0
    %2847 = vmatprep.subr.mxu0 0.0
    %2848 = vmatpush1.msra.mxu0 0.0
    %2849 = vmatprep.subr.mxu0 0.0
    %2850 = vmatpush1.msra.mxu0 0.0
    %2851 = vmatprep.subr.mxu0 0.0
    %2852 = vmatpush1.msra.mxu0 0.0
    %2853 = vmatprep.subr.mxu0 0.0
    %2854 = vmatpush1.msra.mxu0 0.0
    %2855 = vmatprep.subr.mxu0 0.0
    %2856 = vmatpush1.msra.mxu0 0.0
    %2857 = vmatprep.subr.mxu0 0.0
    %2858 = vmatpush1.msra.mxu0 0.0
    %2859 = vmatprep.subr.mxu0 0.0
    %2860 = vmatpush1.msra.mxu0 0.0
    %2861 = vmatprep.subr.mxu0 0.0
    %2862 = vmatpush1.msra.mxu0 0.0
    %2863 = vmatprep.subr.mxu0 0.0
    %2864 = vmatpush1.msra.mxu0 0.0
    %2865 = vmatprep.subr.mxu0 0.0
    %2866 = vmatpush1.msra.mxu0 0.0
    %2867 = vmatprep.subr.mxu0 0.0
    %2868 = vmatpush1.msra.mxu0 0.0
    %2869 = vmatprep.subr.mxu0 0.0
    %2870 = vmatpush1.msra.mxu0 0.0
    %2871 = vmatprep.subr.mxu0 0.0
    %2872 = vmatpush1.msra.mxu0 0.0
    %2873 = vmatprep.subr.mxu0 0.0
    %2874 = vmatpush1.msra.mxu0 0.0
    %2875 = vmatprep.subr.mxu0 0.0
    %2876 = vmatpush1.msra.mxu0 0.0
    %2877 = vmatprep.subr.mxu0 0.0
    %2878 = vmatpush1.msra.mxu0 0.0
    %2879 = vmatprep.subr.mxu0 0.0
    %2880 = vmatpush1.msra.mxu0 0.0
    %2881 = vmatprep.mubr.f32.mxu0 0.0
    %2882 = vmatmul.mubr.f32.gmra.mrb[0].mxu0 %v2815
    %v2883 = vpop.f32.mrb[0].mxu0
    %v2884 = vadd.f32 %v146, %v2883
    %v2885 = vpop.f32.mrb[0].mxu0
    %2886 = vdwg.mxu0
    %v2887 = vxor.u32 %v2884, 2147483648
    %v2888 = vmul.f32 %v2887, 1.442695
    %v2889 = vpow.pop %v2888
    %v2890 = vadd.f32 %v2889, 1.0
    %v2891 = vrcp.pop %v2890
    %v2892 = vmul.f32 1.0, %v2891
    %v2893 = vtanh.pop %v2884
    %v2894 = vmul.f32 %v2892, %v2699
    %2896 = vrot.lane.b32.xlu0 %v2893, 64
    %v2897 = vpop.permute.xlu0 %2896
    %v2899 = vmul.f32 %v2892, %v2897
    %2901 = vrot.lane.b32.xlu0 %v2899, 32
    %v2902 = vpop.permute.xlu0 %2901
    %v2904 = vadd.f32 %v2894, %v2902
    %v2905 = vtanh.pop %v2904
    %2907 = vrot.lane.b32.xlu0 %v2905, 64
    %v2908 = vpop.permute.xlu0 %2907
    %v2910 = vmul.f32 %v2892, %v2908
    %s2911 = scalar_lea.vmem %s0, 28
    %v2912 = vld [vmem:[%s2911] sm:$0x3]
    %v2913 = vsel %vm38, %v2807, 0
    %2915 = vmatprep.subr.mxu0 0.0
    %2916 = vmatpush1.msra.mxu0 %v24
    %2917 = vmatprep.subr.mxu0 0.0
    %2918 = vmatpush1.msra.mxu0 %v25
    %2919 = vmatprep.subr.mxu0 0.0
    %2920 = vmatpush1.msra.mxu0 %v26
    %2921 = vmatprep.subr.mxu0 0.0
    %2922 = vmatpush1.msra.mxu0 %v27
    %2923 = vmatprep.subr.mxu0 0.0
    %2924 = vmatpush1.msra.mxu0 0.0
    %2925 = vmatprep.subr.mxu0 0.0
    %2926 = vmatpush1.msra.mxu0 0.0
    %2927 = vmatprep.subr.mxu0 0.0
    %2928 = vmatpush1.msra.mxu0 0.0
    %2929 = vmatprep.subr.mxu0 0.0
    %2930 = vmatpush1.msra.mxu0 0.0
    %2931 = vmatprep.subr.mxu0 0.0
    %2932 = vmatpush1.msra.mxu0 0.0
    %2933 = vmatprep.subr.mxu0 0.0
    %2934 = vmatpush1.msra.mxu0 0.0
    %2935 = vmatprep.subr.mxu0 0.0
    %2936 = vmatpush1.msra.mxu0 0.0
    %2937 = vmatprep.subr.mxu0 0.0
    %2938 = vmatpush1.msra.mxu0 0.0
    %2939 = vmatprep.subr.mxu0 0.0
    %2940 = vmatpush1.msra.mxu0 0.0
    %2941 = vmatprep.subr.mxu0 0.0
    %2942 = vmatpush1.msra.mxu0 0.0
    %2943 = vmatprep.subr.mxu0 0.0
    %2944 = vmatpush1.msra.mxu0 0.0
    %2945 = vmatprep.subr.mxu0 0.0
    %2946 = vmatpush1.msra.mxu0 0.0
    %2947 = vmatprep.subr.mxu0 0.0
    %2948 = vmatpush1.msra.mxu0 0.0
    %2949 = vmatprep.subr.mxu0 0.0
    %2950 = vmatpush1.msra.mxu0 0.0
    %2951 = vmatprep.subr.mxu0 0.0
    %2952 = vmatpush1.msra.mxu0 0.0
    %2953 = vmatprep.subr.mxu0 0.0
    %2954 = vmatpush1.msra.mxu0 0.0
    %2955 = vmatprep.subr.mxu0 0.0
    %2956 = vmatpush1.msra.mxu0 0.0
    %2957 = vmatprep.subr.mxu0 0.0
    %2958 = vmatpush1.msra.mxu0 0.0
    %2959 = vmatprep.subr.mxu0 0.0
    %2960 = vmatpush1.msra.mxu0 0.0
    %2961 = vmatprep.subr.mxu0 0.0
    %2962 = vmatpush1.msra.mxu0 0.0
    %2963 = vmatprep.subr.mxu0 0.0
    %2964 = vmatpush1.msra.mxu0 0.0
    %2965 = vmatprep.subr.mxu0 0.0
    %2966 = vmatpush1.msra.mxu0 0.0
    %2967 = vmatprep.subr.mxu0 0.0
    %2968 = vmatpush1.msra.mxu0 0.0
    %2969 = vmatprep.subr.mxu0 0.0
    %2970 = vmatpush1.msra.mxu0 0.0
    %2971 = vmatprep.subr.mxu0 0.0
    %2972 = vmatpush1.msra.mxu0 0.0
    %2973 = vmatprep.subr.mxu0 0.0
    %2974 = vmatpush1.msra.mxu0 0.0
    %2975 = vmatprep.subr.mxu0 0.0
    %2976 = vmatpush1.msra.mxu0 0.0
    %2977 = vmatprep.subr.mxu0 0.0
    %2978 = vmatpush1.msra.mxu0 0.0
    %2979 = vmatprep.mubr.f32.mxu0 0.0
    %2980 = vmatmul.mubr.f32.gmra.mrb[0].mxu0 %v2913
    %v2981 = vpop.f32.mrb[0].mxu0
    %v2982 = vadd.f32 0.0, %v2981
    %v2983 = vpop.f32.mrb[0].mxu0
    %2984 = vdwg.mxu0
    %v2985 = vadd.f32 %v2912, %v2982
    %v2986 = vxor.u32 %v2985, 2147483648
    %v2987 = vmul.f32 %v2986, 1.442695
    %v2988 = vpow.pop %v2987
    %v2989 = vadd.f32 %v2988, 1.0
    %v2990 = vrcp.pop %v2989
    %v2991 = vmul.f32 1.0, %v2990
    %v2992 = vtanh.pop %v2985
    %v2993 = vmul.f32 %v2991, %v2798
    %2995 = vrot.lane.b32.xlu0 %v2992, 64
    %v2996 = vpop.permute.xlu0 %2995
    %v2998 = vmul.f32 %v2991, %v2996
    %3000 = vrot.lane.b32.xlu0 %v2998, 32
    %v3001 = vpop.permute.xlu0 %3000
    %v3003 = vadd.f32 %v2993, %v3001
    %v3004 = vtanh.pop %v3003
    %3006 = vrot.lane.b32.xlu0 %v3004, 64
    %v3007 = vpop.permute.xlu0 %3006
    %v3009 = vmul.f32 %v2991, %v3007
    %3011 = vrot.lane.b32.xlu0 %v3009, 32
    %v3012 = vpop.permute.xlu0 %3011
    %3015 = vrot.lane.b32.xlu0 %v2910, 64
    %v3016 = vpop.permute.xlu0 %3015
    %v3018 = vsel %vm38, %v3012, %v3016
    %v3020 = vsel %vm148, %v3018, 0
    %3022 = vmatprep.subr.mxu0 0.0
    %3023 = vmatpush1.msra.mxu0 %v28
    %3024 = vmatprep.subr.mxu0 0.0
    %3025 = vmatpush1.msra.mxu0 %v29
    %3026 = vmatprep.subr.mxu0 0.0
    %3027 = vmatpush1.msra.mxu0 %v30
    %3028 = vmatprep.subr.mxu0 0.0
    %3029 = vmatpush1.msra.mxu0 %v31
    %3030 = vmatprep.subr.mxu0 0.0
    %3031 = vmatpush1.msra.mxu0 %v32
    %3032 = vmatprep.subr.mxu0 0.0
    %3033 = vmatpush1.msra.mxu0 %v33
    %3034 = vmatprep.subr.mxu0 0.0
    %3035 = vmatpush1.msra.mxu0 %v34
    %3036 = vmatprep.subr.mxu0 0.0
    %3037 = vmatpush1.msra.mxu0 %v35
    %3038 = vmatprep.subr.mxu0 0.0
    %3039 = vmatpush1.msra.mxu0 0.0
    %3040 = vmatprep.subr.mxu0 0.0
    %3041 = vmatpush1.msra.mxu0 0.0
    %3042 = vmatprep.subr.mxu0 0.0
    %3043 = vmatpush1.msra.mxu0 0.0
    %3044 = vmatprep.subr.mxu0 0.0
    %3045 = vmatpush1.msra.mxu0 0.0
    %3046 = vmatprep.subr.mxu0 0.0
    %3047 = vmatpush1.msra.mxu0 0.0
    %3048 = vmatprep.subr.mxu0 0.0
    %3049 = vmatpush1.msra.mxu0 0.0
    %3050 = vmatprep.subr.mxu0 0.0
    %3051 = vmatpush1.msra.mxu0 0.0
    %3052 = vmatprep.subr.mxu0 0.0
    %3053 = vmatpush1.msra.mxu0 0.0
    %3054 = vmatprep.subr.mxu0 0.0
    %3055 = vmatpush1.msra.mxu0 0.0
    %3056 = vmatprep.subr.mxu0 0.0
    %3057 = vmatpush1.msra.mxu0 0.0
    %3058 = vmatprep.subr.mxu0 0.0
    %3059 = vmatpush1.msra.mxu0 0.0
    %3060 = vmatprep.subr.mxu0 0.0
    %3061 = vmatpush1.msra.mxu0 0.0
    %3062 = vmatprep.subr.mxu0 0.0
    %3063 = vmatpush1.msra.mxu0 0.0
    %3064 = vmatprep.subr.mxu0 0.0
    %3065 = vmatpush1.msra.mxu0 0.0
    %3066 = vmatprep.subr.mxu0 0.0
    %3067 = vmatpush1.msra.mxu0 0.0
    %3068 = vmatprep.subr.mxu0 0.0
    %3069 = vmatpush1.msra.mxu0 0.0
    %3070 = vmatprep.subr.mxu0 0.0
    %3071 = vmatpush1.msra.mxu0 0.0
    %3072 = vmatprep.subr.mxu0 0.0
    %3073 = vmatpush1.msra.mxu0 0.0
    %3074 = vmatprep.subr.mxu0 0.0
    %3075 = vmatpush1.msra.mxu0 0.0
    %3076 = vmatprep.subr.mxu0 0.0
    %3077 = vmatpush1.msra.mxu0 0.0
    %3078 = vmatprep.subr.mxu0 0.0
    %3079 = vmatpush1.msra.mxu0 0.0
    %3080 = vmatprep.subr.mxu0 0.0
    %3081 = vmatpush1.msra.mxu0 0.0
    %3082 = vmatprep.subr.mxu0 0.0
    %3083 = vmatpush1.msra.mxu0 0.0
    %3084 = vmatprep.subr.mxu0 0.0
    %3085 = vmatpush1.msra.mxu0 0.0
    %3086 = vmatprep.mubr.f32.mxu0 0.0
    %3087 = vmatmul.mubr.f32.gmra.mrb[0].mxu0 %v3020
    %v3088 = vpop.f32.mrb[0].mxu0
    %v3089 = vadd.f32 %v146, %v3088
    %v3090 = vpop.f32.mrb[0].mxu0
    %3091 = vdwg.mxu0
    %v3092 = vxor.u32 %v3089, 2147483648
    %v3093 = vmul.f32 %v3092, 1.442695
    %v3094 = vpow.pop %v3093
    %v3095 = vadd.f32 %v3094, 1.0
    %v3096 = vrcp.pop %v3095
    %v3097 = vmul.f32 1.0, %v3096
    %v3098 = vtanh.pop %v3089
    %v3099 = vmul.f32 %v3097, %v2904
    %3101 = vrot.lane.b32.xlu0 %v3098, 64
    %v3102 = vpop.permute.xlu0 %3101
    %v3104 = vmul.f32 %v3097, %v3102
    %3106 = vrot.lane.b32.xlu0 %v3104, 32
    %v3107 = vpop.permute.xlu0 %3106
    %v3109 = vadd.f32 %v3099, %v3107
    %v3110 = vtanh.pop %v3109
    %3112 = vrot.lane.b32.xlu0 %v3110, 64
    %v3113 = vpop.permute.xlu0 %3112
    %v3115 = vmul.f32 %v3097, %v3113
    %s3116 = scalar_lea.vmem %s0, 30
    %v3117 = vld [vmem:[%s3116] sm:$0x3]
    %v3118 = vsel %vm38, %v3012, 0
    %3120 = vmatprep.subr.mxu0 0.0
    %3121 = vmatpush1.msra.mxu0 %v24
    %3122 = vmatprep.subr.mxu0 0.0
    %3123 = vmatpush1.msra.mxu0 %v25
    %3124 = vmatprep.subr.mxu0 0.0
    %3125 = vmatpush1.msra.mxu0 %v26
    %3126 = vmatprep.subr.mxu0 0.0
    %3127 = vmatpush1.msra.mxu0 %v27
    %3128 = vmatprep.subr.mxu0 0.0
    %3129 = vmatpush1.msra.mxu0 0.0
    %3130 = vmatprep.subr.mxu0 0.0
    %3131 = vmatpush1.msra.mxu0 0.0
    %3132 = vmatprep.subr.mxu0 0.0
    %3133 = vmatpush1.msra.mxu0 0.0
    %3134 = vmatprep.subr.mxu0 0.0
    %3135 = vmatpush1.msra.mxu0 0.0
    %3136 = vmatprep.subr.mxu0 0.0
    %3137 = vmatpush1.msra.mxu0 0.0
    %3138 = vmatprep.subr.mxu0 0.0
    %3139 = vmatpush1.msra.mxu0 0.0
    %3140 = vmatprep.subr.mxu0 0.0
    %3141 = vmatpush1.msra.mxu0 0.0
    %3142 = vmatprep.subr.mxu0 0.0
    %3143 = vmatpush1.msra.mxu0 0.0
    %3144 = vmatprep.subr.mxu0 0.0
    %3145 = vmatpush1.msra.mxu0 0.0
    %3146 = vmatprep.subr.mxu0 0.0
    %3147 = vmatpush1.msra.mxu0 0.0
    %3148 = vmatprep.subr.mxu0 0.0
    %3149 = vmatpush1.msra.mxu0 0.0
    %3150 = vmatprep.subr.mxu0 0.0
    %3151 = vmatpush1.msra.mxu0 0.0
    %3152 = vmatprep.subr.mxu0 0.0
    %3153 = vmatpush1.msra.mxu0 0.0
    %3154 = vmatprep.subr.mxu0 0.0
    %3155 = vmatpush1.msra.mxu0 0.0
    %3156 = vmatprep.subr.mxu0 0.0
    %3157 = vmatpush1.msra.mxu0 0.0
    %3158 = vmatprep.subr.mxu0 0.0
    %3159 = vmatpush1.msra.mxu0 0.0
    %3160 = vmatprep.subr.mxu0 0.0
    %3161 = vmatpush1.msra.mxu0 0.0
    %3162 = vmatprep.subr.mxu0 0.0
    %3163 = vmatpush1.msra.mxu0 0.0
    %3164 = vmatprep.subr.mxu0 0.0
    %3165 = vmatpush1.msra.mxu0 0.0
    %3166 = vmatprep.subr.mxu0 0.0
    %3167 = vmatpush1.msra.mxu0 0.0
    %3168 = vmatprep.subr.mxu0 0.0
    %3169 = vmatpush1.msra.mxu0 0.0
    %3170 = vmatprep.subr.mxu0 0.0
    %3171 = vmatpush1.msra.mxu0 0.0
    %3172 = vmatprep.subr.mxu0 0.0
    %3173 = vmatpush1.msra.mxu0 0.0
    %3174 = vmatprep.subr.mxu0 0.0
    %3175 = vmatpush1.msra.mxu0 0.0
    %3176 = vmatprep.subr.mxu0 0.0
    %3177 = vmatpush1.msra.mxu0 0.0
    %3178 = vmatprep.subr.mxu0 0.0
    %3179 = vmatpush1.msra.mxu0 0.0
    %3180 = vmatprep.subr.mxu0 0.0
    %3181 = vmatpush1.msra.mxu0 0.0
    %3182 = vmatprep.subr.mxu0 0.0
    %3183 = vmatpush1.msra.mxu0 0.0
    %3184 = vmatprep.mubr.f32.mxu0 0.0
    %3185 = vmatmul.mubr.f32.gmra.mrb[0].mxu0 %v3118
    %v3186 = vpop.f32.mrb[0].mxu0
    %v3187 = vadd.f32 0.0, %v3186
    %v3188 = vpop.f32.mrb[0].mxu0
    %3189 = vdwg.mxu0
    %v3190 = vadd.f32 %v3117, %v3187
    %v3191 = vxor.u32 %v3190, 2147483648
    %v3192 = vmul.f32 %v3191, 1.442695
    %v3193 = vpow.pop %v3192
    %v3194 = vadd.f32 %v3193, 1.0
    %v3195 = vrcp.pop %v3194
    %v3196 = vmul.f32 1.0, %v3195
    %v3197 = vtanh.pop %v3190
    %v3198 = vmul.f32 %v3196, %v3003
    %3200 = vrot.lane.b32.xlu0 %v3197, 64
    %v3201 = vpop.permute.xlu0 %3200
    %v3203 = vmul.f32 %v3196, %v3201
    %3205 = vrot.lane.b32.xlu0 %v3203, 32
    %v3206 = vpop.permute.xlu0 %3205
    %v3208 = vadd.f32 %v3198, %v3206
    %v3209 = vtanh.pop %v3208
    %3211 = vrot.lane.b32.xlu0 %v3209, 64
    %v3212 = vpop.permute.xlu0 %3211
    %v3214 = vmul.f32 %v3196, %v3212
    %3216 = vrot.lane.b32.xlu0 %v3214, 32
    %v3217 = vpop.permute.xlu0 %3216
    %3220 = vrot.lane.b32.xlu0 %v3115, 64
    %v3221 = vpop.permute.xlu0 %3220
    %v3223 = vsel %vm38, %v3217, %v3221
    %v3225 = vsel %vm148, %v3223, 0
    %3227 = vmatprep.subr.mxu0 0.0
    %3228 = vmatpush1.msra.mxu0 %v28
    %3229 = vmatprep.subr.mxu0 0.0
    %3230 = vmatpush1.msra.mxu0 %v29
    %3231 = vmatprep.subr.mxu0 0.0
    %3232 = vmatpush1.msra.mxu0 %v30
    %3233 = vmatprep.subr.mxu0 0.0
    %3234 = vmatpush1.msra.mxu0 %v31
    %3235 = vmatprep.subr.mxu0 0.0
    %3236 = vmatpush1.msra.mxu0 %v32
    %3237 = vmatprep.subr.mxu0 0.0
    %3238 = vmatpush1.msra.mxu0 %v33
    %3239 = vmatprep.subr.mxu0 0.0
    %3240 = vmatpush1.msra.mxu0 %v34
    %3241 = vmatprep.subr.mxu0 0.0
    %3242 = vmatpush1.msra.mxu0 %v35
    %3243 = vmatprep.subr.mxu0 0.0
    %3244 = vmatpush1.msra.mxu0 0.0
    %3245 = vmatprep.subr.mxu0 0.0
    %3246 = vmatpush1.msra.mxu0 0.0
    %3247 = vmatprep.subr.mxu0 0.0
    %3248 = vmatpush1.msra.mxu0 0.0
    %3249 = vmatprep.subr.mxu0 0.0
    %3250 = vmatpush1.msra.mxu0 0.0
    %3251 = vmatprep.subr.mxu0 0.0
    %3252 = vmatpush1.msra.mxu0 0.0
    %3253 = vmatprep.subr.mxu0 0.0
    %3254 = vmatpush1.msra.mxu0 0.0
    %3255 = vmatprep.subr.mxu0 0.0
    %3256 = vmatpush1.msra.mxu0 0.0
    %3257 = vmatprep.subr.mxu0 0.0
    %3258 = vmatpush1.msra.mxu0 0.0
    %3259 = vmatprep.subr.mxu0 0.0
    %3260 = vmatpush1.msra.mxu0 0.0
    %3261 = vmatprep.subr.mxu0 0.0
    %3262 = vmatpush1.msra.mxu0 0.0
    %3263 = vmatprep.subr.mxu0 0.0
    %3264 = vmatpush1.msra.mxu0 0.0
    %3265 = vmatprep.subr.mxu0 0.0
    %3266 = vmatpush1.msra.mxu0 0.0
    %3267 = vmatprep.subr.mxu0 0.0
    %3268 = vmatpush1.msra.mxu0 0.0
    %3269 = vmatprep.subr.mxu0 0.0
    %3270 = vmatpush1.msra.mxu0 0.0
    %3271 = vmatprep.subr.mxu0 0.0
    %3272 = vmatpush1.msra.mxu0 0.0
    %3273 = vmatprep.subr.mxu0 0.0
    %3274 = vmatpush1.msra.mxu0 0.0
    %3275 = vmatprep.subr.mxu0 0.0
    %3276 = vmatpush1.msra.mxu0 0.0
    %3277 = vmatprep.subr.mxu0 0.0
    %3278 = vmatpush1.msra.mxu0 0.0
    %3279 = vmatprep.subr.mxu0 0.0
    %3280 = vmatpush1.msra.mxu0 0.0
    %3281 = vmatprep.subr.mxu0 0.0
    %3282 = vmatpush1.msra.mxu0 0.0
    %3283 = vmatprep.subr.mxu0 0.0
    %3284 = vmatpush1.msra.mxu0 0.0
    %3285 = vmatprep.subr.mxu0 0.0
    %3286 = vmatpush1.msra.mxu0 0.0
    %3287 = vmatprep.subr.mxu0 0.0
    %3288 = vmatpush1.msra.mxu0 0.0
    %3289 = vmatprep.subr.mxu0 0.0
    %3290 = vmatpush1.msra.mxu0 0.0
    %3291 = vmatprep.mubr.f32.mxu0 0.0
    %3292 = vmatmul.mubr.f32.gmra.mrb[0].mxu0 %v3225
    %v3293 = vpop.f32.mrb[0].mxu0
    %v3294 = vadd.f32 %v146, %v3293
    %v3295 = vpop.f32.mrb[0].mxu0
    %3296 = vdwg.mxu0
    %v3297 = vxor.u32 %v3294, 2147483648
    %v3298 = vmul.f32 %v3297, 1.442695
    %v3299 = vpow.pop %v3298
    %v3300 = vadd.f32 %v3299, 1.0
    %v3301 = vrcp.pop %v3300
    %v3302 = vmul.f32 1.0, %v3301
    %v3303 = vtanh.pop %v3294
    %v3304 = vmul.f32 %v3302, %v3109
    %3306 = vrot.lane.b32.xlu0 %v3303, 64
    %v3307 = vpop.permute.xlu0 %3306
    %v3309 = vmul.f32 %v3302, %v3307
    %3311 = vrot.lane.b32.xlu0 %v3309, 32
    %v3312 = vpop.permute.xlu0 %3311
    %v3314 = vadd.f32 %v3304, %v3312
    %v3315 = vtanh.pop %v3314
    %3317 = vrot.lane.b32.xlu0 %v3315, 64
    %v3318 = vpop.permute.xlu0 %3317
    %v3320 = vmul.f32 %v3302, %v3318
    %s3321 = scalar_lea.vmem %s0, 32
    %v3322 = vld [vmem:[%s3321] sm:$0x3]
    %v3323 = vsel %vm38, %v3217, 0
    %3325 = vmatprep.subr.mxu0 0.0
    %3326 = vmatpush1.msra.mxu0 %v24
    %3327 = vmatprep.subr.mxu0 0.0
    %3328 = vmatpush1.msra.mxu0 %v25
    %3329 = vmatprep.subr.mxu0 0.0
    %3330 = vmatpush1.msra.mxu0 %v26
    %3331 = vmatprep.subr.mxu0 0.0
    %3332 = vmatpush1.msra.mxu0 %v27
    %3333 = vmatprep.subr.mxu0 0.0
    %3334 = vmatpush1.msra.mxu0 0.0
    %3335 = vmatprep.subr.mxu0 0.0
    %3336 = vmatpush1.msra.mxu0 0.0
    %3337 = vmatprep.subr.mxu0 0.0
    %3338 = vmatpush1.msra.mxu0 0.0
    %3339 = vmatprep.subr.mxu0 0.0
    %3340 = vmatpush1.msra.mxu0 0.0
    %3341 = vmatprep.subr.mxu0 0.0
    %3342 = vmatpush1.msra.mxu0 0.0
    %3343 = vmatprep.subr.mxu0 0.0
    %3344 = vmatpush1.msra.mxu0 0.0
    %3345 = vmatprep.subr.mxu0 0.0
    %3346 = vmatpush1.msra.mxu0 0.0
    %3347 = vmatprep.subr.mxu0 0.0
    %3348 = vmatpush1.msra.mxu0 0.0
    %3349 = vmatprep.subr.mxu0 0.0
    %3350 = vmatpush1.msra.mxu0 0.0
    %3351 = vmatprep.subr.mxu0 0.0
    %3352 = vmatpush1.msra.mxu0 0.0
    %3353 = vmatprep.subr.mxu0 0.0
    %3354 = vmatpush1.msra.mxu0 0.0
    %3355 = vmatprep.subr.mxu0 0.0
    %3356 = vmatpush1.msra.mxu0 0.0
    %3357 = vmatprep.subr.mxu0 0.0
    %3358 = vmatpush1.msra.mxu0 0.0
    %3359 = vmatprep.subr.mxu0 0.0
    %3360 = vmatpush1.msra.mxu0 0.0
    %3361 = vmatprep.subr.mxu0 0.0
    %3362 = vmatpush1.msra.mxu0 0.0
    %3363 = vmatprep.subr.mxu0 0.0
    %3364 = vmatpush1.msra.mxu0 0.0
    %3365 = vmatprep.subr.mxu0 0.0
    %3366 = vmatpush1.msra.mxu0 0.0
    %3367 = vmatprep.subr.mxu0 0.0
    %3368 = vmatpush1.msra.mxu0 0.0
    %3369 = vmatprep.subr.mxu0 0.0
    %3370 = vmatpush1.msra.mxu0 0.0
    %3371 = vmatprep.subr.mxu0 0.0
    %3372 = vmatpush1.msra.mxu0 0.0
    %3373 = vmatprep.subr.mxu0 0.0
    %3374 = vmatpush1.msra.mxu0 0.0
    %3375 = vmatprep.subr.mxu0 0.0
    %3376 = vmatpush1.msra.mxu0 0.0
    %3377 = vmatprep.subr.mxu0 0.0
    %3378 = vmatpush1.msra.mxu0 0.0
    %3379 = vmatprep.subr.mxu0 0.0
    %3380 = vmatpush1.msra.mxu0 0.0
    %3381 = vmatprep.subr.mxu0 0.0
    %3382 = vmatpush1.msra.mxu0 0.0
    %3383 = vmatprep.subr.mxu0 0.0
    %3384 = vmatpush1.msra.mxu0 0.0
    %3385 = vmatprep.subr.mxu0 0.0
    %3386 = vmatpush1.msra.mxu0 0.0
    %3387 = vmatprep.subr.mxu0 0.0
    %3388 = vmatpush1.msra.mxu0 0.0
    %3389 = vmatprep.mubr.f32.mxu0 0.0
    %3390 = vmatmul.mubr.f32.gmra.mrb[0].mxu0 %v3323
    %v3391 = vpop.f32.mrb[0].mxu0
    %v3392 = vadd.f32 0.0, %v3391
    %v3393 = vpop.f32.mrb[0].mxu0
    %3394 = vdwg.mxu0
    %v3395 = vadd.f32 %v3322, %v3392
    %v3396 = vxor.u32 %v3395, 2147483648
    %v3397 = vmul.f32 %v3396, 1.442695
    %v3398 = vpow.pop %v3397
    %v3399 = vadd.f32 %v3398, 1.0
    %v3400 = vrcp.pop %v3399
    %v3401 = vmul.f32 1.0, %v3400
    %v3402 = vtanh.pop %v3395
    %v3403 = vmul.f32 %v3401, %v3208
    %3405 = vrot.lane.b32.xlu0 %v3402, 64
    %v3406 = vpop.permute.xlu0 %3405
    %v3408 = vmul.f32 %v3401, %v3406
    %3410 = vrot.lane.b32.xlu0 %v3408, 32
    %v3411 = vpop.permute.xlu0 %3410
    %v3413 = vadd.f32 %v3403, %v3411
    %v3414 = vtanh.pop %v3413
    %3416 = vrot.lane.b32.xlu0 %v3414, 64
    %v3417 = vpop.permute.xlu0 %3416
    %v3419 = vmul.f32 %v3401, %v3417
    %3421 = vrot.lane.b32.xlu0 %v3419, 32
    %v3422 = vpop.permute.xlu0 %3421
    %3425 = vrot.lane.b32.xlu0 %v3320, 64
    %v3426 = vpop.permute.xlu0 %3425
    %v3428 = vsel %vm38, %v3422, %v3426
    %v3430 = vsel %vm148, %v3428, 0
    %3432 = vmatprep.subr.mxu0 0.0
    %3433 = vmatpush1.msra.mxu0 %v28
    %3434 = vmatprep.subr.mxu0 0.0
    %3435 = vmatpush1.msra.mxu0 %v29
    %3436 = vmatprep.subr.mxu0 0.0
    %3437 = vmatpush1.msra.mxu0 %v30
    %3438 = vmatprep.subr.mxu0 0.0
    %3439 = vmatpush1.msra.mxu0 %v31
    %3440 = vmatprep.subr.mxu0 0.0
    %3441 = vmatpush1.msra.mxu0 %v32
    %3442 = vmatprep.subr.mxu0 0.0
    %3443 = vmatpush1.msra.mxu0 %v33
    %3444 = vmatprep.subr.mxu0 0.0
    %3445 = vmatpush1.msra.mxu0 %v34
    %3446 = vmatprep.subr.mxu0 0.0
    %3447 = vmatpush1.msra.mxu0 %v35
    %3448 = vmatprep.subr.mxu0 0.0
    %3449 = vmatpush1.msra.mxu0 0.0
    %3450 = vmatprep.subr.mxu0 0.0
    %3451 = vmatpush1.msra.mxu0 0.0
    %3452 = vmatprep.subr.mxu0 0.0
    %3453 = vmatpush1.msra.mxu0 0.0
    %3454 = vmatprep.subr.mxu0 0.0
    %3455 = vmatpush1.msra.mxu0 0.0
    %3456 = vmatprep.subr.mxu0 0.0
    %3457 = vmatpush1.msra.mxu0 0.0
    %3458 = vmatprep.subr.mxu0 0.0
    %3459 = vmatpush1.msra.mxu0 0.0
    %3460 = vmatprep.subr.mxu0 0.0
    %3461 = vmatpush1.msra.mxu0 0.0
    %3462 = vmatprep.subr.mxu0 0.0
    %3463 = vmatpush1.msra.mxu0 0.0
    %3464 = vmatprep.subr.mxu0 0.0
    %3465 = vmatpush1.msra.mxu0 0.0
    %3466 = vmatprep.subr.mxu0 0.0
    %3467 = vmatpush1.msra.mxu0 0.0
    %3468 = vmatprep.subr.mxu0 0.0
    %3469 = vmatpush1.msra.mxu0 0.0
    %3470 = vmatprep.subr.mxu0 0.0
    %3471 = vmatpush1.msra.mxu0 0.0
    %3472 = vmatprep.subr.mxu0 0.0
    %3473 = vmatpush1.msra.mxu0 0.0
    %3474 = vmatprep.subr.mxu0 0.0
    %3475 = vmatpush1.msra.mxu0 0.0
    %3476 = vmatprep.subr.mxu0 0.0
    %3477 = vmatpush1.msra.mxu0 0.0
    %3478 = vmatprep.subr.mxu0 0.0
    %3479 = vmatpush1.msra.mxu0 0.0
    %3480 = vmatprep.subr.mxu0 0.0
    %3481 = vmatpush1.msra.mxu0 0.0
    %3482 = vmatprep.subr.mxu0 0.0
    %3483 = vmatpush1.msra.mxu0 0.0
    %3484 = vmatprep.subr.mxu0 0.0
    %3485 = vmatpush1.msra.mxu0 0.0
    %3486 = vmatprep.subr.mxu0 0.0
    %3487 = vmatpush1.msra.mxu0 0.0
    %3488 = vmatprep.subr.mxu0 0.0
    %3489 = vmatpush1.msra.mxu0 0.0
    %3490 = vmatprep.subr.mxu0 0.0
    %3491 = vmatpush1.msra.mxu0 0.0
    %3492 = vmatprep.subr.mxu0 0.0
    %3493 = vmatpush1.msra.mxu0 0.0
    %3494 = vmatprep.subr.mxu0 0.0
    %3495 = vmatpush1.msra.mxu0 0.0
    %3496 = vmatprep.mubr.f32.mxu0 0.0
    %3497 = vmatmul.mubr.f32.gmra.mrb[0].mxu0 %v3430
    %v3498 = vpop.f32.mrb[0].mxu0
    %v3499 = vadd.f32 %v146, %v3498
    %v3500 = vpop.f32.mrb[0].mxu0
    %3501 = vdwg.mxu0
    %v3502 = vxor.u32 %v3499, 2147483648
    %v3503 = vmul.f32 %v3502, 1.442695
    %v3504 = vpow.pop %v3503
    %v3505 = vadd.f32 %v3504, 1.0
    %v3506 = vrcp.pop %v3505
    %v3507 = vmul.f32 1.0, %v3506
    %v3508 = vtanh.pop %v3499
    %v3509 = vmul.f32 %v3507, %v3314
    %3511 = vrot.lane.b32.xlu0 %v3508, 64
    %v3512 = vpop.permute.xlu0 %3511
    %v3514 = vmul.f32 %v3507, %v3512
    %3516 = vrot.lane.b32.xlu0 %v3514, 32
    %v3517 = vpop.permute.xlu0 %3516
    %v3519 = vadd.f32 %v3509, %v3517
    %v3520 = vtanh.pop %v3519
    %3522 = vrot.lane.b32.xlu0 %v3520, 64
    %v3523 = vpop.permute.xlu0 %3522
    %v3525 = vmul.f32 %v3507, %v3523
    %s3526 = scalar_lea.vmem %s0, 34
    %v3527 = vld [vmem:[%s3526] sm:$0x3]
    %v3528 = vsel %vm38, %v3422, 0
    %3530 = vmatprep.subr.mxu0 0.0
    %3531 = vmatpush1.msra.mxu0 %v24
    %3532 = vmatprep.subr.mxu0 0.0
    %3533 = vmatpush1.msra.mxu0 %v25
    %3534 = vmatprep.subr.mxu0 0.0
    %3535 = vmatpush1.msra.mxu0 %v26
    %3536 = vmatprep.subr.mxu0 0.0
    %3537 = vmatpush1.msra.mxu0 %v27
    %3538 = vmatprep.subr.mxu0 0.0
    %3539 = vmatpush1.msra.mxu0 0.0
    %3540 = vmatprep.subr.mxu0 0.0
    %3541 = vmatpush1.msra.mxu0 0.0
    %3542 = vmatprep.subr.mxu0 0.0
    %3543 = vmatpush1.msra.mxu0 0.0
    %3544 = vmatprep.subr.mxu0 0.0
    %3545 = vmatpush1.msra.mxu0 0.0
    %3546 = vmatprep.subr.mxu0 0.0
    %3547 = vmatpush1.msra.mxu0 0.0
    %3548 = vmatprep.subr.mxu0 0.0
    %3549 = vmatpush1.msra.mxu0 0.0
    %3550 = vmatprep.subr.mxu0 0.0
    %3551 = vmatpush1.msra.mxu0 0.0
    %3552 = vmatprep.subr.mxu0 0.0
    %3553 = vmatpush1.msra.mxu0 0.0
    %3554 = vmatprep.subr.mxu0 0.0
    %3555 = vmatpush1.msra.mxu0 0.0
    %3556 = vmatprep.subr.mxu0 0.0
    %3557 = vmatpush1.msra.mxu0 0.0
    %3558 = vmatprep.subr.mxu0 0.0
    %3559 = vmatpush1.msra.mxu0 0.0
    %3560 = vmatprep.subr.mxu0 0.0
    %3561 = vmatpush1.msra.mxu0 0.0
    %3562 = vmatprep.subr.mxu0 0.0
    %3563 = vmatpush1.msra.mxu0 0.0
    %3564 = vmatprep.subr.mxu0 0.0
    %3565 = vmatpush1.msra.mxu0 0.0
    %3566 = vmatprep.subr.mxu0 0.0
    %3567 = vmatpush1.msra.mxu0 0.0
    %3568 = vmatprep.subr.mxu0 0.0
    %3569 = vmatpush1.msra.mxu0 0.0
    %3570 = vmatprep.subr.mxu0 0.0
    %3571 = vmatpush1.msra.mxu0 0.0
    %3572 = vmatprep.subr.mxu0 0.0
    %3573 = vmatpush1.msra.mxu0 0.0
    %3574 = vmatprep.subr.mxu0 0.0
    %3575 = vmatpush1.msra.mxu0 0.0
    %3576 = vmatprep.subr.mxu0 0.0
    %3577 = vmatpush1.msra.mxu0 0.0
    %3578 = vmatprep.subr.mxu0 0.0
    %3579 = vmatpush1.msra.mxu0 0.0
    %3580 = vmatprep.subr.mxu0 0.0
    %3581 = vmatpush1.msra.mxu0 0.0
    %3582 = vmatprep.subr.mxu0 0.0
    %3583 = vmatpush1.msra.mxu0 0.0
    %3584 = vmatprep.subr.mxu0 0.0
    %3585 = vmatpush1.msra.mxu0 0.0
    %3586 = vmatprep.subr.mxu0 0.0
    %3587 = vmatpush1.msra.mxu0 0.0
    %3588 = vmatprep.subr.mxu0 0.0
    %3589 = vmatpush1.msra.mxu0 0.0
    %3590 = vmatprep.subr.mxu0 0.0
    %3591 = vmatpush1.msra.mxu0 0.0
    %3592 = vmatprep.subr.mxu0 0.0
    %3593 = vmatpush1.msra.mxu0 0.0
    %3594 = vmatprep.mubr.f32.mxu0 0.0
    %3595 = vmatmul.mubr.f32.gmra.mrb[0].mxu0 %v3528
    %v3596 = vpop.f32.mrb[0].mxu0
    %v3597 = vadd.f32 0.0, %v3596
    %v3598 = vpop.f32.mrb[0].mxu0
    %3599 = vdwg.mxu0
    %v3600 = vadd.f32 %v3527, %v3597
    %v3601 = vxor.u32 %v3600, 2147483648
    %v3602 = vmul.f32 %v3601, 1.442695
    %v3603 = vpow.pop %v3602
    %v3604 = vadd.f32 %v3603, 1.0
    %v3605 = vrcp.pop %v3604
    %v3606 = vmul.f32 1.0, %v3605
    %v3607 = vtanh.pop %v3600
    %v3608 = vmul.f32 %v3606, %v3413
    %3610 = vrot.lane.b32.xlu0 %v3607, 64
    %v3611 = vpop.permute.xlu0 %3610
    %v3613 = vmul.f32 %v3606, %v3611
    %3615 = vrot.lane.b32.xlu0 %v3613, 32
    %v3616 = vpop.permute.xlu0 %3615
    %v3618 = vadd.f32 %v3608, %v3616
    %v3619 = vtanh.pop %v3618
    %3621 = vrot.lane.b32.xlu0 %v3619, 64
    %v3622 = vpop.permute.xlu0 %3621
    %v3624 = vmul.f32 %v3606, %v3622
    %3626 = vrot.lane.b32.xlu0 %v3624, 32
    %v3627 = vpop.permute.xlu0 %3626
    %3630 = vrot.lane.b32.xlu0 %v3525, 64
    %v3631 = vpop.permute.xlu0 %3630
    %v3633 = vsel %vm38, %v3627, %v3631
    %v3635 = vsel %vm148, %v3633, 0
    %3637 = vmatprep.subr.mxu0 0.0
    %3638 = vmatpush1.msra.mxu0 %v28
    %3639 = vmatprep.subr.mxu0 0.0
    %3640 = vmatpush1.msra.mxu0 %v29
    %3641 = vmatprep.subr.mxu0 0.0
    %3642 = vmatpush1.msra.mxu0 %v30
    %3643 = vmatprep.subr.mxu0 0.0
    %3644 = vmatpush1.msra.mxu0 %v31
    %3645 = vmatprep.subr.mxu0 0.0
    %3646 = vmatpush1.msra.mxu0 %v32
    %3647 = vmatprep.subr.mxu0 0.0
    %3648 = vmatpush1.msra.mxu0 %v33
    %3649 = vmatprep.subr.mxu0 0.0
    %3650 = vmatpush1.msra.mxu0 %v34
    %3651 = vmatprep.subr.mxu0 0.0
    %3652 = vmatpush1.msra.mxu0 %v35
    %3653 = vmatprep.subr.mxu0 0.0
    %3654 = vmatpush1.msra.mxu0 0.0
    %3655 = vmatprep.subr.mxu0 0.0
    %3656 = vmatpush1.msra.mxu0 0.0
    %3657 = vmatprep.subr.mxu0 0.0
    %3658 = vmatpush1.msra.mxu0 0.0
    %3659 = vmatprep.subr.mxu0 0.0
    %3660 = vmatpush1.msra.mxu0 0.0
    %3661 = vmatprep.subr.mxu0 0.0
    %3662 = vmatpush1.msra.mxu0 0.0
    %3663 = vmatprep.subr.mxu0 0.0
    %3664 = vmatpush1.msra.mxu0 0.0
    %3665 = vmatprep.subr.mxu0 0.0
    %3666 = vmatpush1.msra.mxu0 0.0
    %3667 = vmatprep.subr.mxu0 0.0
    %3668 = vmatpush1.msra.mxu0 0.0
    %3669 = vmatprep.subr.mxu0 0.0
    %3670 = vmatpush1.msra.mxu0 0.0
    %3671 = vmatprep.subr.mxu0 0.0
    %3672 = vmatpush1.msra.mxu0 0.0
    %3673 = vmatprep.subr.mxu0 0.0
    %3674 = vmatpush1.msra.mxu0 0.0
    %3675 = vmatprep.subr.mxu0 0.0
    %3676 = vmatpush1.msra.mxu0 0.0
    %3677 = vmatprep.subr.mxu0 0.0
    %3678 = vmatpush1.msra.mxu0 0.0
    %3679 = vmatprep.subr.mxu0 0.0
    %3680 = vmatpush1.msra.mxu0 0.0
    %3681 = vmatprep.subr.mxu0 0.0
    %3682 = vmatpush1.msra.mxu0 0.0
    %3683 = vmatprep.subr.mxu0 0.0
    %3684 = vmatpush1.msra.mxu0 0.0
    %3685 = vmatprep.subr.mxu0 0.0
    %3686 = vmatpush1.msra.mxu0 0.0
    %3687 = vmatprep.subr.mxu0 0.0
    %3688 = vmatpush1.msra.mxu0 0.0
    %3689 = vmatprep.subr.mxu0 0.0
    %3690 = vmatpush1.msra.mxu0 0.0
    %3691 = vmatprep.subr.mxu0 0.0
    %3692 = vmatpush1.msra.mxu0 0.0
    %3693 = vmatprep.subr.mxu0 0.0
    %3694 = vmatpush1.msra.mxu0 0.0
    %3695 = vmatprep.subr.mxu0 0.0
    %3696 = vmatpush1.msra.mxu0 0.0
    %3697 = vmatprep.subr.mxu0 0.0
    %3698 = vmatpush1.msra.mxu0 0.0
    %3699 = vmatprep.subr.mxu0 0.0
    %3700 = vmatpush1.msra.mxu0 0.0
    %3701 = vmatprep.mubr.f32.mxu0 0.0
    %3702 = vmatmul.mubr.f32.gmra.mrb[0].mxu0 %v3635
    %v3703 = vpop.f32.mrb[0].mxu0
    %v3704 = vadd.f32 %v146, %v3703
    %v3705 = vpop.f32.mrb[0].mxu0
    %3706 = vdwg.mxu0
    %v3707 = vxor.u32 %v3704, 2147483648
    %v3708 = vmul.f32 %v3707, 1.442695
    %v3709 = vpow.pop %v3708
    %v3710 = vadd.f32 %v3709, 1.0
    %v3711 = vrcp.pop %v3710
    %v3712 = vmul.f32 1.0, %v3711
    %v3713 = vtanh.pop %v3704
    %v3714 = vmul.f32 %v3712, %v3519
    %3716 = vrot.lane.b32.xlu0 %v3713, 64
    %v3717 = vpop.permute.xlu0 %3716
    %v3719 = vmul.f32 %v3712, %v3717
    %3721 = vrot.lane.b32.xlu0 %v3719, 32
    %v3722 = vpop.permute.xlu0 %3721
    %v3724 = vadd.f32 %v3714, %v3722
    %v3725 = vtanh.pop %v3724
    %3727 = vrot.lane.b32.xlu0 %v3725, 64
    %v3728 = vpop.permute.xlu0 %3727
    %v3730 = vmul.f32 %v3712, %v3728
    %s3731 = scalar_lea.vmem %s0, 36
    %v3732 = vld [vmem:[%s3731] sm:$0x3]
    %v3733 = vsel %vm38, %v3627, 0
    %3735 = vmatprep.subr.mxu0 0.0
    %3736 = vmatpush1.msra.mxu0 %v24
    %3737 = vmatprep.subr.mxu0 0.0
    %3738 = vmatpush1.msra.mxu0 %v25
    %3739 = vmatprep.subr.mxu0 0.0
    %3740 = vmatpush1.msra.mxu0 %v26
    %3741 = vmatprep.subr.mxu0 0.0
    %3742 = vmatpush1.msra.mxu0 %v27
    %3743 = vmatprep.subr.mxu0 0.0
    %3744 = vmatpush1.msra.mxu0 0.0
    %3745 = vmatprep.subr.mxu0 0.0
    %3746 = vmatpush1.msra.mxu0 0.0
    %3747 = vmatprep.subr.mxu0 0.0
    %3748 = vmatpush1.msra.mxu0 0.0
    %3749 = vmatprep.subr.mxu0 0.0
    %3750 = vmatpush1.msra.mxu0 0.0
    %3751 = vmatprep.subr.mxu0 0.0
    %3752 = vmatpush1.msra.mxu0 0.0
    %3753 = vmatprep.subr.mxu0 0.0
    %3754 = vmatpush1.msra.mxu0 0.0
    %3755 = vmatprep.subr.mxu0 0.0
    %3756 = vmatpush1.msra.mxu0 0.0
    %3757 = vmatprep.subr.mxu0 0.0
    %3758 = vmatpush1.msra.mxu0 0.0
    %3759 = vmatprep.subr.mxu0 0.0
    %3760 = vmatpush1.msra.mxu0 0.0
    %3761 = vmatprep.subr.mxu0 0.0
    %3762 = vmatpush1.msra.mxu0 0.0
    %3763 = vmatprep.subr.mxu0 0.0
    %3764 = vmatpush1.msra.mxu0 0.0
    %3765 = vmatprep.subr.mxu0 0.0
    %3766 = vmatpush1.msra.mxu0 0.0
    %3767 = vmatprep.subr.mxu0 0.0
    %3768 = vmatpush1.msra.mxu0 0.0
    %3769 = vmatprep.subr.mxu0 0.0
    %3770 = vmatpush1.msra.mxu0 0.0
    %3771 = vmatprep.subr.mxu0 0.0
    %3772 = vmatpush1.msra.mxu0 0.0
    %3773 = vmatprep.subr.mxu0 0.0
    %3774 = vmatpush1.msra.mxu0 0.0
    %3775 = vmatprep.subr.mxu0 0.0
    %3776 = vmatpush1.msra.mxu0 0.0
    %3777 = vmatprep.subr.mxu0 0.0
    %3778 = vmatpush1.msra.mxu0 0.0
    %3779 = vmatprep.subr.mxu0 0.0
    %3780 = vmatpush1.msra.mxu0 0.0
    %3781 = vmatprep.subr.mxu0 0.0
    %3782 = vmatpush1.msra.mxu0 0.0
    %3783 = vmatprep.subr.mxu0 0.0
    %3784 = vmatpush1.msra.mxu0 0.0
    %3785 = vmatprep.subr.mxu0 0.0
    %3786 = vmatpush1.msra.mxu0 0.0
    %3787 = vmatprep.subr.mxu0 0.0
    %3788 = vmatpush1.msra.mxu0 0.0
    %3789 = vmatprep.subr.mxu0 0.0
    %3790 = vmatpush1.msra.mxu0 0.0
    %3791 = vmatprep.subr.mxu0 0.0
    %3792 = vmatpush1.msra.mxu0 0.0
    %3793 = vmatprep.subr.mxu0 0.0
    %3794 = vmatpush1.msra.mxu0 0.0
    %3795 = vmatprep.subr.mxu0 0.0
    %3796 = vmatpush1.msra.mxu0 0.0
    %3797 = vmatprep.subr.mxu0 0.0
    %3798 = vmatpush1.msra.mxu0 0.0
    %3799 = vmatprep.mubr.f32.mxu0 0.0
    %3800 = vmatmul.mubr.f32.gmra.mrb[0].mxu0 %v3733
    %v3801 = vpop.f32.mrb[0].mxu0
    %v3802 = vadd.f32 0.0, %v3801
    %v3803 = vpop.f32.mrb[0].mxu0
    %3804 = vdwg.mxu0
    %v3805 = vadd.f32 %v3732, %v3802
    %v3806 = vxor.u32 %v3805, 2147483648
    %v3807 = vmul.f32 %v3806, 1.442695
    %v3808 = vpow.pop %v3807
    %v3809 = vadd.f32 %v3808, 1.0
    %v3810 = vrcp.pop %v3809
    %v3811 = vmul.f32 1.0, %v3810
    %v3812 = vtanh.pop %v3805
    %v3813 = vmul.f32 %v3811, %v3618
    %3815 = vrot.lane.b32.xlu0 %v3812, 64
    %v3816 = vpop.permute.xlu0 %3815
    %v3818 = vmul.f32 %v3811, %v3816
    %3820 = vrot.lane.b32.xlu0 %v3818, 32
    %v3821 = vpop.permute.xlu0 %3820
    %v3823 = vadd.f32 %v3813, %v3821
    %v3824 = vtanh.pop %v3823
    %3826 = vrot.lane.b32.xlu0 %v3824, 64
    %v3827 = vpop.permute.xlu0 %3826
    %v3829 = vmul.f32 %v3811, %v3827
    %3831 = vrot.lane.b32.xlu0 %v3829, 32
    %v3832 = vpop.permute.xlu0 %3831
    %3835 = vrot.lane.b32.xlu0 %v3730, 64
    %v3836 = vpop.permute.xlu0 %3835
    %v3838 = vsel %vm38, %v3832, %v3836
    %v3840 = vsel %vm148, %v3838, 0
    %3842 = vmatprep.subr.mxu0 0.0
    %3843 = vmatpush1.msra.mxu0 %v28
    %3844 = vmatprep.subr.mxu0 0.0
    %3845 = vmatpush1.msra.mxu0 %v29
    %3846 = vmatprep.subr.mxu0 0.0
    %3847 = vmatpush1.msra.mxu0 %v30
    %3848 = vmatprep.subr.mxu0 0.0
    %3849 = vmatpush1.msra.mxu0 %v31
    %3850 = vmatprep.subr.mxu0 0.0
    %3851 = vmatpush1.msra.mxu0 %v32
    %3852 = vmatprep.subr.mxu0 0.0
    %3853 = vmatpush1.msra.mxu0 %v33
    %3854 = vmatprep.subr.mxu0 0.0
    %3855 = vmatpush1.msra.mxu0 %v34
    %3856 = vmatprep.subr.mxu0 0.0
    %3857 = vmatpush1.msra.mxu0 %v35
    %3858 = vmatprep.subr.mxu0 0.0
    %3859 = vmatpush1.msra.mxu0 0.0
    %3860 = vmatprep.subr.mxu0 0.0
    %3861 = vmatpush1.msra.mxu0 0.0
    %3862 = vmatprep.subr.mxu0 0.0
    %3863 = vmatpush1.msra.mxu0 0.0
    %3864 = vmatprep.subr.mxu0 0.0
    %3865 = vmatpush1.msra.mxu0 0.0
    %3866 = vmatprep.subr.mxu0 0.0
    %3867 = vmatpush1.msra.mxu0 0.0
    %3868 = vmatprep.subr.mxu0 0.0
    %3869 = vmatpush1.msra.mxu0 0.0
    %3870 = vmatprep.subr.mxu0 0.0
    %3871 = vmatpush1.msra.mxu0 0.0
    %3872 = vmatprep.subr.mxu0 0.0
    %3873 = vmatpush1.msra.mxu0 0.0
    %3874 = vmatprep.subr.mxu0 0.0
    %3875 = vmatpush1.msra.mxu0 0.0
    %3876 = vmatprep.subr.mxu0 0.0
    %3877 = vmatpush1.msra.mxu0 0.0
    %3878 = vmatprep.subr.mxu0 0.0
    %3879 = vmatpush1.msra.mxu0 0.0
    %3880 = vmatprep.subr.mxu0 0.0
    %3881 = vmatpush1.msra.mxu0 0.0
    %3882 = vmatprep.subr.mxu0 0.0
    %3883 = vmatpush1.msra.mxu0 0.0
    %3884 = vmatprep.subr.mxu0 0.0
    %3885 = vmatpush1.msra.mxu0 0.0
    %3886 = vmatprep.subr.mxu0 0.0
    %3887 = vmatpush1.msra.mxu0 0.0
    %3888 = vmatprep.subr.mxu0 0.0
    %3889 = vmatpush1.msra.mxu0 0.0
    %3890 = vmatprep.subr.mxu0 0.0
    %3891 = vmatpush1.msra.mxu0 0.0
    %3892 = vmatprep.subr.mxu0 0.0
    %3893 = vmatpush1.msra.mxu0 0.0
    %3894 = vmatprep.subr.mxu0 0.0
    %3895 = vmatpush1.msra.mxu0 0.0
    %3896 = vmatprep.subr.mxu0 0.0
    %3897 = vmatpush1.msra.mxu0 0.0
    %3898 = vmatprep.subr.mxu0 0.0
    %3899 = vmatpush1.msra.mxu0 0.0
    %3900 = vmatprep.subr.mxu0 0.0
    %3901 = vmatpush1.msra.mxu0 0.0
    %3902 = vmatprep.subr.mxu0 0.0
    %3903 = vmatpush1.msra.mxu0 0.0
    %3904 = vmatprep.subr.mxu0 0.0
    %3905 = vmatpush1.msra.mxu0 0.0
    %3906 = vmatprep.mubr.f32.mxu0 0.0
    %3907 = vmatmul.mubr.f32.gmra.mrb[0].mxu0 %v3840
    %v3908 = vpop.f32.mrb[0].mxu0
    %v3909 = vadd.f32 %v146, %v3908
    %v3910 = vpop.f32.mrb[0].mxu0
    %3911 = vdwg.mxu0
    %v3912 = vxor.u32 %v3909, 2147483648
    %v3913 = vmul.f32 %v3912, 1.442695
    %v3914 = vpow.pop %v3913
    %v3915 = vadd.f32 %v3914, 1.0
    %v3916 = vrcp.pop %v3915
    %v3917 = vmul.f32 1.0, %v3916
    %v3918 = vtanh.pop %v3909
    %v3919 = vmul.f32 %v3917, %v3724
    %3921 = vrot.lane.b32.xlu0 %v3918, 64
    %v3922 = vpop.permute.xlu0 %3921
    %v3924 = vmul.f32 %v3917, %v3922
    %3926 = vrot.lane.b32.xlu0 %v3924, 32
    %v3927 = vpop.permute.xlu0 %3926
    %v3929 = vadd.f32 %v3919, %v3927
    %v3930 = vtanh.pop %v3929
    %3932 = vrot.lane.b32.xlu0 %v3930, 64
    %v3933 = vpop.permute.xlu0 %3932
    %v3935 = vmul.f32 %v3917, %v3933
    %s3936 = scalar_lea.vmem %s0, 38
    %v3937 = vld [vmem:[%s3936] sm:$0x3]
    %v3938 = vsel %vm38, %v3832, 0
    %3940 = vmatprep.subr.mxu0 0.0
    %3941 = vmatpush1.msra.mxu0 %v24
    %3942 = vmatprep.subr.mxu0 0.0
    %3943 = vmatpush1.msra.mxu0 %v25
    %3944 = vmatprep.subr.mxu0 0.0
    %3945 = vmatpush1.msra.mxu0 %v26
    %3946 = vmatprep.subr.mxu0 0.0
    %3947 = vmatpush1.msra.mxu0 %v27
    %3948 = vmatprep.subr.mxu0 0.0
    %3949 = vmatpush1.msra.mxu0 0.0
    %3950 = vmatprep.subr.mxu0 0.0
    %3951 = vmatpush1.msra.mxu0 0.0
    %3952 = vmatprep.subr.mxu0 0.0
    %3953 = vmatpush1.msra.mxu0 0.0
    %3954 = vmatprep.subr.mxu0 0.0
    %3955 = vmatpush1.msra.mxu0 0.0
    %3956 = vmatprep.subr.mxu0 0.0
    %3957 = vmatpush1.msra.mxu0 0.0
    %3958 = vmatprep.subr.mxu0 0.0
    %3959 = vmatpush1.msra.mxu0 0.0
    %3960 = vmatprep.subr.mxu0 0.0
    %3961 = vmatpush1.msra.mxu0 0.0
    %3962 = vmatprep.subr.mxu0 0.0
    %3963 = vmatpush1.msra.mxu0 0.0
    %3964 = vmatprep.subr.mxu0 0.0
    %3965 = vmatpush1.msra.mxu0 0.0
    %3966 = vmatprep.subr.mxu0 0.0
    %3967 = vmatpush1.msra.mxu0 0.0
    %3968 = vmatprep.subr.mxu0 0.0
    %3969 = vmatpush1.msra.mxu0 0.0
    %3970 = vmatprep.subr.mxu0 0.0
    %3971 = vmatpush1.msra.mxu0 0.0
    %3972 = vmatprep.subr.mxu0 0.0
    %3973 = vmatpush1.msra.mxu0 0.0
    %3974 = vmatprep.subr.mxu0 0.0
    %3975 = vmatpush1.msra.mxu0 0.0
    %3976 = vmatprep.subr.mxu0 0.0
    %3977 = vmatpush1.msra.mxu0 0.0
    %3978 = vmatprep.subr.mxu0 0.0
    %3979 = vmatpush1.msra.mxu0 0.0
    %3980 = vmatprep.subr.mxu0 0.0
    %3981 = vmatpush1.msra.mxu0 0.0
    %3982 = vmatprep.subr.mxu0 0.0
    %3983 = vmatpush1.msra.mxu0 0.0
    %3984 = vmatprep.subr.mxu0 0.0
    %3985 = vmatpush1.msra.mxu0 0.0
    %3986 = vmatprep.subr.mxu0 0.0
    %3987 = vmatpush1.msra.mxu0 0.0
    %3988 = vmatprep.subr.mxu0 0.0
    %3989 = vmatpush1.msra.mxu0 0.0
    %3990 = vmatprep.subr.mxu0 0.0
    %3991 = vmatpush1.msra.mxu0 0.0
    %3992 = vmatprep.subr.mxu0 0.0
    %3993 = vmatpush1.msra.mxu0 0.0
    %3994 = vmatprep.subr.mxu0 0.0
    %3995 = vmatpush1.msra.mxu0 0.0
    %3996 = vmatprep.subr.mxu0 0.0
    %3997 = vmatpush1.msra.mxu0 0.0
    %3998 = vmatprep.subr.mxu0 0.0
    %3999 = vmatpush1.msra.mxu0 0.0
    %4000 = vmatprep.subr.mxu0 0.0
    %4001 = vmatpush1.msra.mxu0 0.0
    %4002 = vmatprep.subr.mxu0 0.0
    %4003 = vmatpush1.msra.mxu0 0.0
    %4004 = vmatprep.mubr.f32.mxu0 0.0
    %4005 = vmatmul.mubr.f32.gmra.mrb[0].mxu0 %v3938
    %v4006 = vpop.f32.mrb[0].mxu0
    %v4007 = vadd.f32 0.0, %v4006
    %v4008 = vpop.f32.mrb[0].mxu0
    %4009 = vdwg.mxu0
    %v4010 = vadd.f32 %v3937, %v4007
    %v4011 = vxor.u32 %v4010, 2147483648
    %v4012 = vmul.f32 %v4011, 1.442695
    %v4013 = vpow.pop %v4012
    %v4014 = vadd.f32 %v4013, 1.0
    %v4015 = vrcp.pop %v4014
    %v4016 = vmul.f32 1.0, %v4015
    %v4017 = vtanh.pop %v4010
    %v4018 = vmul.f32 %v4016, %v3823
    %4020 = vrot.lane.b32.xlu0 %v4017, 64
    %v4021 = vpop.permute.xlu0 %4020
    %v4023 = vmul.f32 %v4016, %v4021
    %4025 = vrot.lane.b32.xlu0 %v4023, 32
    %v4026 = vpop.permute.xlu0 %4025
    %v4028 = vadd.f32 %v4018, %v4026
    %v4029 = vtanh.pop %v4028
    %4031 = vrot.lane.b32.xlu0 %v4029, 64
    %v4032 = vpop.permute.xlu0 %4031
    %v4034 = vmul.f32 %v4016, %v4032
    %4036 = vrot.lane.b32.xlu0 %v4034, 32
    %v4037 = vpop.permute.xlu0 %4036
    %4040 = vrot.lane.b32.xlu0 %v3935, 64
    %v4041 = vpop.permute.xlu0 %4040
    %v4043 = vsel %vm38, %v4037, %v4041
    %v4045 = vsel %vm148, %v4043, 0
    %4047 = vmatprep.subr.mxu0 0.0
    %4048 = vmatpush1.msra.mxu0 %v28
    %4049 = vmatprep.subr.mxu0 0.0
    %4050 = vmatpush1.msra.mxu0 %v29
    %4051 = vmatprep.subr.mxu0 0.0
    %4052 = vmatpush1.msra.mxu0 %v30
    %4053 = vmatprep.subr.mxu0 0.0
    %4054 = vmatpush1.msra.mxu0 %v31
    %4055 = vmatprep.subr.mxu0 0.0
    %4056 = vmatpush1.msra.mxu0 %v32
    %4057 = vmatprep.subr.mxu0 0.0
    %4058 = vmatpush1.msra.mxu0 %v33
    %4059 = vmatprep.subr.mxu0 0.0
    %4060 = vmatpush1.msra.mxu0 %v34
    %4061 = vmatprep.subr.mxu0 0.0
    %4062 = vmatpush1.msra.mxu0 %v35
    %4063 = vmatprep.subr.mxu0 0.0
    %4064 = vmatpush1.msra.mxu0 0.0
    %4065 = vmatprep.subr.mxu0 0.0
    %4066 = vmatpush1.msra.mxu0 0.0
    %4067 = vmatprep.subr.mxu0 0.0
    %4068 = vmatpush1.msra.mxu0 0.0
    %4069 = vmatprep.subr.mxu0 0.0
    %4070 = vmatpush1.msra.mxu0 0.0
    %4071 = vmatprep.subr.mxu0 0.0
    %4072 = vmatpush1.msra.mxu0 0.0
    %4073 = vmatprep.subr.mxu0 0.0
    %4074 = vmatpush1.msra.mxu0 0.0
    %4075 = vmatprep.subr.mxu0 0.0
    %4076 = vmatpush1.msra.mxu0 0.0
    %4077 = vmatprep.subr.mxu0 0.0
    %4078 = vmatpush1.msra.mxu0 0.0
    %4079 = vmatprep.subr.mxu0 0.0
    %4080 = vmatpush1.msra.mxu0 0.0
    %4081 = vmatprep.subr.mxu0 0.0
    %4082 = vmatpush1.msra.mxu0 0.0
    %4083 = vmatprep.subr.mxu0 0.0
    %4084 = vmatpush1.msra.mxu0 0.0
    %4085 = vmatprep.subr.mxu0 0.0
    %4086 = vmatpush1.msra.mxu0 0.0
    %4087 = vmatprep.subr.mxu0 0.0
    %4088 = vmatpush1.msra.mxu0 0.0
    %4089 = vmatprep.subr.mxu0 0.0
    %4090 = vmatpush1.msra.mxu0 0.0
    %4091 = vmatprep.subr.mxu0 0.0
    %4092 = vmatpush1.msra.mxu0 0.0
    %4093 = vmatprep.subr.mxu0 0.0
    %4094 = vmatpush1.msra.mxu0 0.0
    %4095 = vmatprep.subr.mxu0 0.0
    %4096 = vmatpush1.msra.mxu0 0.0
    %4097 = vmatprep.subr.mxu0 0.0
    %4098 = vmatpush1.msra.mxu0 0.0
    %4099 = vmatprep.subr.mxu0 0.0
    %4100 = vmatpush1.msra.mxu0 0.0
    %4101 = vmatprep.subr.mxu0 0.0
    %4102 = vmatpush1.msra.mxu0 0.0
    %4103 = vmatprep.subr.mxu0 0.0
    %4104 = vmatpush1.msra.mxu0 0.0
    %4105 = vmatprep.subr.mxu0 0.0
    %4106 = vmatpush1.msra.mxu0 0.0
    %4107 = vmatprep.subr.mxu0 0.0
    %4108 = vmatpush1.msra.mxu0 0.0
    %4109 = vmatprep.subr.mxu0 0.0
    %4110 = vmatpush1.msra.mxu0 0.0
    %4111 = vmatprep.mubr.f32.mxu0 0.0
    %4112 = vmatmul.mubr.f32.gmra.mrb[0].mxu0 %v4045
    %v4113 = vpop.f32.mrb[0].mxu0
    %v4114 = vadd.f32 %v146, %v4113
    %v4115 = vpop.f32.mrb[0].mxu0
    %4116 = vdwg.mxu0
    %v4117 = vxor.u32 %v4114, 2147483648
    %v4118 = vmul.f32 %v4117, 1.442695
    %v4119 = vpow.pop %v4118
    %v4120 = vadd.f32 %v4119, 1.0
    %v4121 = vrcp.pop %v4120
    %v4122 = vmul.f32 1.0, %v4121
    %v4123 = vtanh.pop %v4114
    %v4124 = vmul.f32 %v4122, %v3929
    %4126 = vrot.lane.b32.xlu0 %v4123, 64
    %v4127 = vpop.permute.xlu0 %4126
    %v4129 = vmul.f32 %v4122, %v4127
    %4131 = vrot.lane.b32.xlu0 %v4129, 32
    %v4132 = vpop.permute.xlu0 %4131
    %v4134 = vadd.f32 %v4124, %v4132
    %v4135 = vtanh.pop %v4134
    %4137 = vrot.lane.b32.xlu0 %v4135, 64
    %v4138 = vpop.permute.xlu0 %4137
    %v4140 = vmul.f32 %v4122, %v4138
    %s4141 = scalar_lea.vmem %s0, 40
    %v4142 = vld [vmem:[%s4141] sm:$0x3]
    %v4143 = vsel %vm38, %v4037, 0
    %4145 = vmatprep.subr.mxu0 0.0
    %4146 = vmatpush1.msra.mxu0 %v24
    %4147 = vmatprep.subr.mxu0 0.0
    %4148 = vmatpush1.msra.mxu0 %v25
    %4149 = vmatprep.subr.mxu0 0.0
    %4150 = vmatpush1.msra.mxu0 %v26
    %4151 = vmatprep.subr.mxu0 0.0
    %4152 = vmatpush1.msra.mxu0 %v27
    %4153 = vmatprep.subr.mxu0 0.0
    %4154 = vmatpush1.msra.mxu0 0.0
    %4155 = vmatprep.subr.mxu0 0.0
    %4156 = vmatpush1.msra.mxu0 0.0
    %4157 = vmatprep.subr.mxu0 0.0
    %4158 = vmatpush1.msra.mxu0 0.0
    %4159 = vmatprep.subr.mxu0 0.0
    %4160 = vmatpush1.msra.mxu0 0.0
    %4161 = vmatprep.subr.mxu0 0.0
    %4162 = vmatpush1.msra.mxu0 0.0
    %4163 = vmatprep.subr.mxu0 0.0
    %4164 = vmatpush1.msra.mxu0 0.0
    %4165 = vmatprep.subr.mxu0 0.0
    %4166 = vmatpush1.msra.mxu0 0.0
    %4167 = vmatprep.subr.mxu0 0.0
    %4168 = vmatpush1.msra.mxu0 0.0
    %4169 = vmatprep.subr.mxu0 0.0
    %4170 = vmatpush1.msra.mxu0 0.0
    %4171 = vmatprep.subr.mxu0 0.0
    %4172 = vmatpush1.msra.mxu0 0.0
    %4173 = vmatprep.subr.mxu0 0.0
    %4174 = vmatpush1.msra.mxu0 0.0
    %4175 = vmatprep.subr.mxu0 0.0
    %4176 = vmatpush1.msra.mxu0 0.0
    %4177 = vmatprep.subr.mxu0 0.0
    %4178 = vmatpush1.msra.mxu0 0.0
    %4179 = vmatprep.subr.mxu0 0.0
    %4180 = vmatpush1.msra.mxu0 0.0
    %4181 = vmatprep.subr.mxu0 0.0
    %4182 = vmatpush1.msra.mxu0 0.0
    %4183 = vmatprep.subr.mxu0 0.0
    %4184 = vmatpush1.msra.mxu0 0.0
    %4185 = vmatprep.subr.mxu0 0.0
    %4186 = vmatpush1.msra.mxu0 0.0
    %4187 = vmatprep.subr.mxu0 0.0
    %4188 = vmatpush1.msra.mxu0 0.0
    %4189 = vmatprep.subr.mxu0 0.0
    %4190 = vmatpush1.msra.mxu0 0.0
    %4191 = vmatprep.subr.mxu0 0.0
    %4192 = vmatpush1.msra.mxu0 0.0
    %4193 = vmatprep.subr.mxu0 0.0
    %4194 = vmatpush1.msra.mxu0 0.0
    %4195 = vmatprep.subr.mxu0 0.0
    %4196 = vmatpush1.msra.mxu0 0.0
    %4197 = vmatprep.subr.mxu0 0.0
    %4198 = vmatpush1.msra.mxu0 0.0
    %4199 = vmatprep.subr.mxu0 0.0
    %4200 = vmatpush1.msra.mxu0 0.0
    %4201 = vmatprep.subr.mxu0 0.0
    %4202 = vmatpush1.msra.mxu0 0.0
    %4203 = vmatprep.subr.mxu0 0.0
    %4204 = vmatpush1.msra.mxu0 0.0
    %4205 = vmatprep.subr.mxu0 0.0
    %4206 = vmatpush1.msra.mxu0 0.0
    %4207 = vmatprep.subr.mxu0 0.0
    %4208 = vmatpush1.msra.mxu0 0.0
    %4209 = vmatprep.mubr.f32.mxu0 0.0
    %4210 = vmatmul.mubr.f32.gmra.mrb[0].mxu0 %v4143
    %v4211 = vpop.f32.mrb[0].mxu0
    %v4212 = vadd.f32 0.0, %v4211
    %v4213 = vpop.f32.mrb[0].mxu0
    %4214 = vdwg.mxu0
    %v4215 = vadd.f32 %v4142, %v4212
    %v4216 = vxor.u32 %v4215, 2147483648
    %v4217 = vmul.f32 %v4216, 1.442695
    %v4218 = vpow.pop %v4217
    %v4219 = vadd.f32 %v4218, 1.0
    %v4220 = vrcp.pop %v4219
    %v4221 = vmul.f32 1.0, %v4220
    %v4222 = vtanh.pop %v4215
    %v4223 = vmul.f32 %v4221, %v4028
    %4225 = vrot.lane.b32.xlu0 %v4222, 64
    %v4226 = vpop.permute.xlu0 %4225
    %v4228 = vmul.f32 %v4221, %v4226
    %4230 = vrot.lane.b32.xlu0 %v4228, 32
    %v4231 = vpop.permute.xlu0 %4230
    %v4233 = vadd.f32 %v4223, %v4231
    %v4234 = vtanh.pop %v4233
    %4236 = vrot.lane.b32.xlu0 %v4234, 64
    %v4237 = vpop.permute.xlu0 %4236
    %v4239 = vmul.f32 %v4221, %v4237
    %4241 = vrot.lane.b32.xlu0 %v4239, 32
    %v4242 = vpop.permute.xlu0 %4241
    %4245 = vrot.lane.b32.xlu0 %v4140, 64
    %v4246 = vpop.permute.xlu0 %4245
    %v4248 = vsel %vm38, %v4242, %v4246
    %v4250 = vsel %vm148, %v4248, 0
    %4252 = vmatprep.subr.mxu0 0.0
    %4253 = vmatpush1.msra.mxu0 %v28
    %4254 = vmatprep.subr.mxu0 0.0
    %4255 = vmatpush1.msra.mxu0 %v29
    %4256 = vmatprep.subr.mxu0 0.0
    %4257 = vmatpush1.msra.mxu0 %v30
    %4258 = vmatprep.subr.mxu0 0.0
    %4259 = vmatpush1.msra.mxu0 %v31
    %4260 = vmatprep.subr.mxu0 0.0
    %4261 = vmatpush1.msra.mxu0 %v32
    %4262 = vmatprep.subr.mxu0 0.0
    %4263 = vmatpush1.msra.mxu0 %v33
    %4264 = vmatprep.subr.mxu0 0.0
    %4265 = vmatpush1.msra.mxu0 %v34
    %4266 = vmatprep.subr.mxu0 0.0
    %4267 = vmatpush1.msra.mxu0 %v35
    %4268 = vmatprep.subr.mxu0 0.0
    %4269 = vmatpush1.msra.mxu0 0.0
    %4270 = vmatprep.subr.mxu0 0.0
    %4271 = vmatpush1.msra.mxu0 0.0
    %4272 = vmatprep.subr.mxu0 0.0
    %4273 = vmatpush1.msra.mxu0 0.0
    %4274 = vmatprep.subr.mxu0 0.0
    %4275 = vmatpush1.msra.mxu0 0.0
    %4276 = vmatprep.subr.mxu0 0.0
    %4277 = vmatpush1.msra.mxu0 0.0
    %4278 = vmatprep.subr.mxu0 0.0
    %4279 = vmatpush1.msra.mxu0 0.0
    %4280 = vmatprep.subr.mxu0 0.0
    %4281 = vmatpush1.msra.mxu0 0.0
    %4282 = vmatprep.subr.mxu0 0.0
    %4283 = vmatpush1.msra.mxu0 0.0
    %4284 = vmatprep.subr.mxu0 0.0
    %4285 = vmatpush1.msra.mxu0 0.0
    %4286 = vmatprep.subr.mxu0 0.0
    %4287 = vmatpush1.msra.mxu0 0.0
    %4288 = vmatprep.subr.mxu0 0.0
    %4289 = vmatpush1.msra.mxu0 0.0
    %4290 = vmatprep.subr.mxu0 0.0
    %4291 = vmatpush1.msra.mxu0 0.0
    %4292 = vmatprep.subr.mxu0 0.0
    %4293 = vmatpush1.msra.mxu0 0.0
    %4294 = vmatprep.subr.mxu0 0.0
    %4295 = vmatpush1.msra.mxu0 0.0
    %4296 = vmatprep.subr.mxu0 0.0
    %4297 = vmatpush1.msra.mxu0 0.0
    %4298 = vmatprep.subr.mxu0 0.0
    %4299 = vmatpush1.msra.mxu0 0.0
    %4300 = vmatprep.subr.mxu0 0.0
    %4301 = vmatpush1.msra.mxu0 0.0
    %4302 = vmatprep.subr.mxu0 0.0
    %4303 = vmatpush1.msra.mxu0 0.0
    %4304 = vmatprep.subr.mxu0 0.0
    %4305 = vmatpush1.msra.mxu0 0.0
    %4306 = vmatprep.subr.mxu0 0.0
    %4307 = vmatpush1.msra.mxu0 0.0
    %4308 = vmatprep.subr.mxu0 0.0
    %4309 = vmatpush1.msra.mxu0 0.0
    %4310 = vmatprep.subr.mxu0 0.0
    %4311 = vmatpush1.msra.mxu0 0.0
    %4312 = vmatprep.subr.mxu0 0.0
    %4313 = vmatpush1.msra.mxu0 0.0
    %4314 = vmatprep.subr.mxu0 0.0
    %4315 = vmatpush1.msra.mxu0 0.0
    %4316 = vmatprep.mubr.f32.mxu0 0.0
    %4317 = vmatmul.mubr.f32.gmra.mrb[0].mxu0 %v4250
    %v4318 = vpop.f32.mrb[0].mxu0
    %v4319 = vadd.f32 %v146, %v4318
    %v4320 = vpop.f32.mrb[0].mxu0
    %4321 = vdwg.mxu0
    %v4322 = vxor.u32 %v4319, 2147483648
    %v4323 = vmul.f32 %v4322, 1.442695
    %v4324 = vpow.pop %v4323
    %v4325 = vadd.f32 %v4324, 1.0
    %v4326 = vrcp.pop %v4325
    %v4327 = vmul.f32 1.0, %v4326
    %v4328 = vtanh.pop %v4319
    %v4329 = vmul.f32 %v4327, %v4134
    %4331 = vrot.lane.b32.xlu0 %v4328, 64
    %v4332 = vpop.permute.xlu0 %4331
    %v4334 = vmul.f32 %v4327, %v4332
    %4336 = vrot.lane.b32.xlu0 %v4334, 32
    %v4337 = vpop.permute.xlu0 %4336
    %v4339 = vadd.f32 %v4329, %v4337
    %v4340 = vtanh.pop %v4339
    %4342 = vrot.lane.b32.xlu0 %v4340, 64
    %v4343 = vpop.permute.xlu0 %4342
    %v4345 = vmul.f32 %v4327, %v4343
    %s4346 = scalar_lea.vmem %s0, 42
    %v4347 = vld [vmem:[%s4346] sm:$0x3]
    %v4348 = vsel %vm38, %v4242, 0
    %4350 = vmatprep.subr.mxu0 0.0
    %4351 = vmatpush1.msra.mxu0 %v24
    %4352 = vmatprep.subr.mxu0 0.0
    %4353 = vmatpush1.msra.mxu0 %v25
    %4354 = vmatprep.subr.mxu0 0.0
    %4355 = vmatpush1.msra.mxu0 %v26
    %4356 = vmatprep.subr.mxu0 0.0
    %4357 = vmatpush1.msra.mxu0 %v27
    %4358 = vmatprep.subr.mxu0 0.0
    %4359 = vmatpush1.msra.mxu0 0.0
    %4360 = vmatprep.subr.mxu0 0.0
    %4361 = vmatpush1.msra.mxu0 0.0
    %4362 = vmatprep.subr.mxu0 0.0
    %4363 = vmatpush1.msra.mxu0 0.0
    %4364 = vmatprep.subr.mxu0 0.0
    %4365 = vmatpush1.msra.mxu0 0.0
    %4366 = vmatprep.subr.mxu0 0.0
    %4367 = vmatpush1.msra.mxu0 0.0
    %4368 = vmatprep.subr.mxu0 0.0
    %4369 = vmatpush1.msra.mxu0 0.0
    %4370 = vmatprep.subr.mxu0 0.0
    %4371 = vmatpush1.msra.mxu0 0.0
    %4372 = vmatprep.subr.mxu0 0.0
    %4373 = vmatpush1.msra.mxu0 0.0
    %4374 = vmatprep.subr.mxu0 0.0
    %4375 = vmatpush1.msra.mxu0 0.0
    %4376 = vmatprep.subr.mxu0 0.0
    %4377 = vmatpush1.msra.mxu0 0.0
    %4378 = vmatprep.subr.mxu0 0.0
    %4379 = vmatpush1.msra.mxu0 0.0
    %4380 = vmatprep.subr.mxu0 0.0
    %4381 = vmatpush1.msra.mxu0 0.0
    %4382 = vmatprep.subr.mxu0 0.0
    %4383 = vmatpush1.msra.mxu0 0.0
    %4384 = vmatprep.subr.mxu0 0.0
    %4385 = vmatpush1.msra.mxu0 0.0
    %4386 = vmatprep.subr.mxu0 0.0
    %4387 = vmatpush1.msra.mxu0 0.0
    %4388 = vmatprep.subr.mxu0 0.0
    %4389 = vmatpush1.msra.mxu0 0.0
    %4390 = vmatprep.subr.mxu0 0.0
    %4391 = vmatpush1.msra.mxu0 0.0
    %4392 = vmatprep.subr.mxu0 0.0
    %4393 = vmatpush1.msra.mxu0 0.0
    %4394 = vmatprep.subr.mxu0 0.0
    %4395 = vmatpush1.msra.mxu0 0.0
    %4396 = vmatprep.subr.mxu0 0.0
    %4397 = vmatpush1.msra.mxu0 0.0
    %4398 = vmatprep.subr.mxu0 0.0
    %4399 = vmatpush1.msra.mxu0 0.0
    %4400 = vmatprep.subr.mxu0 0.0
    %4401 = vmatpush1.msra.mxu0 0.0
    %4402 = vmatprep.subr.mxu0 0.0
    %4403 = vmatpush1.msra.mxu0 0.0
    %4404 = vmatprep.subr.mxu0 0.0
    %4405 = vmatpush1.msra.mxu0 0.0
    %4406 = vmatprep.subr.mxu0 0.0
    %4407 = vmatpush1.msra.mxu0 0.0
    %4408 = vmatprep.subr.mxu0 0.0
    %4409 = vmatpush1.msra.mxu0 0.0
    %4410 = vmatprep.subr.mxu0 0.0
    %4411 = vmatpush1.msra.mxu0 0.0
    %4412 = vmatprep.subr.mxu0 0.0
    %4413 = vmatpush1.msra.mxu0 0.0
    %4414 = vmatprep.mubr.f32.mxu0 0.0
    %4415 = vmatmul.mubr.f32.gmra.mrb[0].mxu0 %v4348
    %v4416 = vpop.f32.mrb[0].mxu0
    %v4417 = vadd.f32 0.0, %v4416
    %v4418 = vpop.f32.mrb[0].mxu0
    %4419 = vdwg.mxu0
    %v4420 = vadd.f32 %v4347, %v4417
    %v4421 = vxor.u32 %v4420, 2147483648
    %v4422 = vmul.f32 %v4421, 1.442695
    %v4423 = vpow.pop %v4422
    %v4424 = vadd.f32 %v4423, 1.0
    %v4425 = vrcp.pop %v4424
    %v4426 = vmul.f32 1.0, %v4425
    %v4427 = vtanh.pop %v4420
    %v4428 = vmul.f32 %v4426, %v4233
    %4430 = vrot.lane.b32.xlu0 %v4427, 64
    %v4431 = vpop.permute.xlu0 %4430
    %v4433 = vmul.f32 %v4426, %v4431
    %4435 = vrot.lane.b32.xlu0 %v4433, 32
    %v4436 = vpop.permute.xlu0 %4435
    %v4438 = vadd.f32 %v4428, %v4436
    %v4439 = vtanh.pop %v4438
    %4441 = vrot.lane.b32.xlu0 %v4439, 64
    %v4442 = vpop.permute.xlu0 %4441
    %v4444 = vmul.f32 %v4426, %v4442
    %4446 = vrot.lane.b32.xlu0 %v4444, 32
    %v4447 = vpop.permute.xlu0 %4446
    %4450 = vrot.lane.b32.xlu0 %v4345, 64
    %v4451 = vpop.permute.xlu0 %4450
    %v4453 = vsel %vm38, %v4447, %v4451
    %v4455 = vsel %vm148, %v4453, 0
    %4457 = vmatprep.subr.mxu0 0.0
    %4458 = vmatpush1.msra.mxu0 %v28
    %4459 = vmatprep.subr.mxu0 0.0
    %4460 = vmatpush1.msra.mxu0 %v29
    %4461 = vmatprep.subr.mxu0 0.0
    %4462 = vmatpush1.msra.mxu0 %v30
    %4463 = vmatprep.subr.mxu0 0.0
    %4464 = vmatpush1.msra.mxu0 %v31
    %4465 = vmatprep.subr.mxu0 0.0
    %4466 = vmatpush1.msra.mxu0 %v32
    %4467 = vmatprep.subr.mxu0 0.0
    %4468 = vmatpush1.msra.mxu0 %v33
    %4469 = vmatprep.subr.mxu0 0.0
    %4470 = vmatpush1.msra.mxu0 %v34
    %4471 = vmatprep.subr.mxu0 0.0
    %4472 = vmatpush1.msra.mxu0 %v35
    %4473 = vmatprep.subr.mxu0 0.0
    %4474 = vmatpush1.msra.mxu0 0.0
    %4475 = vmatprep.subr.mxu0 0.0
    %4476 = vmatpush1.msra.mxu0 0.0
    %4477 = vmatprep.subr.mxu0 0.0
    %4478 = vmatpush1.msra.mxu0 0.0
    %4479 = vmatprep.subr.mxu0 0.0
    %4480 = vmatpush1.msra.mxu0 0.0
    %4481 = vmatprep.subr.mxu0 0.0
    %4482 = vmatpush1.msra.mxu0 0.0
    %4483 = vmatprep.subr.mxu0 0.0
    %4484 = vmatpush1.msra.mxu0 0.0
    %4485 = vmatprep.subr.mxu0 0.0
    %4486 = vmatpush1.msra.mxu0 0.0
    %4487 = vmatprep.subr.mxu0 0.0
    %4488 = vmatpush1.msra.mxu0 0.0
    %4489 = vmatprep.subr.mxu0 0.0
    %4490 = vmatpush1.msra.mxu0 0.0
    %4491 = vmatprep.subr.mxu0 0.0
    %4492 = vmatpush1.msra.mxu0 0.0
    %4493 = vmatprep.subr.mxu0 0.0
    %4494 = vmatpush1.msra.mxu0 0.0
    %4495 = vmatprep.subr.mxu0 0.0
    %4496 = vmatpush1.msra.mxu0 0.0
    %4497 = vmatprep.subr.mxu0 0.0
    %4498 = vmatpush1.msra.mxu0 0.0
    %4499 = vmatprep.subr.mxu0 0.0
    %4500 = vmatpush1.msra.mxu0 0.0
    %4501 = vmatprep.subr.mxu0 0.0
    %4502 = vmatpush1.msra.mxu0 0.0
    %4503 = vmatprep.subr.mxu0 0.0
    %4504 = vmatpush1.msra.mxu0 0.0
    %4505 = vmatprep.subr.mxu0 0.0
    %4506 = vmatpush1.msra.mxu0 0.0
    %4507 = vmatprep.subr.mxu0 0.0
    %4508 = vmatpush1.msra.mxu0 0.0
    %4509 = vmatprep.subr.mxu0 0.0
    %4510 = vmatpush1.msra.mxu0 0.0
    %4511 = vmatprep.subr.mxu0 0.0
    %4512 = vmatpush1.msra.mxu0 0.0
    %4513 = vmatprep.subr.mxu0 0.0
    %4514 = vmatpush1.msra.mxu0 0.0
    %4515 = vmatprep.subr.mxu0 0.0
    %4516 = vmatpush1.msra.mxu0 0.0
    %4517 = vmatprep.subr.mxu0 0.0
    %4518 = vmatpush1.msra.mxu0 0.0
    %4519 = vmatprep.subr.mxu0 0.0
    %4520 = vmatpush1.msra.mxu0 0.0
    %4521 = vmatprep.mubr.f32.mxu0 0.0
    %4522 = vmatmul.mubr.f32.gmra.mrb[0].mxu0 %v4455
    %v4523 = vpop.f32.mrb[0].mxu0
    %v4524 = vadd.f32 %v146, %v4523
    %v4525 = vpop.f32.mrb[0].mxu0
    %4526 = vdwg.mxu0
    %v4527 = vxor.u32 %v4524, 2147483648
    %v4528 = vmul.f32 %v4527, 1.442695
    %v4529 = vpow.pop %v4528
    %v4530 = vadd.f32 %v4529, 1.0
    %v4531 = vrcp.pop %v4530
    %v4532 = vmul.f32 1.0, %v4531
    %v4533 = vtanh.pop %v4524
    %v4534 = vmul.f32 %v4532, %v4339
    %4536 = vrot.lane.b32.xlu0 %v4533, 64
    %v4537 = vpop.permute.xlu0 %4536
    %v4539 = vmul.f32 %v4532, %v4537
    %4541 = vrot.lane.b32.xlu0 %v4539, 32
    %v4542 = vpop.permute.xlu0 %4541
    %v4544 = vadd.f32 %v4534, %v4542
    %v4545 = vtanh.pop %v4544
    %4547 = vrot.lane.b32.xlu0 %v4545, 64
    %v4548 = vpop.permute.xlu0 %4547
    %v4550 = vmul.f32 %v4532, %v4548
    %s4551 = scalar_lea.vmem %s0, 44
    %v4552 = vld [vmem:[%s4551] sm:$0x3]
    %v4553 = vsel %vm38, %v4447, 0
    %4555 = vmatprep.subr.mxu0 0.0
    %4556 = vmatpush1.msra.mxu0 %v24
    %4557 = vmatprep.subr.mxu0 0.0
    %4558 = vmatpush1.msra.mxu0 %v25
    %4559 = vmatprep.subr.mxu0 0.0
    %4560 = vmatpush1.msra.mxu0 %v26
    %4561 = vmatprep.subr.mxu0 0.0
    %4562 = vmatpush1.msra.mxu0 %v27
    %4563 = vmatprep.subr.mxu0 0.0
    %4564 = vmatpush1.msra.mxu0 0.0
    %4565 = vmatprep.subr.mxu0 0.0
    %4566 = vmatpush1.msra.mxu0 0.0
    %4567 = vmatprep.subr.mxu0 0.0
    %4568 = vmatpush1.msra.mxu0 0.0
    %4569 = vmatprep.subr.mxu0 0.0
    %4570 = vmatpush1.msra.mxu0 0.0
    %4571 = vmatprep.subr.mxu0 0.0
    %4572 = vmatpush1.msra.mxu0 0.0
    %4573 = vmatprep.subr.mxu0 0.0
    %4574 = vmatpush1.msra.mxu0 0.0
    %4575 = vmatprep.subr.mxu0 0.0
    %4576 = vmatpush1.msra.mxu0 0.0
    %4577 = vmatprep.subr.mxu0 0.0
    %4578 = vmatpush1.msra.mxu0 0.0
    %4579 = vmatprep.subr.mxu0 0.0
    %4580 = vmatpush1.msra.mxu0 0.0
    %4581 = vmatprep.subr.mxu0 0.0
    %4582 = vmatpush1.msra.mxu0 0.0
    %4583 = vmatprep.subr.mxu0 0.0
    %4584 = vmatpush1.msra.mxu0 0.0
    %4585 = vmatprep.subr.mxu0 0.0
    %4586 = vmatpush1.msra.mxu0 0.0
    %4587 = vmatprep.subr.mxu0 0.0
    %4588 = vmatpush1.msra.mxu0 0.0
    %4589 = vmatprep.subr.mxu0 0.0
    %4590 = vmatpush1.msra.mxu0 0.0
    %4591 = vmatprep.subr.mxu0 0.0
    %4592 = vmatpush1.msra.mxu0 0.0
    %4593 = vmatprep.subr.mxu0 0.0
    %4594 = vmatpush1.msra.mxu0 0.0
    %4595 = vmatprep.subr.mxu0 0.0
    %4596 = vmatpush1.msra.mxu0 0.0
    %4597 = vmatprep.subr.mxu0 0.0
    %4598 = vmatpush1.msra.mxu0 0.0
    %4599 = vmatprep.subr.mxu0 0.0
    %4600 = vmatpush1.msra.mxu0 0.0
    %4601 = vmatprep.subr.mxu0 0.0
    %4602 = vmatpush1.msra.mxu0 0.0
    %4603 = vmatprep.subr.mxu0 0.0
    %4604 = vmatpush1.msra.mxu0 0.0
    %4605 = vmatprep.subr.mxu0 0.0
    %4606 = vmatpush1.msra.mxu0 0.0
    %4607 = vmatprep.subr.mxu0 0.0
    %4608 = vmatpush1.msra.mxu0 0.0
    %4609 = vmatprep.subr.mxu0 0.0
    %4610 = vmatpush1.msra.mxu0 0.0
    %4611 = vmatprep.subr.mxu0 0.0
    %4612 = vmatpush1.msra.mxu0 0.0
    %4613 = vmatprep.subr.mxu0 0.0
    %4614 = vmatpush1.msra.mxu0 0.0
    %4615 = vmatprep.subr.mxu0 0.0
    %4616 = vmatpush1.msra.mxu0 0.0
    %4617 = vmatprep.subr.mxu0 0.0
    %4618 = vmatpush1.msra.mxu0 0.0
    %4619 = vmatprep.mubr.f32.mxu0 0.0
    %4620 = vmatmul.mubr.f32.gmra.mrb[0].mxu0 %v4553
    %v4621 = vpop.f32.mrb[0].mxu0
    %v4622 = vadd.f32 0.0, %v4621
    %v4623 = vpop.f32.mrb[0].mxu0
    %4624 = vdwg.mxu0
    %v4625 = vadd.f32 %v4552, %v4622
    %v4626 = vxor.u32 %v4625, 2147483648
    %v4627 = vmul.f32 %v4626, 1.442695
    %v4628 = vpow.pop %v4627
    %v4629 = vadd.f32 %v4628, 1.0
    %v4630 = vrcp.pop %v4629
    %v4631 = vmul.f32 1.0, %v4630
    %v4632 = vtanh.pop %v4625
    %v4633 = vmul.f32 %v4631, %v4438
    %4635 = vrot.lane.b32.xlu0 %v4632, 64
    %v4636 = vpop.permute.xlu0 %4635
    %v4638 = vmul.f32 %v4631, %v4636
    %4640 = vrot.lane.b32.xlu0 %v4638, 32
    %v4641 = vpop.permute.xlu0 %4640
    %v4643 = vadd.f32 %v4633, %v4641
    %v4644 = vtanh.pop %v4643
    %4646 = vrot.lane.b32.xlu0 %v4644, 64
    %v4647 = vpop.permute.xlu0 %4646
    %v4649 = vmul.f32 %v4631, %v4647
    %4651 = vrot.lane.b32.xlu0 %v4649, 32
    %v4652 = vpop.permute.xlu0 %4651
    %4655 = vrot.lane.b32.xlu0 %v4550, 64
    %v4656 = vpop.permute.xlu0 %4655
    %v4658 = vsel %vm38, %v4652, %v4656
    %v4660 = vsel %vm148, %v4658, 0
    %4662 = vmatprep.subr.mxu0 0.0
    %4663 = vmatpush1.msra.mxu0 %v28
    %4664 = vmatprep.subr.mxu0 0.0
    %4665 = vmatpush1.msra.mxu0 %v29
    %4666 = vmatprep.subr.mxu0 0.0
    %4667 = vmatpush1.msra.mxu0 %v30
    %4668 = vmatprep.subr.mxu0 0.0
    %4669 = vmatpush1.msra.mxu0 %v31
    %4670 = vmatprep.subr.mxu0 0.0
    %4671 = vmatpush1.msra.mxu0 %v32
    %4672 = vmatprep.subr.mxu0 0.0
    %4673 = vmatpush1.msra.mxu0 %v33
    %4674 = vmatprep.subr.mxu0 0.0
    %4675 = vmatpush1.msra.mxu0 %v34
    %4676 = vmatprep.subr.mxu0 0.0
    %4677 = vmatpush1.msra.mxu0 %v35
    %4678 = vmatprep.subr.mxu0 0.0
    %4679 = vmatpush1.msra.mxu0 0.0
    %4680 = vmatprep.subr.mxu0 0.0
    %4681 = vmatpush1.msra.mxu0 0.0
    %4682 = vmatprep.subr.mxu0 0.0
    %4683 = vmatpush1.msra.mxu0 0.0
    %4684 = vmatprep.subr.mxu0 0.0
    %4685 = vmatpush1.msra.mxu0 0.0
    %4686 = vmatprep.subr.mxu0 0.0
    %4687 = vmatpush1.msra.mxu0 0.0
    %4688 = vmatprep.subr.mxu0 0.0
    %4689 = vmatpush1.msra.mxu0 0.0
    %4690 = vmatprep.subr.mxu0 0.0
    %4691 = vmatpush1.msra.mxu0 0.0
    %4692 = vmatprep.subr.mxu0 0.0
    %4693 = vmatpush1.msra.mxu0 0.0
    %4694 = vmatprep.subr.mxu0 0.0
    %4695 = vmatpush1.msra.mxu0 0.0
    %4696 = vmatprep.subr.mxu0 0.0
    %4697 = vmatpush1.msra.mxu0 0.0
    %4698 = vmatprep.subr.mxu0 0.0
    %4699 = vmatpush1.msra.mxu0 0.0
    %4700 = vmatprep.subr.mxu0 0.0
    %4701 = vmatpush1.msra.mxu0 0.0
    %4702 = vmatprep.subr.mxu0 0.0
    %4703 = vmatpush1.msra.mxu0 0.0
    %4704 = vmatprep.subr.mxu0 0.0
    %4705 = vmatpush1.msra.mxu0 0.0
    %4706 = vmatprep.subr.mxu0 0.0
    %4707 = vmatpush1.msra.mxu0 0.0
    %4708 = vmatprep.subr.mxu0 0.0
    %4709 = vmatpush1.msra.mxu0 0.0
    %4710 = vmatprep.subr.mxu0 0.0
    %4711 = vmatpush1.msra.mxu0 0.0
    %4712 = vmatprep.subr.mxu0 0.0
    %4713 = vmatpush1.msra.mxu0 0.0
    %4714 = vmatprep.subr.mxu0 0.0
    %4715 = vmatpush1.msra.mxu0 0.0
    %4716 = vmatprep.subr.mxu0 0.0
    %4717 = vmatpush1.msra.mxu0 0.0
    %4718 = vmatprep.subr.mxu0 0.0
    %4719 = vmatpush1.msra.mxu0 0.0
    %4720 = vmatprep.subr.mxu0 0.0
    %4721 = vmatpush1.msra.mxu0 0.0
    %4722 = vmatprep.subr.mxu0 0.0
    %4723 = vmatpush1.msra.mxu0 0.0
    %4724 = vmatprep.subr.mxu0 0.0
    %4725 = vmatpush1.msra.mxu0 0.0
    %4726 = vmatprep.mubr.f32.mxu0 0.0
    %4727 = vmatmul.mubr.f32.gmra.mrb[0].mxu0 %v4660
    %v4728 = vpop.f32.mrb[0].mxu0
    %v4729 = vadd.f32 %v146, %v4728
    %v4730 = vpop.f32.mrb[0].mxu0
    %4731 = vdwg.mxu0
    %v4732 = vxor.u32 %v4729, 2147483648
    %v4733 = vmul.f32 %v4732, 1.442695
    %v4734 = vpow.pop %v4733
    %v4735 = vadd.f32 %v4734, 1.0
    %v4736 = vrcp.pop %v4735
    %v4737 = vmul.f32 1.0, %v4736
    %v4738 = vtanh.pop %v4729
    %v4739 = vmul.f32 %v4737, %v4544
    %4741 = vrot.lane.b32.xlu0 %v4738, 64
    %v4742 = vpop.permute.xlu0 %4741
    %v4744 = vmul.f32 %v4737, %v4742
    %4746 = vrot.lane.b32.xlu0 %v4744, 32
    %v4747 = vpop.permute.xlu0 %4746
    %v4749 = vadd.f32 %v4739, %v4747
    %v4750 = vtanh.pop %v4749
    %4752 = vrot.lane.b32.xlu0 %v4750, 64
    %v4753 = vpop.permute.xlu0 %4752
    %v4755 = vmul.f32 %v4737, %v4753
    %s4756 = scalar_lea.vmem %s0, 46
    %v4757 = vld [vmem:[%s4756] sm:$0x3]
    %v4758 = vsel %vm38, %v4652, 0
    %4760 = vmatprep.subr.mxu0 0.0
    %4761 = vmatpush1.msra.mxu0 %v24
    %4762 = vmatprep.subr.mxu0 0.0
    %4763 = vmatpush1.msra.mxu0 %v25
    %4764 = vmatprep.subr.mxu0 0.0
    %4765 = vmatpush1.msra.mxu0 %v26
    %4766 = vmatprep.subr.mxu0 0.0
    %4767 = vmatpush1.msra.mxu0 %v27
    %4768 = vmatprep.subr.mxu0 0.0
    %4769 = vmatpush1.msra.mxu0 0.0
    %4770 = vmatprep.subr.mxu0 0.0
    %4771 = vmatpush1.msra.mxu0 0.0
    %4772 = vmatprep.subr.mxu0 0.0
    %4773 = vmatpush1.msra.mxu0 0.0
    %4774 = vmatprep.subr.mxu0 0.0
    %4775 = vmatpush1.msra.mxu0 0.0
    %4776 = vmatprep.subr.mxu0 0.0
    %4777 = vmatpush1.msra.mxu0 0.0
    %4778 = vmatprep.subr.mxu0 0.0
    %4779 = vmatpush1.msra.mxu0 0.0
    %4780 = vmatprep.subr.mxu0 0.0
    %4781 = vmatpush1.msra.mxu0 0.0
    %4782 = vmatprep.subr.mxu0 0.0
    %4783 = vmatpush1.msra.mxu0 0.0
    %4784 = vmatprep.subr.mxu0 0.0
    %4785 = vmatpush1.msra.mxu0 0.0
    %4786 = vmatprep.subr.mxu0 0.0
    %4787 = vmatpush1.msra.mxu0 0.0
    %4788 = vmatprep.subr.mxu0 0.0
    %4789 = vmatpush1.msra.mxu0 0.0
    %4790 = vmatprep.subr.mxu0 0.0
    %4791 = vmatpush1.msra.mxu0 0.0
    %4792 = vmatprep.subr.mxu0 0.0
    %4793 = vmatpush1.msra.mxu0 0.0
    %4794 = vmatprep.subr.mxu0 0.0
    %4795 = vmatpush1.msra.mxu0 0.0
    %4796 = vmatprep.subr.mxu0 0.0
    %4797 = vmatpush1.msra.mxu0 0.0
    %4798 = vmatprep.subr.mxu0 0.0
    %4799 = vmatpush1.msra.mxu0 0.0
    %4800 = vmatprep.subr.mxu0 0.0
    %4801 = vmatpush1.msra.mxu0 0.0
    %4802 = vmatprep.subr.mxu0 0.0
    %4803 = vmatpush1.msra.mxu0 0.0
    %4804 = vmatprep.subr.mxu0 0.0
    %4805 = vmatpush1.msra.mxu0 0.0
    %4806 = vmatprep.subr.mxu0 0.0
    %4807 = vmatpush1.msra.mxu0 0.0
    %4808 = vmatprep.subr.mxu0 0.0
    %4809 = vmatpush1.msra.mxu0 0.0
    %4810 = vmatprep.subr.mxu0 0.0
    %4811 = vmatpush1.msra.mxu0 0.0
    %4812 = vmatprep.subr.mxu0 0.0
    %4813 = vmatpush1.msra.mxu0 0.0
    %4814 = vmatprep.subr.mxu0 0.0
    %4815 = vmatpush1.msra.mxu0 0.0
    %4816 = vmatprep.subr.mxu0 0.0
    %4817 = vmatpush1.msra.mxu0 0.0
    %4818 = vmatprep.subr.mxu0 0.0
    %4819 = vmatpush1.msra.mxu0 0.0
    %4820 = vmatprep.subr.mxu0 0.0
    %4821 = vmatpush1.msra.mxu0 0.0
    %4822 = vmatprep.subr.mxu0 0.0
    %4823 = vmatpush1.msra.mxu0 0.0
    %4824 = vmatprep.mubr.f32.mxu0 0.0
    %4825 = vmatmul.mubr.f32.gmra.mrb[0].mxu0 %v4758
    %v4826 = vpop.f32.mrb[0].mxu0
    %v4827 = vadd.f32 0.0, %v4826
    %v4828 = vpop.f32.mrb[0].mxu0
    %4829 = vdwg.mxu0
    %v4830 = vadd.f32 %v4757, %v4827
    %v4831 = vxor.u32 %v4830, 2147483648
    %v4832 = vmul.f32 %v4831, 1.442695
    %v4833 = vpow.pop %v4832
    %v4834 = vadd.f32 %v4833, 1.0
    %v4835 = vrcp.pop %v4834
    %v4836 = vmul.f32 1.0, %v4835
    %v4837 = vtanh.pop %v4830
    %v4838 = vmul.f32 %v4836, %v4643
    %4840 = vrot.lane.b32.xlu0 %v4837, 64
    %v4841 = vpop.permute.xlu0 %4840
    %v4843 = vmul.f32 %v4836, %v4841
    %4845 = vrot.lane.b32.xlu0 %v4843, 32
    %v4846 = vpop.permute.xlu0 %4845
    %v4848 = vadd.f32 %v4838, %v4846
    %v4849 = vtanh.pop %v4848
    %4851 = vrot.lane.b32.xlu0 %v4849, 64
    %v4852 = vpop.permute.xlu0 %4851
    %v4854 = vmul.f32 %v4836, %v4852
    %4856 = vrot.lane.b32.xlu0 %v4854, 32
    %v4857 = vpop.permute.xlu0 %4856
    %4860 = vrot.lane.b32.xlu0 %v4755, 64
    %v4861 = vpop.permute.xlu0 %4860
    %v4863 = vsel %vm38, %v4857, %v4861
    %v4865 = vsel %vm148, %v4863, 0
    %4867 = vmatprep.subr.mxu0 0.0
    %4868 = vmatpush1.msra.mxu0 %v28
    %4869 = vmatprep.subr.mxu0 0.0
    %4870 = vmatpush1.msra.mxu0 %v29
    %4871 = vmatprep.subr.mxu0 0.0
    %4872 = vmatpush1.msra.mxu0 %v30
    %4873 = vmatprep.subr.mxu0 0.0
    %4874 = vmatpush1.msra.mxu0 %v31
    %4875 = vmatprep.subr.mxu0 0.0
    %4876 = vmatpush1.msra.mxu0 %v32
    %4877 = vmatprep.subr.mxu0 0.0
    %4878 = vmatpush1.msra.mxu0 %v33
    %4879 = vmatprep.subr.mxu0 0.0
    %4880 = vmatpush1.msra.mxu0 %v34
    %4881 = vmatprep.subr.mxu0 0.0
    %4882 = vmatpush1.msra.mxu0 %v35
    %4883 = vmatprep.subr.mxu0 0.0
    %4884 = vmatpush1.msra.mxu0 0.0
    %4885 = vmatprep.subr.mxu0 0.0
    %4886 = vmatpush1.msra.mxu0 0.0
    %4887 = vmatprep.subr.mxu0 0.0
    %4888 = vmatpush1.msra.mxu0 0.0
    %4889 = vmatprep.subr.mxu0 0.0
    %4890 = vmatpush1.msra.mxu0 0.0
    %4891 = vmatprep.subr.mxu0 0.0
    %4892 = vmatpush1.msra.mxu0 0.0
    %4893 = vmatprep.subr.mxu0 0.0
    %4894 = vmatpush1.msra.mxu0 0.0
    %4895 = vmatprep.subr.mxu0 0.0
    %4896 = vmatpush1.msra.mxu0 0.0
    %4897 = vmatprep.subr.mxu0 0.0
    %4898 = vmatpush1.msra.mxu0 0.0
    %4899 = vmatprep.subr.mxu0 0.0
    %4900 = vmatpush1.msra.mxu0 0.0
    %4901 = vmatprep.subr.mxu0 0.0
    %4902 = vmatpush1.msra.mxu0 0.0
    %4903 = vmatprep.subr.mxu0 0.0
    %4904 = vmatpush1.msra.mxu0 0.0
    %4905 = vmatprep.subr.mxu0 0.0
    %4906 = vmatpush1.msra.mxu0 0.0
    %4907 = vmatprep.subr.mxu0 0.0
    %4908 = vmatpush1.msra.mxu0 0.0
    %4909 = vmatprep.subr.mxu0 0.0
    %4910 = vmatpush1.msra.mxu0 0.0
    %4911 = vmatprep.subr.mxu0 0.0
    %4912 = vmatpush1.msra.mxu0 0.0
    %4913 = vmatprep.subr.mxu0 0.0
    %4914 = vmatpush1.msra.mxu0 0.0
    %4915 = vmatprep.subr.mxu0 0.0
    %4916 = vmatpush1.msra.mxu0 0.0
    %4917 = vmatprep.subr.mxu0 0.0
    %4918 = vmatpush1.msra.mxu0 0.0
    %4919 = vmatprep.subr.mxu0 0.0
    %4920 = vmatpush1.msra.mxu0 0.0
    %4921 = vmatprep.subr.mxu0 0.0
    %4922 = vmatpush1.msra.mxu0 0.0
    %4923 = vmatprep.subr.mxu0 0.0
    %4924 = vmatpush1.msra.mxu0 0.0
    %4925 = vmatprep.subr.mxu0 0.0
    %4926 = vmatpush1.msra.mxu0 0.0
    %4927 = vmatprep.subr.mxu0 0.0
    %4928 = vmatpush1.msra.mxu0 0.0
    %4929 = vmatprep.subr.mxu0 0.0
    %4930 = vmatpush1.msra.mxu0 0.0
    %4931 = vmatprep.mubr.f32.mxu0 0.0
    %4932 = vmatmul.mubr.f32.gmra.mrb[0].mxu0 %v4865
    %v4933 = vpop.f32.mrb[0].mxu0
    %v4934 = vadd.f32 %v146, %v4933
    %v4935 = vpop.f32.mrb[0].mxu0
    %4936 = vdwg.mxu0
    %v4937 = vxor.u32 %v4934, 2147483648
    %v4938 = vmul.f32 %v4937, 1.442695
    %v4939 = vpow.pop %v4938
    %v4940 = vadd.f32 %v4939, 1.0
    %v4941 = vrcp.pop %v4940
    %v4942 = vmul.f32 1.0, %v4941
    %v4943 = vtanh.pop %v4934
    %v4944 = vmul.f32 %v4942, %v4749
    %4946 = vrot.lane.b32.xlu0 %v4943, 64
    %v4947 = vpop.permute.xlu0 %4946
    %v4949 = vmul.f32 %v4942, %v4947
    %4951 = vrot.lane.b32.xlu0 %v4949, 32
    %v4952 = vpop.permute.xlu0 %4951
    %v4954 = vadd.f32 %v4944, %v4952
    %v4955 = vtanh.pop %v4954
    %4957 = vrot.lane.b32.xlu0 %v4955, 64
    %v4958 = vpop.permute.xlu0 %4957
    %v4960 = vmul.f32 %v4942, %v4958
    %s4961 = scalar_lea.vmem %s0, 48
    %v4962 = vld [vmem:[%s4961] sm:$0x3]
    %v4963 = vsel %vm38, %v4857, 0
    %4965 = vmatprep.subr.mxu0 0.0
    %4966 = vmatpush1.msra.mxu0 %v24
    %4967 = vmatprep.subr.mxu0 0.0
    %4968 = vmatpush1.msra.mxu0 %v25
    %4969 = vmatprep.subr.mxu0 0.0
    %4970 = vmatpush1.msra.mxu0 %v26
    %4971 = vmatprep.subr.mxu0 0.0
    %4972 = vmatpush1.msra.mxu0 %v27
    %4973 = vmatprep.subr.mxu0 0.0
    %4974 = vmatpush1.msra.mxu0 0.0
    %4975 = vmatprep.subr.mxu0 0.0
    %4976 = vmatpush1.msra.mxu0 0.0
    %4977 = vmatprep.subr.mxu0 0.0
    %4978 = vmatpush1.msra.mxu0 0.0
    %4979 = vmatprep.subr.mxu0 0.0
    %4980 = vmatpush1.msra.mxu0 0.0
    %4981 = vmatprep.subr.mxu0 0.0
    %4982 = vmatpush1.msra.mxu0 0.0
    %4983 = vmatprep.subr.mxu0 0.0
    %4984 = vmatpush1.msra.mxu0 0.0
    %4985 = vmatprep.subr.mxu0 0.0
    %4986 = vmatpush1.msra.mxu0 0.0
    %4987 = vmatprep.subr.mxu0 0.0
    %4988 = vmatpush1.msra.mxu0 0.0
    %4989 = vmatprep.subr.mxu0 0.0
    %4990 = vmatpush1.msra.mxu0 0.0
    %4991 = vmatprep.subr.mxu0 0.0
    %4992 = vmatpush1.msra.mxu0 0.0
    %4993 = vmatprep.subr.mxu0 0.0
    %4994 = vmatpush1.msra.mxu0 0.0
    %4995 = vmatprep.subr.mxu0 0.0
    %4996 = vmatpush1.msra.mxu0 0.0
    %4997 = vmatprep.subr.mxu0 0.0
    %4998 = vmatpush1.msra.mxu0 0.0
    %4999 = vmatprep.subr.mxu0 0.0
    %5000 = vmatpush1.msra.mxu0 0.0
    %5001 = vmatprep.subr.mxu0 0.0
    %5002 = vmatpush1.msra.mxu0 0.0
    %5003 = vmatprep.subr.mxu0 0.0
    %5004 = vmatpush1.msra.mxu0 0.0
    %5005 = vmatprep.subr.mxu0 0.0
    %5006 = vmatpush1.msra.mxu0 0.0
    %5007 = vmatprep.subr.mxu0 0.0
    %5008 = vmatpush1.msra.mxu0 0.0
    %5009 = vmatprep.subr.mxu0 0.0
    %5010 = vmatpush1.msra.mxu0 0.0
    %5011 = vmatprep.subr.mxu0 0.0
    %5012 = vmatpush1.msra.mxu0 0.0
    %5013 = vmatprep.subr.mxu0 0.0
    %5014 = vmatpush1.msra.mxu0 0.0
    %5015 = vmatprep.subr.mxu0 0.0
    %5016 = vmatpush1.msra.mxu0 0.0
    %5017 = vmatprep.subr.mxu0 0.0
    %5018 = vmatpush1.msra.mxu0 0.0
    %5019 = vmatprep.subr.mxu0 0.0
    %5020 = vmatpush1.msra.mxu0 0.0
    %5021 = vmatprep.subr.mxu0 0.0
    %5022 = vmatpush1.msra.mxu0 0.0
    %5023 = vmatprep.subr.mxu0 0.0
    %5024 = vmatpush1.msra.mxu0 0.0
    %5025 = vmatprep.subr.mxu0 0.0
    %5026 = vmatpush1.msra.mxu0 0.0
    %5027 = vmatprep.subr.mxu0 0.0
    %5028 = vmatpush1.msra.mxu0 0.0
    %5029 = vmatprep.mubr.f32.mxu0 0.0
    %5030 = vmatmul.mubr.f32.gmra.mrb[0].mxu0 %v4963
    %v5031 = vpop.f32.mrb[0].mxu0
    %v5032 = vadd.f32 0.0, %v5031
    %v5033 = vpop.f32.mrb[0].mxu0
    %5034 = vdwg.mxu0
    %v5035 = vadd.f32 %v4962, %v5032
    %v5036 = vxor.u32 %v5035, 2147483648
    %v5037 = vmul.f32 %v5036, 1.442695
    %v5038 = vpow.pop %v5037
    %v5039 = vadd.f32 %v5038, 1.0
    %v5040 = vrcp.pop %v5039
    %v5041 = vmul.f32 1.0, %v5040
    %v5042 = vtanh.pop %v5035
    %v5043 = vmul.f32 %v5041, %v4848
    %5045 = vrot.lane.b32.xlu0 %v5042, 64
    %v5046 = vpop.permute.xlu0 %5045
    %v5048 = vmul.f32 %v5041, %v5046
    %5050 = vrot.lane.b32.xlu0 %v5048, 32
    %v5051 = vpop.permute.xlu0 %5050
    %v5053 = vadd.f32 %v5043, %v5051
    %v5054 = vtanh.pop %v5053
    %5056 = vrot.lane.b32.xlu0 %v5054, 64
    %v5057 = vpop.permute.xlu0 %5056
    %v5059 = vmul.f32 %v5041, %v5057
    %5061 = vrot.lane.b32.xlu0 %v5059, 32
    %v5062 = vpop.permute.xlu0 %5061
    %5065 = vrot.lane.b32.xlu0 %v4960, 64
    %v5066 = vpop.permute.xlu0 %5065
    %v5068 = vsel %vm38, %v5062, %v5066
    %v5070 = vsel %vm148, %v5068, 0
    %5072 = vmatprep.subr.mxu0 0.0
    %5073 = vmatpush1.msra.mxu0 %v28
    %5074 = vmatprep.subr.mxu0 0.0
    %5075 = vmatpush1.msra.mxu0 %v29
    %5076 = vmatprep.subr.mxu0 0.0
    %5077 = vmatpush1.msra.mxu0 %v30
    %5078 = vmatprep.subr.mxu0 0.0
    %5079 = vmatpush1.msra.mxu0 %v31
    %5080 = vmatprep.subr.mxu0 0.0
    %5081 = vmatpush1.msra.mxu0 %v32
    %5082 = vmatprep.subr.mxu0 0.0
    %5083 = vmatpush1.msra.mxu0 %v33
    %5084 = vmatprep.subr.mxu0 0.0
    %5085 = vmatpush1.msra.mxu0 %v34
    %5086 = vmatprep.subr.mxu0 0.0
    %5087 = vmatpush1.msra.mxu0 %v35
    %5088 = vmatprep.subr.mxu0 0.0
    %5089 = vmatpush1.msra.mxu0 0.0
    %5090 = vmatprep.subr.mxu0 0.0
    %5091 = vmatpush1.msra.mxu0 0.0
    %5092 = vmatprep.subr.mxu0 0.0
    %5093 = vmatpush1.msra.mxu0 0.0
    %5094 = vmatprep.subr.mxu0 0.0
    %5095 = vmatpush1.msra.mxu0 0.0
    %5096 = vmatprep.subr.mxu0 0.0
    %5097 = vmatpush1.msra.mxu0 0.0
    %5098 = vmatprep.subr.mxu0 0.0
    %5099 = vmatpush1.msra.mxu0 0.0
    %5100 = vmatprep.subr.mxu0 0.0
    %5101 = vmatpush1.msra.mxu0 0.0
    %5102 = vmatprep.subr.mxu0 0.0
    %5103 = vmatpush1.msra.mxu0 0.0
    %5104 = vmatprep.subr.mxu0 0.0
    %5105 = vmatpush1.msra.mxu0 0.0
    %5106 = vmatprep.subr.mxu0 0.0
    %5107 = vmatpush1.msra.mxu0 0.0
    %5108 = vmatprep.subr.mxu0 0.0
    %5109 = vmatpush1.msra.mxu0 0.0
    %5110 = vmatprep.subr.mxu0 0.0
    %5111 = vmatpush1.msra.mxu0 0.0
    %5112 = vmatprep.subr.mxu0 0.0
    %5113 = vmatpush1.msra.mxu0 0.0
    %5114 = vmatprep.subr.mxu0 0.0
    %5115 = vmatpush1.msra.mxu0 0.0
    %5116 = vmatprep.subr.mxu0 0.0
    %5117 = vmatpush1.msra.mxu0 0.0
    %5118 = vmatprep.subr.mxu0 0.0
    %5119 = vmatpush1.msra.mxu0 0.0
    %5120 = vmatprep.subr.mxu0 0.0
    %5121 = vmatpush1.msra.mxu0 0.0
    %5122 = vmatprep.subr.mxu0 0.0
    %5123 = vmatpush1.msra.mxu0 0.0
    %5124 = vmatprep.subr.mxu0 0.0
    %5125 = vmatpush1.msra.mxu0 0.0
    %5126 = vmatprep.subr.mxu0 0.0
    %5127 = vmatpush1.msra.mxu0 0.0
    %5128 = vmatprep.subr.mxu0 0.0
    %5129 = vmatpush1.msra.mxu0 0.0
    %5130 = vmatprep.subr.mxu0 0.0
    %5131 = vmatpush1.msra.mxu0 0.0
    %5132 = vmatprep.subr.mxu0 0.0
    %5133 = vmatpush1.msra.mxu0 0.0
    %5134 = vmatprep.subr.mxu0 0.0
    %5135 = vmatpush1.msra.mxu0 0.0
    %5136 = vmatprep.mubr.f32.mxu0 0.0
    %5137 = vmatmul.mubr.f32.gmra.mrb[0].mxu0 %v5070
    %v5138 = vpop.f32.mrb[0].mxu0
    %v5139 = vadd.f32 %v146, %v5138
    %v5140 = vpop.f32.mrb[0].mxu0
    %5141 = vdwg.mxu0
    %v5142 = vxor.u32 %v5139, 2147483648
    %v5143 = vmul.f32 %v5142, 1.442695
    %v5144 = vpow.pop %v5143
    %v5145 = vadd.f32 %v5144, 1.0
    %v5146 = vrcp.pop %v5145
    %v5147 = vmul.f32 1.0, %v5146
    %v5148 = vtanh.pop %v5139
    %v5149 = vmul.f32 %v5147, %v4954
    %5151 = vrot.lane.b32.xlu0 %v5148, 64
    %v5152 = vpop.permute.xlu0 %5151
    %v5154 = vmul.f32 %v5147, %v5152
    %5156 = vrot.lane.b32.xlu0 %v5154, 32
    %v5157 = vpop.permute.xlu0 %5156
    %v5159 = vadd.f32 %v5149, %v5157
    %v5160 = vtanh.pop %v5159
    %5162 = vrot.lane.b32.xlu0 %v5160, 64
    %v5163 = vpop.permute.xlu0 %5162
    %v5165 = vmul.f32 %v5147, %v5163
    %s5166 = scalar_lea.vmem %s0, 50
    %v5167 = vld [vmem:[%s5166] sm:$0x3]
    %v5168 = vsel %vm38, %v5062, 0
    %5170 = vmatprep.subr.mxu0 0.0
    %5171 = vmatpush1.msra.mxu0 %v24
    %5172 = vmatprep.subr.mxu0 0.0
    %5173 = vmatpush1.msra.mxu0 %v25
    %5174 = vmatprep.subr.mxu0 0.0
    %5175 = vmatpush1.msra.mxu0 %v26
    %5176 = vmatprep.subr.mxu0 0.0
    %5177 = vmatpush1.msra.mxu0 %v27
    %5178 = vmatprep.subr.mxu0 0.0
    %5179 = vmatpush1.msra.mxu0 0.0
    %5180 = vmatprep.subr.mxu0 0.0
    %5181 = vmatpush1.msra.mxu0 0.0
    %5182 = vmatprep.subr.mxu0 0.0
    %5183 = vmatpush1.msra.mxu0 0.0
    %5184 = vmatprep.subr.mxu0 0.0
    %5185 = vmatpush1.msra.mxu0 0.0
    %5186 = vmatprep.subr.mxu0 0.0
    %5187 = vmatpush1.msra.mxu0 0.0
    %5188 = vmatprep.subr.mxu0 0.0
    %5189 = vmatpush1.msra.mxu0 0.0
    %5190 = vmatprep.subr.mxu0 0.0
    %5191 = vmatpush1.msra.mxu0 0.0
    %5192 = vmatprep.subr.mxu0 0.0
    %5193 = vmatpush1.msra.mxu0 0.0
    %5194 = vmatprep.subr.mxu0 0.0
    %5195 = vmatpush1.msra.mxu0 0.0
    %5196 = vmatprep.subr.mxu0 0.0
    %5197 = vmatpush1.msra.mxu0 0.0
    %5198 = vmatprep.subr.mxu0 0.0
    %5199 = vmatpush1.msra.mxu0 0.0
    %5200 = vmatprep.subr.mxu0 0.0
    %5201 = vmatpush1.msra.mxu0 0.0
    %5202 = vmatprep.subr.mxu0 0.0
    %5203 = vmatpush1.msra.mxu0 0.0
    %5204 = vmatprep.subr.mxu0 0.0
    %5205 = vmatpush1.msra.mxu0 0.0
    %5206 = vmatprep.subr.mxu0 0.0
    %5207 = vmatpush1.msra.mxu0 0.0
    %5208 = vmatprep.subr.mxu0 0.0
    %5209 = vmatpush1.msra.mxu0 0.0
    %5210 = vmatprep.subr.mxu0 0.0
    %5211 = vmatpush1.msra.mxu0 0.0
    %5212 = vmatprep.subr.mxu0 0.0
    %5213 = vmatpush1.msra.mxu0 0.0
    %5214 = vmatprep.subr.mxu0 0.0
    %5215 = vmatpush1.msra.mxu0 0.0
    %5216 = vmatprep.subr.mxu0 0.0
    %5217 = vmatpush1.msra.mxu0 0.0
    %5218 = vmatprep.subr.mxu0 0.0
    %5219 = vmatpush1.msra.mxu0 0.0
    %5220 = vmatprep.subr.mxu0 0.0
    %5221 = vmatpush1.msra.mxu0 0.0
    %5222 = vmatprep.subr.mxu0 0.0
    %5223 = vmatpush1.msra.mxu0 0.0
    %5224 = vmatprep.subr.mxu0 0.0
    %5225 = vmatpush1.msra.mxu0 0.0
    %5226 = vmatprep.subr.mxu0 0.0
    %5227 = vmatpush1.msra.mxu0 0.0
    %5228 = vmatprep.subr.mxu0 0.0
    %5229 = vmatpush1.msra.mxu0 0.0
    %5230 = vmatprep.subr.mxu0 0.0
    %5231 = vmatpush1.msra.mxu0 0.0
    %5232 = vmatprep.subr.mxu0 0.0
    %5233 = vmatpush1.msra.mxu0 0.0
    %5234 = vmatprep.mubr.f32.mxu0 0.0
    %5235 = vmatmul.mubr.f32.gmra.mrb[0].mxu0 %v5168
    %v5236 = vpop.f32.mrb[0].mxu0
    %v5237 = vadd.f32 0.0, %v5236
    %v5238 = vpop.f32.mrb[0].mxu0
    %5239 = vdwg.mxu0
    %v5240 = vadd.f32 %v5167, %v5237
    %v5241 = vxor.u32 %v5240, 2147483648
    %v5242 = vmul.f32 %v5241, 1.442695
    %v5243 = vpow.pop %v5242
    %v5244 = vadd.f32 %v5243, 1.0
    %v5245 = vrcp.pop %v5244
    %v5246 = vmul.f32 1.0, %v5245
    %v5247 = vtanh.pop %v5240
    %v5248 = vmul.f32 %v5246, %v5053
    %5250 = vrot.lane.b32.xlu0 %v5247, 64
    %v5251 = vpop.permute.xlu0 %5250
    %v5253 = vmul.f32 %v5246, %v5251
    %5255 = vrot.lane.b32.xlu0 %v5253, 32
    %v5256 = vpop.permute.xlu0 %5255
    %v5258 = vadd.f32 %v5248, %v5256
    %v5259 = vtanh.pop %v5258
    %5261 = vrot.lane.b32.xlu0 %v5259, 64
    %v5262 = vpop.permute.xlu0 %5261
    %v5264 = vmul.f32 %v5246, %v5262
    %5266 = vrot.lane.b32.xlu0 %v5264, 32
    %v5267 = vpop.permute.xlu0 %5266
    %5270 = vrot.lane.b32.xlu0 %v5165, 64
    %v5271 = vpop.permute.xlu0 %5270
    %v5273 = vsel %vm38, %v5267, %v5271
    %v5275 = vsel %vm148, %v5273, 0
    %5277 = vmatprep.subr.mxu0 0.0
    %5278 = vmatpush1.msra.mxu0 %v28
    %5279 = vmatprep.subr.mxu0 0.0
    %5280 = vmatpush1.msra.mxu0 %v29
    %5281 = vmatprep.subr.mxu0 0.0
    %5282 = vmatpush1.msra.mxu0 %v30
    %5283 = vmatprep.subr.mxu0 0.0
    %5284 = vmatpush1.msra.mxu0 %v31
    %5285 = vmatprep.subr.mxu0 0.0
    %5286 = vmatpush1.msra.mxu0 %v32
    %5287 = vmatprep.subr.mxu0 0.0
    %5288 = vmatpush1.msra.mxu0 %v33
    %5289 = vmatprep.subr.mxu0 0.0
    %5290 = vmatpush1.msra.mxu0 %v34
    %5291 = vmatprep.subr.mxu0 0.0
    %5292 = vmatpush1.msra.mxu0 %v35
    %5293 = vmatprep.subr.mxu0 0.0
    %5294 = vmatpush1.msra.mxu0 0.0
    %5295 = vmatprep.subr.mxu0 0.0
    %5296 = vmatpush1.msra.mxu0 0.0
    %5297 = vmatprep.subr.mxu0 0.0
    %5298 = vmatpush1.msra.mxu0 0.0
    %5299 = vmatprep.subr.mxu0 0.0
    %5300 = vmatpush1.msra.mxu0 0.0
    %5301 = vmatprep.subr.mxu0 0.0
    %5302 = vmatpush1.msra.mxu0 0.0
    %5303 = vmatprep.subr.mxu0 0.0
    %5304 = vmatpush1.msra.mxu0 0.0
    %5305 = vmatprep.subr.mxu0 0.0
    %5306 = vmatpush1.msra.mxu0 0.0
    %5307 = vmatprep.subr.mxu0 0.0
    %5308 = vmatpush1.msra.mxu0 0.0
    %5309 = vmatprep.subr.mxu0 0.0
    %5310 = vmatpush1.msra.mxu0 0.0
    %5311 = vmatprep.subr.mxu0 0.0
    %5312 = vmatpush1.msra.mxu0 0.0
    %5313 = vmatprep.subr.mxu0 0.0
    %5314 = vmatpush1.msra.mxu0 0.0
    %5315 = vmatprep.subr.mxu0 0.0
    %5316 = vmatpush1.msra.mxu0 0.0
    %5317 = vmatprep.subr.mxu0 0.0
    %5318 = vmatpush1.msra.mxu0 0.0
    %5319 = vmatprep.subr.mxu0 0.0
    %5320 = vmatpush1.msra.mxu0 0.0
    %5321 = vmatprep.subr.mxu0 0.0
    %5322 = vmatpush1.msra.mxu0 0.0
    %5323 = vmatprep.subr.mxu0 0.0
    %5324 = vmatpush1.msra.mxu0 0.0
    %5325 = vmatprep.subr.mxu0 0.0
    %5326 = vmatpush1.msra.mxu0 0.0
    %5327 = vmatprep.subr.mxu0 0.0
    %5328 = vmatpush1.msra.mxu0 0.0
    %5329 = vmatprep.subr.mxu0 0.0
    %5330 = vmatpush1.msra.mxu0 0.0
    %5331 = vmatprep.subr.mxu0 0.0
    %5332 = vmatpush1.msra.mxu0 0.0
    %5333 = vmatprep.subr.mxu0 0.0
    %5334 = vmatpush1.msra.mxu0 0.0
    %5335 = vmatprep.subr.mxu0 0.0
    %5336 = vmatpush1.msra.mxu0 0.0
    %5337 = vmatprep.subr.mxu0 0.0
    %5338 = vmatpush1.msra.mxu0 0.0
    %5339 = vmatprep.subr.mxu0 0.0
    %5340 = vmatpush1.msra.mxu0 0.0
    %5341 = vmatprep.mubr.f32.mxu0 0.0
    %5342 = vmatmul.mubr.f32.gmra.mrb[0].mxu0 %v5275
    %v5343 = vpop.f32.mrb[0].mxu0
    %v5344 = vadd.f32 %v146, %v5343
    %v5345 = vpop.f32.mrb[0].mxu0
    %5346 = vdwg.mxu0
    %v5347 = vxor.u32 %v5344, 2147483648
    %v5348 = vmul.f32 %v5347, 1.442695
    %v5349 = vpow.pop %v5348
    %v5350 = vadd.f32 %v5349, 1.0
    %v5351 = vrcp.pop %v5350
    %v5352 = vmul.f32 1.0, %v5351
    %v5353 = vtanh.pop %v5344
    %v5354 = vmul.f32 %v5352, %v5159
    %5356 = vrot.lane.b32.xlu0 %v5353, 64
    %v5357 = vpop.permute.xlu0 %5356
    %v5359 = vmul.f32 %v5352, %v5357
    %5361 = vrot.lane.b32.xlu0 %v5359, 32
    %v5362 = vpop.permute.xlu0 %5361
    %v5364 = vadd.f32 %v5354, %v5362
    %v5365 = vtanh.pop %v5364
    %5367 = vrot.lane.b32.xlu0 %v5365, 64
    %v5368 = vpop.permute.xlu0 %5367
    %v5370 = vmul.f32 %v5352, %v5368
    %s5371 = scalar_lea.vmem %s0, 52
    %v5372 = vld [vmem:[%s5371] sm:$0x3]
    %v5373 = vsel %vm38, %v5267, 0
    %5375 = vmatprep.subr.mxu0 0.0
    %5376 = vmatpush1.msra.mxu0 %v24
    %5377 = vmatprep.subr.mxu0 0.0
    %5378 = vmatpush1.msra.mxu0 %v25
    %5379 = vmatprep.subr.mxu0 0.0
    %5380 = vmatpush1.msra.mxu0 %v26
    %5381 = vmatprep.subr.mxu0 0.0
    %5382 = vmatpush1.msra.mxu0 %v27
    %5383 = vmatprep.subr.mxu0 0.0
    %5384 = vmatpush1.msra.mxu0 0.0
    %5385 = vmatprep.subr.mxu0 0.0
    %5386 = vmatpush1.msra.mxu0 0.0
    %5387 = vmatprep.subr.mxu0 0.0
    %5388 = vmatpush1.msra.mxu0 0.0
    %5389 = vmatprep.subr.mxu0 0.0
    %5390 = vmatpush1.msra.mxu0 0.0
    %5391 = vmatprep.subr.mxu0 0.0
    %5392 = vmatpush1.msra.mxu0 0.0
    %5393 = vmatprep.subr.mxu0 0.0
    %5394 = vmatpush1.msra.mxu0 0.0
    %5395 = vmatprep.subr.mxu0 0.0
    %5396 = vmatpush1.msra.mxu0 0.0
    %5397 = vmatprep.subr.mxu0 0.0
    %5398 = vmatpush1.msra.mxu0 0.0
    %5399 = vmatprep.subr.mxu0 0.0
    %5400 = vmatpush1.msra.mxu0 0.0
    %5401 = vmatprep.subr.mxu0 0.0
    %5402 = vmatpush1.msra.mxu0 0.0
    %5403 = vmatprep.subr.mxu0 0.0
    %5404 = vmatpush1.msra.mxu0 0.0
    %5405 = vmatprep.subr.mxu0 0.0
    %5406 = vmatpush1.msra.mxu0 0.0
    %5407 = vmatprep.subr.mxu0 0.0
    %5408 = vmatpush1.msra.mxu0 0.0
    %5409 = vmatprep.subr.mxu0 0.0
    %5410 = vmatpush1.msra.mxu0 0.0
    %5411 = vmatprep.subr.mxu0 0.0
    %5412 = vmatpush1.msra.mxu0 0.0
    %5413 = vmatprep.subr.mxu0 0.0
    %5414 = vmatpush1.msra.mxu0 0.0
    %5415 = vmatprep.subr.mxu0 0.0
    %5416 = vmatpush1.msra.mxu0 0.0
    %5417 = vmatprep.subr.mxu0 0.0
    %5418 = vmatpush1.msra.mxu0 0.0
    %5419 = vmatprep.subr.mxu0 0.0
    %5420 = vmatpush1.msra.mxu0 0.0
    %5421 = vmatprep.subr.mxu0 0.0
    %5422 = vmatpush1.msra.mxu0 0.0
    %5423 = vmatprep.subr.mxu0 0.0
    %5424 = vmatpush1.msra.mxu0 0.0
    %5425 = vmatprep.subr.mxu0 0.0
    %5426 = vmatpush1.msra.mxu0 0.0
    %5427 = vmatprep.subr.mxu0 0.0
    %5428 = vmatpush1.msra.mxu0 0.0
    %5429 = vmatprep.subr.mxu0 0.0
    %5430 = vmatpush1.msra.mxu0 0.0
    %5431 = vmatprep.subr.mxu0 0.0
    %5432 = vmatpush1.msra.mxu0 0.0
    %5433 = vmatprep.subr.mxu0 0.0
    %5434 = vmatpush1.msra.mxu0 0.0
    %5435 = vmatprep.subr.mxu0 0.0
    %5436 = vmatpush1.msra.mxu0 0.0
    %5437 = vmatprep.subr.mxu0 0.0
    %5438 = vmatpush1.msra.mxu0 0.0
    %5439 = vmatprep.mubr.f32.mxu0 0.0
    %5440 = vmatmul.mubr.f32.gmra.mrb[0].mxu0 %v5373
    %v5441 = vpop.f32.mrb[0].mxu0
    %v5442 = vadd.f32 0.0, %v5441
    %v5443 = vpop.f32.mrb[0].mxu0
    %5444 = vdwg.mxu0
    %v5445 = vadd.f32 %v5372, %v5442
    %v5446 = vxor.u32 %v5445, 2147483648
    %v5447 = vmul.f32 %v5446, 1.442695
    %v5448 = vpow.pop %v5447
    %v5449 = vadd.f32 %v5448, 1.0
    %v5450 = vrcp.pop %v5449
    %v5451 = vmul.f32 1.0, %v5450
    %v5452 = vtanh.pop %v5445
    %v5453 = vmul.f32 %v5451, %v5258
    %5455 = vrot.lane.b32.xlu0 %v5452, 64
    %v5456 = vpop.permute.xlu0 %5455
    %v5458 = vmul.f32 %v5451, %v5456
    %5460 = vrot.lane.b32.xlu0 %v5458, 32
    %v5461 = vpop.permute.xlu0 %5460
    %v5463 = vadd.f32 %v5453, %v5461
    %v5464 = vtanh.pop %v5463
    %5466 = vrot.lane.b32.xlu0 %v5464, 64
    %v5467 = vpop.permute.xlu0 %5466
    %v5469 = vmul.f32 %v5451, %v5467
    %5471 = vrot.lane.b32.xlu0 %v5469, 32
    %v5472 = vpop.permute.xlu0 %5471
    %5475 = vrot.lane.b32.xlu0 %v5370, 64
    %v5476 = vpop.permute.xlu0 %5475
    %v5478 = vsel %vm38, %v5472, %v5476
    %v5480 = vsel %vm148, %v5478, 0
    %5482 = vmatprep.subr.mxu0 0.0
    %5483 = vmatpush1.msra.mxu0 %v28
    %5484 = vmatprep.subr.mxu0 0.0
    %5485 = vmatpush1.msra.mxu0 %v29
    %5486 = vmatprep.subr.mxu0 0.0
    %5487 = vmatpush1.msra.mxu0 %v30
    %5488 = vmatprep.subr.mxu0 0.0
    %5489 = vmatpush1.msra.mxu0 %v31
    %5490 = vmatprep.subr.mxu0 0.0
    %5491 = vmatpush1.msra.mxu0 %v32
    %5492 = vmatprep.subr.mxu0 0.0
    %5493 = vmatpush1.msra.mxu0 %v33
    %5494 = vmatprep.subr.mxu0 0.0
    %5495 = vmatpush1.msra.mxu0 %v34
    %5496 = vmatprep.subr.mxu0 0.0
    %5497 = vmatpush1.msra.mxu0 %v35
    %5498 = vmatprep.subr.mxu0 0.0
    %5499 = vmatpush1.msra.mxu0 0.0
    %5500 = vmatprep.subr.mxu0 0.0
    %5501 = vmatpush1.msra.mxu0 0.0
    %5502 = vmatprep.subr.mxu0 0.0
    %5503 = vmatpush1.msra.mxu0 0.0
    %5504 = vmatprep.subr.mxu0 0.0
    %5505 = vmatpush1.msra.mxu0 0.0
    %5506 = vmatprep.subr.mxu0 0.0
    %5507 = vmatpush1.msra.mxu0 0.0
    %5508 = vmatprep.subr.mxu0 0.0
    %5509 = vmatpush1.msra.mxu0 0.0
    %5510 = vmatprep.subr.mxu0 0.0
    %5511 = vmatpush1.msra.mxu0 0.0
    %5512 = vmatprep.subr.mxu0 0.0
    %5513 = vmatpush1.msra.mxu0 0.0
    %5514 = vmatprep.subr.mxu0 0.0
    %5515 = vmatpush1.msra.mxu0 0.0
    %5516 = vmatprep.subr.mxu0 0.0
    %5517 = vmatpush1.msra.mxu0 0.0
    %5518 = vmatprep.subr.mxu0 0.0
    %5519 = vmatpush1.msra.mxu0 0.0
    %5520 = vmatprep.subr.mxu0 0.0
    %5521 = vmatpush1.msra.mxu0 0.0
    %5522 = vmatprep.subr.mxu0 0.0
    %5523 = vmatpush1.msra.mxu0 0.0
    %5524 = vmatprep.subr.mxu0 0.0
    %5525 = vmatpush1.msra.mxu0 0.0
    %5526 = vmatprep.subr.mxu0 0.0
    %5527 = vmatpush1.msra.mxu0 0.0
    %5528 = vmatprep.subr.mxu0 0.0
    %5529 = vmatpush1.msra.mxu0 0.0
    %5530 = vmatprep.subr.mxu0 0.0
    %5531 = vmatpush1.msra.mxu0 0.0
    %5532 = vmatprep.subr.mxu0 0.0
    %5533 = vmatpush1.msra.mxu0 0.0
    %5534 = vmatprep.subr.mxu0 0.0
    %5535 = vmatpush1.msra.mxu0 0.0
    %5536 = vmatprep.subr.mxu0 0.0
    %5537 = vmatpush1.msra.mxu0 0.0
    %5538 = vmatprep.subr.mxu0 0.0
    %5539 = vmatpush1.msra.mxu0 0.0
    %5540 = vmatprep.subr.mxu0 0.0
    %5541 = vmatpush1.msra.mxu0 0.0
    %5542 = vmatprep.subr.mxu0 0.0
    %5543 = vmatpush1.msra.mxu0 0.0
    %5544 = vmatprep.subr.mxu0 0.0
    %5545 = vmatpush1.msra.mxu0 0.0
    %5546 = vmatprep.mubr.f32.mxu0 0.0
    %5547 = vmatmul.mubr.f32.gmra.mrb[0].mxu0 %v5480
    %v5548 = vpop.f32.mrb[0].mxu0
    %v5549 = vadd.f32 %v146, %v5548
    %v5550 = vpop.f32.mrb[0].mxu0
    %5551 = vdwg.mxu0
    %v5552 = vxor.u32 %v5549, 2147483648
    %v5553 = vmul.f32 %v5552, 1.442695
    %v5554 = vpow.pop %v5553
    %v5555 = vadd.f32 %v5554, 1.0
    %v5556 = vrcp.pop %v5555
    %v5557 = vmul.f32 1.0, %v5556
    %v5558 = vtanh.pop %v5549
    %v5559 = vmul.f32 %v5557, %v5364
    %5561 = vrot.lane.b32.xlu0 %v5558, 64
    %v5562 = vpop.permute.xlu0 %5561
    %v5564 = vmul.f32 %v5557, %v5562
    %5566 = vrot.lane.b32.xlu0 %v5564, 32
    %v5567 = vpop.permute.xlu0 %5566
    %v5569 = vadd.f32 %v5559, %v5567
    %v5570 = vtanh.pop %v5569
    %5572 = vrot.lane.b32.xlu0 %v5570, 64
    %v5573 = vpop.permute.xlu0 %5572
    %v5575 = vmul.f32 %v5557, %v5573
    %s5576 = scalar_lea.vmem %s0, 54
    %v5577 = vld [vmem:[%s5576] sm:$0x3]
    %v5578 = vsel %vm38, %v5472, 0
    %5580 = vmatprep.subr.mxu0 0.0
    %5581 = vmatpush1.msra.mxu0 %v24
    %5582 = vmatprep.subr.mxu0 0.0
    %5583 = vmatpush1.msra.mxu0 %v25
    %5584 = vmatprep.subr.mxu0 0.0
    %5585 = vmatpush1.msra.mxu0 %v26
    %5586 = vmatprep.subr.mxu0 0.0
    %5587 = vmatpush1.msra.mxu0 %v27
    %5588 = vmatprep.subr.mxu0 0.0
    %5589 = vmatpush1.msra.mxu0 0.0
    %5590 = vmatprep.subr.mxu0 0.0
    %5591 = vmatpush1.msra.mxu0 0.0
    %5592 = vmatprep.subr.mxu0 0.0
    %5593 = vmatpush1.msra.mxu0 0.0
    %5594 = vmatprep.subr.mxu0 0.0
    %5595 = vmatpush1.msra.mxu0 0.0
    %5596 = vmatprep.subr.mxu0 0.0
    %5597 = vmatpush1.msra.mxu0 0.0
    %5598 = vmatprep.subr.mxu0 0.0
    %5599 = vmatpush1.msra.mxu0 0.0
    %5600 = vmatprep.subr.mxu0 0.0
    %5601 = vmatpush1.msra.mxu0 0.0
    %5602 = vmatprep.subr.mxu0 0.0
    %5603 = vmatpush1.msra.mxu0 0.0
    %5604 = vmatprep.subr.mxu0 0.0
    %5605 = vmatpush1.msra.mxu0 0.0
    %5606 = vmatprep.subr.mxu0 0.0
    %5607 = vmatpush1.msra.mxu0 0.0
    %5608 = vmatprep.subr.mxu0 0.0
    %5609 = vmatpush1.msra.mxu0 0.0
    %5610 = vmatprep.subr.mxu0 0.0
    %5611 = vmatpush1.msra.mxu0 0.0
    %5612 = vmatprep.subr.mxu0 0.0
    %5613 = vmatpush1.msra.mxu0 0.0
    %5614 = vmatprep.subr.mxu0 0.0
    %5615 = vmatpush1.msra.mxu0 0.0
    %5616 = vmatprep.subr.mxu0 0.0
    %5617 = vmatpush1.msra.mxu0 0.0
    %5618 = vmatprep.subr.mxu0 0.0
    %5619 = vmatpush1.msra.mxu0 0.0
    %5620 = vmatprep.subr.mxu0 0.0
    %5621 = vmatpush1.msra.mxu0 0.0
    %5622 = vmatprep.subr.mxu0 0.0
    %5623 = vmatpush1.msra.mxu0 0.0
    %5624 = vmatprep.subr.mxu0 0.0
    %5625 = vmatpush1.msra.mxu0 0.0
    %5626 = vmatprep.subr.mxu0 0.0
    %5627 = vmatpush1.msra.mxu0 0.0
    %5628 = vmatprep.subr.mxu0 0.0
    %5629 = vmatpush1.msra.mxu0 0.0
    %5630 = vmatprep.subr.mxu0 0.0
    %5631 = vmatpush1.msra.mxu0 0.0
    %5632 = vmatprep.subr.mxu0 0.0
    %5633 = vmatpush1.msra.mxu0 0.0
    %5634 = vmatprep.subr.mxu0 0.0
    %5635 = vmatpush1.msra.mxu0 0.0
    %5636 = vmatprep.subr.mxu0 0.0
    %5637 = vmatpush1.msra.mxu0 0.0
    %5638 = vmatprep.subr.mxu0 0.0
    %5639 = vmatpush1.msra.mxu0 0.0
    %5640 = vmatprep.subr.mxu0 0.0
    %5641 = vmatpush1.msra.mxu0 0.0
    %5642 = vmatprep.subr.mxu0 0.0
    %5643 = vmatpush1.msra.mxu0 0.0
    %5644 = vmatprep.mubr.f32.mxu0 0.0
    %5645 = vmatmul.mubr.f32.gmra.mrb[0].mxu0 %v5578
    %v5646 = vpop.f32.mrb[0].mxu0
    %v5647 = vadd.f32 0.0, %v5646
    %v5648 = vpop.f32.mrb[0].mxu0
    %5649 = vdwg.mxu0
    %v5650 = vadd.f32 %v5577, %v5647
    %v5651 = vxor.u32 %v5650, 2147483648
    %v5652 = vmul.f32 %v5651, 1.442695
    %v5653 = vpow.pop %v5652
    %v5654 = vadd.f32 %v5653, 1.0
    %v5655 = vrcp.pop %v5654
    %v5656 = vmul.f32 1.0, %v5655
    %v5657 = vtanh.pop %v5650
    %v5658 = vmul.f32 %v5656, %v5463
    %5660 = vrot.lane.b32.xlu0 %v5657, 64
    %v5661 = vpop.permute.xlu0 %5660
    %v5663 = vmul.f32 %v5656, %v5661
    %5665 = vrot.lane.b32.xlu0 %v5663, 32
    %v5666 = vpop.permute.xlu0 %5665
    %v5668 = vadd.f32 %v5658, %v5666
    %v5669 = vtanh.pop %v5668
    %5671 = vrot.lane.b32.xlu0 %v5669, 64
    %v5672 = vpop.permute.xlu0 %5671
    %v5674 = vmul.f32 %v5656, %v5672
    %5676 = vrot.lane.b32.xlu0 %v5674, 32
    %v5677 = vpop.permute.xlu0 %5676
    %5680 = vrot.lane.b32.xlu0 %v5575, 64
    %v5681 = vpop.permute.xlu0 %5680
    %v5683 = vsel %vm38, %v5677, %v5681
    %v5685 = vsel %vm148, %v5683, 0
    %5687 = vmatprep.subr.mxu0 0.0
    %5688 = vmatpush1.msra.mxu0 %v28
    %5689 = vmatprep.subr.mxu0 0.0
    %5690 = vmatpush1.msra.mxu0 %v29
    %5691 = vmatprep.subr.mxu0 0.0
    %5692 = vmatpush1.msra.mxu0 %v30
    %5693 = vmatprep.subr.mxu0 0.0
    %5694 = vmatpush1.msra.mxu0 %v31
    %5695 = vmatprep.subr.mxu0 0.0
    %5696 = vmatpush1.msra.mxu0 %v32
    %5697 = vmatprep.subr.mxu0 0.0
    %5698 = vmatpush1.msra.mxu0 %v33
    %5699 = vmatprep.subr.mxu0 0.0
    %5700 = vmatpush1.msra.mxu0 %v34
    %5701 = vmatprep.subr.mxu0 0.0
    %5702 = vmatpush1.msra.mxu0 %v35
    %5703 = vmatprep.subr.mxu0 0.0
    %5704 = vmatpush1.msra.mxu0 0.0
    %5705 = vmatprep.subr.mxu0 0.0
    %5706 = vmatpush1.msra.mxu0 0.0
    %5707 = vmatprep.subr.mxu0 0.0
    %5708 = vmatpush1.msra.mxu0 0.0
    %5709 = vmatprep.subr.mxu0 0.0
    %5710 = vmatpush1.msra.mxu0 0.0
    %5711 = vmatprep.subr.mxu0 0.0
    %5712 = vmatpush1.msra.mxu0 0.0
    %5713 = vmatprep.subr.mxu0 0.0
    %5714 = vmatpush1.msra.mxu0 0.0
    %5715 = vmatprep.subr.mxu0 0.0
    %5716 = vmatpush1.msra.mxu0 0.0
    %5717 = vmatprep.subr.mxu0 0.0
    %5718 = vmatpush1.msra.mxu0 0.0
    %5719 = vmatprep.subr.mxu0 0.0
    %5720 = vmatpush1.msra.mxu0 0.0
    %5721 = vmatprep.subr.mxu0 0.0
    %5722 = vmatpush1.msra.mxu0 0.0
    %5723 = vmatprep.subr.mxu0 0.0
    %5724 = vmatpush1.msra.mxu0 0.0
    %5725 = vmatprep.subr.mxu0 0.0
    %5726 = vmatpush1.msra.mxu0 0.0
    %5727 = vmatprep.subr.mxu0 0.0
    %5728 = vmatpush1.msra.mxu0 0.0
    %5729 = vmatprep.subr.mxu0 0.0
    %5730 = vmatpush1.msra.mxu0 0.0
    %5731 = vmatprep.subr.mxu0 0.0
    %5732 = vmatpush1.msra.mxu0 0.0
    %5733 = vmatprep.subr.mxu0 0.0
    %5734 = vmatpush1.msra.mxu0 0.0
    %5735 = vmatprep.subr.mxu0 0.0
    %5736 = vmatpush1.msra.mxu0 0.0
    %5737 = vmatprep.subr.mxu0 0.0
    %5738 = vmatpush1.msra.mxu0 0.0
    %5739 = vmatprep.subr.mxu0 0.0
    %5740 = vmatpush1.msra.mxu0 0.0
    %5741 = vmatprep.subr.mxu0 0.0
    %5742 = vmatpush1.msra.mxu0 0.0
    %5743 = vmatprep.subr.mxu0 0.0
    %5744 = vmatpush1.msra.mxu0 0.0
    %5745 = vmatprep.subr.mxu0 0.0
    %5746 = vmatpush1.msra.mxu0 0.0
    %5747 = vmatprep.subr.mxu0 0.0
    %5748 = vmatpush1.msra.mxu0 0.0
    %5749 = vmatprep.subr.mxu0 0.0
    %5750 = vmatpush1.msra.mxu0 0.0
    %5751 = vmatprep.mubr.f32.mxu0 0.0
    %5752 = vmatmul.mubr.f32.gmra.mrb[0].mxu0 %v5685
    %v5753 = vpop.f32.mrb[0].mxu0
    %v5754 = vadd.f32 %v146, %v5753
    %v5755 = vpop.f32.mrb[0].mxu0
    %5756 = vdwg.mxu0
    %v5757 = vxor.u32 %v5754, 2147483648
    %v5758 = vmul.f32 %v5757, 1.442695
    %v5759 = vpow.pop %v5758
    %v5760 = vadd.f32 %v5759, 1.0
    %v5761 = vrcp.pop %v5760
    %v5762 = vmul.f32 1.0, %v5761
    %v5763 = vtanh.pop %v5754
    %v5764 = vmul.f32 %v5762, %v5569
    %5766 = vrot.lane.b32.xlu0 %v5763, 64
    %v5767 = vpop.permute.xlu0 %5766
    %v5769 = vmul.f32 %v5762, %v5767
    %5771 = vrot.lane.b32.xlu0 %v5769, 32
    %v5772 = vpop.permute.xlu0 %5771
    %v5774 = vadd.f32 %v5764, %v5772
    %v5775 = vtanh.pop %v5774
    %5777 = vrot.lane.b32.xlu0 %v5775, 64
    %v5778 = vpop.permute.xlu0 %5777
    %v5780 = vmul.f32 %v5762, %v5778
    %v5781 = vld [vmem:[%s4] sm:$0xff]
    %v5782 = vld [vmem:[%s4 + $0x8] sm:$0xff]
    %v5783 = vld [vmem:[%s4 + $0x10] sm:$0xff]
    %v5784 = vld [vmem:[%s4 + $0x18] sm:$0xff]
    %v5785 = vld [vmem:[%s5] sm:$0x1]
    %v5787 = vlaneseq
    %v5788 = vshrl.u32 %v5787, 7
    %v5789 = vsub.s32 0, %v5788
    %v5790 = vrot.slane %v5785, %v5789
    %5793 = vrot.lane.b32.xlu0 %v5780, 32
    %v5794 = vpop.permute.xlu0 %5793
    %v5795 = vsel %vm38, %v5794, 0
    %5797 = vmatprep.subr.mxu0 0.0
    %5798 = vmatpush1.msra.mxu0 %v5781
    %5799 = vmatprep.subr.mxu0 0.0
    %5800 = vmatpush1.msra.mxu0 %v5782
    %5801 = vmatprep.subr.mxu0 0.0
    %5802 = vmatpush1.msra.mxu0 %v5783
    %5803 = vmatprep.subr.mxu0 0.0
    %5804 = vmatpush1.msra.mxu0 %v5784
    %5805 = vmatprep.subr.mxu0 0.0
    %5806 = vmatpush1.msra.mxu0 0.0
    %5807 = vmatprep.subr.mxu0 0.0
    %5808 = vmatpush1.msra.mxu0 0.0
    %5809 = vmatprep.subr.mxu0 0.0
    %5810 = vmatpush1.msra.mxu0 0.0
    %5811 = vmatprep.subr.mxu0 0.0
    %5812 = vmatpush1.msra.mxu0 0.0
    %5813 = vmatprep.subr.mxu0 0.0
    %5814 = vmatpush1.msra.mxu0 0.0
    %5815 = vmatprep.subr.mxu0 0.0
    %5816 = vmatpush1.msra.mxu0 0.0
    %5817 = vmatprep.subr.mxu0 0.0
    %5818 = vmatpush1.msra.mxu0 0.0
    %5819 = vmatprep.subr.mxu0 0.0
    %5820 = vmatpush1.msra.mxu0 0.0
    %5821 = vmatprep.subr.mxu0 0.0
    %5822 = vmatpush1.msra.mxu0 0.0
    %5823 = vmatprep.subr.mxu0 0.0
    %5824 = vmatpush1.msra.mxu0 0.0
    %5825 = vmatprep.subr.mxu0 0.0
    %5826 = vmatpush1.msra.mxu0 0.0
    %5827 = vmatprep.subr.mxu0 0.0
    %5828 = vmatpush1.msra.mxu0 0.0
    %5829 = vmatprep.subr.mxu0 0.0
    %5830 = vmatpush1.msra.mxu0 0.0
    %5831 = vmatprep.subr.mxu0 0.0
    %5832 = vmatpush1.msra.mxu0 0.0
    %5833 = vmatprep.subr.mxu0 0.0
    %5834 = vmatpush1.msra.mxu0 0.0
    %5835 = vmatprep.subr.mxu0 0.0
    %5836 = vmatpush1.msra.mxu0 0.0
    %5837 = vmatprep.subr.mxu0 0.0
    %5838 = vmatpush1.msra.mxu0 0.0
    %5839 = vmatprep.subr.mxu0 0.0
    %5840 = vmatpush1.msra.mxu0 0.0
    %5841 = vmatprep.subr.mxu0 0.0
    %5842 = vmatpush1.msra.mxu0 0.0
    %5843 = vmatprep.subr.mxu0 0.0
    %5844 = vmatpush1.msra.mxu0 0.0
    %5845 = vmatprep.subr.mxu0 0.0
    %5846 = vmatpush1.msra.mxu0 0.0
    %5847 = vmatprep.subr.mxu0 0.0
    %5848 = vmatpush1.msra.mxu0 0.0
    %5849 = vmatprep.subr.mxu0 0.0
    %5850 = vmatpush1.msra.mxu0 0.0
    %5851 = vmatprep.subr.mxu0 0.0
    %5852 = vmatpush1.msra.mxu0 0.0
    %5853 = vmatprep.subr.mxu0 0.0
    %5854 = vmatpush1.msra.mxu0 0.0
    %5855 = vmatprep.subr.mxu0 0.0
    %5856 = vmatpush1.msra.mxu0 0.0
    %5857 = vmatprep.subr.mxu0 0.0
    %5858 = vmatpush1.msra.mxu0 0.0
    %5859 = vmatprep.subr.mxu0 0.0
    %5860 = vmatpush1.msra.mxu0 0.0
    %5861 = vmatprep.mubr.f32.mxu0 0.0
    %5862 = vmatmul.mubr.f32.gmra.mrb[0].mxu0 %v5795
    %v5863 = vpop.f32.mrb[0].mxu0
    %v5864 = vadd.f32 %v5790, %v5863
    %v5865 = vpop.f32.mrb[0].mxu0
    %5866 = vdwg.mxu0
    %vm5867 = vcmask 17408
    %5868 = vst.msk [vmem:[#allocation2] sm:$0x3] %vm5867, %v5864
    // Predicated region
    $region26: #{cnn_lstm_forward.3} parent=1 // pred_check
      _
    $region27: #{cnn_lstm_forward.3} parent=1 // pred_check_branch
      %5870 = sbr.rel (0) target = $region29
    $region28: #{cnn_lstm_forward.3} parent=1 // pred_region
      %s5872 = ssub.s32 32, 32
      %5873 = vsyncadd [#allocation3], %s5872
      %s5875 = sshll.u32 [#allocation2], 4
      %s5876 = int_to_ptr.vmem [resolvable:$true] %s5875
      %5878 = dma.vmem_to_hbm [thread:$0]  %s5876, 32, %s6, [#allocation3]
    $region29: #{cnn_lstm_forward.3} parent=1 // pred_fallthru
      _
    // Predicated region
    $region30: #{cnn_lstm_forward.3} parent=1 // pred_check
      _
    $region31: #{cnn_lstm_forward.3} parent=1 // pred_check_branch
      %5880 = sbr.rel (0) target = $region33
    $region32: #{cnn_lstm_forward.3} parent=1 // pred_region
      %5881 = dma.done [#allocation3], 32
    $region33: #{cnn_lstm_forward.3} parent=1 // pred_fallthru
      _
    %5882 = vsyncpa [#allocation3], 1

</llo_original>
